<compile_context>
chip_gen: v7x
topology: tpu7x:2x2x1
jax: 0.10.0
libtpu: 0.0.40
codegen_flags: <defaults>
</compile_context>

<pallas_src>
import jax
import jax.numpy as jnp
import numpy as np
from jax.experimental import pallas as pl
from jax.experimental.pallas import tpu as pltpu

D_MODEL = 768
H1 = 512
H2 = 256
VOCAB = 1000


def _magnitude_kernel(ids_ref, mask_ref, tbl_ref,
                      w1_ref, b1_ref, w2_ref, b2_ref, w3t_ref, b3_ref,
                      out_ref, cnt_acc):
    # Grid = (batch tiles ["parallel"], sequence tiles ["arbitrary"]).
    # ids_ref  : (tb, ts) int32   token ids tile (lane-dense)
    # mask_ref : (tb, ts) f32     attention-mask tile (lane-dense)
    # tbl_ref  : (v_pad, 768) bf16 embedding table, VMEM-resident
    # cnt_acc  : (tb, v_pad) f32  masked per-vocab token counts (accumulator)
    s = pl.program_id(1)

    @pl.when(s == 0)
    def _init():
        cnt_acc[...] = jnp.zeros_like(cnt_acc)

    # ---- fused gather + masked pooling for this sequence tile ----
    # cnt_acc[b, v] += sum_s mask[b, s] * [ids[b, s] == v]
    ids = ids_ref[...]                                   # (tb, ts) int32
    mask = mask_ref[...]                                 # (tb, ts) f32
    tb, ts = ids.shape
    v_pad = cnt_acc.shape[-1]
    iota_v = jax.lax.broadcasted_iota(jnp.int32, (tb, ts, v_pad), 2)
    onehot = (ids[:, :, None] == iota_v).astype(jnp.float32)       # (tb, ts, Vp)
    cnt_acc[...] += jnp.sum(onehot * mask[:, :, None], axis=1)     # (tb, Vp)

    # ---- finalize: mean pooling (counts @ table) + 3-layer regression head ----
    @pl.when(s == pl.num_programs(1) - 1)
    def _finalize():
        counts = cnt_acc[...]                                       # (tb, Vp) f32
        # sum_s mask[b,s] == sum_v counts[b,v]   (padding vocab rows stay 0)
        n_tok = jnp.maximum(jnp.sum(counts, axis=-1, keepdims=True), 1e-9)
        # sum of masked token embeddings == counts @ table   (one MXU matmul)
        sum_emb = jnp.dot(counts, tbl_ref[...].astype(jnp.float32),
                          preferred_element_type=jnp.float32)       # (tb, D)
        sent = (sum_emb / n_tok).astype(jnp.bfloat16)               # exact divide

        # Linear(768->512) + ReLU   (Dropout = identity at inference)
        h1 = jnp.dot(sent, w1_ref[...],
                     preferred_element_type=jnp.float32) + b1_ref[...]
        h1 = jnp.maximum(h1, 0.0).astype(jnp.bfloat16)
        # Linear(512->256) + ReLU
        h2 = jnp.dot(h1, w2_ref[...],
                     preferred_element_type=jnp.float32) + b2_ref[...]
        h2 = jnp.maximum(h2, 0.0)
        # Linear(256->1): VPU multiply + lane reduce (avoid an N=1 MXU pass)
        out = jnp.sum(h2 * w3t_ref[...], axis=-1, keepdims=True) + b3_ref[...]
        out_ref[...] = out.astype(out_ref.dtype)                    # (tb, 1)


def magnitude_regression(input_ids, attention_mask, params, emb_table,
                         *, tb=None, ts=None):
    """input_ids, attention_mask: (B, S); emb_table: (vocab, 768) -> (B,) f32."""
    B, S = input_ids.shape
    vocab, d = emb_table.shape
    assert d == D_MODEL
    w1, b1, w2, b2, w3, b3 = params

    # ---- tile selection ----
    # Small batch tiles are enough now that the only HBM stream is ids+mask;
    # >=2 batch tiles lets the "parallel" axis use both v7x TensorCores.
    if tb is None:
        tb = B
        for cand in (16, 8):
            if B % cand == 0 and B // cand >= 2:
                tb = cand
                break
    if ts is None:
        ts = 128 if S % 128 == 0 else S          # lane-dense tile or full sequence
    assert B % tb == 0 and S % ts == 0, "B/S must be divisible by tile sizes"
    assert tb == B or tb % 8 == 0, "batch tile must be a multiple of 8 or == B"
    assert ts == S or ts % 128 == 0, "seq tile must be a multiple of 128 or == S"

    # ---- pad vocab to a lane multiple; padding rows are zero & never indexed ----
    v_pad = ((vocab + 127) // 128) * 128
    tbl = emb_table.astype(jnp.bfloat16)
    if v_pad != vocab:
        tbl = jnp.concatenate(
            [tbl, jnp.zeros((v_pad - vocab, D_MODEL), jnp.bfloat16)], axis=0)

    ids = input_ids.astype(jnp.int32)
    mask = attention_mask.astype(jnp.float32)      # lane-dense 2-D mask
    w1b = w1.astype(jnp.bfloat16)
    w2b = w2.astype(jnp.bfloat16)
    b1r = b1.reshape(1, H1).astype(jnp.float32)
    b2r = b2.reshape(1, H2).astype(jnp.float32)
    w3t = w3.astype(jnp.float32).reshape(1, H2)
    b3r = b3.astype(jnp.float32).reshape(1, 1)

    # ---- VMEM budget (v7x: 64 MiB/core -> stay under ~48 MiB) ----
    onehot_tmp = 4 * tb * ts * v_pad * 4                  # iota/bool/f32 temporaries
    streams = 2 * 2 * tb * ts * 4                         # ids + mask, double buffered
    resident = 2 * (v_pad * D_MODEL * 2 + D_MODEL * H1 * 2 + H1 * H2 * 2
                    + (H1 + 2 * H2 + 1) * 4)              # table + head weights
    scratch = tb * v_pad * 4 + 2 * tb * 4                 # count accumulator + out
    vmem_needed = onehot_tmp + streams + resident + scratch
    assert vmem_needed <= 44 * 1024 * 1024, (
        f"tiles ({tb},{ts}) need ~{vmem_needed >> 20} MiB VMEM; shrink tb/ts")

    const = lambda i, s: (0, 0)                            # resident across the grid
    grid = (B // tb, S // ts)

    out = pl.pallas_call(
        _magnitude_kernel,
        out_shape=jax.ShapeDtypeStruct((B, 1), jnp.float32),
        grid_spec=pltpu.PrefetchScalarGridSpec(
            num_scalar_prefetch=0,
            grid=grid,
            in_specs=[
                pl.BlockSpec((tb, ts), lambda i, s: (i, s)),   # input_ids
                pl.BlockSpec((tb, ts), lambda i, s: (i, s)),   # attention mask
                pl.BlockSpec((v_pad, D_MODEL), const),         # embedding table
                pl.BlockSpec((D_MODEL, H1), const),            # w1
                pl.BlockSpec((1, H1), const),                  # b1
                pl.BlockSpec((H1, H2), const),                 # w2
                pl.BlockSpec((1, H2), const),                  # b2
                pl.BlockSpec((1, H2), const),                  # w3^T
                pl.BlockSpec((1, 1), const),                   # b3
            ],
            out_specs=pl.BlockSpec((tb, 1), lambda i, s: (i, 0)),
            scratch_shapes=[pltpu.VMEM((tb, v_pad), jnp.float32)],
        ),
        compiler_params=pltpu.CompilerParams(
            dimension_semantics=("parallel", "arbitrary"),
            vmem_limit_bytes=48 * 1024 * 1024,   # safe on v5e/v6e (128 MiB) and v7x (64 MiB)
        ),
    )(ids, mask, tbl, w1b, b1r, w2b, b2r, w3t, b3r)
    return out[:, 0]  # squeeze(-1)


def init_params(key):
    """Deterministic init of the head (torch-style uniform +-1/sqrt(fan_in))."""
    ks = jax.random.split(key, 7)

    def linear(kw, kb, fan_in, fan_out):
        bound = 1.0 / jnp.sqrt(jnp.float32(fan_in))
        w = jax.random.uniform(kw, (fan_in, fan_out), jnp.float32, -bound, bound)
        b = jax.random.uniform(kb, (1, fan_out), jnp.float32, -bound, bound)
        return w, b

    w1, b1 = linear(ks[0], ks[1], D_MODEL, H1)
    w2, b2 = linear(ks[2], ks[3], H1, H2)
    w3, b3 = linear(ks[4], ks[5], H2, 1)
    # Frozen "base model" embedding table, stored bf16 (the resident dtype).
    emb_table = (0.02 * jax.random.normal(ks[6], (VOCAB, D_MODEL), jnp.float32)
                 ).astype(jnp.bfloat16)
    return (w1, b1, w2, b2, w3, b3), emb_table


def _reference(input_ids, attention_mask, params, emb_table):
    """Pure-JAX reference mirroring the kernel's numerics."""
    w1, b1, w2, b2, w3, b3 = params
    tok = jnp.take(emb_table.astype(jnp.float32), input_ids, axis=0)   # (B,S,D)
    m = attention_mask.astype(jnp.float32)
    summ = jnp.einsum("bs,bsd->bd", m, tok)
    n = jnp.maximum(jnp.sum(m, axis=-1, keepdims=True), 1e-9)
    sent = (summ / n).astype(jnp.bfloat16)
    h1 = jnp.maximum(jnp.dot(sent, w1.astype(jnp.bfloat16),
                             preferred_element_type=jnp.float32) + b1, 0.0)
    h1 = h1.astype(jnp.bfloat16)
    h2 = jnp.maximum(jnp.dot(h1, w2.astype(jnp.bfloat16),
                             preferred_element_type=jnp.float32) + b2, 0.0)
    out = jnp.sum(h2 * w3.astype(jnp.float32).reshape(1, H2), axis=-1) + b3[0, 0]
    return out


if __name__ == "__main__":
    key = jax.random.PRNGKey(0)
    k_param, k_ids, k_len = jax.random.split(key, 3)

    B, S = 16, 256          # small demo shapes; defaults -> tb=8, ts=128, grid (2, 2)
    params, emb_table = init_params(k_param)

    input_ids = jax.random.randint(k_ids, (B, S), 0, VOCAB, dtype=jnp.int32)
    # Variable-length sequences: half the batch is padded.
    lengths = jnp.concatenate([
        jnp.full((B // 2,), S, dtype=jnp.int32),
        jax.random.randint(k_len, (B - B // 2,), 4, S, dtype=jnp.int32),
    ])
    attention_mask = (jnp.arange(S)[None, :] < lengths[:, None]).astype(jnp.int32)

    magnitude = magnitude_regression(input_ids, attention_mask, params, emb_table)
    magnitude = jax.block_until_ready(magnitude)

    assert magnitude.shape == (B,)
    assert magnitude.dtype == jnp.float32

    ref = _reference(input_ids, attention_mask, params, emb_table)
    np.testing.assert_allclose(np.asarray(magnitude), np.asarray(ref),
                               rtol=5e-2, atol=5e-2)

    print("KERNEL_OK")
</pallas_src>

<mosaic_0001>
module attributes {stable_mosaic.version = 11 : i64} {
  func.func @_magnitude_kernel(%arg0: i32, %arg1: i32, %arg2: memref<8x128xi32, #tpu.memory_space<vmem>>, %arg3: memref<8x128xf32, #tpu.memory_space<vmem>>, %arg4: memref<1024x768xbf16, #tpu.memory_space<vmem>>, %arg5: memref<768x512xbf16, #tpu.memory_space<vmem>>, %arg6: memref<1x512xf32, #tpu.memory_space<vmem>>, %arg7: memref<512x256xbf16, #tpu.memory_space<vmem>>, %arg8: memref<1x256xf32, #tpu.memory_space<vmem>>, %arg9: memref<1x256xf32, #tpu.memory_space<vmem>>, %arg10: memref<1x1xf32, #tpu.memory_space<vmem>>, %arg11: memref<8x1xf32, #tpu.memory_space<vmem>>, %arg12: memref<8x1024xf32, #tpu.memory_space<vmem>>) attributes {dimension_semantics = [#tpu.dimension_semantics<parallel>, #tpu.dimension_semantics<arbitrary>], iteration_bounds = array<i64: 2, 2>, scalar_prefetch = 0 : i64, scratch_operands = 1 : i64, tpu.core_type = #tpu.core_type<tc>, window_params = [{transform_indices = @transform_0, window_bounds = array<i64: 8, 128>}, {transform_indices = @transform_1, window_bounds = array<i64: 8, 128>}, {pipeline_mode = #tpu.pipeline_mode<synchronous>, transform_indices = @transform_2, window_bounds = array<i64: 1024, 768>}, {pipeline_mode = #tpu.pipeline_mode<synchronous>, transform_indices = @transform_3, window_bounds = array<i64: 768, 512>}, {pipeline_mode = #tpu.pipeline_mode<synchronous>, transform_indices = @transform_4, window_bounds = array<i64: 1, 512>}, {pipeline_mode = #tpu.pipeline_mode<synchronous>, transform_indices = @transform_5, window_bounds = array<i64: 512, 256>}, {pipeline_mode = #tpu.pipeline_mode<synchronous>, transform_indices = @transform_6, window_bounds = array<i64: 1, 256>}, {pipeline_mode = #tpu.pipeline_mode<synchronous>, transform_indices = @transform_7, window_bounds = array<i64: 1, 256>}, {pipeline_mode = #tpu.pipeline_mode<synchronous>, transform_indices = @transform_8, window_bounds = array<i64: 1, 1>}, {transform_indices = @transform_9, window_bounds = array<i64: 8, 1>}]} {
    %c0_i32 = arith.constant 0 : i32
    %0 = arith.cmpi eq, %arg1, %c0_i32 : i32
    %1 = arith.extui %0 : i1 to i32
    %c0_i32_0 = arith.constant 0 : i32
    %2 = arith.cmpi ne, %1, %c0_i32_0 : i32
    scf.if %2 {
      %cst_9 = arith.constant 0.000000e+00 : f32
      %21 = vector.broadcast %cst_9 : f32 to vector<8x1024xf32>
      %c0_10 = arith.constant 0 : index
      %c0_11 = arith.constant 0 : index
      %22 = vector.load %arg12[%c0_10, %c0_11] : memref<8x1024xf32, #tpu.memory_space<vmem>>, vector<8x1024xf32>
      tpu.vector_store %arg12[%c0_10, %c0_11], %21 {strides = array<i32>} : memref<8x1024xf32, #tpu.memory_space<vmem>>, vector<8x1024xf32>,
    } else {
    }
    %c0 = arith.constant 0 : index
    %c0_1 = arith.constant 0 : index
    %3 = vector.load %arg2[%c0, %c0_1] : memref<8x128xi32, #tpu.memory_space<vmem>>, vector<8x128xi32>
    %c0_2 = arith.constant 0 : index
    %c0_3 = arith.constant 0 : index
    %4 = vector.load %arg3[%c0_2, %c0_3] : memref<8x128xf32, #tpu.memory_space<vmem>>, vector<8x128xf32>
    %5 = tpu.iota {dimensions = array<i32: 2>} : vector<8x128x1024xi32>
    %6 = vector.shape_cast %3 : vector<8x128xi32> to vector<8x128x1xi32>
    %7 = vector.broadcast %6 : vector<8x128x1xi32> to vector<8x128x1024xi32>
    %8 = arith.cmpi eq, %7, %5 : vector<8x128x1024xi32>
    %9 = arith.extui %8 : vector<8x128x1024xi1> to vector<8x128x1024xi32>
    %10 = arith.sitofp %9 : vector<8x128x1024xi32> to vector<8x128x1024xf32>
    %c0_4 = arith.constant 0 : index
    %c0_5 = arith.constant 0 : index
    %11 = vector.load %arg12[%c0_4, %c0_5] : memref<8x1024xf32, #tpu.memory_space<vmem>>, vector<8x1024xf32>
    %12 = vector.shape_cast %4 : vector<8x128xf32> to vector<8x128x1xf32>
    %13 = vector.broadcast %12 : vector<8x128x1xf32> to vector<8x128x1024xf32>
    %14 = arith.mulf %10, %13 : vector<8x128x1024xf32>
    %cst = arith.constant dense<0.000000e+00> : vector<8x1024xf32>
    %15 = vector.multi_reduction <add>, %14, %cst [1] : vector<8x128x1024xf32> to vector<8x1024xf32>
    %16 = arith.addf %11, %15 : vector<8x1024xf32>
    %c0_6 = arith.constant 0 : index
    %c0_7 = arith.constant 0 : index
    %17 = vector.load %arg12[%c0_6, %c0_7] : memref<8x1024xf32, #tpu.memory_space<vmem>>, vector<8x1024xf32>
    tpu.vector_store %arg12[%c0_6, %c0_7], %16 {strides = array<i32>} : memref<8x1024xf32, #tpu.memory_space<vmem>>, vector<8x1024xf32>,
    %c1_i32 = arith.constant 1 : i32
    %18 = arith.cmpi eq, %arg1, %c1_i32 : i32
    %19 = arith.extui %18 : i1 to i32
    %c0_i32_8 = arith.constant 0 : i32
    %20 = arith.cmpi ne, %19, %c0_i32_8 : i32
    scf.if %20 {
      %c0_9 = arith.constant 0 : index
      %c0_10 = arith.constant 0 : index
      %21 = vector.load %arg12[%c0_9, %c0_10] : memref<8x1024xf32, #tpu.memory_space<vmem>>, vector<8x1024xf32>
      %cst_11 = arith.constant dense<0.000000e+00> : vector<8xf32>
      %22 = vector.multi_reduction <add>, %21, %cst_11 [1] : vector<8x1024xf32> to vector<8xf32>
      %23 = vector.shape_cast %22 : vector<8xf32> to vector<8x1xf32>
      %cst_12 = arith.constant 9.99999971E-10 : f32
      %24 = vector.broadcast %cst_12 : f32 to vector<8x1xf32>
      %25 = arith.maximumf %23, %24 : vector<8x1xf32>
      %c0_13 = arith.constant 0 : index
      %c0_14 = arith.constant 0 : index
      %26 = vector.load %arg4[%c0_13, %c0_14] : memref<1024x768xbf16, #tpu.memory_space<vmem>>, vector<1024x768xbf16>
      %27 = arith.extf %26 : vector<1024x768xbf16> to vector<1024x768xf32>
      %cst_15 = arith.constant dense<0.000000e+00> : vector<8x768xf32>
      %28 = tpu.matmul %21, %27, %cst_15 {dimension_numbers = #tpu.dot_dimension_numbers<[1], [0], [0], [1], [0, 0, 1, 1], [], []>} : vector<8x1024xf32>, vector<1024x768xf32>, vector<8x768xf32> -> vector<8x768xf32>
      %29 = vector.broadcast %25 : vector<8x1xf32> to vector<8x768xf32>
      %30 = arith.divf %28, %29 : vector<8x768xf32>
      %31 = arith.truncf %30 : vector<8x768xf32> to vector<8x768xbf16>
      %c0_16 = arith.constant 0 : index
      %c0_17 = arith.constant 0 : index
      %32 = vector.load %arg5[%c0_16, %c0_17] : memref<768x512xbf16, #tpu.memory_space<vmem>>, vector<768x512xbf16>
      %cst_18 = arith.constant dense<0.000000e+00> : vector<8x512xf32>
      %33 = tpu.matmul %31, %32, %cst_18 {dimension_numbers = #tpu.dot_dimension_numbers<[1], [0], [0], [1], [0, 0, 1, 1], [], []>} : vector<8x768xbf16>, vector<768x512xbf16>, vector<8x512xf32> -> vector<8x512xf32>
      %c0_19 = arith.constant 0 : index
      %c0_20 = arith.constant 0 : index
      %34 = vector.load %arg6[%c0_19, %c0_20] : memref<1x512xf32, #tpu.memory_space<vmem>>, vector<1x512xf32>
      %35 = vector.broadcast %34 : vector<1x512xf32> to vector<8x512xf32>
      %36 = arith.addf %33, %35 : vector<8x512xf32>
      %cst_21 = arith.constant 0.000000e+00 : f32
      %37 = vector.broadcast %cst_21 : f32 to vector<8x512xf32>
      %38 = arith.maximumf %36, %37 : vector<8x512xf32>
      %39 = arith.truncf %38 : vector<8x512xf32> to vector<8x512xbf16>
      %c0_22 = arith.constant 0 : index
      %c0_23 = arith.constant 0 : index
      %40 = vector.load %arg7[%c0_22, %c0_23] : memref<512x256xbf16, #tpu.memory_space<vmem>>, vector<512x256xbf16>
      %cst_24 = arith.constant dense<0.000000e+00> : vector<8x256xf32>
      %41 = tpu.matmul %39, %40, %cst_24 {dimension_numbers = #tpu.dot_dimension_numbers<[1], [0], [0], [1], [0, 0, 1, 1], [], []>} : vector<8x512xbf16>, vector<512x256xbf16>, vector<8x256xf32> -> vector<8x256xf32>
      %c0_25 = arith.constant 0 : index
      %c0_26 = arith.constant 0 : index
      %42 = vector.load %arg8[%c0_25, %c0_26] : memref<1x256xf32, #tpu.memory_space<vmem>>, vector<1x256xf32>
      %43 = vector.broadcast %42 : vector<1x256xf32> to vector<8x256xf32>
      %44 = arith.addf %41, %43 : vector<8x256xf32>
      %cst_27 = arith.constant 0.000000e+00 : f32
      %45 = vector.broadcast %cst_27 : f32 to vector<8x256xf32>
      %46 = arith.maximumf %44, %45 : vector<8x256xf32>
      %c0_28 = arith.constant 0 : index
      %c0_29 = arith.constant 0 : index
      %47 = vector.load %arg9[%c0_28, %c0_29] : memref<1x256xf32, #tpu.memory_space<vmem>>, vector<1x256xf32>
      %48 = vector.broadcast %47 : vector<1x256xf32> to vector<8x256xf32>
      %49 = arith.mulf %46, %48 : vector<8x256xf32>
      %cst_30 = arith.constant dense<0.000000e+00> : vector<8xf32>
      %50 = vector.multi_reduction <add>, %49, %cst_30 [1] : vector<8x256xf32> to vector<8xf32>
      %51 = vector.shape_cast %50 : vector<8xf32> to vector<8x1xf32>
      %c0_31 = arith.constant 0 : index
      %c0_32 = arith.constant 0 : index
      %52 = vector.load %arg10[%c0_31, %c0_32] : memref<1x1xf32, #tpu.memory_space<vmem>>, vector<1x1xf32>
      %53 = vector.broadcast %52 : vector<1x1xf32> to vector<8x1xf32>
      %54 = arith.addf %51, %53 : vector<8x1xf32>
      %c0_33 = arith.constant 0 : index
      %c0_34 = arith.constant 0 : index
      %55 = vector.load %arg11[%c0_33, %c0_34] : memref<8x1xf32, #tpu.memory_space<vmem>>, vector<8x1xf32>
      tpu.vector_store %arg11[%c0_33, %c0_34], %54 {strides = array<i32>} : memref<8x1xf32, #tpu.memory_space<vmem>>, vector<8x1xf32>,
    } else {
    }
    return
  }
  func.func @transform_0(%arg0: i32, %arg1: i32) -> (i32, i32) {
    %c0_i32 = arith.constant 0 : i32
    return %arg0, %arg1 : i32, i32
  }
  func.func @transform_1(%arg0: i32, %arg1: i32) -> (i32, i32) {
    %c0_i32 = arith.constant 0 : i32
    return %arg0, %arg1 : i32, i32
  }
  func.func @transform_2(%arg0: i32, %arg1: i32) -> (i32, i32) {
    %c0_i32 = arith.constant 0 : i32
    %c0_i32_0 = arith.constant 0 : i32
    %c0_i32_1 = arith.constant 0 : i32
    return %c0_i32, %c0_i32_0 : i32, i32
  }
  func.func @transform_3(%arg0: i32, %arg1: i32) -> (i32, i32) {
    %c0_i32 = arith.constant 0 : i32
    %c0_i32_0 = arith.constant 0 : i32
    %c0_i32_1 = arith.constant 0 : i32
    return %c0_i32, %c0_i32_0 : i32, i32
  }
  func.func @transform_4(%arg0: i32, %arg1: i32) -> (i32, i32) {
    %c0_i32 = arith.constant 0 : i32
    %c0_i32_0 = arith.constant 0 : i32
    %c0_i32_1 = arith.constant 0 : i32
    return %c0_i32, %c0_i32_0 : i32, i32
  }
  func.func @transform_5(%arg0: i32, %arg1: i32) -> (i32, i32) {
    %c0_i32 = arith.constant 0 : i32
    %c0_i32_0 = arith.constant 0 : i32
    %c0_i32_1 = arith.constant 0 : i32
    return %c0_i32, %c0_i32_0 : i32, i32
  }
  func.func @transform_6(%arg0: i32, %arg1: i32) -> (i32, i32) {
    %c0_i32 = arith.constant 0 : i32
    %c0_i32_0 = arith.constant 0 : i32
    %c0_i32_1 = arith.constant 0 : i32
    return %c0_i32, %c0_i32_0 : i32, i32
  }
  func.func @transform_7(%arg0: i32, %arg1: i32) -> (i32, i32) {
    %c0_i32 = arith.constant 0 : i32
    %c0_i32_0 = arith.constant 0 : i32
    %c0_i32_1 = arith.constant 0 : i32
    return %c0_i32, %c0_i32_0 : i32, i32
  }
  func.func @transform_8(%arg0: i32, %arg1: i32) -> (i32, i32) {
    %c0_i32 = arith.constant 0 : i32
    %c0_i32_0 = arith.constant 0 : i32
    %c0_i32_1 = arith.constant 0 : i32
    return %c0_i32, %c0_i32_0 : i32, i32
  }
  func.func @transform_9(%arg0: i32, %arg1: i32) -> (i32, i32) {
    %c0_i32 = arith.constant 0 : i32
    %c0_i32_0 = arith.constant 0 : i32
    return %arg0, %c0_i32 : i32, i32
  }
}

</mosaic_0001>

<llo_original>
// kernel: tpu_custom_call.1
$region0: #{tpu_custom_call.1}
  #allocation0 [shape = 'u32[]', space=smem, size = 0x4, offset = 0x4, fixed_abs, tag = 'smem constant byte address 0x4 - core index']
  #allocation1 [shape = 'u32[144,128]{1,0:T(1,128)}', space=vmem, size = 0x12000, scoped, tag = 'internal scratch']
  #allocation2 [shape = 'f32[8,1024]{1,0:T(8,128)}', space=vmem, size = 0x8000, scoped, tag = 'scratch operand']
  #allocation3 [shape = 'f32[1,1]{1,0:T(1,128)S(1)}', space=vmem, size = 0x200, scoped, tag = 'scoped memory for tpu_custom_call.1']
  %s0 = inlined_call_operand.hbm [shape: s32[16,256], index: 0, kind: input, shape index: {}]
  %s1 = inlined_call_operand.hbm [shape: f32[16,256], index: 1, kind: input, shape index: {}]
  %s2 = inlined_call_operand.hbm [shape: bf16[1024,768], index: 2, kind: input, shape index: {}]
  %s3 = inlined_call_operand.hbm [shape: bf16[768,512], index: 3, kind: input, shape index: {}]
  %s4 = inlined_call_operand.hbm [shape: f32[1,512], index: 4, kind: input, shape index: {}]
  %s5 = inlined_call_operand.hbm [shape: bf16[512,256], index: 5, kind: input, shape index: {}]
  %s6 = inlined_call_operand.hbm [shape: f32[1,256], index: 6, kind: input, shape index: {}]
  %s7 = inlined_call_operand.hbm [shape: f32[1,256], index: 7, kind: input, shape index: {}]
  %s8 = inlined_call_operand.<no memory space> [shape: f32[1,1], index: 8, kind: input, shape index: {}]
  %s9 = inlined_call_operand.vmem [shape: f32[16,1], index: 9, kind: output, shape index: {}]
  %s10 = sld [smem:[#allocation0]]
  $region109: #{tpu_custom_call.1} parent=0
    _
  %s12 = ssub.s32 1, %s10
  %s13 = scalar_select 0, %s12, %s10
  %v14 = vstv %s8
  %15 = vst [vmem:[#allocation3] sm:$0x1] %v14
  $region1: #{tpu_custom_call.1} parent=0
    #allocation4 [shape = 'u8[8192]{0}', space=vmem, size = 0x2000, scoped, tag = 'input window, operand 0']
    #allocation5 [shape = 's32[2]{0}', space=sflag, size = 0x8, scoped, tag = 'scoped memory for tpu_custom_call.1']
    #allocation6 [shape = 'u8[8192]{0}', space=vmem, size = 0x2000, scoped, tag = 'input window, operand 1']
    #allocation7 [shape = 's32[2]{0}', space=sflag, size = 0x8, scoped, tag = 'scoped memory for tpu_custom_call.1']
    #allocation8 [shape = 'u8[1572864]{0}', space=vmem, size = 0x180000, scoped, tag = 'input window, operand 2, single buffered']
    #allocation9 [shape = 'u8[786432]{0}', space=vmem, size = 0xc0000, scoped, tag = 'input window, operand 3, single buffered']
    #allocation10 [shape = 's32[1]{0}', space=sflag, size = 0x4, scoped, tag = 'scoped memory for tpu_custom_call.1']
    #allocation11 [shape = 'u8[2048]{0}', space=vmem, size = 0x800, scoped, tag = 'input window, operand 4, single buffered']
    #allocation12 [shape = 'u8[262144]{0}', space=vmem, size = 0x40000, scoped, tag = 'input window, operand 5, single buffered']
    #allocation13 [shape = 's32[1]{0}', space=sflag, size = 0x4, scoped, tag = 'scoped memory for tpu_custom_call.1']
    #allocation14 [shape = 'u8[1024]{0}', space=vmem, size = 0x400, scoped, tag = 'input window, operand 6, single buffered']
    #allocation15 [shape = 'u8[1024]{0}', space=vmem, size = 0x400, scoped, tag = 'input window, operand 7, single buffered']
    #allocation16 [shape = 's32[1]{0}', space=sflag, size = 0x4, scoped, tag = 'scoped memory for tpu_custom_call.1']
    %16 = vsyncpa [#allocation5], 0
    %s17 = scalar_lea.sflag [#allocation5], 1
    %18 = vsyncpa %s17, 0
    %19 = vsyncpa [#allocation7], 0
    %s20 = scalar_lea.sflag [#allocation7], 1
    %21 = vsyncpa %s20, 0
    %22 = vsyncpa [#allocation10], 0
    %23 = vsyncpa [#allocation13], 0
    %24 = vsyncpa [#allocation16], 0
    loop: start=0, step=1, limit=6
    $region2: #{tpu_custom_call.1} parent=1 // loop_pre_header
      _
    $region3: #{tpu_custom_call.1} parent=1 // loop_header
      %s26 = sphi 0, %s30
      %p27 = scmp.ge.s32.totalorder %s26, 6
      %s33 = sphi 0, %s45
      %s34 = sphi 0, %s41
      %s35 = sphi 0, %s33
      %s36 = sphi 0, %s34
      %s37 = sphi 0, %s35
      %s38 = sphi 0, %s36
      %s50 = sphi 0, %s52
      %s53 = sphi 0, %s50
      %s54 = sphi 0, %s53
      %s70 = sphi 0, %s54
      %s78 = sphi 0, %s80
      %s81 = sphi 0, %s78
      %s82 = sphi 0, %s81
      %s98 = sphi 0, %s82
      %s102 = sphi 0, %s102
      %s104 = sphi 0, %s102
      %s105 = sphi 0, %s104
      %s119 = sphi 0, %s105
      %s123 = sphi 0, %s123
      %s125 = sphi 0, %s123
      %s126 = sphi 0, %s125
      %s140 = sphi 0, %s126
      %s144 = sphi 0, %s144
      %s146 = sphi 0, %s144
      %s147 = sphi 0, %s146
      %s161 = sphi 0, %s147
      %s165 = sphi 0, %s165
      %s167 = sphi 0, %s165
      %s168 = sphi 0, %s167
      %s182 = sphi 0, %s168
      %s186 = sphi 0, %s186
      %s188 = sphi 0, %s186
      %s189 = sphi 0, %s188
      %s203 = sphi 0, %s189
      %s207 = sphi 0, %s207
      %s209 = sphi 0, %s207
      %s210 = sphi 0, %s209
      %s224 = sphi 0, %s210
      %s228 = sphi 0, %s228
      %s230 = sphi 0, %s228
      %s231 = sphi 0, %s230
      %s245 = sphi 0, %s231
      %s251 = sphi 0, %s253
      %s254 = sphi 0, %s251
      %s255 = sphi 0, %s254
      %s271 = sphi 0, %s255
    $region4: #{tpu_custom_call.1} parent=1 // loop_header_branch
      %29 = sbr.rel (%p27) target = $region8
    $region5: #{tpu_custom_call.1} parent=1 // loop_body
      %s31 = ssub.s32 %s26, 1
      %s32 = ssub.s32 %s26, 2
      %s39 = sadd.s32 1, %s34
      %p40 = scmp.ge.s32.totalorder %s39, 2
      %s41 = scalar_select %p40, 0, %s39
      %s42 = sadd.s32 1, %s33
      %s43 = scalar_select %p40, %s42, %s33
      %p44 = scmp.ge.s32.totalorder %s43, 2
      %s45 = scalar_select %p44, 0, %s43
      %s46 = ssub.s32 %s33, %s45
      %s47 = ssub.s32 %s34, %s41
      %s48 = sor.u32 %s46, %s47
      %p49 = scmp.eq.s32.totalorder %s48, 0
      %s51 = sadd.s32 %s50, 1
      %s52 = scalar_select %p49, %s50, %s51
      %p55 = pneg %p49
      %p56 = scmp.eq.s32.totalorder %s26, 3
      %p57 = por %p55, %p56
      %p58 = scmp.ne.s32.totalorder %s50, %s53
      %p59 = scmp.eq.s32.totalorder %s26, 0
      %p60 = por %p58, %p59
      %p61 = scmp.ne.s32.totalorder %s50, %s53
      %p62 = scmp.eq.s32.totalorder %s31, 3
      %p63 = por %p61, %p62
      %p64 = scmp.ne.s32.totalorder %s53, %s54
      %p65 = scmp.eq.s32.totalorder %s31, 0
      %p66 = por %p64, %p65
      %p67 = scmp.ne.s32.totalorder %s53, %s54
      %p68 = scmp.eq.s32.totalorder %s32, 3
      %p69 = por %p67, %p68
      %p71 = scmp.ne.s32.totalorder %s54, %s70
      %p72 = scmp.eq.s32.totalorder %s32, 0
      %p73 = por %p71, %p72
      %s74 = ssub.s32 %s33, %s45
      %s75 = ssub.s32 %s34, %s41
      %s76 = sor.u32 %s74, %s75
      %p77 = scmp.eq.s32.totalorder %s76, 0
      %s79 = sadd.s32 %s78, 1
      %s80 = scalar_select %p77, %s78, %s79
      %p83 = pneg %p77
      %p84 = scmp.eq.s32.totalorder %s26, 3
      %p85 = por %p83, %p84
      %p86 = scmp.ne.s32.totalorder %s78, %s81
      %p87 = scmp.eq.s32.totalorder %s26, 0
      %p88 = por %p86, %p87
      %p89 = scmp.ne.s32.totalorder %s78, %s81
      %p90 = scmp.eq.s32.totalorder %s31, 3
      %p91 = por %p89, %p90
      %p92 = scmp.ne.s32.totalorder %s81, %s82
      %p93 = scmp.eq.s32.totalorder %s31, 0
      %p94 = por %p92, %p93
      %p95 = scmp.ne.s32.totalorder %s81, %s82
      %p96 = scmp.eq.s32.totalorder %s32, 3
      %p97 = por %p95, %p96
      %p99 = scmp.ne.s32.totalorder %s82, %s98
      %p100 = scmp.eq.s32.totalorder %s32, 0
      %p101 = por %p99, %p100
      %s103 = sadd.s32 %s102, 1
      %p106 = scmp.eq.s32.totalorder %s26, 3
      %p107 = scmp.ne.s32.totalorder %s102, %s104
      %p108 = scmp.eq.s32.totalorder %s26, 0
      %p109 = por %p107, %p108
      %p110 = scmp.ne.s32.totalorder %s102, %s104
      %p111 = scmp.eq.s32.totalorder %s31, 3
      %p112 = por %p110, %p111
      %p113 = scmp.ne.s32.totalorder %s104, %s105
      %p114 = scmp.eq.s32.totalorder %s31, 0
      %p115 = por %p113, %p114
      %p116 = scmp.ne.s32.totalorder %s104, %s105
      %p117 = scmp.eq.s32.totalorder %s32, 3
      %p118 = por %p116, %p117
      %p120 = scmp.ne.s32.totalorder %s105, %s119
      %p121 = scmp.eq.s32.totalorder %s32, 0
      %p122 = por %p120, %p121
      %s124 = sadd.s32 %s123, 1
      %p127 = scmp.eq.s32.totalorder %s26, 3
      %p128 = scmp.ne.s32.totalorder %s123, %s125
      %p129 = scmp.eq.s32.totalorder %s26, 0
      %p130 = por %p128, %p129
      %p131 = scmp.ne.s32.totalorder %s123, %s125
      %p132 = scmp.eq.s32.totalorder %s31, 3
      %p133 = por %p131, %p132
      %p134 = scmp.ne.s32.totalorder %s125, %s126
      %p135 = scmp.eq.s32.totalorder %s31, 0
      %p136 = por %p134, %p135
      %p137 = scmp.ne.s32.totalorder %s125, %s126
      %p138 = scmp.eq.s32.totalorder %s32, 3
      %p139 = por %p137, %p138
      %p141 = scmp.ne.s32.totalorder %s126, %s140
      %p142 = scmp.eq.s32.totalorder %s32, 0
      %p143 = por %p141, %p142
      %s145 = sadd.s32 %s144, 1
      %p148 = scmp.eq.s32.totalorder %s26, 3
      %p149 = scmp.ne.s32.totalorder %s144, %s146
      %p150 = scmp.eq.s32.totalorder %s26, 0
      %p151 = por %p149, %p150
      %p152 = scmp.ne.s32.totalorder %s144, %s146
      %p153 = scmp.eq.s32.totalorder %s31, 3
      %p154 = por %p152, %p153
      %p155 = scmp.ne.s32.totalorder %s146, %s147
      %p156 = scmp.eq.s32.totalorder %s31, 0
      %p157 = por %p155, %p156
      %p158 = scmp.ne.s32.totalorder %s146, %s147
      %p159 = scmp.eq.s32.totalorder %s32, 3
      %p160 = por %p158, %p159
      %p162 = scmp.ne.s32.totalorder %s147, %s161
      %p163 = scmp.eq.s32.totalorder %s32, 0
      %p164 = por %p162, %p163
      %s166 = sadd.s32 %s165, 1
      %p169 = scmp.eq.s32.totalorder %s26, 3
      %p170 = scmp.ne.s32.totalorder %s165, %s167
      %p171 = scmp.eq.s32.totalorder %s26, 0
      %p172 = por %p170, %p171
      %p173 = scmp.ne.s32.totalorder %s165, %s167
      %p174 = scmp.eq.s32.totalorder %s31, 3
      %p175 = por %p173, %p174
      %p176 = scmp.ne.s32.totalorder %s167, %s168
      %p177 = scmp.eq.s32.totalorder %s31, 0
      %p178 = por %p176, %p177
      %p179 = scmp.ne.s32.totalorder %s167, %s168
      %p180 = scmp.eq.s32.totalorder %s32, 3
      %p181 = por %p179, %p180
      %p183 = scmp.ne.s32.totalorder %s168, %s182
      %p184 = scmp.eq.s32.totalorder %s32, 0
      %p185 = por %p183, %p184
      %s187 = sadd.s32 %s186, 1
      %p190 = scmp.eq.s32.totalorder %s26, 3
      %p191 = scmp.ne.s32.totalorder %s186, %s188
      %p192 = scmp.eq.s32.totalorder %s26, 0
      %p193 = por %p191, %p192
      %p194 = scmp.ne.s32.totalorder %s186, %s188
      %p195 = scmp.eq.s32.totalorder %s31, 3
      %p196 = por %p194, %p195
      %p197 = scmp.ne.s32.totalorder %s188, %s189
      %p198 = scmp.eq.s32.totalorder %s31, 0
      %p199 = por %p197, %p198
      %p200 = scmp.ne.s32.totalorder %s188, %s189
      %p201 = scmp.eq.s32.totalorder %s32, 3
      %p202 = por %p200, %p201
      %p204 = scmp.ne.s32.totalorder %s189, %s203
      %p205 = scmp.eq.s32.totalorder %s32, 0
      %p206 = por %p204, %p205
      %s208 = sadd.s32 %s207, 1
      %p211 = scmp.eq.s32.totalorder %s26, 3
      %p212 = scmp.ne.s32.totalorder %s207, %s209
      %p213 = scmp.eq.s32.totalorder %s26, 0
      %p214 = por %p212, %p213
      %p215 = scmp.ne.s32.totalorder %s207, %s209
      %p216 = scmp.eq.s32.totalorder %s31, 3
      %p217 = por %p215, %p216
      %p218 = scmp.ne.s32.totalorder %s209, %s210
      %p219 = scmp.eq.s32.totalorder %s31, 0
      %p220 = por %p218, %p219
      %p221 = scmp.ne.s32.totalorder %s209, %s210
      %p222 = scmp.eq.s32.totalorder %s32, 3
      %p223 = por %p221, %p222
      %p225 = scmp.ne.s32.totalorder %s210, %s224
      %p226 = scmp.eq.s32.totalorder %s32, 0
      %p227 = por %p225, %p226
      %s229 = sadd.s32 %s228, 1
      %p232 = scmp.eq.s32.totalorder %s26, 3
      %p233 = scmp.ne.s32.totalorder %s228, %s230
      %p234 = scmp.eq.s32.totalorder %s26, 0
      %p235 = por %p233, %p234
      %p236 = scmp.ne.s32.totalorder %s228, %s230
      %p237 = scmp.eq.s32.totalorder %s31, 3
      %p238 = por %p236, %p237
      %p239 = scmp.ne.s32.totalorder %s230, %s231
      %p240 = scmp.eq.s32.totalorder %s31, 0
      %p241 = por %p239, %p240
      %p242 = scmp.ne.s32.totalorder %s230, %s231
      %p243 = scmp.eq.s32.totalorder %s32, 3
      %p244 = por %p242, %p243
      %p246 = scmp.ne.s32.totalorder %s231, %s245
      %p247 = scmp.eq.s32.totalorder %s32, 0
      %p248 = por %p246, %p247
      %s249 = ssub.s32 %s33, %s45
      %p250 = scmp.eq.s32.totalorder %s249, 0
      %s252 = sadd.s32 %s251, 1
      %s253 = scalar_select %p250, %s251, %s252
      %p256 = pneg %p250
      %p257 = scmp.eq.s32.totalorder %s26, 3
      %p258 = por %p256, %p257
      %p259 = scmp.ne.s32.totalorder %s251, %s254
      %p260 = scmp.eq.s32.totalorder %s26, 0
      %p261 = por %p259, %p260
      %p262 = scmp.ne.s32.totalorder %s251, %s254
      %p263 = scmp.eq.s32.totalorder %s31, 3
      %p264 = por %p262, %p263
      %p265 = scmp.ne.s32.totalorder %s254, %s255
      %p266 = scmp.eq.s32.totalorder %s31, 0
      %p267 = por %p265, %p266
      %p268 = scmp.ne.s32.totalorder %s254, %s255
      %p269 = scmp.eq.s32.totalorder %s32, 3
      %p270 = por %p268, %p269
      %p272 = scmp.ne.s32.totalorder %s255, %s271
      %p273 = scmp.eq.s32.totalorder %s32, 0
      %p274 = por %p272, %p273
      %p275 = scmp.le.s32.totalorder 1, %s26
      %p276 = scmp.lt.s32.totalorder %s26, 5
      %p277 = pnand %p275, %p276
      %p278 = pneg %p277
      // Predicated region
      $region9: #{tpu_custom_call.1} parent=5 // pred_check
        _
      $region10: #{tpu_custom_call.1} parent=5 // pred_check_branch
        %280 = sbr.rel (%p277) target = $region12
      $region11: #{tpu_custom_call.1} parent=5 // pred_region
        %s281 = ssub.s32 %s26, 1
        // Predicated region
        $region13: #{tpu_custom_call.1} parent=11 // pred_check
          %p282 = pneg %p115
        $region14: #{tpu_custom_call.1} parent=11 // pred_check_branch
          %284 = sbr.rel (%p282) target = $region16
        $region15: #{tpu_custom_call.1} parent=11 // pred_region
          %s286 = ssub.s32 49152, 49152
          %287 = vsyncadd [#allocation7], %s286
          %s288 = sshll.u32 [#allocation8], 4
          %s289 = int_to_ptr.vmem [resolvable:$true] %s288
          %294 = dma.hbm_to_vmem [thread:$0]  %s2, 49152, %s289, [#allocation7], 384, 384, 24
        $region16: #{tpu_custom_call.1} parent=11 // pred_fallthru
          _
        // Predicated region
        $region17: #{tpu_custom_call.1} parent=11 // pred_check
          %p295 = pneg %p136
        $region18: #{tpu_custom_call.1} parent=11 // pred_check_branch
          %297 = sbr.rel (%p295) target = $region20
        $region19: #{tpu_custom_call.1} parent=11 // pred_region
          %s299 = ssub.s32 24576, 24576
          %300 = vsyncadd [#allocation10], %s299
          %s301 = sshll.u32 [#allocation9], 4
          %s302 = int_to_ptr.vmem [resolvable:$true] %s301
          %307 = dma.hbm_to_vmem [thread:$0]  %s3, 24576, %s302, [#allocation10], 256, 256, 16
        $region20: #{tpu_custom_call.1} parent=11 // pred_fallthru
          _
        // Predicated region
        $region21: #{tpu_custom_call.1} parent=11 // pred_check
          %p308 = pneg %p157
        $region22: #{tpu_custom_call.1} parent=11 // pred_check_branch
          %310 = sbr.rel (%p308) target = $region24
        $region23: #{tpu_custom_call.1} parent=11 // pred_region
          %s312 = ssub.s32 64, 64
          %313 = vsyncadd [#allocation10], %s312
          %s315 = sshll.u32 [#allocation11], 4
          %s316 = int_to_ptr.vmem [resolvable:$true] %s315
          %318 = dma.hbm_to_vmem [thread:$0]  %s4, 64, %s316, [#allocation10]
        $region24: #{tpu_custom_call.1} parent=11 // pred_fallthru
          _
        // Predicated region
        $region25: #{tpu_custom_call.1} parent=11 // pred_check
          %p319 = pneg %p178
        $region26: #{tpu_custom_call.1} parent=11 // pred_check_branch
          %321 = sbr.rel (%p319) target = $region28
        $region27: #{tpu_custom_call.1} parent=11 // pred_region
          %s323 = ssub.s32 8192, 8192
          %324 = vsyncadd [#allocation13], %s323
          %s325 = sshll.u32 [#allocation12], 4
          %s326 = int_to_ptr.vmem [resolvable:$true] %s325
          %331 = dma.hbm_to_vmem [thread:$0]  %s5, 8192, %s326, [#allocation13], 128, 128, 8
        $region28: #{tpu_custom_call.1} parent=11 // pred_fallthru
          _
        // Predicated region
        $region29: #{tpu_custom_call.1} parent=11 // pred_check
          %p332 = pneg %p199
        $region30: #{tpu_custom_call.1} parent=11 // pred_check_branch
          %334 = sbr.rel (%p332) target = $region32
        $region31: #{tpu_custom_call.1} parent=11 // pred_region
          %s336 = ssub.s32 32, 32
          %337 = vsyncadd [#allocation13], %s336
          %s339 = sshll.u32 [#allocation14], 4
          %s340 = int_to_ptr.vmem [resolvable:$true] %s339
          %342 = dma.hbm_to_vmem [thread:$0]  %s6, 32, %s340, [#allocation13]
        $region32: #{tpu_custom_call.1} parent=11 // pred_fallthru
          _
        // Predicated region
        $region33: #{tpu_custom_call.1} parent=11 // pred_check
          %p343 = pneg %p220
        $region34: #{tpu_custom_call.1} parent=11 // pred_check_branch
          %345 = sbr.rel (%p343) target = $region36
        $region35: #{tpu_custom_call.1} parent=11 // pred_region
          %s347 = ssub.s32 32, 32
          %348 = vsyncadd [#allocation16], %s347
          %s350 = sshll.u32 [#allocation15], 4
          %s351 = int_to_ptr.vmem [resolvable:$true] %s350
          %353 = dma.hbm_to_vmem [thread:$0]  %s7, 32, %s351, [#allocation16]
        $region36: #{tpu_custom_call.1} parent=11 // pred_fallthru
          _
        // Predicated region
        $region37: #{tpu_custom_call.1} parent=11 // pred_check
          %p354 = pneg %p241
        $region38: #{tpu_custom_call.1} parent=11 // pred_check_branch
          %356 = sbr.rel (%p354) target = $region40
        $region39: #{tpu_custom_call.1} parent=11 // pred_region
          _
        $region40: #{tpu_custom_call.1} parent=11 // pred_fallthru
          _
      $region12: #{tpu_custom_call.1} parent=5 // pred_fallthru
        _
      %p357 = scmp.lt.s32.totalorder %s26, 4
      // Predicated region
      $region41: #{tpu_custom_call.1} parent=5 // pred_check
        %p358 = pneg %p357
      $region42: #{tpu_custom_call.1} parent=5 // pred_check_branch
        %360 = sbr.rel (%p358) target = $region44
      $region43: #{tpu_custom_call.1} parent=5 // pred_region
        // Predicated region
        $region45: #{tpu_custom_call.1} parent=43 // pred_check
          %p361 = pneg %p60
        $region46: #{tpu_custom_call.1} parent=43 // pred_check_branch
          %363 = sbr.rel (%p361) target = $region48
        $region47: #{tpu_custom_call.1} parent=43 // pred_region
          %s364 = sand.u32 %s50, 1
          %s365 = scalar_lea.sflag [#allocation5], %s364
          %s366 = sand.u32 %s50, 1
          %s367 = smul.addr %s366, 8
          %s368 = scalar_lea.vmem [#allocation4], %s367
          %s370 = ssub.s32 128, 128
          %371 = vsyncadd %s365, %s370
          %s372 = smul.addr %s33, 2
          %s373 = sadd.s32 %s34, %s372
          %s374 = smul.addr %s373, 128
          %s375 = scalar_lea.hbm %s0, %s374
          %s377 = sshll.u32 %s368, 4
          %s378 = int_to_ptr.vmem [resolvable:$true] %s377
          %380 = dma.hbm_to_vmem [thread:$0]  %s375, 128, %s378, %s365
        $region48: #{tpu_custom_call.1} parent=43 // pred_fallthru
          _
        // Predicated region
        $region49: #{tpu_custom_call.1} parent=43 // pred_check
          %p381 = pneg %p88
        $region50: #{tpu_custom_call.1} parent=43 // pred_check_branch
          %383 = sbr.rel (%p381) target = $region52
        $region51: #{tpu_custom_call.1} parent=43 // pred_region
          %s384 = sand.u32 %s26, 1
          %s385 = scalar_lea.sflag [#allocation7], %s384
          %s386 = sand.u32 %s78, 1
          %s387 = smul.addr %s386, 8
          %s388 = scalar_lea.vmem [#allocation6], %s387
          %s390 = ssub.s32 128, 128
          %391 = vsyncadd %s385, %s390
          %s392 = smul.addr %s33, 2
          %s393 = sadd.s32 %s34, %s392
          %s394 = smul.addr %s393, 128
          %s395 = scalar_lea.hbm %s1, %s394
          %s397 = sshll.u32 %s388, 4
          %s398 = int_to_ptr.vmem [resolvable:$true] %s397
          %400 = dma.hbm_to_vmem [thread:$0]  %s395, 128, %s398, %s385
        $region52: #{tpu_custom_call.1} parent=43 // pred_fallthru
          _
      $region44: #{tpu_custom_call.1} parent=5 // pred_fallthru
        _
      %p401 = scmp.le.s32.totalorder 1, %s26
      %p402 = scmp.lt.s32.totalorder %s26, 5
      %p403 = pnand %p401, %p402
      %p404 = pneg %p403
      // Predicated region
      $region53: #{tpu_custom_call.1} parent=5 // pred_check
        _
      $region54: #{tpu_custom_call.1} parent=5 // pred_check_branch
        %406 = sbr.rel (%p403) target = $region56
      $region55: #{tpu_custom_call.1} parent=5 // pred_region
        %s407 = ssub.s32 %s26, 1
        %s408 = sand.u32 %s53, 1
        %s409 = scalar_lea.sflag [#allocation5], %s408
        %s410 = sand.u32 %s53, 1
        %s411 = smul.addr %s410, 8
        %s412 = scalar_lea.vmem [#allocation4], %s411
        // Predicated region
        $region57: #{tpu_custom_call.1} parent=55 // pred_check
          %p413 = pneg %p66
        $region58: #{tpu_custom_call.1} parent=55 // pred_check_branch
          %415 = sbr.rel (%p413) target = $region60
        $region59: #{tpu_custom_call.1} parent=55 // pred_region
          %416 = dma.done %s409, 128
        $region60: #{tpu_custom_call.1} parent=55 // pred_fallthru
          _
        %s417 = sand.u32 %s31, 1
        %s418 = scalar_lea.sflag [#allocation7], %s417
        %s419 = sand.u32 %s81, 1
        %s420 = smul.addr %s419, 8
        %s421 = scalar_lea.vmem [#allocation6], %s420
        // Predicated region
        $region61: #{tpu_custom_call.1} parent=55 // pred_check
          %p422 = pneg %p94
        $region62: #{tpu_custom_call.1} parent=55 // pred_check_branch
          %424 = sbr.rel (%p422) target = $region64
        $region63: #{tpu_custom_call.1} parent=55 // pred_region
          %425 = dma.done %s418, 128
        $region64: #{tpu_custom_call.1} parent=55 // pred_fallthru
          _
        // Predicated region
        $region65: #{tpu_custom_call.1} parent=55 // pred_check
          %p426 = pneg %p115
        $region66: #{tpu_custom_call.1} parent=55 // pred_check_branch
          %428 = sbr.rel (%p426) target = $region68
        $region67: #{tpu_custom_call.1} parent=55 // pred_region
          %429 = dma.done [#allocation7], 49152
        $region68: #{tpu_custom_call.1} parent=55 // pred_fallthru
          _
        // Predicated region
        $region69: #{tpu_custom_call.1} parent=55 // pred_check
          %p430 = pneg %p136
        $region70: #{tpu_custom_call.1} parent=55 // pred_check_branch
          %432 = sbr.rel (%p430) target = $region72
        $region71: #{tpu_custom_call.1} parent=55 // pred_region
          %433 = dma.done [#allocation10], 24576
        $region72: #{tpu_custom_call.1} parent=55 // pred_fallthru
          _
        // Predicated region
        $region73: #{tpu_custom_call.1} parent=55 // pred_check
          %p434 = pneg %p157
        $region74: #{tpu_custom_call.1} parent=55 // pred_check_branch
          %436 = sbr.rel (%p434) target = $region76
        $region75: #{tpu_custom_call.1} parent=55 // pred_region
          %437 = dma.done [#allocation10], 64
        $region76: #{tpu_custom_call.1} parent=55 // pred_fallthru
          _
        // Predicated region
        $region77: #{tpu_custom_call.1} parent=55 // pred_check
          %p438 = pneg %p178
        $region78: #{tpu_custom_call.1} parent=55 // pred_check_branch
          %440 = sbr.rel (%p438) target = $region80
        $region79: #{tpu_custom_call.1} parent=55 // pred_region
          %441 = dma.done [#allocation13], 8192
        $region80: #{tpu_custom_call.1} parent=55 // pred_fallthru
          _
        // Predicated region
        $region81: #{tpu_custom_call.1} parent=55 // pred_check
          %p442 = pneg %p199
        $region82: #{tpu_custom_call.1} parent=55 // pred_check_branch
          %444 = sbr.rel (%p442) target = $region84
        $region83: #{tpu_custom_call.1} parent=55 // pred_region
          %445 = dma.done [#allocation13], 32
        $region84: #{tpu_custom_call.1} parent=55 // pred_fallthru
          _
        // Predicated region
        $region85: #{tpu_custom_call.1} parent=55 // pred_check
          %p446 = pneg %p220
        $region86: #{tpu_custom_call.1} parent=55 // pred_check_branch
          %448 = sbr.rel (%p446) target = $region88
        $region87: #{tpu_custom_call.1} parent=55 // pred_region
          %449 = dma.done [#allocation16], 32
        $region88: #{tpu_custom_call.1} parent=55 // pred_fallthru
          _
        %s450 = sand.u32 %s53, 1
        %s451 = scalar_lea.sflag [#allocation5], %s450
        %s452 = sand.u32 %s53, 1
        %s453 = smul.addr %s452, 8
        %s454 = scalar_lea.vmem [#allocation4], %s453
        %p455 = pneg %p66
        %p456 = pneg %p63
        %s457 = sand.u32 %s31, 1
        %s458 = scalar_lea.sflag [#allocation7], %s457
        %s459 = sand.u32 %s81, 1
        %s460 = smul.addr %s459, 8
        %s461 = scalar_lea.vmem [#allocation6], %s460
        %p462 = pneg %p94
        %p463 = pneg %p91
        %p464 = pneg %p115
        %p465 = pneg %p112
        %p466 = pneg %p136
        %p467 = pneg %p133
        %p468 = pneg %p157
        %p469 = pneg %p154
        %p470 = pneg %p178
        %p471 = pneg %p175
        %p472 = pneg %p199
        %p473 = pneg %p196
        %p474 = pneg %p220
        %p475 = pneg %p217
        %p476 = pneg %p241
        %p477 = pneg %p238
        %p478 = pneg %p267
        %p479 = pneg %p264
        %p480 = scmp.lt.s32.totalorder %s35, 1
        %s481 = scalar_select %p480, %s35, 1
        %s482 = smul.addr %s481, 8
        %s483 = scalar_lea.vmem %s9, %s482
        %p484 = scmp.lt.s32.totalorder %s35, 1
        %s485 = scalar_select %p484, %s35, 1
        %s486 = smul.addr %s485, 8
        %s487 = scalar_lea.vmem %s9, %s486
        %p488 = scmp.eq.s32.totalorder %s36, 0
        // Predicated region
        $region89: #{tpu_custom_call.1} parent=55 // pred_check
          %p489 = pneg %p488
        $region90: #{tpu_custom_call.1} parent=55 // pred_check_branch
          %491 = sbr.rel (%p489) target = $region92
        $region91: #{tpu_custom_call.1} parent=55 // pred_region
          %492 = vst [vmem:[#allocation2] sm:$0xff] 0.0
          %493 = vst [vmem:[#allocation2 + $0x8] sm:$0xff] 0.0
          %494 = vst [vmem:[#allocation2 + $0x10] sm:$0xff] 0.0
          %495 = vst [vmem:[#allocation2 + $0x18] sm:$0xff] 0.0
          %496 = vst [vmem:[#allocation2 + $0x20] sm:$0xff] 0.0
          %497 = vst [vmem:[#allocation2 + $0x28] sm:$0xff] 0.0
          %498 = vst [vmem:[#allocation2 + $0x30] sm:$0xff] 0.0
          %499 = vst [vmem:[#allocation2 + $0x38] sm:$0xff] 0.0
        $region92: #{tpu_custom_call.1} parent=55 // pred_fallthru
          _
        %v500 = vld [vmem:[%s412] sm:$0xff]
        %v501 = vld [vmem:[%s421] sm:$0xff]
        %v502 = vlaneseq
        %v503 = vand.u32 %v502, 127
        %v504 = vadd.s32 %v503, 128
        %v505 = vadd.s32 %v503, 256
        %v506 = vadd.s32 %v503, 384
        %v507 = vadd.s32 %v503, 512
        %v508 = vadd.s32 %v503, 640
        %v509 = vadd.s32 %v503, 768
        %v510 = vadd.s32 %v503, 896
        %v511 = vlaneseq
        %v512 = vshrl.u32 %v511, 7
        %v513 = vsub.s32 0, %v512
        %v514 = vrot.slane %v500, %v513
        %516 = vbcast.lane.b32.xlu0 %v514, 256
        %v517 = vpop.permute.xlu0 %516
        %s519 = sor.u32 256, 8
        %520 = vbcast.lane.b32.xlu0 %v514, %s519
        %v521 = vpop.permute.xlu0 %520
        %s523 = sor.u32 256, 16
        %524 = vbcast.lane.b32.xlu0 %v514, %s523
        %v525 = vpop.permute.xlu0 %524
        %s527 = sor.u32 256, 24
        %528 = vbcast.lane.b32.xlu0 %v514, %s527
        %v529 = vpop.permute.xlu0 %528
        %s531 = sor.u32 256, 32
        %532 = vbcast.lane.b32.xlu0 %v514, %s531
        %v533 = vpop.permute.xlu0 %532
        %s535 = sor.u32 256, 40
        %536 = vbcast.lane.b32.xlu0 %v514, %s535
        %v537 = vpop.permute.xlu0 %536
        %s539 = sor.u32 256, 48
        %540 = vbcast.lane.b32.xlu0 %v514, %s539
        %v541 = vpop.permute.xlu0 %540
        %s543 = sor.u32 256, 56
        %544 = vbcast.lane.b32.xlu0 %v514, %s543
        %v545 = vpop.permute.xlu0 %544
        %s547 = sor.u32 256, 64
        %548 = vbcast.lane.b32.xlu0 %v514, %s547
        %v549 = vpop.permute.xlu0 %548
        %s551 = sor.u32 256, 72
        %552 = vbcast.lane.b32.xlu0 %v514, %s551
        %v553 = vpop.permute.xlu0 %552
        %s555 = sor.u32 256, 80
        %556 = vbcast.lane.b32.xlu0 %v514, %s555
        %v557 = vpop.permute.xlu0 %556
        %s559 = sor.u32 256, 88
        %560 = vbcast.lane.b32.xlu0 %v514, %s559
        %v561 = vpop.permute.xlu0 %560
        %s563 = sor.u32 256, 96
        %564 = vbcast.lane.b32.xlu0 %v514, %s563
        %v565 = vpop.permute.xlu0 %564
        %s567 = sor.u32 256, 104
        %568 = vbcast.lane.b32.xlu0 %v514, %s567
        %v569 = vpop.permute.xlu0 %568
        %s571 = sor.u32 256, 112
        %572 = vbcast.lane.b32.xlu0 %v514, %s571
        %v573 = vpop.permute.xlu0 %572
        %s575 = sor.u32 256, 120
        %576 = vbcast.lane.b32.xlu0 %v514, %s575
        %v577 = vpop.permute.xlu0 %576
        %v578 = vlaneseq
        %v579 = vshrl.u32 %v578, 7
        %v580 = vsub.s32 1, %v579
        %v581 = vrot.slane %v500, %v580
        %583 = vbcast.lane.b32.xlu0 %v581, 256
        %v584 = vpop.permute.xlu0 %583
        %s586 = sor.u32 256, 8
        %587 = vbcast.lane.b32.xlu0 %v581, %s586
        %v588 = vpop.permute.xlu0 %587
        %s590 = sor.u32 256, 16
        %591 = vbcast.lane.b32.xlu0 %v581, %s590
        %v592 = vpop.permute.xlu0 %591
        %s594 = sor.u32 256, 24
        %595 = vbcast.lane.b32.xlu0 %v581, %s594
        %v596 = vpop.permute.xlu0 %595
        %s598 = sor.u32 256, 32
        %599 = vbcast.lane.b32.xlu0 %v581, %s598
        %v600 = vpop.permute.xlu0 %599
        %s602 = sor.u32 256, 40
        %603 = vbcast.lane.b32.xlu0 %v581, %s602
        %v604 = vpop.permute.xlu0 %603
        %s606 = sor.u32 256, 48
        %607 = vbcast.lane.b32.xlu0 %v581, %s606
        %v608 = vpop.permute.xlu0 %607
        %s610 = sor.u32 256, 56
        %611 = vbcast.lane.b32.xlu0 %v581, %s610
        %v612 = vpop.permute.xlu0 %611
        %s614 = sor.u32 256, 64
        %615 = vbcast.lane.b32.xlu0 %v581, %s614
        %v616 = vpop.permute.xlu0 %615
        %s618 = sor.u32 256, 72
        %619 = vbcast.lane.b32.xlu0 %v581, %s618
        %v620 = vpop.permute.xlu0 %619
        %s622 = sor.u32 256, 80
        %623 = vbcast.lane.b32.xlu0 %v581, %s622
        %v624 = vpop.permute.xlu0 %623
        %s626 = sor.u32 256, 88
        %627 = vbcast.lane.b32.xlu0 %v581, %s626
        %v628 = vpop.permute.xlu0 %627
        %s630 = sor.u32 256, 96
        %631 = vbcast.lane.b32.xlu0 %v581, %s630
        %v632 = vpop.permute.xlu0 %631
        %s634 = sor.u32 256, 104
        %635 = vbcast.lane.b32.xlu0 %v581, %s634
        %v636 = vpop.permute.xlu0 %635
        %s638 = sor.u32 256, 112
        %639 = vbcast.lane.b32.xlu0 %v581, %s638
        %v640 = vpop.permute.xlu0 %639
        %s642 = sor.u32 256, 120
        %643 = vbcast.lane.b32.xlu0 %v581, %s642
        %v644 = vpop.permute.xlu0 %643
        %v645 = vlaneseq
        %v646 = vshrl.u32 %v645, 7
        %v647 = vsub.s32 2, %v646
        %v648 = vrot.slane %v500, %v647
        %650 = vbcast.lane.b32.xlu0 %v648, 256
        %v651 = vpop.permute.xlu0 %650
        %s653 = sor.u32 256, 8
        %654 = vbcast.lane.b32.xlu0 %v648, %s653
        %v655 = vpop.permute.xlu0 %654
        %s657 = sor.u32 256, 16
        %658 = vbcast.lane.b32.xlu0 %v648, %s657
        %v659 = vpop.permute.xlu0 %658
        %s661 = sor.u32 256, 24
        %662 = vbcast.lane.b32.xlu0 %v648, %s661
        %v663 = vpop.permute.xlu0 %662
        %s665 = sor.u32 256, 32
        %666 = vbcast.lane.b32.xlu0 %v648, %s665
        %v667 = vpop.permute.xlu0 %666
        %s669 = sor.u32 256, 40
        %670 = vbcast.lane.b32.xlu0 %v648, %s669
        %v671 = vpop.permute.xlu0 %670
        %s673 = sor.u32 256, 48
        %674 = vbcast.lane.b32.xlu0 %v648, %s673
        %v675 = vpop.permute.xlu0 %674
        %s677 = sor.u32 256, 56
        %678 = vbcast.lane.b32.xlu0 %v648, %s677
        %v679 = vpop.permute.xlu0 %678
        %s681 = sor.u32 256, 64
        %682 = vbcast.lane.b32.xlu0 %v648, %s681
        %v683 = vpop.permute.xlu0 %682
        %s685 = sor.u32 256, 72
        %686 = vbcast.lane.b32.xlu0 %v648, %s685
        %v687 = vpop.permute.xlu0 %686
        %s689 = sor.u32 256, 80
        %690 = vbcast.lane.b32.xlu0 %v648, %s689
        %v691 = vpop.permute.xlu0 %690
        %s693 = sor.u32 256, 88
        %694 = vbcast.lane.b32.xlu0 %v648, %s693
        %v695 = vpop.permute.xlu0 %694
        %s697 = sor.u32 256, 96
        %698 = vbcast.lane.b32.xlu0 %v648, %s697
        %v699 = vpop.permute.xlu0 %698
        %s701 = sor.u32 256, 104
        %702 = vbcast.lane.b32.xlu0 %v648, %s701
        %v703 = vpop.permute.xlu0 %702
        %s705 = sor.u32 256, 112
        %706 = vbcast.lane.b32.xlu0 %v648, %s705
        %v707 = vpop.permute.xlu0 %706
        %s709 = sor.u32 256, 120
        %710 = vbcast.lane.b32.xlu0 %v648, %s709
        %v711 = vpop.permute.xlu0 %710
        %v712 = vlaneseq
        %v713 = vshrl.u32 %v712, 7
        %v714 = vsub.s32 3, %v713
        %v715 = vrot.slane %v500, %v714
        %717 = vbcast.lane.b32.xlu0 %v715, 256
        %v718 = vpop.permute.xlu0 %717
        %s720 = sor.u32 256, 8
        %721 = vbcast.lane.b32.xlu0 %v715, %s720
        %v722 = vpop.permute.xlu0 %721
        %s724 = sor.u32 256, 16
        %725 = vbcast.lane.b32.xlu0 %v715, %s724
        %v726 = vpop.permute.xlu0 %725
        %s728 = sor.u32 256, 24
        %729 = vbcast.lane.b32.xlu0 %v715, %s728
        %v730 = vpop.permute.xlu0 %729
        %s732 = sor.u32 256, 32
        %733 = vbcast.lane.b32.xlu0 %v715, %s732
        %v734 = vpop.permute.xlu0 %733
        %s736 = sor.u32 256, 40
        %737 = vbcast.lane.b32.xlu0 %v715, %s736
        %v738 = vpop.permute.xlu0 %737
        %s740 = sor.u32 256, 48
        %741 = vbcast.lane.b32.xlu0 %v715, %s740
        %v742 = vpop.permute.xlu0 %741
        %s744 = sor.u32 256, 56
        %745 = vbcast.lane.b32.xlu0 %v715, %s744
        %v746 = vpop.permute.xlu0 %745
        %s748 = sor.u32 256, 64
        %749 = vbcast.lane.b32.xlu0 %v715, %s748
        %v750 = vpop.permute.xlu0 %749
        %s752 = sor.u32 256, 72
        %753 = vbcast.lane.b32.xlu0 %v715, %s752
        %v754 = vpop.permute.xlu0 %753
        %s756 = sor.u32 256, 80
        %757 = vbcast.lane.b32.xlu0 %v715, %s756
        %v758 = vpop.permute.xlu0 %757
        %s760 = sor.u32 256, 88
        %761 = vbcast.lane.b32.xlu0 %v715, %s760
        %v762 = vpop.permute.xlu0 %761
        %s764 = sor.u32 256, 96
        %765 = vbcast.lane.b32.xlu0 %v715, %s764
        %v766 = vpop.permute.xlu0 %765
        %s768 = sor.u32 256, 104
        %769 = vbcast.lane.b32.xlu0 %v715, %s768
        %v770 = vpop.permute.xlu0 %769
        %s772 = sor.u32 256, 112
        %773 = vbcast.lane.b32.xlu0 %v715, %s772
        %v774 = vpop.permute.xlu0 %773
        %s776 = sor.u32 256, 120
        %777 = vbcast.lane.b32.xlu0 %v715, %s776
        %v778 = vpop.permute.xlu0 %777
        %v779 = vlaneseq
        %v780 = vshrl.u32 %v779, 7
        %v781 = vsub.s32 4, %v780
        %v782 = vrot.slane %v500, %v781
        %784 = vbcast.lane.b32.xlu0 %v782, 256
        %v785 = vpop.permute.xlu0 %784
        %s787 = sor.u32 256, 8
        %788 = vbcast.lane.b32.xlu0 %v782, %s787
        %v789 = vpop.permute.xlu0 %788
        %s791 = sor.u32 256, 16
        %792 = vbcast.lane.b32.xlu0 %v782, %s791
        %v793 = vpop.permute.xlu0 %792
        %s795 = sor.u32 256, 24
        %796 = vbcast.lane.b32.xlu0 %v782, %s795
        %v797 = vpop.permute.xlu0 %796
        %s799 = sor.u32 256, 32
        %800 = vbcast.lane.b32.xlu0 %v782, %s799
        %v801 = vpop.permute.xlu0 %800
        %s803 = sor.u32 256, 40
        %804 = vbcast.lane.b32.xlu0 %v782, %s803
        %v805 = vpop.permute.xlu0 %804
        %s807 = sor.u32 256, 48
        %808 = vbcast.lane.b32.xlu0 %v782, %s807
        %v809 = vpop.permute.xlu0 %808
        %s811 = sor.u32 256, 56
        %812 = vbcast.lane.b32.xlu0 %v782, %s811
        %v813 = vpop.permute.xlu0 %812
        %s815 = sor.u32 256, 64
        %816 = vbcast.lane.b32.xlu0 %v782, %s815
        %v817 = vpop.permute.xlu0 %816
        %s819 = sor.u32 256, 72
        %820 = vbcast.lane.b32.xlu0 %v782, %s819
        %v821 = vpop.permute.xlu0 %820
        %s823 = sor.u32 256, 80
        %824 = vbcast.lane.b32.xlu0 %v782, %s823
        %v825 = vpop.permute.xlu0 %824
        %s827 = sor.u32 256, 88
        %828 = vbcast.lane.b32.xlu0 %v782, %s827
        %v829 = vpop.permute.xlu0 %828
        %s831 = sor.u32 256, 96
        %832 = vbcast.lane.b32.xlu0 %v782, %s831
        %v833 = vpop.permute.xlu0 %832
        %s835 = sor.u32 256, 104
        %836 = vbcast.lane.b32.xlu0 %v782, %s835
        %v837 = vpop.permute.xlu0 %836
        %s839 = sor.u32 256, 112
        %840 = vbcast.lane.b32.xlu0 %v782, %s839
        %v841 = vpop.permute.xlu0 %840
        %s843 = sor.u32 256, 120
        %844 = vbcast.lane.b32.xlu0 %v782, %s843
        %v845 = vpop.permute.xlu0 %844
        %v846 = vlaneseq
        %v847 = vshrl.u32 %v846, 7
        %v848 = vsub.s32 5, %v847
        %v849 = vrot.slane %v500, %v848
        %851 = vbcast.lane.b32.xlu0 %v849, 256
        %v852 = vpop.permute.xlu0 %851
        %s854 = sor.u32 256, 8
        %855 = vbcast.lane.b32.xlu0 %v849, %s854
        %v856 = vpop.permute.xlu0 %855
        %s858 = sor.u32 256, 16
        %859 = vbcast.lane.b32.xlu0 %v849, %s858
        %v860 = vpop.permute.xlu0 %859
        %s862 = sor.u32 256, 24
        %863 = vbcast.lane.b32.xlu0 %v849, %s862
        %v864 = vpop.permute.xlu0 %863
        %s866 = sor.u32 256, 32
        %867 = vbcast.lane.b32.xlu0 %v849, %s866
        %v868 = vpop.permute.xlu0 %867
        %s870 = sor.u32 256, 40
        %871 = vbcast.lane.b32.xlu0 %v849, %s870
        %v872 = vpop.permute.xlu0 %871
        %s874 = sor.u32 256, 48
        %875 = vbcast.lane.b32.xlu0 %v849, %s874
        %v876 = vpop.permute.xlu0 %875
        %s878 = sor.u32 256, 56
        %879 = vbcast.lane.b32.xlu0 %v849, %s878
        %v880 = vpop.permute.xlu0 %879
        %s882 = sor.u32 256, 64
        %883 = vbcast.lane.b32.xlu0 %v849, %s882
        %v884 = vpop.permute.xlu0 %883
        %s886 = sor.u32 256, 72
        %887 = vbcast.lane.b32.xlu0 %v849, %s886
        %v888 = vpop.permute.xlu0 %887
        %s890 = sor.u32 256, 80
        %891 = vbcast.lane.b32.xlu0 %v849, %s890
        %v892 = vpop.permute.xlu0 %891
        %s894 = sor.u32 256, 88
        %895 = vbcast.lane.b32.xlu0 %v849, %s894
        %v896 = vpop.permute.xlu0 %895
        %s898 = sor.u32 256, 96
        %899 = vbcast.lane.b32.xlu0 %v849, %s898
        %v900 = vpop.permute.xlu0 %899
        %s902 = sor.u32 256, 104
        %903 = vbcast.lane.b32.xlu0 %v849, %s902
        %v904 = vpop.permute.xlu0 %903
        %s906 = sor.u32 256, 112
        %907 = vbcast.lane.b32.xlu0 %v849, %s906
        %v908 = vpop.permute.xlu0 %907
        %s910 = sor.u32 256, 120
        %911 = vbcast.lane.b32.xlu0 %v849, %s910
        %v912 = vpop.permute.xlu0 %911
        %v913 = vlaneseq
        %v914 = vshrl.u32 %v913, 7
        %v915 = vsub.s32 6, %v914
        %v916 = vrot.slane %v500, %v915
        %918 = vbcast.lane.b32.xlu0 %v916, 256
        %v919 = vpop.permute.xlu0 %918
        %s921 = sor.u32 256, 8
        %922 = vbcast.lane.b32.xlu0 %v916, %s921
        %v923 = vpop.permute.xlu0 %922
        %s925 = sor.u32 256, 16
        %926 = vbcast.lane.b32.xlu0 %v916, %s925
        %v927 = vpop.permute.xlu0 %926
        %s929 = sor.u32 256, 24
        %930 = vbcast.lane.b32.xlu0 %v916, %s929
        %v931 = vpop.permute.xlu0 %930
        %s933 = sor.u32 256, 32
        %934 = vbcast.lane.b32.xlu0 %v916, %s933
        %v935 = vpop.permute.xlu0 %934
        %s937 = sor.u32 256, 40
        %938 = vbcast.lane.b32.xlu0 %v916, %s937
        %v939 = vpop.permute.xlu0 %938
        %s941 = sor.u32 256, 48
        %942 = vbcast.lane.b32.xlu0 %v916, %s941
        %v943 = vpop.permute.xlu0 %942
        %s945 = sor.u32 256, 56
        %946 = vbcast.lane.b32.xlu0 %v916, %s945
        %v947 = vpop.permute.xlu0 %946
        %s949 = sor.u32 256, 64
        %950 = vbcast.lane.b32.xlu0 %v916, %s949
        %v951 = vpop.permute.xlu0 %950
        %s953 = sor.u32 256, 72
        %954 = vbcast.lane.b32.xlu0 %v916, %s953
        %v955 = vpop.permute.xlu0 %954
        %s957 = sor.u32 256, 80
        %958 = vbcast.lane.b32.xlu0 %v916, %s957
        %v959 = vpop.permute.xlu0 %958
        %s961 = sor.u32 256, 88
        %962 = vbcast.lane.b32.xlu0 %v916, %s961
        %v963 = vpop.permute.xlu0 %962
        %s965 = sor.u32 256, 96
        %966 = vbcast.lane.b32.xlu0 %v916, %s965
        %v967 = vpop.permute.xlu0 %966
        %s969 = sor.u32 256, 104
        %970 = vbcast.lane.b32.xlu0 %v916, %s969
        %v971 = vpop.permute.xlu0 %970
        %s973 = sor.u32 256, 112
        %974 = vbcast.lane.b32.xlu0 %v916, %s973
        %v975 = vpop.permute.xlu0 %974
        %s977 = sor.u32 256, 120
        %978 = vbcast.lane.b32.xlu0 %v916, %s977
        %v979 = vpop.permute.xlu0 %978
        %v980 = vlaneseq
        %v981 = vshrl.u32 %v980, 7
        %v982 = vsub.s32 7, %v981
        %v983 = vrot.slane %v500, %v982
        %985 = vbcast.lane.b32.xlu0 %v983, 256
        %v986 = vpop.permute.xlu0 %985
        %s988 = sor.u32 256, 8
        %989 = vbcast.lane.b32.xlu0 %v983, %s988
        %v990 = vpop.permute.xlu0 %989
        %s992 = sor.u32 256, 16
        %993 = vbcast.lane.b32.xlu0 %v983, %s992
        %v994 = vpop.permute.xlu0 %993
        %s996 = sor.u32 256, 24
        %997 = vbcast.lane.b32.xlu0 %v983, %s996
        %v998 = vpop.permute.xlu0 %997
        %s1000 = sor.u32 256, 32
        %1001 = vbcast.lane.b32.xlu0 %v983, %s1000
        %v1002 = vpop.permute.xlu0 %1001
        %s1004 = sor.u32 256, 40
        %1005 = vbcast.lane.b32.xlu0 %v983, %s1004
        %v1006 = vpop.permute.xlu0 %1005
        %s1008 = sor.u32 256, 48
        %1009 = vbcast.lane.b32.xlu0 %v983, %s1008
        %v1010 = vpop.permute.xlu0 %1009
        %s1012 = sor.u32 256, 56
        %1013 = vbcast.lane.b32.xlu0 %v983, %s1012
        %v1014 = vpop.permute.xlu0 %1013
        %s1016 = sor.u32 256, 64
        %1017 = vbcast.lane.b32.xlu0 %v983, %s1016
        %v1018 = vpop.permute.xlu0 %1017
        %s1020 = sor.u32 256, 72
        %1021 = vbcast.lane.b32.xlu0 %v983, %s1020
        %v1022 = vpop.permute.xlu0 %1021
        %s1024 = sor.u32 256, 80
        %1025 = vbcast.lane.b32.xlu0 %v983, %s1024
        %v1026 = vpop.permute.xlu0 %1025
        %s1028 = sor.u32 256, 88
        %1029 = vbcast.lane.b32.xlu0 %v983, %s1028
        %v1030 = vpop.permute.xlu0 %1029
        %s1032 = sor.u32 256, 96
        %1033 = vbcast.lane.b32.xlu0 %v983, %s1032
        %v1034 = vpop.permute.xlu0 %1033
        %s1036 = sor.u32 256, 104
        %1037 = vbcast.lane.b32.xlu0 %v983, %s1036
        %v1038 = vpop.permute.xlu0 %1037
        %s1040 = sor.u32 256, 112
        %1041 = vbcast.lane.b32.xlu0 %v983, %s1040
        %v1042 = vpop.permute.xlu0 %1041
        %s1044 = sor.u32 256, 120
        %1045 = vbcast.lane.b32.xlu0 %v983, %s1044
        %v1046 = vpop.permute.xlu0 %1045
        %vm1047 = vcmp.eq.s32.totalorder %v517, %v503
        %vm1048 = vcmp.eq.s32.totalorder %v517, %v504
        %vm1049 = vcmp.eq.s32.totalorder %v517, %v505
        %vm1050 = vcmp.eq.s32.totalorder %v517, %v506
        %vm1051 = vcmp.eq.s32.totalorder %v517, %v507
        %vm1052 = vcmp.eq.s32.totalorder %v517, %v508
        %vm1053 = vcmp.eq.s32.totalorder %v517, %v509
        %vm1054 = vcmp.eq.s32.totalorder %v517, %v510
        %vm1055 = vcmp.eq.s32.totalorder %v521, %v503
        %vm1056 = vcmp.eq.s32.totalorder %v521, %v504
        %vm1057 = vcmp.eq.s32.totalorder %v521, %v505
        %vm1058 = vcmp.eq.s32.totalorder %v521, %v506
        %vm1059 = vcmp.eq.s32.totalorder %v521, %v507
        %vm1060 = vcmp.eq.s32.totalorder %v521, %v508
        %vm1061 = vcmp.eq.s32.totalorder %v521, %v509
        %vm1062 = vcmp.eq.s32.totalorder %v521, %v510
        %vm1063 = vcmp.eq.s32.totalorder %v525, %v503
        %vm1064 = vcmp.eq.s32.totalorder %v525, %v504
        %vm1065 = vcmp.eq.s32.totalorder %v525, %v505
        %vm1066 = vcmp.eq.s32.totalorder %v525, %v506
        %vm1067 = vcmp.eq.s32.totalorder %v525, %v507
        %vm1068 = vcmp.eq.s32.totalorder %v525, %v508
        %vm1069 = vcmp.eq.s32.totalorder %v525, %v509
        %vm1070 = vcmp.eq.s32.totalorder %v525, %v510
        %vm1071 = vcmp.eq.s32.totalorder %v529, %v503
        %vm1072 = vcmp.eq.s32.totalorder %v529, %v504
        %vm1073 = vcmp.eq.s32.totalorder %v529, %v505
        %vm1074 = vcmp.eq.s32.totalorder %v529, %v506
        %vm1075 = vcmp.eq.s32.totalorder %v529, %v507
        %vm1076 = vcmp.eq.s32.totalorder %v529, %v508
        %vm1077 = vcmp.eq.s32.totalorder %v529, %v509
        %vm1078 = vcmp.eq.s32.totalorder %v529, %v510
        %vm1079 = vcmp.eq.s32.totalorder %v533, %v503
        %vm1080 = vcmp.eq.s32.totalorder %v533, %v504
        %vm1081 = vcmp.eq.s32.totalorder %v533, %v505
        %vm1082 = vcmp.eq.s32.totalorder %v533, %v506
        %vm1083 = vcmp.eq.s32.totalorder %v533, %v507
        %vm1084 = vcmp.eq.s32.totalorder %v533, %v508
        %vm1085 = vcmp.eq.s32.totalorder %v533, %v509
        %vm1086 = vcmp.eq.s32.totalorder %v533, %v510
        %vm1087 = vcmp.eq.s32.totalorder %v537, %v503
        %vm1088 = vcmp.eq.s32.totalorder %v537, %v504
        %vm1089 = vcmp.eq.s32.totalorder %v537, %v505
        %vm1090 = vcmp.eq.s32.totalorder %v537, %v506
        %vm1091 = vcmp.eq.s32.totalorder %v537, %v507
        %vm1092 = vcmp.eq.s32.totalorder %v537, %v508
        %vm1093 = vcmp.eq.s32.totalorder %v537, %v509
        %vm1094 = vcmp.eq.s32.totalorder %v537, %v510
        %vm1095 = vcmp.eq.s32.totalorder %v541, %v503
        %vm1096 = vcmp.eq.s32.totalorder %v541, %v504
        %vm1097 = vcmp.eq.s32.totalorder %v541, %v505
        %vm1098 = vcmp.eq.s32.totalorder %v541, %v506
        %vm1099 = vcmp.eq.s32.totalorder %v541, %v507
        %vm1100 = vcmp.eq.s32.totalorder %v541, %v508
        %vm1101 = vcmp.eq.s32.totalorder %v541, %v509
        %vm1102 = vcmp.eq.s32.totalorder %v541, %v510
        %vm1103 = vcmp.eq.s32.totalorder %v545, %v503
        %vm1104 = vcmp.eq.s32.totalorder %v545, %v504
        %vm1105 = vcmp.eq.s32.totalorder %v545, %v505
        %vm1106 = vcmp.eq.s32.totalorder %v545, %v506
        %vm1107 = vcmp.eq.s32.totalorder %v545, %v507
        %vm1108 = vcmp.eq.s32.totalorder %v545, %v508
        %vm1109 = vcmp.eq.s32.totalorder %v545, %v509
        %vm1110 = vcmp.eq.s32.totalorder %v545, %v510
        %vm1111 = vcmp.eq.s32.totalorder %v549, %v503
        %vm1112 = vcmp.eq.s32.totalorder %v549, %v504
        %vm1113 = vcmp.eq.s32.totalorder %v549, %v505
        %vm1114 = vcmp.eq.s32.totalorder %v549, %v506
        %vm1115 = vcmp.eq.s32.totalorder %v549, %v507
        %vm1116 = vcmp.eq.s32.totalorder %v549, %v508
        %vm1117 = vcmp.eq.s32.totalorder %v549, %v509
        %vm1118 = vcmp.eq.s32.totalorder %v549, %v510
        %vm1119 = vcmp.eq.s32.totalorder %v553, %v503
        %vm1120 = vcmp.eq.s32.totalorder %v553, %v504
        %vm1121 = vcmp.eq.s32.totalorder %v553, %v505
        %vm1122 = vcmp.eq.s32.totalorder %v553, %v506
        %vm1123 = vcmp.eq.s32.totalorder %v553, %v507
        %vm1124 = vcmp.eq.s32.totalorder %v553, %v508
        %vm1125 = vcmp.eq.s32.totalorder %v553, %v509
        %vm1126 = vcmp.eq.s32.totalorder %v553, %v510
        %vm1127 = vcmp.eq.s32.totalorder %v557, %v503
        %vm1128 = vcmp.eq.s32.totalorder %v557, %v504
        %vm1129 = vcmp.eq.s32.totalorder %v557, %v505
        %vm1130 = vcmp.eq.s32.totalorder %v557, %v506
        %vm1131 = vcmp.eq.s32.totalorder %v557, %v507
        %vm1132 = vcmp.eq.s32.totalorder %v557, %v508
        %vm1133 = vcmp.eq.s32.totalorder %v557, %v509
        %vm1134 = vcmp.eq.s32.totalorder %v557, %v510
        %vm1135 = vcmp.eq.s32.totalorder %v561, %v503
        %vm1136 = vcmp.eq.s32.totalorder %v561, %v504
        %vm1137 = vcmp.eq.s32.totalorder %v561, %v505
        %vm1138 = vcmp.eq.s32.totalorder %v561, %v506
        %vm1139 = vcmp.eq.s32.totalorder %v561, %v507
        %vm1140 = vcmp.eq.s32.totalorder %v561, %v508
        %vm1141 = vcmp.eq.s32.totalorder %v561, %v509
        %vm1142 = vcmp.eq.s32.totalorder %v561, %v510
        %vm1143 = vcmp.eq.s32.totalorder %v565, %v503
        %vm1144 = vcmp.eq.s32.totalorder %v565, %v504
        %vm1145 = vcmp.eq.s32.totalorder %v565, %v505
        %vm1146 = vcmp.eq.s32.totalorder %v565, %v506
        %vm1147 = vcmp.eq.s32.totalorder %v565, %v507
        %vm1148 = vcmp.eq.s32.totalorder %v565, %v508
        %vm1149 = vcmp.eq.s32.totalorder %v565, %v509
        %vm1150 = vcmp.eq.s32.totalorder %v565, %v510
        %vm1151 = vcmp.eq.s32.totalorder %v569, %v503
        %vm1152 = vcmp.eq.s32.totalorder %v569, %v504
        %vm1153 = vcmp.eq.s32.totalorder %v569, %v505
        %vm1154 = vcmp.eq.s32.totalorder %v569, %v506
        %vm1155 = vcmp.eq.s32.totalorder %v569, %v507
        %vm1156 = vcmp.eq.s32.totalorder %v569, %v508
        %vm1157 = vcmp.eq.s32.totalorder %v569, %v509
        %vm1158 = vcmp.eq.s32.totalorder %v569, %v510
        %vm1159 = vcmp.eq.s32.totalorder %v573, %v503
        %vm1160 = vcmp.eq.s32.totalorder %v573, %v504
        %vm1161 = vcmp.eq.s32.totalorder %v573, %v505
        %vm1162 = vcmp.eq.s32.totalorder %v573, %v506
        %vm1163 = vcmp.eq.s32.totalorder %v573, %v507
        %vm1164 = vcmp.eq.s32.totalorder %v573, %v508
        %vm1165 = vcmp.eq.s32.totalorder %v573, %v509
        %vm1166 = vcmp.eq.s32.totalorder %v573, %v510
        %vm1167 = vcmp.eq.s32.totalorder %v577, %v503
        %vm1168 = vcmp.eq.s32.totalorder %v577, %v504
        %vm1169 = vcmp.eq.s32.totalorder %v577, %v505
        %vm1170 = vcmp.eq.s32.totalorder %v577, %v506
        %vm1171 = vcmp.eq.s32.totalorder %v577, %v507
        %vm1172 = vcmp.eq.s32.totalorder %v577, %v508
        %vm1173 = vcmp.eq.s32.totalorder %v577, %v509
        %vm1174 = vcmp.eq.s32.totalorder %v577, %v510
        %vm1175 = vcmp.eq.s32.totalorder %v584, %v503
        %vm1176 = vcmp.eq.s32.totalorder %v584, %v504
        %vm1177 = vcmp.eq.s32.totalorder %v584, %v505
        %vm1178 = vcmp.eq.s32.totalorder %v584, %v506
        %vm1179 = vcmp.eq.s32.totalorder %v584, %v507
        %vm1180 = vcmp.eq.s32.totalorder %v584, %v508
        %vm1181 = vcmp.eq.s32.totalorder %v584, %v509
        %vm1182 = vcmp.eq.s32.totalorder %v584, %v510
        %vm1183 = vcmp.eq.s32.totalorder %v588, %v503
        %vm1184 = vcmp.eq.s32.totalorder %v588, %v504
        %vm1185 = vcmp.eq.s32.totalorder %v588, %v505
        %vm1186 = vcmp.eq.s32.totalorder %v588, %v506
        %vm1187 = vcmp.eq.s32.totalorder %v588, %v507
        %vm1188 = vcmp.eq.s32.totalorder %v588, %v508
        %vm1189 = vcmp.eq.s32.totalorder %v588, %v509
        %vm1190 = vcmp.eq.s32.totalorder %v588, %v510
        %vm1191 = vcmp.eq.s32.totalorder %v592, %v503
        %vm1192 = vcmp.eq.s32.totalorder %v592, %v504
        %vm1193 = vcmp.eq.s32.totalorder %v592, %v505
        %vm1194 = vcmp.eq.s32.totalorder %v592, %v506
        %vm1195 = vcmp.eq.s32.totalorder %v592, %v507
        %vm1196 = vcmp.eq.s32.totalorder %v592, %v508
        %vm1197 = vcmp.eq.s32.totalorder %v592, %v509
        %vm1198 = vcmp.eq.s32.totalorder %v592, %v510
        %vm1199 = vcmp.eq.s32.totalorder %v596, %v503
        %vm1200 = vcmp.eq.s32.totalorder %v596, %v504
        %vm1201 = vcmp.eq.s32.totalorder %v596, %v505
        %vm1202 = vcmp.eq.s32.totalorder %v596, %v506
        %vm1203 = vcmp.eq.s32.totalorder %v596, %v507
        %vm1204 = vcmp.eq.s32.totalorder %v596, %v508
        %vm1205 = vcmp.eq.s32.totalorder %v596, %v509
        %vm1206 = vcmp.eq.s32.totalorder %v596, %v510
        %vm1207 = vcmp.eq.s32.totalorder %v600, %v503
        %vm1208 = vcmp.eq.s32.totalorder %v600, %v504
        %vm1209 = vcmp.eq.s32.totalorder %v600, %v505
        %vm1210 = vcmp.eq.s32.totalorder %v600, %v506
        %vm1211 = vcmp.eq.s32.totalorder %v600, %v507
        %vm1212 = vcmp.eq.s32.totalorder %v600, %v508
        %vm1213 = vcmp.eq.s32.totalorder %v600, %v509
        %vm1214 = vcmp.eq.s32.totalorder %v600, %v510
        %vm1215 = vcmp.eq.s32.totalorder %v604, %v503
        %vm1216 = vcmp.eq.s32.totalorder %v604, %v504
        %vm1217 = vcmp.eq.s32.totalorder %v604, %v505
        %vm1218 = vcmp.eq.s32.totalorder %v604, %v506
        %vm1219 = vcmp.eq.s32.totalorder %v604, %v507
        %vm1220 = vcmp.eq.s32.totalorder %v604, %v508
        %vm1221 = vcmp.eq.s32.totalorder %v604, %v509
        %vm1222 = vcmp.eq.s32.totalorder %v604, %v510
        %vm1223 = vcmp.eq.s32.totalorder %v608, %v503
        %vm1224 = vcmp.eq.s32.totalorder %v608, %v504
        %vm1225 = vcmp.eq.s32.totalorder %v608, %v505
        %vm1226 = vcmp.eq.s32.totalorder %v608, %v506
        %vm1227 = vcmp.eq.s32.totalorder %v608, %v507
        %vm1228 = vcmp.eq.s32.totalorder %v608, %v508
        %vm1229 = vcmp.eq.s32.totalorder %v608, %v509
        %vm1230 = vcmp.eq.s32.totalorder %v608, %v510
        %vm1231 = vcmp.eq.s32.totalorder %v612, %v503
        %vm1232 = vcmp.eq.s32.totalorder %v612, %v504
        %vm1233 = vcmp.eq.s32.totalorder %v612, %v505
        %vm1234 = vcmp.eq.s32.totalorder %v612, %v506
        %vm1235 = vcmp.eq.s32.totalorder %v612, %v507
        %vm1236 = vcmp.eq.s32.totalorder %v612, %v508
        %vm1237 = vcmp.eq.s32.totalorder %v612, %v509
        %vm1238 = vcmp.eq.s32.totalorder %v612, %v510
        %vm1239 = vcmp.eq.s32.totalorder %v616, %v503
        %vm1240 = vcmp.eq.s32.totalorder %v616, %v504
        %vm1241 = vcmp.eq.s32.totalorder %v616, %v505
        %vm1242 = vcmp.eq.s32.totalorder %v616, %v506
        %vm1243 = vcmp.eq.s32.totalorder %v616, %v507
        %vm1244 = vcmp.eq.s32.totalorder %v616, %v508
        %vm1245 = vcmp.eq.s32.totalorder %v616, %v509
        %vm1246 = vcmp.eq.s32.totalorder %v616, %v510
        %vm1247 = vcmp.eq.s32.totalorder %v620, %v503
        %vm1248 = vcmp.eq.s32.totalorder %v620, %v504
        %vm1249 = vcmp.eq.s32.totalorder %v620, %v505
        %vm1250 = vcmp.eq.s32.totalorder %v620, %v506
        %vm1251 = vcmp.eq.s32.totalorder %v620, %v507
        %vm1252 = vcmp.eq.s32.totalorder %v620, %v508
        %vm1253 = vcmp.eq.s32.totalorder %v620, %v509
        %vm1254 = vcmp.eq.s32.totalorder %v620, %v510
        %vm1255 = vcmp.eq.s32.totalorder %v624, %v503
        %vm1256 = vcmp.eq.s32.totalorder %v624, %v504
        %vm1257 = vcmp.eq.s32.totalorder %v624, %v505
        %vm1258 = vcmp.eq.s32.totalorder %v624, %v506
        %vm1259 = vcmp.eq.s32.totalorder %v624, %v507
        %vm1260 = vcmp.eq.s32.totalorder %v624, %v508
        %vm1261 = vcmp.eq.s32.totalorder %v624, %v509
        %vm1262 = vcmp.eq.s32.totalorder %v624, %v510
        %vm1263 = vcmp.eq.s32.totalorder %v628, %v503
        %vm1264 = vcmp.eq.s32.totalorder %v628, %v504
        %vm1265 = vcmp.eq.s32.totalorder %v628, %v505
        %vm1266 = vcmp.eq.s32.totalorder %v628, %v506
        %vm1267 = vcmp.eq.s32.totalorder %v628, %v507
        %vm1268 = vcmp.eq.s32.totalorder %v628, %v508
        %vm1269 = vcmp.eq.s32.totalorder %v628, %v509
        %vm1270 = vcmp.eq.s32.totalorder %v628, %v510
        %vm1271 = vcmp.eq.s32.totalorder %v632, %v503
        %vm1272 = vcmp.eq.s32.totalorder %v632, %v504
        %vm1273 = vcmp.eq.s32.totalorder %v632, %v505
        %vm1274 = vcmp.eq.s32.totalorder %v632, %v506
        %vm1275 = vcmp.eq.s32.totalorder %v632, %v507
        %vm1276 = vcmp.eq.s32.totalorder %v632, %v508
        %vm1277 = vcmp.eq.s32.totalorder %v632, %v509
        %vm1278 = vcmp.eq.s32.totalorder %v632, %v510
        %vm1279 = vcmp.eq.s32.totalorder %v636, %v503
        %vm1280 = vcmp.eq.s32.totalorder %v636, %v504
        %vm1281 = vcmp.eq.s32.totalorder %v636, %v505
        %vm1282 = vcmp.eq.s32.totalorder %v636, %v506
        %vm1283 = vcmp.eq.s32.totalorder %v636, %v507
        %vm1284 = vcmp.eq.s32.totalorder %v636, %v508
        %vm1285 = vcmp.eq.s32.totalorder %v636, %v509
        %vm1286 = vcmp.eq.s32.totalorder %v636, %v510
        %vm1287 = vcmp.eq.s32.totalorder %v640, %v503
        %vm1288 = vcmp.eq.s32.totalorder %v640, %v504
        %vm1289 = vcmp.eq.s32.totalorder %v640, %v505
        %vm1290 = vcmp.eq.s32.totalorder %v640, %v506
        %vm1291 = vcmp.eq.s32.totalorder %v640, %v507
        %vm1292 = vcmp.eq.s32.totalorder %v640, %v508
        %vm1293 = vcmp.eq.s32.totalorder %v640, %v509
        %vm1294 = vcmp.eq.s32.totalorder %v640, %v510
        %vm1295 = vcmp.eq.s32.totalorder %v644, %v503
        %vm1296 = vcmp.eq.s32.totalorder %v644, %v504
        %vm1297 = vcmp.eq.s32.totalorder %v644, %v505
        %vm1298 = vcmp.eq.s32.totalorder %v644, %v506
        %vm1299 = vcmp.eq.s32.totalorder %v644, %v507
        %vm1300 = vcmp.eq.s32.totalorder %v644, %v508
        %vm1301 = vcmp.eq.s32.totalorder %v644, %v509
        %vm1302 = vcmp.eq.s32.totalorder %v644, %v510
        %vm1303 = vcmp.eq.s32.totalorder %v651, %v503
        %vm1304 = vcmp.eq.s32.totalorder %v651, %v504
        %vm1305 = vcmp.eq.s32.totalorder %v651, %v505
        %vm1306 = vcmp.eq.s32.totalorder %v651, %v506
        %vm1307 = vcmp.eq.s32.totalorder %v651, %v507
        %vm1308 = vcmp.eq.s32.totalorder %v651, %v508
        %vm1309 = vcmp.eq.s32.totalorder %v651, %v509
        %vm1310 = vcmp.eq.s32.totalorder %v651, %v510
        %vm1311 = vcmp.eq.s32.totalorder %v655, %v503
        %vm1312 = vcmp.eq.s32.totalorder %v655, %v504
        %vm1313 = vcmp.eq.s32.totalorder %v655, %v505
        %vm1314 = vcmp.eq.s32.totalorder %v655, %v506
        %vm1315 = vcmp.eq.s32.totalorder %v655, %v507
        %vm1316 = vcmp.eq.s32.totalorder %v655, %v508
        %vm1317 = vcmp.eq.s32.totalorder %v655, %v509
        %vm1318 = vcmp.eq.s32.totalorder %v655, %v510
        %vm1319 = vcmp.eq.s32.totalorder %v659, %v503
        %vm1320 = vcmp.eq.s32.totalorder %v659, %v504
        %vm1321 = vcmp.eq.s32.totalorder %v659, %v505
        %vm1322 = vcmp.eq.s32.totalorder %v659, %v506
        %vm1323 = vcmp.eq.s32.totalorder %v659, %v507
        %vm1324 = vcmp.eq.s32.totalorder %v659, %v508
        %vm1325 = vcmp.eq.s32.totalorder %v659, %v509
        %vm1326 = vcmp.eq.s32.totalorder %v659, %v510
        %vm1327 = vcmp.eq.s32.totalorder %v663, %v503
        %vm1328 = vcmp.eq.s32.totalorder %v663, %v504
        %vm1329 = vcmp.eq.s32.totalorder %v663, %v505
        %vm1330 = vcmp.eq.s32.totalorder %v663, %v506
        %vm1331 = vcmp.eq.s32.totalorder %v663, %v507
        %vm1332 = vcmp.eq.s32.totalorder %v663, %v508
        %vm1333 = vcmp.eq.s32.totalorder %v663, %v509
        %vm1334 = vcmp.eq.s32.totalorder %v663, %v510
        %vm1335 = vcmp.eq.s32.totalorder %v667, %v503
        %vm1336 = vcmp.eq.s32.totalorder %v667, %v504
        %vm1337 = vcmp.eq.s32.totalorder %v667, %v505
        %vm1338 = vcmp.eq.s32.totalorder %v667, %v506
        %vm1339 = vcmp.eq.s32.totalorder %v667, %v507
        %vm1340 = vcmp.eq.s32.totalorder %v667, %v508
        %vm1341 = vcmp.eq.s32.totalorder %v667, %v509
        %vm1342 = vcmp.eq.s32.totalorder %v667, %v510
        %vm1343 = vcmp.eq.s32.totalorder %v671, %v503
        %vm1344 = vcmp.eq.s32.totalorder %v671, %v504
        %vm1345 = vcmp.eq.s32.totalorder %v671, %v505
        %vm1346 = vcmp.eq.s32.totalorder %v671, %v506
        %vm1347 = vcmp.eq.s32.totalorder %v671, %v507
        %vm1348 = vcmp.eq.s32.totalorder %v671, %v508
        %vm1349 = vcmp.eq.s32.totalorder %v671, %v509
        %vm1350 = vcmp.eq.s32.totalorder %v671, %v510
        %vm1351 = vcmp.eq.s32.totalorder %v675, %v503
        %vm1352 = vcmp.eq.s32.totalorder %v675, %v504
        %vm1353 = vcmp.eq.s32.totalorder %v675, %v505
        %vm1354 = vcmp.eq.s32.totalorder %v675, %v506
        %vm1355 = vcmp.eq.s32.totalorder %v675, %v507
        %vm1356 = vcmp.eq.s32.totalorder %v675, %v508
        %vm1357 = vcmp.eq.s32.totalorder %v675, %v509
        %vm1358 = vcmp.eq.s32.totalorder %v675, %v510
        %vm1359 = vcmp.eq.s32.totalorder %v679, %v503
        %vm1360 = vcmp.eq.s32.totalorder %v679, %v504
        %vm1361 = vcmp.eq.s32.totalorder %v679, %v505
        %vm1362 = vcmp.eq.s32.totalorder %v679, %v506
        %vm1363 = vcmp.eq.s32.totalorder %v679, %v507
        %vm1364 = vcmp.eq.s32.totalorder %v679, %v508
        %vm1365 = vcmp.eq.s32.totalorder %v679, %v509
        %vm1366 = vcmp.eq.s32.totalorder %v679, %v510
        %vm1367 = vcmp.eq.s32.totalorder %v683, %v503
        %vm1368 = vcmp.eq.s32.totalorder %v683, %v504
        %vm1369 = vcmp.eq.s32.totalorder %v683, %v505
        %vm1370 = vcmp.eq.s32.totalorder %v683, %v506
        %vm1371 = vcmp.eq.s32.totalorder %v683, %v507
        %vm1372 = vcmp.eq.s32.totalorder %v683, %v508
        %vm1373 = vcmp.eq.s32.totalorder %v683, %v509
        %vm1374 = vcmp.eq.s32.totalorder %v683, %v510
        %vm1375 = vcmp.eq.s32.totalorder %v687, %v503
        %vm1376 = vcmp.eq.s32.totalorder %v687, %v504
        %vm1377 = vcmp.eq.s32.totalorder %v687, %v505
        %vm1378 = vcmp.eq.s32.totalorder %v687, %v506
        %vm1379 = vcmp.eq.s32.totalorder %v687, %v507
        %vm1380 = vcmp.eq.s32.totalorder %v687, %v508
        %vm1381 = vcmp.eq.s32.totalorder %v687, %v509
        %vm1382 = vcmp.eq.s32.totalorder %v687, %v510
        %vm1383 = vcmp.eq.s32.totalorder %v691, %v503
        %vm1384 = vcmp.eq.s32.totalorder %v691, %v504
        %vm1385 = vcmp.eq.s32.totalorder %v691, %v505
        %vm1386 = vcmp.eq.s32.totalorder %v691, %v506
        %vm1387 = vcmp.eq.s32.totalorder %v691, %v507
        %vm1388 = vcmp.eq.s32.totalorder %v691, %v508
        %vm1389 = vcmp.eq.s32.totalorder %v691, %v509
        %vm1390 = vcmp.eq.s32.totalorder %v691, %v510
        %vm1391 = vcmp.eq.s32.totalorder %v695, %v503
        %vm1392 = vcmp.eq.s32.totalorder %v695, %v504
        %vm1393 = vcmp.eq.s32.totalorder %v695, %v505
        %vm1394 = vcmp.eq.s32.totalorder %v695, %v506
        %vm1395 = vcmp.eq.s32.totalorder %v695, %v507
        %vm1396 = vcmp.eq.s32.totalorder %v695, %v508
        %vm1397 = vcmp.eq.s32.totalorder %v695, %v509
        %vm1398 = vcmp.eq.s32.totalorder %v695, %v510
        %vm1399 = vcmp.eq.s32.totalorder %v699, %v503
        %vm1400 = vcmp.eq.s32.totalorder %v699, %v504
        %vm1401 = vcmp.eq.s32.totalorder %v699, %v505
        %vm1402 = vcmp.eq.s32.totalorder %v699, %v506
        %vm1403 = vcmp.eq.s32.totalorder %v699, %v507
        %vm1404 = vcmp.eq.s32.totalorder %v699, %v508
        %vm1405 = vcmp.eq.s32.totalorder %v699, %v509
        %vm1406 = vcmp.eq.s32.totalorder %v699, %v510
        %vm1407 = vcmp.eq.s32.totalorder %v703, %v503
        %vm1408 = vcmp.eq.s32.totalorder %v703, %v504
        %vm1409 = vcmp.eq.s32.totalorder %v703, %v505
        %vm1410 = vcmp.eq.s32.totalorder %v703, %v506
        %vm1411 = vcmp.eq.s32.totalorder %v703, %v507
        %vm1412 = vcmp.eq.s32.totalorder %v703, %v508
        %vm1413 = vcmp.eq.s32.totalorder %v703, %v509
        %vm1414 = vcmp.eq.s32.totalorder %v703, %v510
        %vm1415 = vcmp.eq.s32.totalorder %v707, %v503
        %vm1416 = vcmp.eq.s32.totalorder %v707, %v504
        %vm1417 = vcmp.eq.s32.totalorder %v707, %v505
        %vm1418 = vcmp.eq.s32.totalorder %v707, %v506
        %vm1419 = vcmp.eq.s32.totalorder %v707, %v507
        %vm1420 = vcmp.eq.s32.totalorder %v707, %v508
        %vm1421 = vcmp.eq.s32.totalorder %v707, %v509
        %vm1422 = vcmp.eq.s32.totalorder %v707, %v510
        %vm1423 = vcmp.eq.s32.totalorder %v711, %v503
        %vm1424 = vcmp.eq.s32.totalorder %v711, %v504
        %vm1425 = vcmp.eq.s32.totalorder %v711, %v505
        %vm1426 = vcmp.eq.s32.totalorder %v711, %v506
        %vm1427 = vcmp.eq.s32.totalorder %v711, %v507
        %vm1428 = vcmp.eq.s32.totalorder %v711, %v508
        %vm1429 = vcmp.eq.s32.totalorder %v711, %v509
        %vm1430 = vcmp.eq.s32.totalorder %v711, %v510
        %vm1431 = vcmp.eq.s32.totalorder %v718, %v503
        %vm1432 = vcmp.eq.s32.totalorder %v718, %v504
        %vm1433 = vcmp.eq.s32.totalorder %v718, %v505
        %vm1434 = vcmp.eq.s32.totalorder %v718, %v506
        %vm1435 = vcmp.eq.s32.totalorder %v718, %v507
        %vm1436 = vcmp.eq.s32.totalorder %v718, %v508
        %vm1437 = vcmp.eq.s32.totalorder %v718, %v509
        %vm1438 = vcmp.eq.s32.totalorder %v718, %v510
        %vm1439 = vcmp.eq.s32.totalorder %v722, %v503
        %vm1440 = vcmp.eq.s32.totalorder %v722, %v504
        %vm1441 = vcmp.eq.s32.totalorder %v722, %v505
        %vm1442 = vcmp.eq.s32.totalorder %v722, %v506
        %vm1443 = vcmp.eq.s32.totalorder %v722, %v507
        %vm1444 = vcmp.eq.s32.totalorder %v722, %v508
        %vm1445 = vcmp.eq.s32.totalorder %v722, %v509
        %vm1446 = vcmp.eq.s32.totalorder %v722, %v510
        %vm1447 = vcmp.eq.s32.totalorder %v726, %v503
        %vm1448 = vcmp.eq.s32.totalorder %v726, %v504
        %vm1449 = vcmp.eq.s32.totalorder %v726, %v505
        %vm1450 = vcmp.eq.s32.totalorder %v726, %v506
        %vm1451 = vcmp.eq.s32.totalorder %v726, %v507
        %vm1452 = vcmp.eq.s32.totalorder %v726, %v508
        %vm1453 = vcmp.eq.s32.totalorder %v726, %v509
        %vm1454 = vcmp.eq.s32.totalorder %v726, %v510
        %vm1455 = vcmp.eq.s32.totalorder %v730, %v503
        %vm1456 = vcmp.eq.s32.totalorder %v730, %v504
        %vm1457 = vcmp.eq.s32.totalorder %v730, %v505
        %vm1458 = vcmp.eq.s32.totalorder %v730, %v506
        %vm1459 = vcmp.eq.s32.totalorder %v730, %v507
        %vm1460 = vcmp.eq.s32.totalorder %v730, %v508
        %vm1461 = vcmp.eq.s32.totalorder %v730, %v509
        %vm1462 = vcmp.eq.s32.totalorder %v730, %v510
        %vm1463 = vcmp.eq.s32.totalorder %v734, %v503
        %vm1464 = vcmp.eq.s32.totalorder %v734, %v504
        %vm1465 = vcmp.eq.s32.totalorder %v734, %v505
        %vm1466 = vcmp.eq.s32.totalorder %v734, %v506
        %vm1467 = vcmp.eq.s32.totalorder %v734, %v507
        %vm1468 = vcmp.eq.s32.totalorder %v734, %v508
        %vm1469 = vcmp.eq.s32.totalorder %v734, %v509
        %vm1470 = vcmp.eq.s32.totalorder %v734, %v510
        %vm1471 = vcmp.eq.s32.totalorder %v738, %v503
        %vm1472 = vcmp.eq.s32.totalorder %v738, %v504
        %vm1473 = vcmp.eq.s32.totalorder %v738, %v505
        %vm1474 = vcmp.eq.s32.totalorder %v738, %v506
        %vm1475 = vcmp.eq.s32.totalorder %v738, %v507
        %vm1476 = vcmp.eq.s32.totalorder %v738, %v508
        %vm1477 = vcmp.eq.s32.totalorder %v738, %v509
        %vm1478 = vcmp.eq.s32.totalorder %v738, %v510
        %vm1479 = vcmp.eq.s32.totalorder %v742, %v503
        %vm1480 = vcmp.eq.s32.totalorder %v742, %v504
        %vm1481 = vcmp.eq.s32.totalorder %v742, %v505
        %vm1482 = vcmp.eq.s32.totalorder %v742, %v506
        %vm1483 = vcmp.eq.s32.totalorder %v742, %v507
        %vm1484 = vcmp.eq.s32.totalorder %v742, %v508
        %vm1485 = vcmp.eq.s32.totalorder %v742, %v509
        %vm1486 = vcmp.eq.s32.totalorder %v742, %v510
        %vm1487 = vcmp.eq.s32.totalorder %v746, %v503
        %vm1488 = vcmp.eq.s32.totalorder %v746, %v504
        %vm1489 = vcmp.eq.s32.totalorder %v746, %v505
        %vm1490 = vcmp.eq.s32.totalorder %v746, %v506
        %vm1491 = vcmp.eq.s32.totalorder %v746, %v507
        %vm1492 = vcmp.eq.s32.totalorder %v746, %v508
        %vm1493 = vcmp.eq.s32.totalorder %v746, %v509
        %vm1494 = vcmp.eq.s32.totalorder %v746, %v510
        %vm1495 = vcmp.eq.s32.totalorder %v750, %v503
        %vm1496 = vcmp.eq.s32.totalorder %v750, %v504
        %vm1497 = vcmp.eq.s32.totalorder %v750, %v505
        %vm1498 = vcmp.eq.s32.totalorder %v750, %v506
        %vm1499 = vcmp.eq.s32.totalorder %v750, %v507
        %vm1500 = vcmp.eq.s32.totalorder %v750, %v508
        %vm1501 = vcmp.eq.s32.totalorder %v750, %v509
        %vm1502 = vcmp.eq.s32.totalorder %v750, %v510
        %vm1503 = vcmp.eq.s32.totalorder %v754, %v503
        %vm1504 = vcmp.eq.s32.totalorder %v754, %v504
        %vm1505 = vcmp.eq.s32.totalorder %v754, %v505
        %vm1506 = vcmp.eq.s32.totalorder %v754, %v506
        %vm1507 = vcmp.eq.s32.totalorder %v754, %v507
        %vm1508 = vcmp.eq.s32.totalorder %v754, %v508
        %vm1509 = vcmp.eq.s32.totalorder %v754, %v509
        %vm1510 = vcmp.eq.s32.totalorder %v754, %v510
        %vm1511 = vcmp.eq.s32.totalorder %v758, %v503
        %vm1512 = vcmp.eq.s32.totalorder %v758, %v504
        %vm1513 = vcmp.eq.s32.totalorder %v758, %v505
        %vm1514 = vcmp.eq.s32.totalorder %v758, %v506
        %vm1515 = vcmp.eq.s32.totalorder %v758, %v507
        %vm1516 = vcmp.eq.s32.totalorder %v758, %v508
        %vm1517 = vcmp.eq.s32.totalorder %v758, %v509
        %vm1518 = vcmp.eq.s32.totalorder %v758, %v510
        %vm1519 = vcmp.eq.s32.totalorder %v762, %v503
        %vm1520 = vcmp.eq.s32.totalorder %v762, %v504
        %vm1521 = vcmp.eq.s32.totalorder %v762, %v505
        %vm1522 = vcmp.eq.s32.totalorder %v762, %v506
        %vm1523 = vcmp.eq.s32.totalorder %v762, %v507
        %vm1524 = vcmp.eq.s32.totalorder %v762, %v508
        %vm1525 = vcmp.eq.s32.totalorder %v762, %v509
        %vm1526 = vcmp.eq.s32.totalorder %v762, %v510
        %vm1527 = vcmp.eq.s32.totalorder %v766, %v503
        %vm1528 = vcmp.eq.s32.totalorder %v766, %v504
        %vm1529 = vcmp.eq.s32.totalorder %v766, %v505
        %vm1530 = vcmp.eq.s32.totalorder %v766, %v506
        %vm1531 = vcmp.eq.s32.totalorder %v766, %v507
        %vm1532 = vcmp.eq.s32.totalorder %v766, %v508
        %vm1533 = vcmp.eq.s32.totalorder %v766, %v509
        %vm1534 = vcmp.eq.s32.totalorder %v766, %v510
        %vm1535 = vcmp.eq.s32.totalorder %v770, %v503
        %vm1536 = vcmp.eq.s32.totalorder %v770, %v504
        %vm1537 = vcmp.eq.s32.totalorder %v770, %v505
        %vm1538 = vcmp.eq.s32.totalorder %v770, %v506
        %vm1539 = vcmp.eq.s32.totalorder %v770, %v507
        %vm1540 = vcmp.eq.s32.totalorder %v770, %v508
        %vm1541 = vcmp.eq.s32.totalorder %v770, %v509
        %vm1542 = vcmp.eq.s32.totalorder %v770, %v510
        %vm1543 = vcmp.eq.s32.totalorder %v774, %v503
        %vm1544 = vcmp.eq.s32.totalorder %v774, %v504
        %vm1545 = vcmp.eq.s32.totalorder %v774, %v505
        %vm1546 = vcmp.eq.s32.totalorder %v774, %v506
        %vm1547 = vcmp.eq.s32.totalorder %v774, %v507
        %vm1548 = vcmp.eq.s32.totalorder %v774, %v508
        %vm1549 = vcmp.eq.s32.totalorder %v774, %v509
        %vm1550 = vcmp.eq.s32.totalorder %v774, %v510
        %vm1551 = vcmp.eq.s32.totalorder %v778, %v503
        %vm1552 = vcmp.eq.s32.totalorder %v778, %v504
        %vm1553 = vcmp.eq.s32.totalorder %v778, %v505
        %vm1554 = vcmp.eq.s32.totalorder %v778, %v506
        %vm1555 = vcmp.eq.s32.totalorder %v778, %v507
        %vm1556 = vcmp.eq.s32.totalorder %v778, %v508
        %vm1557 = vcmp.eq.s32.totalorder %v778, %v509
        %vm1558 = vcmp.eq.s32.totalorder %v778, %v510
        %vm1559 = vcmp.eq.s32.totalorder %v785, %v503
        %vm1560 = vcmp.eq.s32.totalorder %v785, %v504
        %vm1561 = vcmp.eq.s32.totalorder %v785, %v505
        %vm1562 = vcmp.eq.s32.totalorder %v785, %v506
        %vm1563 = vcmp.eq.s32.totalorder %v785, %v507
        %vm1564 = vcmp.eq.s32.totalorder %v785, %v508
        %vm1565 = vcmp.eq.s32.totalorder %v785, %v509
        %vm1566 = vcmp.eq.s32.totalorder %v785, %v510
        %vm1567 = vcmp.eq.s32.totalorder %v789, %v503
        %vm1568 = vcmp.eq.s32.totalorder %v789, %v504
        %vm1569 = vcmp.eq.s32.totalorder %v789, %v505
        %vm1570 = vcmp.eq.s32.totalorder %v789, %v506
        %vm1571 = vcmp.eq.s32.totalorder %v789, %v507
        %vm1572 = vcmp.eq.s32.totalorder %v789, %v508
        %vm1573 = vcmp.eq.s32.totalorder %v789, %v509
        %vm1574 = vcmp.eq.s32.totalorder %v789, %v510
        %vm1575 = vcmp.eq.s32.totalorder %v793, %v503
        %vm1576 = vcmp.eq.s32.totalorder %v793, %v504
        %vm1577 = vcmp.eq.s32.totalorder %v793, %v505
        %vm1578 = vcmp.eq.s32.totalorder %v793, %v506
        %vm1579 = vcmp.eq.s32.totalorder %v793, %v507
        %vm1580 = vcmp.eq.s32.totalorder %v793, %v508
        %vm1581 = vcmp.eq.s32.totalorder %v793, %v509
        %vm1582 = vcmp.eq.s32.totalorder %v793, %v510
        %vm1583 = vcmp.eq.s32.totalorder %v797, %v503
        %vm1584 = vcmp.eq.s32.totalorder %v797, %v504
        %vm1585 = vcmp.eq.s32.totalorder %v797, %v505
        %vm1586 = vcmp.eq.s32.totalorder %v797, %v506
        %vm1587 = vcmp.eq.s32.totalorder %v797, %v507
        %vm1588 = vcmp.eq.s32.totalorder %v797, %v508
        %vm1589 = vcmp.eq.s32.totalorder %v797, %v509
        %vm1590 = vcmp.eq.s32.totalorder %v797, %v510
        %vm1591 = vcmp.eq.s32.totalorder %v801, %v503
        %vm1592 = vcmp.eq.s32.totalorder %v801, %v504
        %vm1593 = vcmp.eq.s32.totalorder %v801, %v505
        %vm1594 = vcmp.eq.s32.totalorder %v801, %v506
        %vm1595 = vcmp.eq.s32.totalorder %v801, %v507
        %vm1596 = vcmp.eq.s32.totalorder %v801, %v508
        %vm1597 = vcmp.eq.s32.totalorder %v801, %v509
        %vm1598 = vcmp.eq.s32.totalorder %v801, %v510
        %vm1599 = vcmp.eq.s32.totalorder %v805, %v503
        %vm1600 = vcmp.eq.s32.totalorder %v805, %v504
        %vm1601 = vcmp.eq.s32.totalorder %v805, %v505
        %vm1602 = vcmp.eq.s32.totalorder %v805, %v506
        %vm1603 = vcmp.eq.s32.totalorder %v805, %v507
        %vm1604 = vcmp.eq.s32.totalorder %v805, %v508
        %vm1605 = vcmp.eq.s32.totalorder %v805, %v509
        %vm1606 = vcmp.eq.s32.totalorder %v805, %v510
        %vm1607 = vcmp.eq.s32.totalorder %v809, %v503
        %vm1608 = vcmp.eq.s32.totalorder %v809, %v504
        %vm1609 = vcmp.eq.s32.totalorder %v809, %v505
        %vm1610 = vcmp.eq.s32.totalorder %v809, %v506
        %vm1611 = vcmp.eq.s32.totalorder %v809, %v507
        %vm1612 = vcmp.eq.s32.totalorder %v809, %v508
        %vm1613 = vcmp.eq.s32.totalorder %v809, %v509
        %vm1614 = vcmp.eq.s32.totalorder %v809, %v510
        %vm1615 = vcmp.eq.s32.totalorder %v813, %v503
        %vm1616 = vcmp.eq.s32.totalorder %v813, %v504
        %vm1617 = vcmp.eq.s32.totalorder %v813, %v505
        %vm1618 = vcmp.eq.s32.totalorder %v813, %v506
        %vm1619 = vcmp.eq.s32.totalorder %v813, %v507
        %vm1620 = vcmp.eq.s32.totalorder %v813, %v508
        %vm1621 = vcmp.eq.s32.totalorder %v813, %v509
        %vm1622 = vcmp.eq.s32.totalorder %v813, %v510
        %vm1623 = vcmp.eq.s32.totalorder %v817, %v503
        %vm1624 = vcmp.eq.s32.totalorder %v817, %v504
        %vm1625 = vcmp.eq.s32.totalorder %v817, %v505
        %vm1626 = vcmp.eq.s32.totalorder %v817, %v506
        %vm1627 = vcmp.eq.s32.totalorder %v817, %v507
        %vm1628 = vcmp.eq.s32.totalorder %v817, %v508
        %vm1629 = vcmp.eq.s32.totalorder %v817, %v509
        %vm1630 = vcmp.eq.s32.totalorder %v817, %v510
        %vm1631 = vcmp.eq.s32.totalorder %v821, %v503
        %vm1632 = vcmp.eq.s32.totalorder %v821, %v504
        %vm1633 = vcmp.eq.s32.totalorder %v821, %v505
        %vm1634 = vcmp.eq.s32.totalorder %v821, %v506
        %vm1635 = vcmp.eq.s32.totalorder %v821, %v507
        %vm1636 = vcmp.eq.s32.totalorder %v821, %v508
        %vm1637 = vcmp.eq.s32.totalorder %v821, %v509
        %vm1638 = vcmp.eq.s32.totalorder %v821, %v510
        %vm1639 = vcmp.eq.s32.totalorder %v825, %v503
        %vm1640 = vcmp.eq.s32.totalorder %v825, %v504
        %vm1641 = vcmp.eq.s32.totalorder %v825, %v505
        %vm1642 = vcmp.eq.s32.totalorder %v825, %v506
        %vm1643 = vcmp.eq.s32.totalorder %v825, %v507
        %vm1644 = vcmp.eq.s32.totalorder %v825, %v508
        %vm1645 = vcmp.eq.s32.totalorder %v825, %v509
        %vm1646 = vcmp.eq.s32.totalorder %v825, %v510
        %vm1647 = vcmp.eq.s32.totalorder %v829, %v503
        %vm1648 = vcmp.eq.s32.totalorder %v829, %v504
        %vm1649 = vcmp.eq.s32.totalorder %v829, %v505
        %vm1650 = vcmp.eq.s32.totalorder %v829, %v506
        %vm1651 = vcmp.eq.s32.totalorder %v829, %v507
        %vm1652 = vcmp.eq.s32.totalorder %v829, %v508
        %vm1653 = vcmp.eq.s32.totalorder %v829, %v509
        %vm1654 = vcmp.eq.s32.totalorder %v829, %v510
        %vm1655 = vcmp.eq.s32.totalorder %v833, %v503
        %vm1656 = vcmp.eq.s32.totalorder %v833, %v504
        %vm1657 = vcmp.eq.s32.totalorder %v833, %v505
        %vm1658 = vcmp.eq.s32.totalorder %v833, %v506
        %vm1659 = vcmp.eq.s32.totalorder %v833, %v507
        %vm1660 = vcmp.eq.s32.totalorder %v833, %v508
        %vm1661 = vcmp.eq.s32.totalorder %v833, %v509
        %vm1662 = vcmp.eq.s32.totalorder %v833, %v510
        %vm1663 = vcmp.eq.s32.totalorder %v837, %v503
        %vm1664 = vcmp.eq.s32.totalorder %v837, %v504
        %vm1665 = vcmp.eq.s32.totalorder %v837, %v505
        %vm1666 = vcmp.eq.s32.totalorder %v837, %v506
        %vm1667 = vcmp.eq.s32.totalorder %v837, %v507
        %vm1668 = vcmp.eq.s32.totalorder %v837, %v508
        %vm1669 = vcmp.eq.s32.totalorder %v837, %v509
        %vm1670 = vcmp.eq.s32.totalorder %v837, %v510
        %vm1671 = vcmp.eq.s32.totalorder %v841, %v503
        %vm1672 = vcmp.eq.s32.totalorder %v841, %v504
        %vm1673 = vcmp.eq.s32.totalorder %v841, %v505
        %vm1674 = vcmp.eq.s32.totalorder %v841, %v506
        %vm1675 = vcmp.eq.s32.totalorder %v841, %v507
        %vm1676 = vcmp.eq.s32.totalorder %v841, %v508
        %vm1677 = vcmp.eq.s32.totalorder %v841, %v509
        %vm1678 = vcmp.eq.s32.totalorder %v841, %v510
        %vm1679 = vcmp.eq.s32.totalorder %v845, %v503
        %vm1680 = vcmp.eq.s32.totalorder %v845, %v504
        %vm1681 = vcmp.eq.s32.totalorder %v845, %v505
        %vm1682 = vcmp.eq.s32.totalorder %v845, %v506
        %vm1683 = vcmp.eq.s32.totalorder %v845, %v507
        %vm1684 = vcmp.eq.s32.totalorder %v845, %v508
        %vm1685 = vcmp.eq.s32.totalorder %v845, %v509
        %vm1686 = vcmp.eq.s32.totalorder %v845, %v510
        %vm1687 = vcmp.eq.s32.totalorder %v852, %v503
        %vm1688 = vcmp.eq.s32.totalorder %v852, %v504
        %vm1689 = vcmp.eq.s32.totalorder %v852, %v505
        %vm1690 = vcmp.eq.s32.totalorder %v852, %v506
        %vm1691 = vcmp.eq.s32.totalorder %v852, %v507
        %vm1692 = vcmp.eq.s32.totalorder %v852, %v508
        %vm1693 = vcmp.eq.s32.totalorder %v852, %v509
        %vm1694 = vcmp.eq.s32.totalorder %v852, %v510
        %vm1695 = vcmp.eq.s32.totalorder %v856, %v503
        %vm1696 = vcmp.eq.s32.totalorder %v856, %v504
        %vm1697 = vcmp.eq.s32.totalorder %v856, %v505
        %vm1698 = vcmp.eq.s32.totalorder %v856, %v506
        %vm1699 = vcmp.eq.s32.totalorder %v856, %v507
        %vm1700 = vcmp.eq.s32.totalorder %v856, %v508
        %vm1701 = vcmp.eq.s32.totalorder %v856, %v509
        %vm1702 = vcmp.eq.s32.totalorder %v856, %v510
        %vm1703 = vcmp.eq.s32.totalorder %v860, %v503
        %vm1704 = vcmp.eq.s32.totalorder %v860, %v504
        %vm1705 = vcmp.eq.s32.totalorder %v860, %v505
        %vm1706 = vcmp.eq.s32.totalorder %v860, %v506
        %vm1707 = vcmp.eq.s32.totalorder %v860, %v507
        %vm1708 = vcmp.eq.s32.totalorder %v860, %v508
        %vm1709 = vcmp.eq.s32.totalorder %v860, %v509
        %vm1710 = vcmp.eq.s32.totalorder %v860, %v510
        %vm1711 = vcmp.eq.s32.totalorder %v864, %v503
        %vm1712 = vcmp.eq.s32.totalorder %v864, %v504
        %vm1713 = vcmp.eq.s32.totalorder %v864, %v505
        %vm1714 = vcmp.eq.s32.totalorder %v864, %v506
        %vm1715 = vcmp.eq.s32.totalorder %v864, %v507
        %vm1716 = vcmp.eq.s32.totalorder %v864, %v508
        %vm1717 = vcmp.eq.s32.totalorder %v864, %v509
        %vm1718 = vcmp.eq.s32.totalorder %v864, %v510
        %vm1719 = vcmp.eq.s32.totalorder %v868, %v503
        %vm1720 = vcmp.eq.s32.totalorder %v868, %v504
        %vm1721 = vcmp.eq.s32.totalorder %v868, %v505
        %vm1722 = vcmp.eq.s32.totalorder %v868, %v506
        %vm1723 = vcmp.eq.s32.totalorder %v868, %v507
        %vm1724 = vcmp.eq.s32.totalorder %v868, %v508
        %vm1725 = vcmp.eq.s32.totalorder %v868, %v509
        %vm1726 = vcmp.eq.s32.totalorder %v868, %v510
        %vm1727 = vcmp.eq.s32.totalorder %v872, %v503
        %vm1728 = vcmp.eq.s32.totalorder %v872, %v504
        %vm1729 = vcmp.eq.s32.totalorder %v872, %v505
        %vm1730 = vcmp.eq.s32.totalorder %v872, %v506
        %vm1731 = vcmp.eq.s32.totalorder %v872, %v507
        %vm1732 = vcmp.eq.s32.totalorder %v872, %v508
        %vm1733 = vcmp.eq.s32.totalorder %v872, %v509
        %vm1734 = vcmp.eq.s32.totalorder %v872, %v510
        %vm1735 = vcmp.eq.s32.totalorder %v876, %v503
        %vm1736 = vcmp.eq.s32.totalorder %v876, %v504
        %vm1737 = vcmp.eq.s32.totalorder %v876, %v505
        %vm1738 = vcmp.eq.s32.totalorder %v876, %v506
        %vm1739 = vcmp.eq.s32.totalorder %v876, %v507
        %vm1740 = vcmp.eq.s32.totalorder %v876, %v508
        %vm1741 = vcmp.eq.s32.totalorder %v876, %v509
        %vm1742 = vcmp.eq.s32.totalorder %v876, %v510
        %vm1743 = vcmp.eq.s32.totalorder %v880, %v503
        %vm1744 = vcmp.eq.s32.totalorder %v880, %v504
        %vm1745 = vcmp.eq.s32.totalorder %v880, %v505
        %vm1746 = vcmp.eq.s32.totalorder %v880, %v506
        %vm1747 = vcmp.eq.s32.totalorder %v880, %v507
        %vm1748 = vcmp.eq.s32.totalorder %v880, %v508
        %vm1749 = vcmp.eq.s32.totalorder %v880, %v509
        %vm1750 = vcmp.eq.s32.totalorder %v880, %v510
        %vm1751 = vcmp.eq.s32.totalorder %v884, %v503
        %vm1752 = vcmp.eq.s32.totalorder %v884, %v504
        %vm1753 = vcmp.eq.s32.totalorder %v884, %v505
        %vm1754 = vcmp.eq.s32.totalorder %v884, %v506
        %vm1755 = vcmp.eq.s32.totalorder %v884, %v507
        %vm1756 = vcmp.eq.s32.totalorder %v884, %v508
        %vm1757 = vcmp.eq.s32.totalorder %v884, %v509
        %vm1758 = vcmp.eq.s32.totalorder %v884, %v510
        %vm1759 = vcmp.eq.s32.totalorder %v888, %v503
        %vm1760 = vcmp.eq.s32.totalorder %v888, %v504
        %vm1761 = vcmp.eq.s32.totalorder %v888, %v505
        %vm1762 = vcmp.eq.s32.totalorder %v888, %v506
        %vm1763 = vcmp.eq.s32.totalorder %v888, %v507
        %vm1764 = vcmp.eq.s32.totalorder %v888, %v508
        %vm1765 = vcmp.eq.s32.totalorder %v888, %v509
        %vm1766 = vcmp.eq.s32.totalorder %v888, %v510
        %vm1767 = vcmp.eq.s32.totalorder %v892, %v503
        %vm1768 = vcmp.eq.s32.totalorder %v892, %v504
        %vm1769 = vcmp.eq.s32.totalorder %v892, %v505
        %vm1770 = vcmp.eq.s32.totalorder %v892, %v506
        %vm1771 = vcmp.eq.s32.totalorder %v892, %v507
        %vm1772 = vcmp.eq.s32.totalorder %v892, %v508
        %vm1773 = vcmp.eq.s32.totalorder %v892, %v509
        %vm1774 = vcmp.eq.s32.totalorder %v892, %v510
        %vm1775 = vcmp.eq.s32.totalorder %v896, %v503
        %vm1776 = vcmp.eq.s32.totalorder %v896, %v504
        %vm1777 = vcmp.eq.s32.totalorder %v896, %v505
        %vm1778 = vcmp.eq.s32.totalorder %v896, %v506
        %vm1779 = vcmp.eq.s32.totalorder %v896, %v507
        %vm1780 = vcmp.eq.s32.totalorder %v896, %v508
        %vm1781 = vcmp.eq.s32.totalorder %v896, %v509
        %vm1782 = vcmp.eq.s32.totalorder %v896, %v510
        %vm1783 = vcmp.eq.s32.totalorder %v900, %v503
        %vm1784 = vcmp.eq.s32.totalorder %v900, %v504
        %vm1785 = vcmp.eq.s32.totalorder %v900, %v505
        %vm1786 = vcmp.eq.s32.totalorder %v900, %v506
        %vm1787 = vcmp.eq.s32.totalorder %v900, %v507
        %vm1788 = vcmp.eq.s32.totalorder %v900, %v508
        %vm1789 = vcmp.eq.s32.totalorder %v900, %v509
        %vm1790 = vcmp.eq.s32.totalorder %v900, %v510
        %vm1791 = vcmp.eq.s32.totalorder %v904, %v503
        %vm1792 = vcmp.eq.s32.totalorder %v904, %v504
        %vm1793 = vcmp.eq.s32.totalorder %v904, %v505
        %vm1794 = vcmp.eq.s32.totalorder %v904, %v506
        %vm1795 = vcmp.eq.s32.totalorder %v904, %v507
        %vm1796 = vcmp.eq.s32.totalorder %v904, %v508
        %vm1797 = vcmp.eq.s32.totalorder %v904, %v509
        %vm1798 = vcmp.eq.s32.totalorder %v904, %v510
        %vm1799 = vcmp.eq.s32.totalorder %v908, %v503
        %vm1800 = vcmp.eq.s32.totalorder %v908, %v504
        %vm1801 = vcmp.eq.s32.totalorder %v908, %v505
        %vm1802 = vcmp.eq.s32.totalorder %v908, %v506
        %vm1803 = vcmp.eq.s32.totalorder %v908, %v507
        %vm1804 = vcmp.eq.s32.totalorder %v908, %v508
        %vm1805 = vcmp.eq.s32.totalorder %v908, %v509
        %vm1806 = vcmp.eq.s32.totalorder %v908, %v510
        %vm1807 = vcmp.eq.s32.totalorder %v912, %v503
        %vm1808 = vcmp.eq.s32.totalorder %v912, %v504
        %vm1809 = vcmp.eq.s32.totalorder %v912, %v505
        %vm1810 = vcmp.eq.s32.totalorder %v912, %v506
        %vm1811 = vcmp.eq.s32.totalorder %v912, %v507
        %vm1812 = vcmp.eq.s32.totalorder %v912, %v508
        %vm1813 = vcmp.eq.s32.totalorder %v912, %v509
        %vm1814 = vcmp.eq.s32.totalorder %v912, %v510
        %vm1815 = vcmp.eq.s32.totalorder %v919, %v503
        %vm1816 = vcmp.eq.s32.totalorder %v919, %v504
        %vm1817 = vcmp.eq.s32.totalorder %v919, %v505
        %vm1818 = vcmp.eq.s32.totalorder %v919, %v506
        %vm1819 = vcmp.eq.s32.totalorder %v919, %v507
        %vm1820 = vcmp.eq.s32.totalorder %v919, %v508
        %vm1821 = vcmp.eq.s32.totalorder %v919, %v509
        %vm1822 = vcmp.eq.s32.totalorder %v919, %v510
        %vm1823 = vcmp.eq.s32.totalorder %v923, %v503
        %vm1824 = vcmp.eq.s32.totalorder %v923, %v504
        %vm1825 = vcmp.eq.s32.totalorder %v923, %v505
        %vm1826 = vcmp.eq.s32.totalorder %v923, %v506
        %vm1827 = vcmp.eq.s32.totalorder %v923, %v507
        %vm1828 = vcmp.eq.s32.totalorder %v923, %v508
        %vm1829 = vcmp.eq.s32.totalorder %v923, %v509
        %vm1830 = vcmp.eq.s32.totalorder %v923, %v510
        %vm1831 = vcmp.eq.s32.totalorder %v927, %v503
        %vm1832 = vcmp.eq.s32.totalorder %v927, %v504
        %vm1833 = vcmp.eq.s32.totalorder %v927, %v505
        %vm1834 = vcmp.eq.s32.totalorder %v927, %v506
        %vm1835 = vcmp.eq.s32.totalorder %v927, %v507
        %vm1836 = vcmp.eq.s32.totalorder %v927, %v508
        %vm1837 = vcmp.eq.s32.totalorder %v927, %v509
        %vm1838 = vcmp.eq.s32.totalorder %v927, %v510
        %vm1839 = vcmp.eq.s32.totalorder %v931, %v503
        %vm1840 = vcmp.eq.s32.totalorder %v931, %v504
        %vm1841 = vcmp.eq.s32.totalorder %v931, %v505
        %vm1842 = vcmp.eq.s32.totalorder %v931, %v506
        %vm1843 = vcmp.eq.s32.totalorder %v931, %v507
        %vm1844 = vcmp.eq.s32.totalorder %v931, %v508
        %vm1845 = vcmp.eq.s32.totalorder %v931, %v509
        %vm1846 = vcmp.eq.s32.totalorder %v931, %v510
        %vm1847 = vcmp.eq.s32.totalorder %v935, %v503
        %vm1848 = vcmp.eq.s32.totalorder %v935, %v504
        %vm1849 = vcmp.eq.s32.totalorder %v935, %v505
        %vm1850 = vcmp.eq.s32.totalorder %v935, %v506
        %vm1851 = vcmp.eq.s32.totalorder %v935, %v507
        %vm1852 = vcmp.eq.s32.totalorder %v935, %v508
        %vm1853 = vcmp.eq.s32.totalorder %v935, %v509
        %vm1854 = vcmp.eq.s32.totalorder %v935, %v510
        %vm1855 = vcmp.eq.s32.totalorder %v939, %v503
        %vm1856 = vcmp.eq.s32.totalorder %v939, %v504
        %vm1857 = vcmp.eq.s32.totalorder %v939, %v505
        %vm1858 = vcmp.eq.s32.totalorder %v939, %v506
        %vm1859 = vcmp.eq.s32.totalorder %v939, %v507
        %vm1860 = vcmp.eq.s32.totalorder %v939, %v508
        %vm1861 = vcmp.eq.s32.totalorder %v939, %v509
        %vm1862 = vcmp.eq.s32.totalorder %v939, %v510
        %vm1863 = vcmp.eq.s32.totalorder %v943, %v503
        %vm1864 = vcmp.eq.s32.totalorder %v943, %v504
        %vm1865 = vcmp.eq.s32.totalorder %v943, %v505
        %vm1866 = vcmp.eq.s32.totalorder %v943, %v506
        %vm1867 = vcmp.eq.s32.totalorder %v943, %v507
        %vm1868 = vcmp.eq.s32.totalorder %v943, %v508
        %vm1869 = vcmp.eq.s32.totalorder %v943, %v509
        %vm1870 = vcmp.eq.s32.totalorder %v943, %v510
        %vm1871 = vcmp.eq.s32.totalorder %v947, %v503
        %vm1872 = vcmp.eq.s32.totalorder %v947, %v504
        %vm1873 = vcmp.eq.s32.totalorder %v947, %v505
        %vm1874 = vcmp.eq.s32.totalorder %v947, %v506
        %vm1875 = vcmp.eq.s32.totalorder %v947, %v507
        %vm1876 = vcmp.eq.s32.totalorder %v947, %v508
        %vm1877 = vcmp.eq.s32.totalorder %v947, %v509
        %vm1878 = vcmp.eq.s32.totalorder %v947, %v510
        %vm1879 = vcmp.eq.s32.totalorder %v951, %v503
        %vm1880 = vcmp.eq.s32.totalorder %v951, %v504
        %vm1881 = vcmp.eq.s32.totalorder %v951, %v505
        %vm1882 = vcmp.eq.s32.totalorder %v951, %v506
        %vm1883 = vcmp.eq.s32.totalorder %v951, %v507
        %vm1884 = vcmp.eq.s32.totalorder %v951, %v508
        %vm1885 = vcmp.eq.s32.totalorder %v951, %v509
        %vm1886 = vcmp.eq.s32.totalorder %v951, %v510
        %vm1887 = vcmp.eq.s32.totalorder %v955, %v503
        %vm1888 = vcmp.eq.s32.totalorder %v955, %v504
        %vm1889 = vcmp.eq.s32.totalorder %v955, %v505
        %vm1890 = vcmp.eq.s32.totalorder %v955, %v506
        %vm1891 = vcmp.eq.s32.totalorder %v955, %v507
        %vm1892 = vcmp.eq.s32.totalorder %v955, %v508
        %vm1893 = vcmp.eq.s32.totalorder %v955, %v509
        %vm1894 = vcmp.eq.s32.totalorder %v955, %v510
        %vm1895 = vcmp.eq.s32.totalorder %v959, %v503
        %vm1896 = vcmp.eq.s32.totalorder %v959, %v504
        %vm1897 = vcmp.eq.s32.totalorder %v959, %v505
        %vm1898 = vcmp.eq.s32.totalorder %v959, %v506
        %vm1899 = vcmp.eq.s32.totalorder %v959, %v507
        %vm1900 = vcmp.eq.s32.totalorder %v959, %v508
        %vm1901 = vcmp.eq.s32.totalorder %v959, %v509
        %vm1902 = vcmp.eq.s32.totalorder %v959, %v510
        %vm1903 = vcmp.eq.s32.totalorder %v963, %v503
        %vm1904 = vcmp.eq.s32.totalorder %v963, %v504
        %vm1905 = vcmp.eq.s32.totalorder %v963, %v505
        %vm1906 = vcmp.eq.s32.totalorder %v963, %v506
        %vm1907 = vcmp.eq.s32.totalorder %v963, %v507
        %vm1908 = vcmp.eq.s32.totalorder %v963, %v508
        %vm1909 = vcmp.eq.s32.totalorder %v963, %v509
        %vm1910 = vcmp.eq.s32.totalorder %v963, %v510
        %vm1911 = vcmp.eq.s32.totalorder %v967, %v503
        %vm1912 = vcmp.eq.s32.totalorder %v967, %v504
        %vm1913 = vcmp.eq.s32.totalorder %v967, %v505
        %vm1914 = vcmp.eq.s32.totalorder %v967, %v506
        %vm1915 = vcmp.eq.s32.totalorder %v967, %v507
        %vm1916 = vcmp.eq.s32.totalorder %v967, %v508
        %vm1917 = vcmp.eq.s32.totalorder %v967, %v509
        %vm1918 = vcmp.eq.s32.totalorder %v967, %v510
        %vm1919 = vcmp.eq.s32.totalorder %v971, %v503
        %vm1920 = vcmp.eq.s32.totalorder %v971, %v504
        %vm1921 = vcmp.eq.s32.totalorder %v971, %v505
        %vm1922 = vcmp.eq.s32.totalorder %v971, %v506
        %vm1923 = vcmp.eq.s32.totalorder %v971, %v507
        %vm1924 = vcmp.eq.s32.totalorder %v971, %v508
        %vm1925 = vcmp.eq.s32.totalorder %v971, %v509
        %vm1926 = vcmp.eq.s32.totalorder %v971, %v510
        %vm1927 = vcmp.eq.s32.totalorder %v975, %v503
        %vm1928 = vcmp.eq.s32.totalorder %v975, %v504
        %vm1929 = vcmp.eq.s32.totalorder %v975, %v505
        %vm1930 = vcmp.eq.s32.totalorder %v975, %v506
        %vm1931 = vcmp.eq.s32.totalorder %v975, %v507
        %vm1932 = vcmp.eq.s32.totalorder %v975, %v508
        %vm1933 = vcmp.eq.s32.totalorder %v975, %v509
        %vm1934 = vcmp.eq.s32.totalorder %v975, %v510
        %vm1935 = vcmp.eq.s32.totalorder %v979, %v503
        %vm1936 = vcmp.eq.s32.totalorder %v979, %v504
        %vm1937 = vcmp.eq.s32.totalorder %v979, %v505
        %vm1938 = vcmp.eq.s32.totalorder %v979, %v506
        %vm1939 = vcmp.eq.s32.totalorder %v979, %v507
        %vm1940 = vcmp.eq.s32.totalorder %v979, %v508
        %vm1941 = vcmp.eq.s32.totalorder %v979, %v509
        %vm1942 = vcmp.eq.s32.totalorder %v979, %v510
        %vm1943 = vcmp.eq.s32.totalorder %v986, %v503
        %vm1944 = vcmp.eq.s32.totalorder %v986, %v504
        %vm1945 = vcmp.eq.s32.totalorder %v986, %v505
        %vm1946 = vcmp.eq.s32.totalorder %v986, %v506
        %vm1947 = vcmp.eq.s32.totalorder %v986, %v507
        %vm1948 = vcmp.eq.s32.totalorder %v986, %v508
        %vm1949 = vcmp.eq.s32.totalorder %v986, %v509
        %vm1950 = vcmp.eq.s32.totalorder %v986, %v510
        %vm1951 = vcmp.eq.s32.totalorder %v990, %v503
        %vm1952 = vcmp.eq.s32.totalorder %v990, %v504
        %vm1953 = vcmp.eq.s32.totalorder %v990, %v505
        %vm1954 = vcmp.eq.s32.totalorder %v990, %v506
        %vm1955 = vcmp.eq.s32.totalorder %v990, %v507
        %vm1956 = vcmp.eq.s32.totalorder %v990, %v508
        %vm1957 = vcmp.eq.s32.totalorder %v990, %v509
        %vm1958 = vcmp.eq.s32.totalorder %v990, %v510
        %vm1959 = vcmp.eq.s32.totalorder %v994, %v503
        %vm1960 = vcmp.eq.s32.totalorder %v994, %v504
        %vm1961 = vcmp.eq.s32.totalorder %v994, %v505
        %vm1962 = vcmp.eq.s32.totalorder %v994, %v506
        %vm1963 = vcmp.eq.s32.totalorder %v994, %v507
        %vm1964 = vcmp.eq.s32.totalorder %v994, %v508
        %vm1965 = vcmp.eq.s32.totalorder %v994, %v509
        %vm1966 = vcmp.eq.s32.totalorder %v994, %v510
        %vm1967 = vcmp.eq.s32.totalorder %v998, %v503
        %vm1968 = vcmp.eq.s32.totalorder %v998, %v504
        %vm1969 = vcmp.eq.s32.totalorder %v998, %v505
        %vm1970 = vcmp.eq.s32.totalorder %v998, %v506
        %vm1971 = vcmp.eq.s32.totalorder %v998, %v507
        %vm1972 = vcmp.eq.s32.totalorder %v998, %v508
        %vm1973 = vcmp.eq.s32.totalorder %v998, %v509
        %vm1974 = vcmp.eq.s32.totalorder %v998, %v510
        %vm1975 = vcmp.eq.s32.totalorder %v1002, %v503
        %vm1976 = vcmp.eq.s32.totalorder %v1002, %v504
        %vm1977 = vcmp.eq.s32.totalorder %v1002, %v505
        %vm1978 = vcmp.eq.s32.totalorder %v1002, %v506
        %vm1979 = vcmp.eq.s32.totalorder %v1002, %v507
        %vm1980 = vcmp.eq.s32.totalorder %v1002, %v508
        %vm1981 = vcmp.eq.s32.totalorder %v1002, %v509
        %vm1982 = vcmp.eq.s32.totalorder %v1002, %v510
        %vm1983 = vcmp.eq.s32.totalorder %v1006, %v503
        %vm1984 = vcmp.eq.s32.totalorder %v1006, %v504
        %vm1985 = vcmp.eq.s32.totalorder %v1006, %v505
        %vm1986 = vcmp.eq.s32.totalorder %v1006, %v506
        %vm1987 = vcmp.eq.s32.totalorder %v1006, %v507
        %vm1988 = vcmp.eq.s32.totalorder %v1006, %v508
        %vm1989 = vcmp.eq.s32.totalorder %v1006, %v509
        %vm1990 = vcmp.eq.s32.totalorder %v1006, %v510
        %vm1991 = vcmp.eq.s32.totalorder %v1010, %v503
        %vm1992 = vcmp.eq.s32.totalorder %v1010, %v504
        %vm1993 = vcmp.eq.s32.totalorder %v1010, %v505
        %vm1994 = vcmp.eq.s32.totalorder %v1010, %v506
        %vm1995 = vcmp.eq.s32.totalorder %v1010, %v507
        %vm1996 = vcmp.eq.s32.totalorder %v1010, %v508
        %vm1997 = vcmp.eq.s32.totalorder %v1010, %v509
        %vm1998 = vcmp.eq.s32.totalorder %v1010, %v510
        %vm1999 = vcmp.eq.s32.totalorder %v1014, %v503
        %vm2000 = vcmp.eq.s32.totalorder %v1014, %v504
        %vm2001 = vcmp.eq.s32.totalorder %v1014, %v505
        %vm2002 = vcmp.eq.s32.totalorder %v1014, %v506
        %vm2003 = vcmp.eq.s32.totalorder %v1014, %v507
        %vm2004 = vcmp.eq.s32.totalorder %v1014, %v508
        %vm2005 = vcmp.eq.s32.totalorder %v1014, %v509
        %vm2006 = vcmp.eq.s32.totalorder %v1014, %v510
        %vm2007 = vcmp.eq.s32.totalorder %v1018, %v503
        %vm2008 = vcmp.eq.s32.totalorder %v1018, %v504
        %vm2009 = vcmp.eq.s32.totalorder %v1018, %v505
        %vm2010 = vcmp.eq.s32.totalorder %v1018, %v506
        %vm2011 = vcmp.eq.s32.totalorder %v1018, %v507
        %vm2012 = vcmp.eq.s32.totalorder %v1018, %v508
        %vm2013 = vcmp.eq.s32.totalorder %v1018, %v509
        %vm2014 = vcmp.eq.s32.totalorder %v1018, %v510
        %vm2015 = vcmp.eq.s32.totalorder %v1022, %v503
        %vm2016 = vcmp.eq.s32.totalorder %v1022, %v504
        %vm2017 = vcmp.eq.s32.totalorder %v1022, %v505
        %vm2018 = vcmp.eq.s32.totalorder %v1022, %v506
        %vm2019 = vcmp.eq.s32.totalorder %v1022, %v507
        %vm2020 = vcmp.eq.s32.totalorder %v1022, %v508
        %vm2021 = vcmp.eq.s32.totalorder %v1022, %v509
        %vm2022 = vcmp.eq.s32.totalorder %v1022, %v510
        %vm2023 = vcmp.eq.s32.totalorder %v1026, %v503
        %vm2024 = vcmp.eq.s32.totalorder %v1026, %v504
        %vm2025 = vcmp.eq.s32.totalorder %v1026, %v505
        %vm2026 = vcmp.eq.s32.totalorder %v1026, %v506
        %vm2027 = vcmp.eq.s32.totalorder %v1026, %v507
        %vm2028 = vcmp.eq.s32.totalorder %v1026, %v508
        %vm2029 = vcmp.eq.s32.totalorder %v1026, %v509
        %vm2030 = vcmp.eq.s32.totalorder %v1026, %v510
        %vm2031 = vcmp.eq.s32.totalorder %v1030, %v503
        %vm2032 = vcmp.eq.s32.totalorder %v1030, %v504
        %vm2033 = vcmp.eq.s32.totalorder %v1030, %v505
        %vm2034 = vcmp.eq.s32.totalorder %v1030, %v506
        %vm2035 = vcmp.eq.s32.totalorder %v1030, %v507
        %vm2036 = vcmp.eq.s32.totalorder %v1030, %v508
        %vm2037 = vcmp.eq.s32.totalorder %v1030, %v509
        %vm2038 = vcmp.eq.s32.totalorder %v1030, %v510
        %vm2039 = vcmp.eq.s32.totalorder %v1034, %v503
        %vm2040 = vcmp.eq.s32.totalorder %v1034, %v504
        %vm2041 = vcmp.eq.s32.totalorder %v1034, %v505
        %vm2042 = vcmp.eq.s32.totalorder %v1034, %v506
        %vm2043 = vcmp.eq.s32.totalorder %v1034, %v507
        %vm2044 = vcmp.eq.s32.totalorder %v1034, %v508
        %vm2045 = vcmp.eq.s32.totalorder %v1034, %v509
        %vm2046 = vcmp.eq.s32.totalorder %v1034, %v510
        %vm2047 = vcmp.eq.s32.totalorder %v1038, %v503
        %vm2048 = vcmp.eq.s32.totalorder %v1038, %v504
        %vm2049 = vcmp.eq.s32.totalorder %v1038, %v505
        %vm2050 = vcmp.eq.s32.totalorder %v1038, %v506
        %vm2051 = vcmp.eq.s32.totalorder %v1038, %v507
        %vm2052 = vcmp.eq.s32.totalorder %v1038, %v508
        %vm2053 = vcmp.eq.s32.totalorder %v1038, %v509
        %vm2054 = vcmp.eq.s32.totalorder %v1038, %v510
        %vm2055 = vcmp.eq.s32.totalorder %v1042, %v503
        %vm2056 = vcmp.eq.s32.totalorder %v1042, %v504
        %vm2057 = vcmp.eq.s32.totalorder %v1042, %v505
        %vm2058 = vcmp.eq.s32.totalorder %v1042, %v506
        %vm2059 = vcmp.eq.s32.totalorder %v1042, %v507
        %vm2060 = vcmp.eq.s32.totalorder %v1042, %v508
        %vm2061 = vcmp.eq.s32.totalorder %v1042, %v509
        %vm2062 = vcmp.eq.s32.totalorder %v1042, %v510
        %vm2063 = vcmp.eq.s32.totalorder %v1046, %v503
        %vm2064 = vcmp.eq.s32.totalorder %v1046, %v504
        %vm2065 = vcmp.eq.s32.totalorder %v1046, %v505
        %vm2066 = vcmp.eq.s32.totalorder %v1046, %v506
        %vm2067 = vcmp.eq.s32.totalorder %v1046, %v507
        %vm2068 = vcmp.eq.s32.totalorder %v1046, %v508
        %vm2069 = vcmp.eq.s32.totalorder %v1046, %v509
        %vm2070 = vcmp.eq.s32.totalorder %v1046, %v510
        %v2071 = vsel %vm1047, 1, 0
        %v2072 = vsel %vm1048, 1, 0
        %v2073 = vsel %vm1049, 1, 0
        %v2074 = vsel %vm1050, 1, 0
        %v2075 = vsel %vm1051, 1, 0
        %v2076 = vsel %vm1052, 1, 0
        %v2077 = vsel %vm1053, 1, 0
        %v2078 = vsel %vm1054, 1, 0
        %v2079 = vsel %vm1055, 1, 0
        %v2080 = vsel %vm1056, 1, 0
        %v2081 = vsel %vm1057, 1, 0
        %v2082 = vsel %vm1058, 1, 0
        %v2083 = vsel %vm1059, 1, 0
        %v2084 = vsel %vm1060, 1, 0
        %v2085 = vsel %vm1061, 1, 0
        %v2086 = vsel %vm1062, 1, 0
        %v2087 = vsel %vm1063, 1, 0
        %v2088 = vsel %vm1064, 1, 0
        %v2089 = vsel %vm1065, 1, 0
        %v2090 = vsel %vm1066, 1, 0
        %v2091 = vsel %vm1067, 1, 0
        %v2092 = vsel %vm1068, 1, 0
        %v2093 = vsel %vm1069, 1, 0
        %v2094 = vsel %vm1070, 1, 0
        %v2095 = vsel %vm1071, 1, 0
        %v2096 = vsel %vm1072, 1, 0
        %v2097 = vsel %vm1073, 1, 0
        %v2098 = vsel %vm1074, 1, 0
        %v2099 = vsel %vm1075, 1, 0
        %v2100 = vsel %vm1076, 1, 0
        %v2101 = vsel %vm1077, 1, 0
        %v2102 = vsel %vm1078, 1, 0
        %v2103 = vsel %vm1079, 1, 0
        %v2104 = vsel %vm1080, 1, 0
        %v2105 = vsel %vm1081, 1, 0
        %v2106 = vsel %vm1082, 1, 0
        %v2107 = vsel %vm1083, 1, 0
        %v2108 = vsel %vm1084, 1, 0
        %v2109 = vsel %vm1085, 1, 0
        %v2110 = vsel %vm1086, 1, 0
        %v2111 = vsel %vm1087, 1, 0
        %v2112 = vsel %vm1088, 1, 0
        %v2113 = vsel %vm1089, 1, 0
        %v2114 = vsel %vm1090, 1, 0
        %v2115 = vsel %vm1091, 1, 0
        %v2116 = vsel %vm1092, 1, 0
        %v2117 = vsel %vm1093, 1, 0
        %v2118 = vsel %vm1094, 1, 0
        %v2119 = vsel %vm1095, 1, 0
        %v2120 = vsel %vm1096, 1, 0
        %v2121 = vsel %vm1097, 1, 0
        %v2122 = vsel %vm1098, 1, 0
        %v2123 = vsel %vm1099, 1, 0
        %v2124 = vsel %vm1100, 1, 0
        %v2125 = vsel %vm1101, 1, 0
        %v2126 = vsel %vm1102, 1, 0
        %v2127 = vsel %vm1103, 1, 0
        %v2128 = vsel %vm1104, 1, 0
        %v2129 = vsel %vm1105, 1, 0
        %v2130 = vsel %vm1106, 1, 0
        %v2131 = vsel %vm1107, 1, 0
        %v2132 = vsel %vm1108, 1, 0
        %v2133 = vsel %vm1109, 1, 0
        %v2134 = vsel %vm1110, 1, 0
        %v2135 = vsel %vm1111, 1, 0
        %v2136 = vsel %vm1112, 1, 0
        %v2137 = vsel %vm1113, 1, 0
        %v2138 = vsel %vm1114, 1, 0
        %v2139 = vsel %vm1115, 1, 0
        %v2140 = vsel %vm1116, 1, 0
        %v2141 = vsel %vm1117, 1, 0
        %v2142 = vsel %vm1118, 1, 0
        %v2143 = vsel %vm1119, 1, 0
        %v2144 = vsel %vm1120, 1, 0
        %v2145 = vsel %vm1121, 1, 0
        %v2146 = vsel %vm1122, 1, 0
        %v2147 = vsel %vm1123, 1, 0
        %v2148 = vsel %vm1124, 1, 0
        %v2149 = vsel %vm1125, 1, 0
        %v2150 = vsel %vm1126, 1, 0
        %v2151 = vsel %vm1127, 1, 0
        %v2152 = vsel %vm1128, 1, 0
        %v2153 = vsel %vm1129, 1, 0
        %v2154 = vsel %vm1130, 1, 0
        %v2155 = vsel %vm1131, 1, 0
        %v2156 = vsel %vm1132, 1, 0
        %v2157 = vsel %vm1133, 1, 0
        %v2158 = vsel %vm1134, 1, 0
        %v2159 = vsel %vm1135, 1, 0
        %v2160 = vsel %vm1136, 1, 0
        %v2161 = vsel %vm1137, 1, 0
        %v2162 = vsel %vm1138, 1, 0
        %v2163 = vsel %vm1139, 1, 0
        %v2164 = vsel %vm1140, 1, 0
        %v2165 = vsel %vm1141, 1, 0
        %v2166 = vsel %vm1142, 1, 0
        %v2167 = vsel %vm1143, 1, 0
        %v2168 = vsel %vm1144, 1, 0
        %v2169 = vsel %vm1145, 1, 0
        %v2170 = vsel %vm1146, 1, 0
        %v2171 = vsel %vm1147, 1, 0
        %v2172 = vsel %vm1148, 1, 0
        %v2173 = vsel %vm1149, 1, 0
        %v2174 = vsel %vm1150, 1, 0
        %v2175 = vsel %vm1151, 1, 0
        %v2176 = vsel %vm1152, 1, 0
        %v2177 = vsel %vm1153, 1, 0
        %v2178 = vsel %vm1154, 1, 0
        %v2179 = vsel %vm1155, 1, 0
        %v2180 = vsel %vm1156, 1, 0
        %v2181 = vsel %vm1157, 1, 0
        %v2182 = vsel %vm1158, 1, 0
        %v2183 = vsel %vm1159, 1, 0
        %v2184 = vsel %vm1160, 1, 0
        %v2185 = vsel %vm1161, 1, 0
        %v2186 = vsel %vm1162, 1, 0
        %v2187 = vsel %vm1163, 1, 0
        %v2188 = vsel %vm1164, 1, 0
        %v2189 = vsel %vm1165, 1, 0
        %v2190 = vsel %vm1166, 1, 0
        %v2191 = vsel %vm1167, 1, 0
        %v2192 = vsel %vm1168, 1, 0
        %v2193 = vsel %vm1169, 1, 0
        %v2194 = vsel %vm1170, 1, 0
        %v2195 = vsel %vm1171, 1, 0
        %v2196 = vsel %vm1172, 1, 0
        %v2197 = vsel %vm1173, 1, 0
        %v2198 = vsel %vm1174, 1, 0
        %v2199 = vsel %vm1175, 1, 0
        %v2200 = vsel %vm1176, 1, 0
        %v2201 = vsel %vm1177, 1, 0
        %v2202 = vsel %vm1178, 1, 0
        %v2203 = vsel %vm1179, 1, 0
        %v2204 = vsel %vm1180, 1, 0
        %v2205 = vsel %vm1181, 1, 0
        %v2206 = vsel %vm1182, 1, 0
        %v2207 = vsel %vm1183, 1, 0
        %v2208 = vsel %vm1184, 1, 0
        %v2209 = vsel %vm1185, 1, 0
        %v2210 = vsel %vm1186, 1, 0
        %v2211 = vsel %vm1187, 1, 0
        %v2212 = vsel %vm1188, 1, 0
        %v2213 = vsel %vm1189, 1, 0
        %v2214 = vsel %vm1190, 1, 0
        %v2215 = vsel %vm1191, 1, 0
        %v2216 = vsel %vm1192, 1, 0
        %v2217 = vsel %vm1193, 1, 0
        %v2218 = vsel %vm1194, 1, 0
        %v2219 = vsel %vm1195, 1, 0
        %v2220 = vsel %vm1196, 1, 0
        %v2221 = vsel %vm1197, 1, 0
        %v2222 = vsel %vm1198, 1, 0
        %v2223 = vsel %vm1199, 1, 0
        %v2224 = vsel %vm1200, 1, 0
        %v2225 = vsel %vm1201, 1, 0
        %v2226 = vsel %vm1202, 1, 0
        %v2227 = vsel %vm1203, 1, 0
        %v2228 = vsel %vm1204, 1, 0
        %v2229 = vsel %vm1205, 1, 0
        %v2230 = vsel %vm1206, 1, 0
        %v2231 = vsel %vm1207, 1, 0
        %v2232 = vsel %vm1208, 1, 0
        %v2233 = vsel %vm1209, 1, 0
        %v2234 = vsel %vm1210, 1, 0
        %v2235 = vsel %vm1211, 1, 0
        %v2236 = vsel %vm1212, 1, 0
        %v2237 = vsel %vm1213, 1, 0
        %v2238 = vsel %vm1214, 1, 0
        %v2239 = vsel %vm1215, 1, 0
        %v2240 = vsel %vm1216, 1, 0
        %v2241 = vsel %vm1217, 1, 0
        %v2242 = vsel %vm1218, 1, 0
        %v2243 = vsel %vm1219, 1, 0
        %v2244 = vsel %vm1220, 1, 0
        %v2245 = vsel %vm1221, 1, 0
        %v2246 = vsel %vm1222, 1, 0
        %v2247 = vsel %vm1223, 1, 0
        %v2248 = vsel %vm1224, 1, 0
        %v2249 = vsel %vm1225, 1, 0
        %v2250 = vsel %vm1226, 1, 0
        %v2251 = vsel %vm1227, 1, 0
        %v2252 = vsel %vm1228, 1, 0
        %v2253 = vsel %vm1229, 1, 0
        %v2254 = vsel %vm1230, 1, 0
        %v2255 = vsel %vm1231, 1, 0
        %v2256 = vsel %vm1232, 1, 0
        %v2257 = vsel %vm1233, 1, 0
        %v2258 = vsel %vm1234, 1, 0
        %v2259 = vsel %vm1235, 1, 0
        %v2260 = vsel %vm1236, 1, 0
        %v2261 = vsel %vm1237, 1, 0
        %v2262 = vsel %vm1238, 1, 0
        %v2263 = vsel %vm1239, 1, 0
        %v2264 = vsel %vm1240, 1, 0
        %v2265 = vsel %vm1241, 1, 0
        %v2266 = vsel %vm1242, 1, 0
        %v2267 = vsel %vm1243, 1, 0
        %v2268 = vsel %vm1244, 1, 0
        %v2269 = vsel %vm1245, 1, 0
        %v2270 = vsel %vm1246, 1, 0
        %v2271 = vsel %vm1247, 1, 0
        %v2272 = vsel %vm1248, 1, 0
        %v2273 = vsel %vm1249, 1, 0
        %v2274 = vsel %vm1250, 1, 0
        %v2275 = vsel %vm1251, 1, 0
        %v2276 = vsel %vm1252, 1, 0
        %v2277 = vsel %vm1253, 1, 0
        %v2278 = vsel %vm1254, 1, 0
        %v2279 = vsel %vm1255, 1, 0
        %v2280 = vsel %vm1256, 1, 0
        %v2281 = vsel %vm1257, 1, 0
        %v2282 = vsel %vm1258, 1, 0
        %v2283 = vsel %vm1259, 1, 0
        %v2284 = vsel %vm1260, 1, 0
        %v2285 = vsel %vm1261, 1, 0
        %v2286 = vsel %vm1262, 1, 0
        %v2287 = vsel %vm1263, 1, 0
        %v2288 = vsel %vm1264, 1, 0
        %v2289 = vsel %vm1265, 1, 0
        %v2290 = vsel %vm1266, 1, 0
        %v2291 = vsel %vm1267, 1, 0
        %v2292 = vsel %vm1268, 1, 0
        %v2293 = vsel %vm1269, 1, 0
        %v2294 = vsel %vm1270, 1, 0
        %v2295 = vsel %vm1271, 1, 0
        %v2296 = vsel %vm1272, 1, 0
        %v2297 = vsel %vm1273, 1, 0
        %v2298 = vsel %vm1274, 1, 0
        %v2299 = vsel %vm1275, 1, 0
        %v2300 = vsel %vm1276, 1, 0
        %v2301 = vsel %vm1277, 1, 0
        %v2302 = vsel %vm1278, 1, 0
        %v2303 = vsel %vm1279, 1, 0
        %v2304 = vsel %vm1280, 1, 0
        %v2305 = vsel %vm1281, 1, 0
        %v2306 = vsel %vm1282, 1, 0
        %v2307 = vsel %vm1283, 1, 0
        %v2308 = vsel %vm1284, 1, 0
        %v2309 = vsel %vm1285, 1, 0
        %v2310 = vsel %vm1286, 1, 0
        %v2311 = vsel %vm1287, 1, 0
        %v2312 = vsel %vm1288, 1, 0
        %v2313 = vsel %vm1289, 1, 0
        %v2314 = vsel %vm1290, 1, 0
        %v2315 = vsel %vm1291, 1, 0
        %v2316 = vsel %vm1292, 1, 0
        %v2317 = vsel %vm1293, 1, 0
        %v2318 = vsel %vm1294, 1, 0
        %v2319 = vsel %vm1295, 1, 0
        %v2320 = vsel %vm1296, 1, 0
        %v2321 = vsel %vm1297, 1, 0
        %v2322 = vsel %vm1298, 1, 0
        %v2323 = vsel %vm1299, 1, 0
        %v2324 = vsel %vm1300, 1, 0
        %v2325 = vsel %vm1301, 1, 0
        %v2326 = vsel %vm1302, 1, 0
        %v2327 = vsel %vm1303, 1, 0
        %v2328 = vsel %vm1304, 1, 0
        %v2329 = vsel %vm1305, 1, 0
        %v2330 = vsel %vm1306, 1, 0
        %v2331 = vsel %vm1307, 1, 0
        %v2332 = vsel %vm1308, 1, 0
        %v2333 = vsel %vm1309, 1, 0
        %v2334 = vsel %vm1310, 1, 0
        %v2335 = vsel %vm1311, 1, 0
        %v2336 = vsel %vm1312, 1, 0
        %v2337 = vsel %vm1313, 1, 0
        %v2338 = vsel %vm1314, 1, 0
        %v2339 = vsel %vm1315, 1, 0
        %v2340 = vsel %vm1316, 1, 0
        %v2341 = vsel %vm1317, 1, 0
        %v2342 = vsel %vm1318, 1, 0
        %v2343 = vsel %vm1319, 1, 0
        %v2344 = vsel %vm1320, 1, 0
        %v2345 = vsel %vm1321, 1, 0
        %v2346 = vsel %vm1322, 1, 0
        %v2347 = vsel %vm1323, 1, 0
        %v2348 = vsel %vm1324, 1, 0
        %v2349 = vsel %vm1325, 1, 0
        %v2350 = vsel %vm1326, 1, 0
        %v2351 = vsel %vm1327, 1, 0
        %v2352 = vsel %vm1328, 1, 0
        %v2353 = vsel %vm1329, 1, 0
        %v2354 = vsel %vm1330, 1, 0
        %v2355 = vsel %vm1331, 1, 0
        %v2356 = vsel %vm1332, 1, 0
        %v2357 = vsel %vm1333, 1, 0
        %v2358 = vsel %vm1334, 1, 0
        %v2359 = vsel %vm1335, 1, 0
        %v2360 = vsel %vm1336, 1, 0
        %v2361 = vsel %vm1337, 1, 0
        %v2362 = vsel %vm1338, 1, 0
        %v2363 = vsel %vm1339, 1, 0
        %v2364 = vsel %vm1340, 1, 0
        %v2365 = vsel %vm1341, 1, 0
        %v2366 = vsel %vm1342, 1, 0
        %v2367 = vsel %vm1343, 1, 0
        %v2368 = vsel %vm1344, 1, 0
        %v2369 = vsel %vm1345, 1, 0
        %v2370 = vsel %vm1346, 1, 0
        %v2371 = vsel %vm1347, 1, 0
        %v2372 = vsel %vm1348, 1, 0
        %v2373 = vsel %vm1349, 1, 0
        %v2374 = vsel %vm1350, 1, 0
        %v2375 = vsel %vm1351, 1, 0
        %v2376 = vsel %vm1352, 1, 0
        %v2377 = vsel %vm1353, 1, 0
        %v2378 = vsel %vm1354, 1, 0
        %v2379 = vsel %vm1355, 1, 0
        %v2380 = vsel %vm1356, 1, 0
        %v2381 = vsel %vm1357, 1, 0
        %v2382 = vsel %vm1358, 1, 0
        %v2383 = vsel %vm1359, 1, 0
        %v2384 = vsel %vm1360, 1, 0
        %v2385 = vsel %vm1361, 1, 0
        %v2386 = vsel %vm1362, 1, 0
        %v2387 = vsel %vm1363, 1, 0
        %v2388 = vsel %vm1364, 1, 0
        %v2389 = vsel %vm1365, 1, 0
        %v2390 = vsel %vm1366, 1, 0
        %v2391 = vsel %vm1367, 1, 0
        %v2392 = vsel %vm1368, 1, 0
        %v2393 = vsel %vm1369, 1, 0
        %v2394 = vsel %vm1370, 1, 0
        %v2395 = vsel %vm1371, 1, 0
        %v2396 = vsel %vm1372, 1, 0
        %v2397 = vsel %vm1373, 1, 0
        %v2398 = vsel %vm1374, 1, 0
        %v2399 = vsel %vm1375, 1, 0
        %v2400 = vsel %vm1376, 1, 0
        %v2401 = vsel %vm1377, 1, 0
        %v2402 = vsel %vm1378, 1, 0
        %v2403 = vsel %vm1379, 1, 0
        %v2404 = vsel %vm1380, 1, 0
        %v2405 = vsel %vm1381, 1, 0
        %v2406 = vsel %vm1382, 1, 0
        %v2407 = vsel %vm1383, 1, 0
        %v2408 = vsel %vm1384, 1, 0
        %v2409 = vsel %vm1385, 1, 0
        %v2410 = vsel %vm1386, 1, 0
        %v2411 = vsel %vm1387, 1, 0
        %v2412 = vsel %vm1388, 1, 0
        %v2413 = vsel %vm1389, 1, 0
        %v2414 = vsel %vm1390, 1, 0
        %v2415 = vsel %vm1391, 1, 0
        %v2416 = vsel %vm1392, 1, 0
        %v2417 = vsel %vm1393, 1, 0
        %v2418 = vsel %vm1394, 1, 0
        %v2419 = vsel %vm1395, 1, 0
        %v2420 = vsel %vm1396, 1, 0
        %v2421 = vsel %vm1397, 1, 0
        %v2422 = vsel %vm1398, 1, 0
        %v2423 = vsel %vm1399, 1, 0
        %v2424 = vsel %vm1400, 1, 0
        %v2425 = vsel %vm1401, 1, 0
        %v2426 = vsel %vm1402, 1, 0
        %v2427 = vsel %vm1403, 1, 0
        %v2428 = vsel %vm1404, 1, 0
        %v2429 = vsel %vm1405, 1, 0
        %v2430 = vsel %vm1406, 1, 0
        %v2431 = vsel %vm1407, 1, 0
        %v2432 = vsel %vm1408, 1, 0
        %v2433 = vsel %vm1409, 1, 0
        %v2434 = vsel %vm1410, 1, 0
        %v2435 = vsel %vm1411, 1, 0
        %v2436 = vsel %vm1412, 1, 0
        %v2437 = vsel %vm1413, 1, 0
        %v2438 = vsel %vm1414, 1, 0
        %v2439 = vsel %vm1415, 1, 0
        %v2440 = vsel %vm1416, 1, 0
        %v2441 = vsel %vm1417, 1, 0
        %v2442 = vsel %vm1418, 1, 0
        %v2443 = vsel %vm1419, 1, 0
        %v2444 = vsel %vm1420, 1, 0
        %v2445 = vsel %vm1421, 1, 0
        %v2446 = vsel %vm1422, 1, 0
        %v2447 = vsel %vm1423, 1, 0
        %v2448 = vsel %vm1424, 1, 0
        %v2449 = vsel %vm1425, 1, 0
        %v2450 = vsel %vm1426, 1, 0
        %v2451 = vsel %vm1427, 1, 0
        %v2452 = vsel %vm1428, 1, 0
        %v2453 = vsel %vm1429, 1, 0
        %v2454 = vsel %vm1430, 1, 0
        %v2455 = vsel %vm1431, 1, 0
        %v2456 = vsel %vm1432, 1, 0
        %v2457 = vsel %vm1433, 1, 0
        %v2458 = vsel %vm1434, 1, 0
        %v2459 = vsel %vm1435, 1, 0
        %v2460 = vsel %vm1436, 1, 0
        %v2461 = vsel %vm1437, 1, 0
        %v2462 = vsel %vm1438, 1, 0
        %v2463 = vsel %vm1439, 1, 0
        %v2464 = vsel %vm1440, 1, 0
        %v2465 = vsel %vm1441, 1, 0
        %v2466 = vsel %vm1442, 1, 0
        %v2467 = vsel %vm1443, 1, 0
        %v2468 = vsel %vm1444, 1, 0
        %v2469 = vsel %vm1445, 1, 0
        %v2470 = vsel %vm1446, 1, 0
        %v2471 = vsel %vm1447, 1, 0
        %v2472 = vsel %vm1448, 1, 0
        %v2473 = vsel %vm1449, 1, 0
        %v2474 = vsel %vm1450, 1, 0
        %v2475 = vsel %vm1451, 1, 0
        %v2476 = vsel %vm1452, 1, 0
        %v2477 = vsel %vm1453, 1, 0
        %v2478 = vsel %vm1454, 1, 0
        %v2479 = vsel %vm1455, 1, 0
        %v2480 = vsel %vm1456, 1, 0
        %v2481 = vsel %vm1457, 1, 0
        %v2482 = vsel %vm1458, 1, 0
        %v2483 = vsel %vm1459, 1, 0
        %v2484 = vsel %vm1460, 1, 0
        %v2485 = vsel %vm1461, 1, 0
        %v2486 = vsel %vm1462, 1, 0
        %v2487 = vsel %vm1463, 1, 0
        %v2488 = vsel %vm1464, 1, 0
        %v2489 = vsel %vm1465, 1, 0
        %v2490 = vsel %vm1466, 1, 0
        %v2491 = vsel %vm1467, 1, 0
        %v2492 = vsel %vm1468, 1, 0
        %v2493 = vsel %vm1469, 1, 0
        %v2494 = vsel %vm1470, 1, 0
        %v2495 = vsel %vm1471, 1, 0
        %v2496 = vsel %vm1472, 1, 0
        %v2497 = vsel %vm1473, 1, 0
        %v2498 = vsel %vm1474, 1, 0
        %v2499 = vsel %vm1475, 1, 0
        %v2500 = vsel %vm1476, 1, 0
        %v2501 = vsel %vm1477, 1, 0
        %v2502 = vsel %vm1478, 1, 0
        %v2503 = vsel %vm1479, 1, 0
        %v2504 = vsel %vm1480, 1, 0
        %v2505 = vsel %vm1481, 1, 0
        %v2506 = vsel %vm1482, 1, 0
        %v2507 = vsel %vm1483, 1, 0
        %v2508 = vsel %vm1484, 1, 0
        %v2509 = vsel %vm1485, 1, 0
        %v2510 = vsel %vm1486, 1, 0
        %v2511 = vsel %vm1487, 1, 0
        %v2512 = vsel %vm1488, 1, 0
        %v2513 = vsel %vm1489, 1, 0
        %v2514 = vsel %vm1490, 1, 0
        %v2515 = vsel %vm1491, 1, 0
        %v2516 = vsel %vm1492, 1, 0
        %v2517 = vsel %vm1493, 1, 0
        %v2518 = vsel %vm1494, 1, 0
        %v2519 = vsel %vm1495, 1, 0
        %v2520 = vsel %vm1496, 1, 0
        %v2521 = vsel %vm1497, 1, 0
        %v2522 = vsel %vm1498, 1, 0
        %v2523 = vsel %vm1499, 1, 0
        %v2524 = vsel %vm1500, 1, 0
        %v2525 = vsel %vm1501, 1, 0
        %v2526 = vsel %vm1502, 1, 0
        %v2527 = vsel %vm1503, 1, 0
        %v2528 = vsel %vm1504, 1, 0
        %v2529 = vsel %vm1505, 1, 0
        %v2530 = vsel %vm1506, 1, 0
        %v2531 = vsel %vm1507, 1, 0
        %v2532 = vsel %vm1508, 1, 0
        %v2533 = vsel %vm1509, 1, 0
        %v2534 = vsel %vm1510, 1, 0
        %v2535 = vsel %vm1511, 1, 0
        %v2536 = vsel %vm1512, 1, 0
        %v2537 = vsel %vm1513, 1, 0
        %v2538 = vsel %vm1514, 1, 0
        %v2539 = vsel %vm1515, 1, 0
        %v2540 = vsel %vm1516, 1, 0
        %v2541 = vsel %vm1517, 1, 0
        %v2542 = vsel %vm1518, 1, 0
        %v2543 = vsel %vm1519, 1, 0
        %v2544 = vsel %vm1520, 1, 0
        %v2545 = vsel %vm1521, 1, 0
        %v2546 = vsel %vm1522, 1, 0
        %v2547 = vsel %vm1523, 1, 0
        %v2548 = vsel %vm1524, 1, 0
        %v2549 = vsel %vm1525, 1, 0
        %v2550 = vsel %vm1526, 1, 0
        %v2551 = vsel %vm1527, 1, 0
        %v2552 = vsel %vm1528, 1, 0
        %v2553 = vsel %vm1529, 1, 0
        %v2554 = vsel %vm1530, 1, 0
        %v2555 = vsel %vm1531, 1, 0
        %v2556 = vsel %vm1532, 1, 0
        %v2557 = vsel %vm1533, 1, 0
        %v2558 = vsel %vm1534, 1, 0
        %v2559 = vsel %vm1535, 1, 0
        %v2560 = vsel %vm1536, 1, 0
        %v2561 = vsel %vm1537, 1, 0
        %v2562 = vsel %vm1538, 1, 0
        %v2563 = vsel %vm1539, 1, 0
        %v2564 = vsel %vm1540, 1, 0
        %v2565 = vsel %vm1541, 1, 0
        %v2566 = vsel %vm1542, 1, 0
        %v2567 = vsel %vm1543, 1, 0
        %v2568 = vsel %vm1544, 1, 0
        %v2569 = vsel %vm1545, 1, 0
        %v2570 = vsel %vm1546, 1, 0
        %v2571 = vsel %vm1547, 1, 0
        %v2572 = vsel %vm1548, 1, 0
        %v2573 = vsel %vm1549, 1, 0
        %v2574 = vsel %vm1550, 1, 0
        %v2575 = vsel %vm1551, 1, 0
        %v2576 = vsel %vm1552, 1, 0
        %v2577 = vsel %vm1553, 1, 0
        %v2578 = vsel %vm1554, 1, 0
        %v2579 = vsel %vm1555, 1, 0
        %v2580 = vsel %vm1556, 1, 0
        %v2581 = vsel %vm1557, 1, 0
        %v2582 = vsel %vm1558, 1, 0
        %v2583 = vsel %vm1559, 1, 0
        %v2584 = vsel %vm1560, 1, 0
        %v2585 = vsel %vm1561, 1, 0
        %v2586 = vsel %vm1562, 1, 0
        %v2587 = vsel %vm1563, 1, 0
        %v2588 = vsel %vm1564, 1, 0
        %v2589 = vsel %vm1565, 1, 0
        %v2590 = vsel %vm1566, 1, 0
        %v2591 = vsel %vm1567, 1, 0
        %v2592 = vsel %vm1568, 1, 0
        %v2593 = vsel %vm1569, 1, 0
        %v2594 = vsel %vm1570, 1, 0
        %v2595 = vsel %vm1571, 1, 0
        %v2596 = vsel %vm1572, 1, 0
        %v2597 = vsel %vm1573, 1, 0
        %v2598 = vsel %vm1574, 1, 0
        %v2599 = vsel %vm1575, 1, 0
        %v2600 = vsel %vm1576, 1, 0
        %v2601 = vsel %vm1577, 1, 0
        %v2602 = vsel %vm1578, 1, 0
        %v2603 = vsel %vm1579, 1, 0
        %v2604 = vsel %vm1580, 1, 0
        %v2605 = vsel %vm1581, 1, 0
        %v2606 = vsel %vm1582, 1, 0
        %v2607 = vsel %vm1583, 1, 0
        %v2608 = vsel %vm1584, 1, 0
        %v2609 = vsel %vm1585, 1, 0
        %v2610 = vsel %vm1586, 1, 0
        %v2611 = vsel %vm1587, 1, 0
        %v2612 = vsel %vm1588, 1, 0
        %v2613 = vsel %vm1589, 1, 0
        %v2614 = vsel %vm1590, 1, 0
        %v2615 = vsel %vm1591, 1, 0
        %v2616 = vsel %vm1592, 1, 0
        %v2617 = vsel %vm1593, 1, 0
        %v2618 = vsel %vm1594, 1, 0
        %v2619 = vsel %vm1595, 1, 0
        %v2620 = vsel %vm1596, 1, 0
        %v2621 = vsel %vm1597, 1, 0
        %v2622 = vsel %vm1598, 1, 0
        %v2623 = vsel %vm1599, 1, 0
        %v2624 = vsel %vm1600, 1, 0
        %v2625 = vsel %vm1601, 1, 0
        %v2626 = vsel %vm1602, 1, 0
        %v2627 = vsel %vm1603, 1, 0
        %v2628 = vsel %vm1604, 1, 0
        %v2629 = vsel %vm1605, 1, 0
        %v2630 = vsel %vm1606, 1, 0
        %v2631 = vsel %vm1607, 1, 0
        %v2632 = vsel %vm1608, 1, 0
        %v2633 = vsel %vm1609, 1, 0
        %v2634 = vsel %vm1610, 1, 0
        %v2635 = vsel %vm1611, 1, 0
        %v2636 = vsel %vm1612, 1, 0
        %v2637 = vsel %vm1613, 1, 0
        %v2638 = vsel %vm1614, 1, 0
        %v2639 = vsel %vm1615, 1, 0
        %v2640 = vsel %vm1616, 1, 0
        %v2641 = vsel %vm1617, 1, 0
        %v2642 = vsel %vm1618, 1, 0
        %v2643 = vsel %vm1619, 1, 0
        %v2644 = vsel %vm1620, 1, 0
        %v2645 = vsel %vm1621, 1, 0
        %v2646 = vsel %vm1622, 1, 0
        %v2647 = vsel %vm1623, 1, 0
        %v2648 = vsel %vm1624, 1, 0
        %v2649 = vsel %vm1625, 1, 0
        %v2650 = vsel %vm1626, 1, 0
        %v2651 = vsel %vm1627, 1, 0
        %v2652 = vsel %vm1628, 1, 0
        %v2653 = vsel %vm1629, 1, 0
        %v2654 = vsel %vm1630, 1, 0
        %v2655 = vsel %vm1631, 1, 0
        %v2656 = vsel %vm1632, 1, 0
        %v2657 = vsel %vm1633, 1, 0
        %v2658 = vsel %vm1634, 1, 0
        %v2659 = vsel %vm1635, 1, 0
        %v2660 = vsel %vm1636, 1, 0
        %v2661 = vsel %vm1637, 1, 0
        %v2662 = vsel %vm1638, 1, 0
        %v2663 = vsel %vm1639, 1, 0
        %v2664 = vsel %vm1640, 1, 0
        %v2665 = vsel %vm1641, 1, 0
        %v2666 = vsel %vm1642, 1, 0
        %v2667 = vsel %vm1643, 1, 0
        %v2668 = vsel %vm1644, 1, 0
        %v2669 = vsel %vm1645, 1, 0
        %v2670 = vsel %vm1646, 1, 0
        %v2671 = vsel %vm1647, 1, 0
        %v2672 = vsel %vm1648, 1, 0
        %v2673 = vsel %vm1649, 1, 0
        %v2674 = vsel %vm1650, 1, 0
        %v2675 = vsel %vm1651, 1, 0
        %v2676 = vsel %vm1652, 1, 0
        %v2677 = vsel %vm1653, 1, 0
        %v2678 = vsel %vm1654, 1, 0
        %v2679 = vsel %vm1655, 1, 0
        %v2680 = vsel %vm1656, 1, 0
        %v2681 = vsel %vm1657, 1, 0
        %v2682 = vsel %vm1658, 1, 0
        %v2683 = vsel %vm1659, 1, 0
        %v2684 = vsel %vm1660, 1, 0
        %v2685 = vsel %vm1661, 1, 0
        %v2686 = vsel %vm1662, 1, 0
        %v2687 = vsel %vm1663, 1, 0
        %v2688 = vsel %vm1664, 1, 0
        %v2689 = vsel %vm1665, 1, 0
        %v2690 = vsel %vm1666, 1, 0
        %v2691 = vsel %vm1667, 1, 0
        %v2692 = vsel %vm1668, 1, 0
        %v2693 = vsel %vm1669, 1, 0
        %v2694 = vsel %vm1670, 1, 0
        %v2695 = vsel %vm1671, 1, 0
        %v2696 = vsel %vm1672, 1, 0
        %v2697 = vsel %vm1673, 1, 0
        %v2698 = vsel %vm1674, 1, 0
        %v2699 = vsel %vm1675, 1, 0
        %v2700 = vsel %vm1676, 1, 0
        %v2701 = vsel %vm1677, 1, 0
        %v2702 = vsel %vm1678, 1, 0
        %v2703 = vsel %vm1679, 1, 0
        %v2704 = vsel %vm1680, 1, 0
        %v2705 = vsel %vm1681, 1, 0
        %v2706 = vsel %vm1682, 1, 0
        %v2707 = vsel %vm1683, 1, 0
        %v2708 = vsel %vm1684, 1, 0
        %v2709 = vsel %vm1685, 1, 0
        %v2710 = vsel %vm1686, 1, 0
        %v2711 = vsel %vm1687, 1, 0
        %v2712 = vsel %vm1688, 1, 0
        %v2713 = vsel %vm1689, 1, 0
        %v2714 = vsel %vm1690, 1, 0
        %v2715 = vsel %vm1691, 1, 0
        %v2716 = vsel %vm1692, 1, 0
        %v2717 = vsel %vm1693, 1, 0
        %v2718 = vsel %vm1694, 1, 0
        %v2719 = vsel %vm1695, 1, 0
        %v2720 = vsel %vm1696, 1, 0
        %v2721 = vsel %vm1697, 1, 0
        %v2722 = vsel %vm1698, 1, 0
        %v2723 = vsel %vm1699, 1, 0
        %v2724 = vsel %vm1700, 1, 0
        %v2725 = vsel %vm1701, 1, 0
        %v2726 = vsel %vm1702, 1, 0
        %v2727 = vsel %vm1703, 1, 0
        %v2728 = vsel %vm1704, 1, 0
        %v2729 = vsel %vm1705, 1, 0
        %v2730 = vsel %vm1706, 1, 0
        %v2731 = vsel %vm1707, 1, 0
        %v2732 = vsel %vm1708, 1, 0
        %v2733 = vsel %vm1709, 1, 0
        %v2734 = vsel %vm1710, 1, 0
        %v2735 = vsel %vm1711, 1, 0
        %v2736 = vsel %vm1712, 1, 0
        %v2737 = vsel %vm1713, 1, 0
        %v2738 = vsel %vm1714, 1, 0
        %v2739 = vsel %vm1715, 1, 0
        %v2740 = vsel %vm1716, 1, 0
        %v2741 = vsel %vm1717, 1, 0
        %v2742 = vsel %vm1718, 1, 0
        %v2743 = vsel %vm1719, 1, 0
        %v2744 = vsel %vm1720, 1, 0
        %v2745 = vsel %vm1721, 1, 0
        %v2746 = vsel %vm1722, 1, 0
        %v2747 = vsel %vm1723, 1, 0
        %v2748 = vsel %vm1724, 1, 0
        %v2749 = vsel %vm1725, 1, 0
        %v2750 = vsel %vm1726, 1, 0
        %v2751 = vsel %vm1727, 1, 0
        %v2752 = vsel %vm1728, 1, 0
        %v2753 = vsel %vm1729, 1, 0
        %v2754 = vsel %vm1730, 1, 0
        %v2755 = vsel %vm1731, 1, 0
        %v2756 = vsel %vm1732, 1, 0
        %v2757 = vsel %vm1733, 1, 0
        %v2758 = vsel %vm1734, 1, 0
        %v2759 = vsel %vm1735, 1, 0
        %v2760 = vsel %vm1736, 1, 0
        %v2761 = vsel %vm1737, 1, 0
        %v2762 = vsel %vm1738, 1, 0
        %v2763 = vsel %vm1739, 1, 0
        %v2764 = vsel %vm1740, 1, 0
        %v2765 = vsel %vm1741, 1, 0
        %v2766 = vsel %vm1742, 1, 0
        %v2767 = vsel %vm1743, 1, 0
        %v2768 = vsel %vm1744, 1, 0
        %v2769 = vsel %vm1745, 1, 0
        %v2770 = vsel %vm1746, 1, 0
        %v2771 = vsel %vm1747, 1, 0
        %v2772 = vsel %vm1748, 1, 0
        %v2773 = vsel %vm1749, 1, 0
        %v2774 = vsel %vm1750, 1, 0
        %v2775 = vsel %vm1751, 1, 0
        %v2776 = vsel %vm1752, 1, 0
        %v2777 = vsel %vm1753, 1, 0
        %v2778 = vsel %vm1754, 1, 0
        %v2779 = vsel %vm1755, 1, 0
        %v2780 = vsel %vm1756, 1, 0
        %v2781 = vsel %vm1757, 1, 0
        %v2782 = vsel %vm1758, 1, 0
        %v2783 = vsel %vm1759, 1, 0
        %v2784 = vsel %vm1760, 1, 0
        %v2785 = vsel %vm1761, 1, 0
        %v2786 = vsel %vm1762, 1, 0
        %v2787 = vsel %vm1763, 1, 0
        %v2788 = vsel %vm1764, 1, 0
        %v2789 = vsel %vm1765, 1, 0
        %v2790 = vsel %vm1766, 1, 0
        %v2791 = vsel %vm1767, 1, 0
        %v2792 = vsel %vm1768, 1, 0
        %v2793 = vsel %vm1769, 1, 0
        %v2794 = vsel %vm1770, 1, 0
        %v2795 = vsel %vm1771, 1, 0
        %v2796 = vsel %vm1772, 1, 0
        %v2797 = vsel %vm1773, 1, 0
        %v2798 = vsel %vm1774, 1, 0
        %v2799 = vsel %vm1775, 1, 0
        %v2800 = vsel %vm1776, 1, 0
        %v2801 = vsel %vm1777, 1, 0
        %v2802 = vsel %vm1778, 1, 0
        %v2803 = vsel %vm1779, 1, 0
        %v2804 = vsel %vm1780, 1, 0
        %v2805 = vsel %vm1781, 1, 0
        %v2806 = vsel %vm1782, 1, 0
        %v2807 = vsel %vm1783, 1, 0
        %v2808 = vsel %vm1784, 1, 0
        %v2809 = vsel %vm1785, 1, 0
        %v2810 = vsel %vm1786, 1, 0
        %v2811 = vsel %vm1787, 1, 0
        %v2812 = vsel %vm1788, 1, 0
        %v2813 = vsel %vm1789, 1, 0
        %v2814 = vsel %vm1790, 1, 0
        %v2815 = vsel %vm1791, 1, 0
        %v2816 = vsel %vm1792, 1, 0
        %v2817 = vsel %vm1793, 1, 0
        %v2818 = vsel %vm1794, 1, 0
        %v2819 = vsel %vm1795, 1, 0
        %v2820 = vsel %vm1796, 1, 0
        %v2821 = vsel %vm1797, 1, 0
        %v2822 = vsel %vm1798, 1, 0
        %v2823 = vsel %vm1799, 1, 0
        %v2824 = vsel %vm1800, 1, 0
        %v2825 = vsel %vm1801, 1, 0
        %v2826 = vsel %vm1802, 1, 0
        %v2827 = vsel %vm1803, 1, 0
        %v2828 = vsel %vm1804, 1, 0
        %v2829 = vsel %vm1805, 1, 0
        %v2830 = vsel %vm1806, 1, 0
        %v2831 = vsel %vm1807, 1, 0
        %v2832 = vsel %vm1808, 1, 0
        %v2833 = vsel %vm1809, 1, 0
        %v2834 = vsel %vm1810, 1, 0
        %v2835 = vsel %vm1811, 1, 0
        %v2836 = vsel %vm1812, 1, 0
        %v2837 = vsel %vm1813, 1, 0
        %v2838 = vsel %vm1814, 1, 0
        %v2839 = vsel %vm1815, 1, 0
        %v2840 = vsel %vm1816, 1, 0
        %v2841 = vsel %vm1817, 1, 0
        %v2842 = vsel %vm1818, 1, 0
        %v2843 = vsel %vm1819, 1, 0
        %v2844 = vsel %vm1820, 1, 0
        %v2845 = vsel %vm1821, 1, 0
        %v2846 = vsel %vm1822, 1, 0
        %v2847 = vsel %vm1823, 1, 0
        %v2848 = vsel %vm1824, 1, 0
        %v2849 = vsel %vm1825, 1, 0
        %v2850 = vsel %vm1826, 1, 0
        %v2851 = vsel %vm1827, 1, 0
        %v2852 = vsel %vm1828, 1, 0
        %v2853 = vsel %vm1829, 1, 0
        %v2854 = vsel %vm1830, 1, 0
        %v2855 = vsel %vm1831, 1, 0
        %v2856 = vsel %vm1832, 1, 0
        %v2857 = vsel %vm1833, 1, 0
        %v2858 = vsel %vm1834, 1, 0
        %v2859 = vsel %vm1835, 1, 0
        %v2860 = vsel %vm1836, 1, 0
        %v2861 = vsel %vm1837, 1, 0
        %v2862 = vsel %vm1838, 1, 0
        %v2863 = vsel %vm1839, 1, 0
        %v2864 = vsel %vm1840, 1, 0
        %v2865 = vsel %vm1841, 1, 0
        %v2866 = vsel %vm1842, 1, 0
        %v2867 = vsel %vm1843, 1, 0
        %v2868 = vsel %vm1844, 1, 0
        %v2869 = vsel %vm1845, 1, 0
        %v2870 = vsel %vm1846, 1, 0
        %v2871 = vsel %vm1847, 1, 0
        %v2872 = vsel %vm1848, 1, 0
        %v2873 = vsel %vm1849, 1, 0
        %v2874 = vsel %vm1850, 1, 0
        %v2875 = vsel %vm1851, 1, 0
        %v2876 = vsel %vm1852, 1, 0
        %v2877 = vsel %vm1853, 1, 0
        %v2878 = vsel %vm1854, 1, 0
        %v2879 = vsel %vm1855, 1, 0
        %v2880 = vsel %vm1856, 1, 0
        %v2881 = vsel %vm1857, 1, 0
        %v2882 = vsel %vm1858, 1, 0
        %v2883 = vsel %vm1859, 1, 0
        %v2884 = vsel %vm1860, 1, 0
        %v2885 = vsel %vm1861, 1, 0
        %v2886 = vsel %vm1862, 1, 0
        %v2887 = vsel %vm1863, 1, 0
        %v2888 = vsel %vm1864, 1, 0
        %v2889 = vsel %vm1865, 1, 0
        %v2890 = vsel %vm1866, 1, 0
        %v2891 = vsel %vm1867, 1, 0
        %v2892 = vsel %vm1868, 1, 0
        %v2893 = vsel %vm1869, 1, 0
        %v2894 = vsel %vm1870, 1, 0
        %v2895 = vsel %vm1871, 1, 0
        %v2896 = vsel %vm1872, 1, 0
        %v2897 = vsel %vm1873, 1, 0
        %v2898 = vsel %vm1874, 1, 0
        %v2899 = vsel %vm1875, 1, 0
        %v2900 = vsel %vm1876, 1, 0
        %v2901 = vsel %vm1877, 1, 0
        %v2902 = vsel %vm1878, 1, 0
        %v2903 = vsel %vm1879, 1, 0
        %v2904 = vsel %vm1880, 1, 0
        %v2905 = vsel %vm1881, 1, 0
        %v2906 = vsel %vm1882, 1, 0
        %v2907 = vsel %vm1883, 1, 0
        %v2908 = vsel %vm1884, 1, 0
        %v2909 = vsel %vm1885, 1, 0
        %v2910 = vsel %vm1886, 1, 0
        %v2911 = vsel %vm1887, 1, 0
        %v2912 = vsel %vm1888, 1, 0
        %v2913 = vsel %vm1889, 1, 0
        %v2914 = vsel %vm1890, 1, 0
        %v2915 = vsel %vm1891, 1, 0
        %v2916 = vsel %vm1892, 1, 0
        %v2917 = vsel %vm1893, 1, 0
        %v2918 = vsel %vm1894, 1, 0
        %v2919 = vsel %vm1895, 1, 0
        %v2920 = vsel %vm1896, 1, 0
        %v2921 = vsel %vm1897, 1, 0
        %v2922 = vsel %vm1898, 1, 0
        %v2923 = vsel %vm1899, 1, 0
        %v2924 = vsel %vm1900, 1, 0
        %v2925 = vsel %vm1901, 1, 0
        %v2926 = vsel %vm1902, 1, 0
        %v2927 = vsel %vm1903, 1, 0
        %v2928 = vsel %vm1904, 1, 0
        %v2929 = vsel %vm1905, 1, 0
        %v2930 = vsel %vm1906, 1, 0
        %v2931 = vsel %vm1907, 1, 0
        %v2932 = vsel %vm1908, 1, 0
        %v2933 = vsel %vm1909, 1, 0
        %v2934 = vsel %vm1910, 1, 0
        %v2935 = vsel %vm1911, 1, 0
        %v2936 = vsel %vm1912, 1, 0
        %v2937 = vsel %vm1913, 1, 0
        %v2938 = vsel %vm1914, 1, 0
        %v2939 = vsel %vm1915, 1, 0
        %v2940 = vsel %vm1916, 1, 0
        %v2941 = vsel %vm1917, 1, 0
        %v2942 = vsel %vm1918, 1, 0
        %v2943 = vsel %vm1919, 1, 0
        %v2944 = vsel %vm1920, 1, 0
        %v2945 = vsel %vm1921, 1, 0
        %v2946 = vsel %vm1922, 1, 0
        %v2947 = vsel %vm1923, 1, 0
        %v2948 = vsel %vm1924, 1, 0
        %v2949 = vsel %vm1925, 1, 0
        %v2950 = vsel %vm1926, 1, 0
        %v2951 = vsel %vm1927, 1, 0
        %v2952 = vsel %vm1928, 1, 0
        %v2953 = vsel %vm1929, 1, 0
        %v2954 = vsel %vm1930, 1, 0
        %v2955 = vsel %vm1931, 1, 0
        %v2956 = vsel %vm1932, 1, 0
        %v2957 = vsel %vm1933, 1, 0
        %v2958 = vsel %vm1934, 1, 0
        %v2959 = vsel %vm1935, 1, 0
        %v2960 = vsel %vm1936, 1, 0
        %v2961 = vsel %vm1937, 1, 0
        %v2962 = vsel %vm1938, 1, 0
        %v2963 = vsel %vm1939, 1, 0
        %v2964 = vsel %vm1940, 1, 0
        %v2965 = vsel %vm1941, 1, 0
        %v2966 = vsel %vm1942, 1, 0
        %v2967 = vsel %vm1943, 1, 0
        %v2968 = vsel %vm1944, 1, 0
        %v2969 = vsel %vm1945, 1, 0
        %v2970 = vsel %vm1946, 1, 0
        %v2971 = vsel %vm1947, 1, 0
        %v2972 = vsel %vm1948, 1, 0
        %v2973 = vsel %vm1949, 1, 0
        %v2974 = vsel %vm1950, 1, 0
        %v2975 = vsel %vm1951, 1, 0
        %v2976 = vsel %vm1952, 1, 0
        %v2977 = vsel %vm1953, 1, 0
        %v2978 = vsel %vm1954, 1, 0
        %v2979 = vsel %vm1955, 1, 0
        %v2980 = vsel %vm1956, 1, 0
        %v2981 = vsel %vm1957, 1, 0
        %v2982 = vsel %vm1958, 1, 0
        %v2983 = vsel %vm1959, 1, 0
        %v2984 = vsel %vm1960, 1, 0
        %v2985 = vsel %vm1961, 1, 0
        %v2986 = vsel %vm1962, 1, 0
        %v2987 = vsel %vm1963, 1, 0
        %v2988 = vsel %vm1964, 1, 0
        %v2989 = vsel %vm1965, 1, 0
        %v2990 = vsel %vm1966, 1, 0
        %v2991 = vsel %vm1967, 1, 0
        %v2992 = vsel %vm1968, 1, 0
        %v2993 = vsel %vm1969, 1, 0
        %v2994 = vsel %vm1970, 1, 0
        %v2995 = vsel %vm1971, 1, 0
        %v2996 = vsel %vm1972, 1, 0
        %v2997 = vsel %vm1973, 1, 0
        %v2998 = vsel %vm1974, 1, 0
        %v2999 = vsel %vm1975, 1, 0
        %v3000 = vsel %vm1976, 1, 0
        %v3001 = vsel %vm1977, 1, 0
        %v3002 = vsel %vm1978, 1, 0
        %v3003 = vsel %vm1979, 1, 0
        %v3004 = vsel %vm1980, 1, 0
        %v3005 = vsel %vm1981, 1, 0
        %v3006 = vsel %vm1982, 1, 0
        %v3007 = vsel %vm1983, 1, 0
        %v3008 = vsel %vm1984, 1, 0
        %v3009 = vsel %vm1985, 1, 0
        %v3010 = vsel %vm1986, 1, 0
        %v3011 = vsel %vm1987, 1, 0
        %v3012 = vsel %vm1988, 1, 0
        %v3013 = vsel %vm1989, 1, 0
        %v3014 = vsel %vm1990, 1, 0
        %v3015 = vsel %vm1991, 1, 0
        %v3016 = vsel %vm1992, 1, 0
        %v3017 = vsel %vm1993, 1, 0
        %v3018 = vsel %vm1994, 1, 0
        %v3019 = vsel %vm1995, 1, 0
        %v3020 = vsel %vm1996, 1, 0
        %v3021 = vsel %vm1997, 1, 0
        %v3022 = vsel %vm1998, 1, 0
        %v3023 = vsel %vm1999, 1, 0
        %v3024 = vsel %vm2000, 1, 0
        %v3025 = vsel %vm2001, 1, 0
        %v3026 = vsel %vm2002, 1, 0
        %v3027 = vsel %vm2003, 1, 0
        %v3028 = vsel %vm2004, 1, 0
        %v3029 = vsel %vm2005, 1, 0
        %v3030 = vsel %vm2006, 1, 0
        %v3031 = vsel %vm2007, 1, 0
        %v3032 = vsel %vm2008, 1, 0
        %v3033 = vsel %vm2009, 1, 0
        %v3034 = vsel %vm2010, 1, 0
        %v3035 = vsel %vm2011, 1, 0
        %v3036 = vsel %vm2012, 1, 0
        %v3037 = vsel %vm2013, 1, 0
        %v3038 = vsel %vm2014, 1, 0
        %v3039 = vsel %vm2015, 1, 0
        %v3040 = vsel %vm2016, 1, 0
        %v3041 = vsel %vm2017, 1, 0
        %v3042 = vsel %vm2018, 1, 0
        %v3043 = vsel %vm2019, 1, 0
        %v3044 = vsel %vm2020, 1, 0
        %v3045 = vsel %vm2021, 1, 0
        %v3046 = vsel %vm2022, 1, 0
        %v3047 = vsel %vm2023, 1, 0
        %v3048 = vsel %vm2024, 1, 0
        %v3049 = vsel %vm2025, 1, 0
        %v3050 = vsel %vm2026, 1, 0
        %v3051 = vsel %vm2027, 1, 0
        %v3052 = vsel %vm2028, 1, 0
        %v3053 = vsel %vm2029, 1, 0
        %v3054 = vsel %vm2030, 1, 0
        %v3055 = vsel %vm2031, 1, 0
        %v3056 = vsel %vm2032, 1, 0
        %v3057 = vsel %vm2033, 1, 0
        %v3058 = vsel %vm2034, 1, 0
        %v3059 = vsel %vm2035, 1, 0
        %v3060 = vsel %vm2036, 1, 0
        %v3061 = vsel %vm2037, 1, 0
        %v3062 = vsel %vm2038, 1, 0
        %v3063 = vsel %vm2039, 1, 0
        %v3064 = vsel %vm2040, 1, 0
        %v3065 = vsel %vm2041, 1, 0
        %v3066 = vsel %vm2042, 1, 0
        %v3067 = vsel %vm2043, 1, 0
        %v3068 = vsel %vm2044, 1, 0
        %v3069 = vsel %vm2045, 1, 0
        %v3070 = vsel %vm2046, 1, 0
        %v3071 = vsel %vm2047, 1, 0
        %v3072 = vsel %vm2048, 1, 0
        %v3073 = vsel %vm2049, 1, 0
        %v3074 = vsel %vm2050, 1, 0
        %v3075 = vsel %vm2051, 1, 0
        %v3076 = vsel %vm2052, 1, 0
        %v3077 = vsel %vm2053, 1, 0
        %v3078 = vsel %vm2054, 1, 0
        %v3079 = vsel %vm2055, 1, 0
        %v3080 = vsel %vm2056, 1, 0
        %v3081 = vsel %vm2057, 1, 0
        %v3082 = vsel %vm2058, 1, 0
        %v3083 = vsel %vm2059, 1, 0
        %v3084 = vsel %vm2060, 1, 0
        %v3085 = vsel %vm2061, 1, 0
        %v3086 = vsel %vm2062, 1, 0
        %v3087 = vsel %vm2063, 1, 0
        %v3088 = vsel %vm2064, 1, 0
        %v3089 = vsel %vm2065, 1, 0
        %v3090 = vsel %vm2066, 1, 0
        %v3091 = vsel %vm2067, 1, 0
        %v3092 = vsel %vm2068, 1, 0
        %v3093 = vsel %vm2069, 1, 0
        %v3094 = vsel %vm2070, 1, 0
        %v3095 = vcvt.s32.f32 %v2071
        %v3096 = vcvt.s32.f32 %v2072
        %v3097 = vcvt.s32.f32 %v2073
        %v3098 = vcvt.s32.f32 %v2074
        %v3099 = vcvt.s32.f32 %v2075
        %v3100 = vcvt.s32.f32 %v2076
        %v3101 = vcvt.s32.f32 %v2077
        %v3102 = vcvt.s32.f32 %v2078
        %v3103 = vcvt.s32.f32 %v2079
        %v3104 = vcvt.s32.f32 %v2080
        %v3105 = vcvt.s32.f32 %v2081
        %v3106 = vcvt.s32.f32 %v2082
        %v3107 = vcvt.s32.f32 %v2083
        %v3108 = vcvt.s32.f32 %v2084
        %v3109 = vcvt.s32.f32 %v2085
        %v3110 = vcvt.s32.f32 %v2086
        %v3111 = vcvt.s32.f32 %v2087
        %v3112 = vcvt.s32.f32 %v2088
        %v3113 = vcvt.s32.f32 %v2089
        %v3114 = vcvt.s32.f32 %v2090
        %v3115 = vcvt.s32.f32 %v2091
        %v3116 = vcvt.s32.f32 %v2092
        %v3117 = vcvt.s32.f32 %v2093
        %v3118 = vcvt.s32.f32 %v2094
        %v3119 = vcvt.s32.f32 %v2095
        %v3120 = vcvt.s32.f32 %v2096
        %v3121 = vcvt.s32.f32 %v2097
        %v3122 = vcvt.s32.f32 %v2098
        %v3123 = vcvt.s32.f32 %v2099
        %v3124 = vcvt.s32.f32 %v2100
        %v3125 = vcvt.s32.f32 %v2101
        %v3126 = vcvt.s32.f32 %v2102
        %v3127 = vcvt.s32.f32 %v2103
        %v3128 = vcvt.s32.f32 %v2104
        %v3129 = vcvt.s32.f32 %v2105
        %v3130 = vcvt.s32.f32 %v2106
        %v3131 = vcvt.s32.f32 %v2107
        %v3132 = vcvt.s32.f32 %v2108
        %v3133 = vcvt.s32.f32 %v2109
        %v3134 = vcvt.s32.f32 %v2110
        %v3135 = vcvt.s32.f32 %v2111
        %v3136 = vcvt.s32.f32 %v2112
        %v3137 = vcvt.s32.f32 %v2113
        %v3138 = vcvt.s32.f32 %v2114
        %v3139 = vcvt.s32.f32 %v2115
        %v3140 = vcvt.s32.f32 %v2116
        %v3141 = vcvt.s32.f32 %v2117
        %v3142 = vcvt.s32.f32 %v2118
        %v3143 = vcvt.s32.f32 %v2119
        %v3144 = vcvt.s32.f32 %v2120
        %v3145 = vcvt.s32.f32 %v2121
        %v3146 = vcvt.s32.f32 %v2122
        %v3147 = vcvt.s32.f32 %v2123
        %v3148 = vcvt.s32.f32 %v2124
        %v3149 = vcvt.s32.f32 %v2125
        %v3150 = vcvt.s32.f32 %v2126
        %v3151 = vcvt.s32.f32 %v2127
        %v3152 = vcvt.s32.f32 %v2128
        %v3153 = vcvt.s32.f32 %v2129
        %v3154 = vcvt.s32.f32 %v2130
        %v3155 = vcvt.s32.f32 %v2131
        %v3156 = vcvt.s32.f32 %v2132
        %v3157 = vcvt.s32.f32 %v2133
        %v3158 = vcvt.s32.f32 %v2134
        %v3159 = vcvt.s32.f32 %v2135
        %v3160 = vcvt.s32.f32 %v2136
        %v3161 = vcvt.s32.f32 %v2137
        %v3162 = vcvt.s32.f32 %v2138
        %v3163 = vcvt.s32.f32 %v2139
        %v3164 = vcvt.s32.f32 %v2140
        %v3165 = vcvt.s32.f32 %v2141
        %v3166 = vcvt.s32.f32 %v2142
        %v3167 = vcvt.s32.f32 %v2143
        %v3168 = vcvt.s32.f32 %v2144
        %v3169 = vcvt.s32.f32 %v2145
        %v3170 = vcvt.s32.f32 %v2146
        %v3171 = vcvt.s32.f32 %v2147
        %v3172 = vcvt.s32.f32 %v2148
        %v3173 = vcvt.s32.f32 %v2149
        %v3174 = vcvt.s32.f32 %v2150
        %v3175 = vcvt.s32.f32 %v2151
        %v3176 = vcvt.s32.f32 %v2152
        %v3177 = vcvt.s32.f32 %v2153
        %v3178 = vcvt.s32.f32 %v2154
        %v3179 = vcvt.s32.f32 %v2155
        %v3180 = vcvt.s32.f32 %v2156
        %v3181 = vcvt.s32.f32 %v2157
        %v3182 = vcvt.s32.f32 %v2158
        %v3183 = vcvt.s32.f32 %v2159
        %v3184 = vcvt.s32.f32 %v2160
        %v3185 = vcvt.s32.f32 %v2161
        %v3186 = vcvt.s32.f32 %v2162
        %v3187 = vcvt.s32.f32 %v2163
        %v3188 = vcvt.s32.f32 %v2164
        %v3189 = vcvt.s32.f32 %v2165
        %v3190 = vcvt.s32.f32 %v2166
        %v3191 = vcvt.s32.f32 %v2167
        %v3192 = vcvt.s32.f32 %v2168
        %v3193 = vcvt.s32.f32 %v2169
        %v3194 = vcvt.s32.f32 %v2170
        %v3195 = vcvt.s32.f32 %v2171
        %v3196 = vcvt.s32.f32 %v2172
        %v3197 = vcvt.s32.f32 %v2173
        %v3198 = vcvt.s32.f32 %v2174
        %v3199 = vcvt.s32.f32 %v2175
        %v3200 = vcvt.s32.f32 %v2176
        %v3201 = vcvt.s32.f32 %v2177
        %v3202 = vcvt.s32.f32 %v2178
        %v3203 = vcvt.s32.f32 %v2179
        %v3204 = vcvt.s32.f32 %v2180
        %v3205 = vcvt.s32.f32 %v2181
        %v3206 = vcvt.s32.f32 %v2182
        %v3207 = vcvt.s32.f32 %v2183
        %v3208 = vcvt.s32.f32 %v2184
        %v3209 = vcvt.s32.f32 %v2185
        %v3210 = vcvt.s32.f32 %v2186
        %v3211 = vcvt.s32.f32 %v2187
        %v3212 = vcvt.s32.f32 %v2188
        %v3213 = vcvt.s32.f32 %v2189
        %v3214 = vcvt.s32.f32 %v2190
        %v3215 = vcvt.s32.f32 %v2191
        %v3216 = vcvt.s32.f32 %v2192
        %v3217 = vcvt.s32.f32 %v2193
        %v3218 = vcvt.s32.f32 %v2194
        %v3219 = vcvt.s32.f32 %v2195
        %v3220 = vcvt.s32.f32 %v2196
        %v3221 = vcvt.s32.f32 %v2197
        %v3222 = vcvt.s32.f32 %v2198
        %v3223 = vcvt.s32.f32 %v2199
        %v3224 = vcvt.s32.f32 %v2200
        %v3225 = vcvt.s32.f32 %v2201
        %v3226 = vcvt.s32.f32 %v2202
        %v3227 = vcvt.s32.f32 %v2203
        %v3228 = vcvt.s32.f32 %v2204
        %v3229 = vcvt.s32.f32 %v2205
        %v3230 = vcvt.s32.f32 %v2206
        %v3231 = vcvt.s32.f32 %v2207
        %v3232 = vcvt.s32.f32 %v2208
        %v3233 = vcvt.s32.f32 %v2209
        %v3234 = vcvt.s32.f32 %v2210
        %v3235 = vcvt.s32.f32 %v2211
        %v3236 = vcvt.s32.f32 %v2212
        %v3237 = vcvt.s32.f32 %v2213
        %v3238 = vcvt.s32.f32 %v2214
        %v3239 = vcvt.s32.f32 %v2215
        %v3240 = vcvt.s32.f32 %v2216
        %v3241 = vcvt.s32.f32 %v2217
        %v3242 = vcvt.s32.f32 %v2218
        %v3243 = vcvt.s32.f32 %v2219
        %v3244 = vcvt.s32.f32 %v2220
        %v3245 = vcvt.s32.f32 %v2221
        %v3246 = vcvt.s32.f32 %v2222
        %v3247 = vcvt.s32.f32 %v2223
        %v3248 = vcvt.s32.f32 %v2224
        %v3249 = vcvt.s32.f32 %v2225
        %v3250 = vcvt.s32.f32 %v2226
        %v3251 = vcvt.s32.f32 %v2227
        %v3252 = vcvt.s32.f32 %v2228
        %v3253 = vcvt.s32.f32 %v2229
        %v3254 = vcvt.s32.f32 %v2230
        %v3255 = vcvt.s32.f32 %v2231
        %v3256 = vcvt.s32.f32 %v2232
        %v3257 = vcvt.s32.f32 %v2233
        %v3258 = vcvt.s32.f32 %v2234
        %v3259 = vcvt.s32.f32 %v2235
        %v3260 = vcvt.s32.f32 %v2236
        %v3261 = vcvt.s32.f32 %v2237
        %v3262 = vcvt.s32.f32 %v2238
        %v3263 = vcvt.s32.f32 %v2239
        %v3264 = vcvt.s32.f32 %v2240
        %v3265 = vcvt.s32.f32 %v2241
        %v3266 = vcvt.s32.f32 %v2242
        %v3267 = vcvt.s32.f32 %v2243
        %v3268 = vcvt.s32.f32 %v2244
        %v3269 = vcvt.s32.f32 %v2245
        %v3270 = vcvt.s32.f32 %v2246
        %v3271 = vcvt.s32.f32 %v2247
        %v3272 = vcvt.s32.f32 %v2248
        %v3273 = vcvt.s32.f32 %v2249
        %v3274 = vcvt.s32.f32 %v2250
        %v3275 = vcvt.s32.f32 %v2251
        %v3276 = vcvt.s32.f32 %v2252
        %v3277 = vcvt.s32.f32 %v2253
        %v3278 = vcvt.s32.f32 %v2254
        %v3279 = vcvt.s32.f32 %v2255
        %v3280 = vcvt.s32.f32 %v2256
        %v3281 = vcvt.s32.f32 %v2257
        %v3282 = vcvt.s32.f32 %v2258
        %v3283 = vcvt.s32.f32 %v2259
        %v3284 = vcvt.s32.f32 %v2260
        %v3285 = vcvt.s32.f32 %v2261
        %v3286 = vcvt.s32.f32 %v2262
        %v3287 = vcvt.s32.f32 %v2263
        %v3288 = vcvt.s32.f32 %v2264
        %v3289 = vcvt.s32.f32 %v2265
        %v3290 = vcvt.s32.f32 %v2266
        %v3291 = vcvt.s32.f32 %v2267
        %v3292 = vcvt.s32.f32 %v2268
        %v3293 = vcvt.s32.f32 %v2269
        %v3294 = vcvt.s32.f32 %v2270
        %v3295 = vcvt.s32.f32 %v2271
        %v3296 = vcvt.s32.f32 %v2272
        %v3297 = vcvt.s32.f32 %v2273
        %v3298 = vcvt.s32.f32 %v2274
        %v3299 = vcvt.s32.f32 %v2275
        %v3300 = vcvt.s32.f32 %v2276
        %v3301 = vcvt.s32.f32 %v2277
        %v3302 = vcvt.s32.f32 %v2278
        %v3303 = vcvt.s32.f32 %v2279
        %v3304 = vcvt.s32.f32 %v2280
        %v3305 = vcvt.s32.f32 %v2281
        %v3306 = vcvt.s32.f32 %v2282
        %v3307 = vcvt.s32.f32 %v2283
        %v3308 = vcvt.s32.f32 %v2284
        %v3309 = vcvt.s32.f32 %v2285
        %v3310 = vcvt.s32.f32 %v2286
        %v3311 = vcvt.s32.f32 %v2287
        %v3312 = vcvt.s32.f32 %v2288
        %v3313 = vcvt.s32.f32 %v2289
        %v3314 = vcvt.s32.f32 %v2290
        %v3315 = vcvt.s32.f32 %v2291
        %v3316 = vcvt.s32.f32 %v2292
        %v3317 = vcvt.s32.f32 %v2293
        %v3318 = vcvt.s32.f32 %v2294
        %v3319 = vcvt.s32.f32 %v2295
        %v3320 = vcvt.s32.f32 %v2296
        %v3321 = vcvt.s32.f32 %v2297
        %v3322 = vcvt.s32.f32 %v2298
        %v3323 = vcvt.s32.f32 %v2299
        %v3324 = vcvt.s32.f32 %v2300
        %v3325 = vcvt.s32.f32 %v2301
        %v3326 = vcvt.s32.f32 %v2302
        %v3327 = vcvt.s32.f32 %v2303
        %v3328 = vcvt.s32.f32 %v2304
        %v3329 = vcvt.s32.f32 %v2305
        %v3330 = vcvt.s32.f32 %v2306
        %v3331 = vcvt.s32.f32 %v2307
        %v3332 = vcvt.s32.f32 %v2308
        %v3333 = vcvt.s32.f32 %v2309
        %v3334 = vcvt.s32.f32 %v2310
        %v3335 = vcvt.s32.f32 %v2311
        %v3336 = vcvt.s32.f32 %v2312
        %v3337 = vcvt.s32.f32 %v2313
        %v3338 = vcvt.s32.f32 %v2314
        %v3339 = vcvt.s32.f32 %v2315
        %v3340 = vcvt.s32.f32 %v2316
        %v3341 = vcvt.s32.f32 %v2317
        %v3342 = vcvt.s32.f32 %v2318
        %v3343 = vcvt.s32.f32 %v2319
        %v3344 = vcvt.s32.f32 %v2320
        %v3345 = vcvt.s32.f32 %v2321
        %v3346 = vcvt.s32.f32 %v2322
        %v3347 = vcvt.s32.f32 %v2323
        %v3348 = vcvt.s32.f32 %v2324
        %v3349 = vcvt.s32.f32 %v2325
        %v3350 = vcvt.s32.f32 %v2326
        %v3351 = vcvt.s32.f32 %v2327
        %v3352 = vcvt.s32.f32 %v2328
        %v3353 = vcvt.s32.f32 %v2329
        %v3354 = vcvt.s32.f32 %v2330
        %v3355 = vcvt.s32.f32 %v2331
        %v3356 = vcvt.s32.f32 %v2332
        %v3357 = vcvt.s32.f32 %v2333
        %v3358 = vcvt.s32.f32 %v2334
        %v3359 = vcvt.s32.f32 %v2335
        %v3360 = vcvt.s32.f32 %v2336
        %v3361 = vcvt.s32.f32 %v2337
        %v3362 = vcvt.s32.f32 %v2338
        %v3363 = vcvt.s32.f32 %v2339
        %v3364 = vcvt.s32.f32 %v2340
        %v3365 = vcvt.s32.f32 %v2341
        %v3366 = vcvt.s32.f32 %v2342
        %v3367 = vcvt.s32.f32 %v2343
        %v3368 = vcvt.s32.f32 %v2344
        %v3369 = vcvt.s32.f32 %v2345
        %v3370 = vcvt.s32.f32 %v2346
        %v3371 = vcvt.s32.f32 %v2347
        %v3372 = vcvt.s32.f32 %v2348
        %v3373 = vcvt.s32.f32 %v2349
        %v3374 = vcvt.s32.f32 %v2350
        %v3375 = vcvt.s32.f32 %v2351
        %v3376 = vcvt.s32.f32 %v2352
        %v3377 = vcvt.s32.f32 %v2353
        %v3378 = vcvt.s32.f32 %v2354
        %v3379 = vcvt.s32.f32 %v2355
        %v3380 = vcvt.s32.f32 %v2356
        %v3381 = vcvt.s32.f32 %v2357
        %v3382 = vcvt.s32.f32 %v2358
        %v3383 = vcvt.s32.f32 %v2359
        %v3384 = vcvt.s32.f32 %v2360
        %v3385 = vcvt.s32.f32 %v2361
        %v3386 = vcvt.s32.f32 %v2362
        %v3387 = vcvt.s32.f32 %v2363
        %v3388 = vcvt.s32.f32 %v2364
        %v3389 = vcvt.s32.f32 %v2365
        %v3390 = vcvt.s32.f32 %v2366
        %v3391 = vcvt.s32.f32 %v2367
        %v3392 = vcvt.s32.f32 %v2368
        %v3393 = vcvt.s32.f32 %v2369
        %v3394 = vcvt.s32.f32 %v2370
        %v3395 = vcvt.s32.f32 %v2371
        %v3396 = vcvt.s32.f32 %v2372
        %v3397 = vcvt.s32.f32 %v2373
        %v3398 = vcvt.s32.f32 %v2374
        %v3399 = vcvt.s32.f32 %v2375
        %v3400 = vcvt.s32.f32 %v2376
        %v3401 = vcvt.s32.f32 %v2377
        %v3402 = vcvt.s32.f32 %v2378
        %v3403 = vcvt.s32.f32 %v2379
        %v3404 = vcvt.s32.f32 %v2380
        %v3405 = vcvt.s32.f32 %v2381
        %v3406 = vcvt.s32.f32 %v2382
        %v3407 = vcvt.s32.f32 %v2383
        %v3408 = vcvt.s32.f32 %v2384
        %v3409 = vcvt.s32.f32 %v2385
        %v3410 = vcvt.s32.f32 %v2386
        %v3411 = vcvt.s32.f32 %v2387
        %v3412 = vcvt.s32.f32 %v2388
        %v3413 = vcvt.s32.f32 %v2389
        %v3414 = vcvt.s32.f32 %v2390
        %v3415 = vcvt.s32.f32 %v2391
        %v3416 = vcvt.s32.f32 %v2392
        %v3417 = vcvt.s32.f32 %v2393
        %v3418 = vcvt.s32.f32 %v2394
        %v3419 = vcvt.s32.f32 %v2395
        %v3420 = vcvt.s32.f32 %v2396
        %v3421 = vcvt.s32.f32 %v2397
        %v3422 = vcvt.s32.f32 %v2398
        %v3423 = vcvt.s32.f32 %v2399
        %v3424 = vcvt.s32.f32 %v2400
        %v3425 = vcvt.s32.f32 %v2401
        %v3426 = vcvt.s32.f32 %v2402
        %v3427 = vcvt.s32.f32 %v2403
        %v3428 = vcvt.s32.f32 %v2404
        %v3429 = vcvt.s32.f32 %v2405
        %v3430 = vcvt.s32.f32 %v2406
        %v3431 = vcvt.s32.f32 %v2407
        %v3432 = vcvt.s32.f32 %v2408
        %v3433 = vcvt.s32.f32 %v2409
        %v3434 = vcvt.s32.f32 %v2410
        %v3435 = vcvt.s32.f32 %v2411
        %v3436 = vcvt.s32.f32 %v2412
        %v3437 = vcvt.s32.f32 %v2413
        %v3438 = vcvt.s32.f32 %v2414
        %v3439 = vcvt.s32.f32 %v2415
        %v3440 = vcvt.s32.f32 %v2416
        %v3441 = vcvt.s32.f32 %v2417
        %v3442 = vcvt.s32.f32 %v2418
        %v3443 = vcvt.s32.f32 %v2419
        %v3444 = vcvt.s32.f32 %v2420
        %v3445 = vcvt.s32.f32 %v2421
        %v3446 = vcvt.s32.f32 %v2422
        %v3447 = vcvt.s32.f32 %v2423
        %v3448 = vcvt.s32.f32 %v2424
        %v3449 = vcvt.s32.f32 %v2425
        %v3450 = vcvt.s32.f32 %v2426
        %v3451 = vcvt.s32.f32 %v2427
        %v3452 = vcvt.s32.f32 %v2428
        %v3453 = vcvt.s32.f32 %v2429
        %v3454 = vcvt.s32.f32 %v2430
        %v3455 = vcvt.s32.f32 %v2431
        %v3456 = vcvt.s32.f32 %v2432
        %v3457 = vcvt.s32.f32 %v2433
        %v3458 = vcvt.s32.f32 %v2434
        %v3459 = vcvt.s32.f32 %v2435
        %v3460 = vcvt.s32.f32 %v2436
        %v3461 = vcvt.s32.f32 %v2437
        %v3462 = vcvt.s32.f32 %v2438
        %v3463 = vcvt.s32.f32 %v2439
        %v3464 = vcvt.s32.f32 %v2440
        %v3465 = vcvt.s32.f32 %v2441
        %v3466 = vcvt.s32.f32 %v2442
        %v3467 = vcvt.s32.f32 %v2443
        %v3468 = vcvt.s32.f32 %v2444
        %v3469 = vcvt.s32.f32 %v2445
        %v3470 = vcvt.s32.f32 %v2446
        %v3471 = vcvt.s32.f32 %v2447
        %v3472 = vcvt.s32.f32 %v2448
        %v3473 = vcvt.s32.f32 %v2449
        %v3474 = vcvt.s32.f32 %v2450
        %v3475 = vcvt.s32.f32 %v2451
        %v3476 = vcvt.s32.f32 %v2452
        %v3477 = vcvt.s32.f32 %v2453
        %v3478 = vcvt.s32.f32 %v2454
        %v3479 = vcvt.s32.f32 %v2455
        %v3480 = vcvt.s32.f32 %v2456
        %v3481 = vcvt.s32.f32 %v2457
        %v3482 = vcvt.s32.f32 %v2458
        %v3483 = vcvt.s32.f32 %v2459
        %v3484 = vcvt.s32.f32 %v2460
        %v3485 = vcvt.s32.f32 %v2461
        %v3486 = vcvt.s32.f32 %v2462
        %v3487 = vcvt.s32.f32 %v2463
        %v3488 = vcvt.s32.f32 %v2464
        %v3489 = vcvt.s32.f32 %v2465
        %v3490 = vcvt.s32.f32 %v2466
        %v3491 = vcvt.s32.f32 %v2467
        %v3492 = vcvt.s32.f32 %v2468
        %v3493 = vcvt.s32.f32 %v2469
        %v3494 = vcvt.s32.f32 %v2470
        %v3495 = vcvt.s32.f32 %v2471
        %v3496 = vcvt.s32.f32 %v2472
        %v3497 = vcvt.s32.f32 %v2473
        %v3498 = vcvt.s32.f32 %v2474
        %v3499 = vcvt.s32.f32 %v2475
        %v3500 = vcvt.s32.f32 %v2476
        %v3501 = vcvt.s32.f32 %v2477
        %v3502 = vcvt.s32.f32 %v2478
        %v3503 = vcvt.s32.f32 %v2479
        %v3504 = vcvt.s32.f32 %v2480
        %v3505 = vcvt.s32.f32 %v2481
        %v3506 = vcvt.s32.f32 %v2482
        %v3507 = vcvt.s32.f32 %v2483
        %v3508 = vcvt.s32.f32 %v2484
        %v3509 = vcvt.s32.f32 %v2485
        %v3510 = vcvt.s32.f32 %v2486
        %v3511 = vcvt.s32.f32 %v2487
        %v3512 = vcvt.s32.f32 %v2488
        %v3513 = vcvt.s32.f32 %v2489
        %v3514 = vcvt.s32.f32 %v2490
        %v3515 = vcvt.s32.f32 %v2491
        %v3516 = vcvt.s32.f32 %v2492
        %v3517 = vcvt.s32.f32 %v2493
        %v3518 = vcvt.s32.f32 %v2494
        %v3519 = vcvt.s32.f32 %v2495
        %v3520 = vcvt.s32.f32 %v2496
        %v3521 = vcvt.s32.f32 %v2497
        %v3522 = vcvt.s32.f32 %v2498
        %v3523 = vcvt.s32.f32 %v2499
        %v3524 = vcvt.s32.f32 %v2500
        %v3525 = vcvt.s32.f32 %v2501
        %v3526 = vcvt.s32.f32 %v2502
        %v3527 = vcvt.s32.f32 %v2503
        %v3528 = vcvt.s32.f32 %v2504
        %v3529 = vcvt.s32.f32 %v2505
        %v3530 = vcvt.s32.f32 %v2506
        %v3531 = vcvt.s32.f32 %v2507
        %v3532 = vcvt.s32.f32 %v2508
        %v3533 = vcvt.s32.f32 %v2509
        %v3534 = vcvt.s32.f32 %v2510
        %v3535 = vcvt.s32.f32 %v2511
        %v3536 = vcvt.s32.f32 %v2512
        %v3537 = vcvt.s32.f32 %v2513
        %v3538 = vcvt.s32.f32 %v2514
        %v3539 = vcvt.s32.f32 %v2515
        %v3540 = vcvt.s32.f32 %v2516
        %v3541 = vcvt.s32.f32 %v2517
        %v3542 = vcvt.s32.f32 %v2518
        %v3543 = vcvt.s32.f32 %v2519
        %v3544 = vcvt.s32.f32 %v2520
        %v3545 = vcvt.s32.f32 %v2521
        %v3546 = vcvt.s32.f32 %v2522
        %v3547 = vcvt.s32.f32 %v2523
        %v3548 = vcvt.s32.f32 %v2524
        %v3549 = vcvt.s32.f32 %v2525
        %v3550 = vcvt.s32.f32 %v2526
        %v3551 = vcvt.s32.f32 %v2527
        %v3552 = vcvt.s32.f32 %v2528
        %v3553 = vcvt.s32.f32 %v2529
        %v3554 = vcvt.s32.f32 %v2530
        %v3555 = vcvt.s32.f32 %v2531
        %v3556 = vcvt.s32.f32 %v2532
        %v3557 = vcvt.s32.f32 %v2533
        %v3558 = vcvt.s32.f32 %v2534
        %v3559 = vcvt.s32.f32 %v2535
        %v3560 = vcvt.s32.f32 %v2536
        %v3561 = vcvt.s32.f32 %v2537
        %v3562 = vcvt.s32.f32 %v2538
        %v3563 = vcvt.s32.f32 %v2539
        %v3564 = vcvt.s32.f32 %v2540
        %v3565 = vcvt.s32.f32 %v2541
        %v3566 = vcvt.s32.f32 %v2542
        %v3567 = vcvt.s32.f32 %v2543
        %v3568 = vcvt.s32.f32 %v2544
        %v3569 = vcvt.s32.f32 %v2545
        %v3570 = vcvt.s32.f32 %v2546
        %v3571 = vcvt.s32.f32 %v2547
        %v3572 = vcvt.s32.f32 %v2548
        %v3573 = vcvt.s32.f32 %v2549
        %v3574 = vcvt.s32.f32 %v2550
        %v3575 = vcvt.s32.f32 %v2551
        %v3576 = vcvt.s32.f32 %v2552
        %v3577 = vcvt.s32.f32 %v2553
        %v3578 = vcvt.s32.f32 %v2554
        %v3579 = vcvt.s32.f32 %v2555
        %v3580 = vcvt.s32.f32 %v2556
        %v3581 = vcvt.s32.f32 %v2557
        %v3582 = vcvt.s32.f32 %v2558
        %v3583 = vcvt.s32.f32 %v2559
        %v3584 = vcvt.s32.f32 %v2560
        %v3585 = vcvt.s32.f32 %v2561
        %v3586 = vcvt.s32.f32 %v2562
        %v3587 = vcvt.s32.f32 %v2563
        %v3588 = vcvt.s32.f32 %v2564
        %v3589 = vcvt.s32.f32 %v2565
        %v3590 = vcvt.s32.f32 %v2566
        %v3591 = vcvt.s32.f32 %v2567
        %v3592 = vcvt.s32.f32 %v2568
        %v3593 = vcvt.s32.f32 %v2569
        %v3594 = vcvt.s32.f32 %v2570
        %v3595 = vcvt.s32.f32 %v2571
        %v3596 = vcvt.s32.f32 %v2572
        %v3597 = vcvt.s32.f32 %v2573
        %v3598 = vcvt.s32.f32 %v2574
        %v3599 = vcvt.s32.f32 %v2575
        %v3600 = vcvt.s32.f32 %v2576
        %v3601 = vcvt.s32.f32 %v2577
        %v3602 = vcvt.s32.f32 %v2578
        %v3603 = vcvt.s32.f32 %v2579
        %v3604 = vcvt.s32.f32 %v2580
        %v3605 = vcvt.s32.f32 %v2581
        %v3606 = vcvt.s32.f32 %v2582
        %v3607 = vcvt.s32.f32 %v2583
        %v3608 = vcvt.s32.f32 %v2584
        %v3609 = vcvt.s32.f32 %v2585
        %v3610 = vcvt.s32.f32 %v2586
        %v3611 = vcvt.s32.f32 %v2587
        %v3612 = vcvt.s32.f32 %v2588
        %v3613 = vcvt.s32.f32 %v2589
        %v3614 = vcvt.s32.f32 %v2590
        %v3615 = vcvt.s32.f32 %v2591
        %v3616 = vcvt.s32.f32 %v2592
        %v3617 = vcvt.s32.f32 %v2593
        %v3618 = vcvt.s32.f32 %v2594
        %v3619 = vcvt.s32.f32 %v2595
        %v3620 = vcvt.s32.f32 %v2596
        %v3621 = vcvt.s32.f32 %v2597
        %v3622 = vcvt.s32.f32 %v2598
        %v3623 = vcvt.s32.f32 %v2599
        %v3624 = vcvt.s32.f32 %v2600
        %v3625 = vcvt.s32.f32 %v2601
        %v3626 = vcvt.s32.f32 %v2602
        %v3627 = vcvt.s32.f32 %v2603
        %v3628 = vcvt.s32.f32 %v2604
        %v3629 = vcvt.s32.f32 %v2605
        %v3630 = vcvt.s32.f32 %v2606
        %v3631 = vcvt.s32.f32 %v2607
        %v3632 = vcvt.s32.f32 %v2608
        %v3633 = vcvt.s32.f32 %v2609
        %v3634 = vcvt.s32.f32 %v2610
        %v3635 = vcvt.s32.f32 %v2611
        %v3636 = vcvt.s32.f32 %v2612
        %v3637 = vcvt.s32.f32 %v2613
        %v3638 = vcvt.s32.f32 %v2614
        %v3639 = vcvt.s32.f32 %v2615
        %v3640 = vcvt.s32.f32 %v2616
        %v3641 = vcvt.s32.f32 %v2617
        %v3642 = vcvt.s32.f32 %v2618
        %v3643 = vcvt.s32.f32 %v2619
        %v3644 = vcvt.s32.f32 %v2620
        %v3645 = vcvt.s32.f32 %v2621
        %v3646 = vcvt.s32.f32 %v2622
        %v3647 = vcvt.s32.f32 %v2623
        %v3648 = vcvt.s32.f32 %v2624
        %v3649 = vcvt.s32.f32 %v2625
        %v3650 = vcvt.s32.f32 %v2626
        %v3651 = vcvt.s32.f32 %v2627
        %v3652 = vcvt.s32.f32 %v2628
        %v3653 = vcvt.s32.f32 %v2629
        %v3654 = vcvt.s32.f32 %v2630
        %v3655 = vcvt.s32.f32 %v2631
        %v3656 = vcvt.s32.f32 %v2632
        %v3657 = vcvt.s32.f32 %v2633
        %v3658 = vcvt.s32.f32 %v2634
        %v3659 = vcvt.s32.f32 %v2635
        %v3660 = vcvt.s32.f32 %v2636
        %v3661 = vcvt.s32.f32 %v2637
        %v3662 = vcvt.s32.f32 %v2638
        %v3663 = vcvt.s32.f32 %v2639
        %v3664 = vcvt.s32.f32 %v2640
        %v3665 = vcvt.s32.f32 %v2641
        %v3666 = vcvt.s32.f32 %v2642
        %v3667 = vcvt.s32.f32 %v2643
        %v3668 = vcvt.s32.f32 %v2644
        %v3669 = vcvt.s32.f32 %v2645
        %v3670 = vcvt.s32.f32 %v2646
        %v3671 = vcvt.s32.f32 %v2647
        %v3672 = vcvt.s32.f32 %v2648
        %v3673 = vcvt.s32.f32 %v2649
        %v3674 = vcvt.s32.f32 %v2650
        %v3675 = vcvt.s32.f32 %v2651
        %v3676 = vcvt.s32.f32 %v2652
        %v3677 = vcvt.s32.f32 %v2653
        %v3678 = vcvt.s32.f32 %v2654
        %v3679 = vcvt.s32.f32 %v2655
        %v3680 = vcvt.s32.f32 %v2656
        %v3681 = vcvt.s32.f32 %v2657
        %v3682 = vcvt.s32.f32 %v2658
        %v3683 = vcvt.s32.f32 %v2659
        %v3684 = vcvt.s32.f32 %v2660
        %v3685 = vcvt.s32.f32 %v2661
        %v3686 = vcvt.s32.f32 %v2662
        %v3687 = vcvt.s32.f32 %v2663
        %v3688 = vcvt.s32.f32 %v2664
        %v3689 = vcvt.s32.f32 %v2665
        %v3690 = vcvt.s32.f32 %v2666
        %v3691 = vcvt.s32.f32 %v2667
        %v3692 = vcvt.s32.f32 %v2668
        %v3693 = vcvt.s32.f32 %v2669
        %v3694 = vcvt.s32.f32 %v2670
        %v3695 = vcvt.s32.f32 %v2671
        %v3696 = vcvt.s32.f32 %v2672
        %v3697 = vcvt.s32.f32 %v2673
        %v3698 = vcvt.s32.f32 %v2674
        %v3699 = vcvt.s32.f32 %v2675
        %v3700 = vcvt.s32.f32 %v2676
        %v3701 = vcvt.s32.f32 %v2677
        %v3702 = vcvt.s32.f32 %v2678
        %v3703 = vcvt.s32.f32 %v2679
        %v3704 = vcvt.s32.f32 %v2680
        %v3705 = vcvt.s32.f32 %v2681
        %v3706 = vcvt.s32.f32 %v2682
        %v3707 = vcvt.s32.f32 %v2683
        %v3708 = vcvt.s32.f32 %v2684
        %v3709 = vcvt.s32.f32 %v2685
        %v3710 = vcvt.s32.f32 %v2686
        %v3711 = vcvt.s32.f32 %v2687
        %v3712 = vcvt.s32.f32 %v2688
        %v3713 = vcvt.s32.f32 %v2689
        %v3714 = vcvt.s32.f32 %v2690
        %v3715 = vcvt.s32.f32 %v2691
        %v3716 = vcvt.s32.f32 %v2692
        %v3717 = vcvt.s32.f32 %v2693
        %v3718 = vcvt.s32.f32 %v2694
        %v3719 = vcvt.s32.f32 %v2695
        %v3720 = vcvt.s32.f32 %v2696
        %v3721 = vcvt.s32.f32 %v2697
        %v3722 = vcvt.s32.f32 %v2698
        %v3723 = vcvt.s32.f32 %v2699
        %v3724 = vcvt.s32.f32 %v2700
        %v3725 = vcvt.s32.f32 %v2701
        %v3726 = vcvt.s32.f32 %v2702
        %v3727 = vcvt.s32.f32 %v2703
        %v3728 = vcvt.s32.f32 %v2704
        %v3729 = vcvt.s32.f32 %v2705
        %v3730 = vcvt.s32.f32 %v2706
        %v3731 = vcvt.s32.f32 %v2707
        %v3732 = vcvt.s32.f32 %v2708
        %v3733 = vcvt.s32.f32 %v2709
        %v3734 = vcvt.s32.f32 %v2710
        %v3735 = vcvt.s32.f32 %v2711
        %v3736 = vcvt.s32.f32 %v2712
        %v3737 = vcvt.s32.f32 %v2713
        %v3738 = vcvt.s32.f32 %v2714
        %v3739 = vcvt.s32.f32 %v2715
        %v3740 = vcvt.s32.f32 %v2716
        %v3741 = vcvt.s32.f32 %v2717
        %v3742 = vcvt.s32.f32 %v2718
        %v3743 = vcvt.s32.f32 %v2719
        %v3744 = vcvt.s32.f32 %v2720
        %v3745 = vcvt.s32.f32 %v2721
        %v3746 = vcvt.s32.f32 %v2722
        %v3747 = vcvt.s32.f32 %v2723
        %v3748 = vcvt.s32.f32 %v2724
        %v3749 = vcvt.s32.f32 %v2725
        %v3750 = vcvt.s32.f32 %v2726
        %v3751 = vcvt.s32.f32 %v2727
        %v3752 = vcvt.s32.f32 %v2728
        %v3753 = vcvt.s32.f32 %v2729
        %v3754 = vcvt.s32.f32 %v2730
        %v3755 = vcvt.s32.f32 %v2731
        %v3756 = vcvt.s32.f32 %v2732
        %v3757 = vcvt.s32.f32 %v2733
        %v3758 = vcvt.s32.f32 %v2734
        %v3759 = vcvt.s32.f32 %v2735
        %v3760 = vcvt.s32.f32 %v2736
        %v3761 = vcvt.s32.f32 %v2737
        %v3762 = vcvt.s32.f32 %v2738
        %v3763 = vcvt.s32.f32 %v2739
        %v3764 = vcvt.s32.f32 %v2740
        %v3765 = vcvt.s32.f32 %v2741
        %v3766 = vcvt.s32.f32 %v2742
        %v3767 = vcvt.s32.f32 %v2743
        %v3768 = vcvt.s32.f32 %v2744
        %v3769 = vcvt.s32.f32 %v2745
        %v3770 = vcvt.s32.f32 %v2746
        %v3771 = vcvt.s32.f32 %v2747
        %v3772 = vcvt.s32.f32 %v2748
        %v3773 = vcvt.s32.f32 %v2749
        %v3774 = vcvt.s32.f32 %v2750
        %v3775 = vcvt.s32.f32 %v2751
        %v3776 = vcvt.s32.f32 %v2752
        %v3777 = vcvt.s32.f32 %v2753
        %v3778 = vcvt.s32.f32 %v2754
        %v3779 = vcvt.s32.f32 %v2755
        %v3780 = vcvt.s32.f32 %v2756
        %v3781 = vcvt.s32.f32 %v2757
        %v3782 = vcvt.s32.f32 %v2758
        %v3783 = vcvt.s32.f32 %v2759
        %v3784 = vcvt.s32.f32 %v2760
        %v3785 = vcvt.s32.f32 %v2761
        %v3786 = vcvt.s32.f32 %v2762
        %v3787 = vcvt.s32.f32 %v2763
        %v3788 = vcvt.s32.f32 %v2764
        %v3789 = vcvt.s32.f32 %v2765
        %v3790 = vcvt.s32.f32 %v2766
        %v3791 = vcvt.s32.f32 %v2767
        %v3792 = vcvt.s32.f32 %v2768
        %v3793 = vcvt.s32.f32 %v2769
        %v3794 = vcvt.s32.f32 %v2770
        %v3795 = vcvt.s32.f32 %v2771
        %v3796 = vcvt.s32.f32 %v2772
        %v3797 = vcvt.s32.f32 %v2773
        %v3798 = vcvt.s32.f32 %v2774
        %v3799 = vcvt.s32.f32 %v2775
        %v3800 = vcvt.s32.f32 %v2776
        %v3801 = vcvt.s32.f32 %v2777
        %v3802 = vcvt.s32.f32 %v2778
        %v3803 = vcvt.s32.f32 %v2779
        %v3804 = vcvt.s32.f32 %v2780
        %v3805 = vcvt.s32.f32 %v2781
        %v3806 = vcvt.s32.f32 %v2782
        %v3807 = vcvt.s32.f32 %v2783
        %v3808 = vcvt.s32.f32 %v2784
        %v3809 = vcvt.s32.f32 %v2785
        %v3810 = vcvt.s32.f32 %v2786
        %v3811 = vcvt.s32.f32 %v2787
        %v3812 = vcvt.s32.f32 %v2788
        %v3813 = vcvt.s32.f32 %v2789
        %v3814 = vcvt.s32.f32 %v2790
        %v3815 = vcvt.s32.f32 %v2791
        %v3816 = vcvt.s32.f32 %v2792
        %v3817 = vcvt.s32.f32 %v2793
        %v3818 = vcvt.s32.f32 %v2794
        %v3819 = vcvt.s32.f32 %v2795
        %v3820 = vcvt.s32.f32 %v2796
        %v3821 = vcvt.s32.f32 %v2797
        %v3822 = vcvt.s32.f32 %v2798
        %v3823 = vcvt.s32.f32 %v2799
        %v3824 = vcvt.s32.f32 %v2800
        %v3825 = vcvt.s32.f32 %v2801
        %v3826 = vcvt.s32.f32 %v2802
        %v3827 = vcvt.s32.f32 %v2803
        %v3828 = vcvt.s32.f32 %v2804
        %v3829 = vcvt.s32.f32 %v2805
        %v3830 = vcvt.s32.f32 %v2806
        %v3831 = vcvt.s32.f32 %v2807
        %v3832 = vcvt.s32.f32 %v2808
        %v3833 = vcvt.s32.f32 %v2809
        %v3834 = vcvt.s32.f32 %v2810
        %v3835 = vcvt.s32.f32 %v2811
        %v3836 = vcvt.s32.f32 %v2812
        %v3837 = vcvt.s32.f32 %v2813
        %v3838 = vcvt.s32.f32 %v2814
        %v3839 = vcvt.s32.f32 %v2815
        %v3840 = vcvt.s32.f32 %v2816
        %v3841 = vcvt.s32.f32 %v2817
        %v3842 = vcvt.s32.f32 %v2818
        %v3843 = vcvt.s32.f32 %v2819
        %v3844 = vcvt.s32.f32 %v2820
        %v3845 = vcvt.s32.f32 %v2821
        %v3846 = vcvt.s32.f32 %v2822
        %v3847 = vcvt.s32.f32 %v2823
        %v3848 = vcvt.s32.f32 %v2824
        %v3849 = vcvt.s32.f32 %v2825
        %v3850 = vcvt.s32.f32 %v2826
        %v3851 = vcvt.s32.f32 %v2827
        %v3852 = vcvt.s32.f32 %v2828
        %v3853 = vcvt.s32.f32 %v2829
        %v3854 = vcvt.s32.f32 %v2830
        %v3855 = vcvt.s32.f32 %v2831
        %v3856 = vcvt.s32.f32 %v2832
        %v3857 = vcvt.s32.f32 %v2833
        %v3858 = vcvt.s32.f32 %v2834
        %v3859 = vcvt.s32.f32 %v2835
        %v3860 = vcvt.s32.f32 %v2836
        %v3861 = vcvt.s32.f32 %v2837
        %v3862 = vcvt.s32.f32 %v2838
        %v3863 = vcvt.s32.f32 %v2839
        %v3864 = vcvt.s32.f32 %v2840
        %v3865 = vcvt.s32.f32 %v2841
        %v3866 = vcvt.s32.f32 %v2842
        %v3867 = vcvt.s32.f32 %v2843
        %v3868 = vcvt.s32.f32 %v2844
        %v3869 = vcvt.s32.f32 %v2845
        %v3870 = vcvt.s32.f32 %v2846
        %v3871 = vcvt.s32.f32 %v2847
        %v3872 = vcvt.s32.f32 %v2848
        %v3873 = vcvt.s32.f32 %v2849
        %v3874 = vcvt.s32.f32 %v2850
        %v3875 = vcvt.s32.f32 %v2851
        %v3876 = vcvt.s32.f32 %v2852
        %v3877 = vcvt.s32.f32 %v2853
        %v3878 = vcvt.s32.f32 %v2854
        %v3879 = vcvt.s32.f32 %v2855
        %v3880 = vcvt.s32.f32 %v2856
        %v3881 = vcvt.s32.f32 %v2857
        %v3882 = vcvt.s32.f32 %v2858
        %v3883 = vcvt.s32.f32 %v2859
        %v3884 = vcvt.s32.f32 %v2860
        %v3885 = vcvt.s32.f32 %v2861
        %v3886 = vcvt.s32.f32 %v2862
        %v3887 = vcvt.s32.f32 %v2863
        %v3888 = vcvt.s32.f32 %v2864
        %v3889 = vcvt.s32.f32 %v2865
        %v3890 = vcvt.s32.f32 %v2866
        %v3891 = vcvt.s32.f32 %v2867
        %v3892 = vcvt.s32.f32 %v2868
        %v3893 = vcvt.s32.f32 %v2869
        %v3894 = vcvt.s32.f32 %v2870
        %v3895 = vcvt.s32.f32 %v2871
        %v3896 = vcvt.s32.f32 %v2872
        %v3897 = vcvt.s32.f32 %v2873
        %v3898 = vcvt.s32.f32 %v2874
        %v3899 = vcvt.s32.f32 %v2875
        %v3900 = vcvt.s32.f32 %v2876
        %v3901 = vcvt.s32.f32 %v2877
        %v3902 = vcvt.s32.f32 %v2878
        %v3903 = vcvt.s32.f32 %v2879
        %v3904 = vcvt.s32.f32 %v2880
        %v3905 = vcvt.s32.f32 %v2881
        %v3906 = vcvt.s32.f32 %v2882
        %v3907 = vcvt.s32.f32 %v2883
        %v3908 = vcvt.s32.f32 %v2884
        %v3909 = vcvt.s32.f32 %v2885
        %v3910 = vcvt.s32.f32 %v2886
        %v3911 = vcvt.s32.f32 %v2887
        %v3912 = vcvt.s32.f32 %v2888
        %v3913 = vcvt.s32.f32 %v2889
        %v3914 = vcvt.s32.f32 %v2890
        %v3915 = vcvt.s32.f32 %v2891
        %v3916 = vcvt.s32.f32 %v2892
        %v3917 = vcvt.s32.f32 %v2893
        %v3918 = vcvt.s32.f32 %v2894
        %v3919 = vcvt.s32.f32 %v2895
        %v3920 = vcvt.s32.f32 %v2896
        %v3921 = vcvt.s32.f32 %v2897
        %v3922 = vcvt.s32.f32 %v2898
        %v3923 = vcvt.s32.f32 %v2899
        %v3924 = vcvt.s32.f32 %v2900
        %v3925 = vcvt.s32.f32 %v2901
        %v3926 = vcvt.s32.f32 %v2902
        %v3927 = vcvt.s32.f32 %v2903
        %v3928 = vcvt.s32.f32 %v2904
        %v3929 = vcvt.s32.f32 %v2905
        %v3930 = vcvt.s32.f32 %v2906
        %v3931 = vcvt.s32.f32 %v2907
        %v3932 = vcvt.s32.f32 %v2908
        %v3933 = vcvt.s32.f32 %v2909
        %v3934 = vcvt.s32.f32 %v2910
        %v3935 = vcvt.s32.f32 %v2911
        %v3936 = vcvt.s32.f32 %v2912
        %v3937 = vcvt.s32.f32 %v2913
        %v3938 = vcvt.s32.f32 %v2914
        %v3939 = vcvt.s32.f32 %v2915
        %v3940 = vcvt.s32.f32 %v2916
        %v3941 = vcvt.s32.f32 %v2917
        %v3942 = vcvt.s32.f32 %v2918
        %v3943 = vcvt.s32.f32 %v2919
        %v3944 = vcvt.s32.f32 %v2920
        %v3945 = vcvt.s32.f32 %v2921
        %v3946 = vcvt.s32.f32 %v2922
        %v3947 = vcvt.s32.f32 %v2923
        %v3948 = vcvt.s32.f32 %v2924
        %v3949 = vcvt.s32.f32 %v2925
        %v3950 = vcvt.s32.f32 %v2926
        %v3951 = vcvt.s32.f32 %v2927
        %v3952 = vcvt.s32.f32 %v2928
        %v3953 = vcvt.s32.f32 %v2929
        %v3954 = vcvt.s32.f32 %v2930
        %v3955 = vcvt.s32.f32 %v2931
        %v3956 = vcvt.s32.f32 %v2932
        %v3957 = vcvt.s32.f32 %v2933
        %v3958 = vcvt.s32.f32 %v2934
        %v3959 = vcvt.s32.f32 %v2935
        %v3960 = vcvt.s32.f32 %v2936
        %v3961 = vcvt.s32.f32 %v2937
        %v3962 = vcvt.s32.f32 %v2938
        %v3963 = vcvt.s32.f32 %v2939
        %v3964 = vcvt.s32.f32 %v2940
        %v3965 = vcvt.s32.f32 %v2941
        %v3966 = vcvt.s32.f32 %v2942
        %v3967 = vcvt.s32.f32 %v2943
        %v3968 = vcvt.s32.f32 %v2944
        %v3969 = vcvt.s32.f32 %v2945
        %v3970 = vcvt.s32.f32 %v2946
        %v3971 = vcvt.s32.f32 %v2947
        %v3972 = vcvt.s32.f32 %v2948
        %v3973 = vcvt.s32.f32 %v2949
        %v3974 = vcvt.s32.f32 %v2950
        %v3975 = vcvt.s32.f32 %v2951
        %v3976 = vcvt.s32.f32 %v2952
        %v3977 = vcvt.s32.f32 %v2953
        %v3978 = vcvt.s32.f32 %v2954
        %v3979 = vcvt.s32.f32 %v2955
        %v3980 = vcvt.s32.f32 %v2956
        %v3981 = vcvt.s32.f32 %v2957
        %v3982 = vcvt.s32.f32 %v2958
        %v3983 = vcvt.s32.f32 %v2959
        %v3984 = vcvt.s32.f32 %v2960
        %v3985 = vcvt.s32.f32 %v2961
        %v3986 = vcvt.s32.f32 %v2962
        %v3987 = vcvt.s32.f32 %v2963
        %v3988 = vcvt.s32.f32 %v2964
        %v3989 = vcvt.s32.f32 %v2965
        %v3990 = vcvt.s32.f32 %v2966
        %v3991 = vcvt.s32.f32 %v2967
        %v3992 = vcvt.s32.f32 %v2968
        %v3993 = vcvt.s32.f32 %v2969
        %v3994 = vcvt.s32.f32 %v2970
        %v3995 = vcvt.s32.f32 %v2971
        %v3996 = vcvt.s32.f32 %v2972
        %v3997 = vcvt.s32.f32 %v2973
        %v3998 = vcvt.s32.f32 %v2974
        %v3999 = vcvt.s32.f32 %v2975
        %v4000 = vcvt.s32.f32 %v2976
        %v4001 = vcvt.s32.f32 %v2977
        %v4002 = vcvt.s32.f32 %v2978
        %v4003 = vcvt.s32.f32 %v2979
        %v4004 = vcvt.s32.f32 %v2980
        %v4005 = vcvt.s32.f32 %v2981
        %v4006 = vcvt.s32.f32 %v2982
        %v4007 = vcvt.s32.f32 %v2983
        %v4008 = vcvt.s32.f32 %v2984
        %v4009 = vcvt.s32.f32 %v2985
        %v4010 = vcvt.s32.f32 %v2986
        %v4011 = vcvt.s32.f32 %v2987
        %v4012 = vcvt.s32.f32 %v2988
        %v4013 = vcvt.s32.f32 %v2989
        %v4014 = vcvt.s32.f32 %v2990
        %v4015 = vcvt.s32.f32 %v2991
        %v4016 = vcvt.s32.f32 %v2992
        %v4017 = vcvt.s32.f32 %v2993
        %v4018 = vcvt.s32.f32 %v2994
        %v4019 = vcvt.s32.f32 %v2995
        %v4020 = vcvt.s32.f32 %v2996
        %v4021 = vcvt.s32.f32 %v2997
        %v4022 = vcvt.s32.f32 %v2998
        %v4023 = vcvt.s32.f32 %v2999
        %v4024 = vcvt.s32.f32 %v3000
        %v4025 = vcvt.s32.f32 %v3001
        %v4026 = vcvt.s32.f32 %v3002
        %v4027 = vcvt.s32.f32 %v3003
        %v4028 = vcvt.s32.f32 %v3004
        %v4029 = vcvt.s32.f32 %v3005
        %v4030 = vcvt.s32.f32 %v3006
        %v4031 = vcvt.s32.f32 %v3007
        %v4032 = vcvt.s32.f32 %v3008
        %v4033 = vcvt.s32.f32 %v3009
        %v4034 = vcvt.s32.f32 %v3010
        %v4035 = vcvt.s32.f32 %v3011
        %v4036 = vcvt.s32.f32 %v3012
        %v4037 = vcvt.s32.f32 %v3013
        %v4038 = vcvt.s32.f32 %v3014
        %v4039 = vcvt.s32.f32 %v3015
        %v4040 = vcvt.s32.f32 %v3016
        %v4041 = vcvt.s32.f32 %v3017
        %v4042 = vcvt.s32.f32 %v3018
        %v4043 = vcvt.s32.f32 %v3019
        %v4044 = vcvt.s32.f32 %v3020
        %v4045 = vcvt.s32.f32 %v3021
        %v4046 = vcvt.s32.f32 %v3022
        %v4047 = vcvt.s32.f32 %v3023
        %v4048 = vcvt.s32.f32 %v3024
        %v4049 = vcvt.s32.f32 %v3025
        %v4050 = vcvt.s32.f32 %v3026
        %v4051 = vcvt.s32.f32 %v3027
        %v4052 = vcvt.s32.f32 %v3028
        %v4053 = vcvt.s32.f32 %v3029
        %v4054 = vcvt.s32.f32 %v3030
        %v4055 = vcvt.s32.f32 %v3031
        %v4056 = vcvt.s32.f32 %v3032
        %v4057 = vcvt.s32.f32 %v3033
        %v4058 = vcvt.s32.f32 %v3034
        %v4059 = vcvt.s32.f32 %v3035
        %v4060 = vcvt.s32.f32 %v3036
        %v4061 = vcvt.s32.f32 %v3037
        %v4062 = vcvt.s32.f32 %v3038
        %v4063 = vcvt.s32.f32 %v3039
        %v4064 = vcvt.s32.f32 %v3040
        %v4065 = vcvt.s32.f32 %v3041
        %v4066 = vcvt.s32.f32 %v3042
        %v4067 = vcvt.s32.f32 %v3043
        %v4068 = vcvt.s32.f32 %v3044
        %v4069 = vcvt.s32.f32 %v3045
        %v4070 = vcvt.s32.f32 %v3046
        %v4071 = vcvt.s32.f32 %v3047
        %v4072 = vcvt.s32.f32 %v3048
        %v4073 = vcvt.s32.f32 %v3049
        %v4074 = vcvt.s32.f32 %v3050
        %v4075 = vcvt.s32.f32 %v3051
        %v4076 = vcvt.s32.f32 %v3052
        %v4077 = vcvt.s32.f32 %v3053
        %v4078 = vcvt.s32.f32 %v3054
        %v4079 = vcvt.s32.f32 %v3055
        %v4080 = vcvt.s32.f32 %v3056
        %v4081 = vcvt.s32.f32 %v3057
        %v4082 = vcvt.s32.f32 %v3058
        %v4083 = vcvt.s32.f32 %v3059
        %v4084 = vcvt.s32.f32 %v3060
        %v4085 = vcvt.s32.f32 %v3061
        %v4086 = vcvt.s32.f32 %v3062
        %v4087 = vcvt.s32.f32 %v3063
        %v4088 = vcvt.s32.f32 %v3064
        %v4089 = vcvt.s32.f32 %v3065
        %v4090 = vcvt.s32.f32 %v3066
        %v4091 = vcvt.s32.f32 %v3067
        %v4092 = vcvt.s32.f32 %v3068
        %v4093 = vcvt.s32.f32 %v3069
        %v4094 = vcvt.s32.f32 %v3070
        %v4095 = vcvt.s32.f32 %v3071
        %v4096 = vcvt.s32.f32 %v3072
        %v4097 = vcvt.s32.f32 %v3073
        %v4098 = vcvt.s32.f32 %v3074
        %v4099 = vcvt.s32.f32 %v3075
        %v4100 = vcvt.s32.f32 %v3076
        %v4101 = vcvt.s32.f32 %v3077
        %v4102 = vcvt.s32.f32 %v3078
        %v4103 = vcvt.s32.f32 %v3079
        %v4104 = vcvt.s32.f32 %v3080
        %v4105 = vcvt.s32.f32 %v3081
        %v4106 = vcvt.s32.f32 %v3082
        %v4107 = vcvt.s32.f32 %v3083
        %v4108 = vcvt.s32.f32 %v3084
        %v4109 = vcvt.s32.f32 %v3085
        %v4110 = vcvt.s32.f32 %v3086
        %v4111 = vcvt.s32.f32 %v3087
        %v4112 = vcvt.s32.f32 %v3088
        %v4113 = vcvt.s32.f32 %v3089
        %v4114 = vcvt.s32.f32 %v3090
        %v4115 = vcvt.s32.f32 %v3091
        %v4116 = vcvt.s32.f32 %v3092
        %v4117 = vcvt.s32.f32 %v3093
        %v4118 = vcvt.s32.f32 %v3094
        %v4119 = vld [vmem:[#allocation2] sm:$0xff]
        %v4120 = vld [vmem:[#allocation2 + $0x8] sm:$0xff]
        %v4121 = vld [vmem:[#allocation2 + $0x10] sm:$0xff]
        %v4122 = vld [vmem:[#allocation2 + $0x18] sm:$0xff]
        %v4123 = vld [vmem:[#allocation2 + $0x20] sm:$0xff]
        %v4124 = vld [vmem:[#allocation2 + $0x28] sm:$0xff]
        %v4125 = vld [vmem:[#allocation2 + $0x30] sm:$0xff]
        %v4126 = vld [vmem:[#allocation2 + $0x38] sm:$0xff]
        %v4127 = vlaneseq
        %v4128 = vshrl.u32 %v4127, 7
        %v4129 = vsub.s32 0, %v4128
        %v4130 = vrot.slane %v501, %v4129
        %4132 = vbcast.lane.b32.xlu0 %v4130, 256
        %v4133 = vpop.permute.xlu0 %4132
        %s4135 = sor.u32 256, 8
        %4136 = vbcast.lane.b32.xlu0 %v4130, %s4135
        %v4137 = vpop.permute.xlu0 %4136
        %s4139 = sor.u32 256, 16
        %4140 = vbcast.lane.b32.xlu0 %v4130, %s4139
        %v4141 = vpop.permute.xlu0 %4140
        %s4143 = sor.u32 256, 24
        %4144 = vbcast.lane.b32.xlu0 %v4130, %s4143
        %v4145 = vpop.permute.xlu0 %4144
        %s4147 = sor.u32 256, 32
        %4148 = vbcast.lane.b32.xlu0 %v4130, %s4147
        %v4149 = vpop.permute.xlu0 %4148
        %s4151 = sor.u32 256, 40
        %4152 = vbcast.lane.b32.xlu0 %v4130, %s4151
        %v4153 = vpop.permute.xlu0 %4152
        %s4155 = sor.u32 256, 48
        %4156 = vbcast.lane.b32.xlu0 %v4130, %s4155
        %v4157 = vpop.permute.xlu0 %4156
        %s4159 = sor.u32 256, 56
        %4160 = vbcast.lane.b32.xlu0 %v4130, %s4159
        %v4161 = vpop.permute.xlu0 %4160
        %s4163 = sor.u32 256, 64
        %4164 = vbcast.lane.b32.xlu0 %v4130, %s4163
        %v4165 = vpop.permute.xlu0 %4164
        %s4167 = sor.u32 256, 72
        %4168 = vbcast.lane.b32.xlu0 %v4130, %s4167
        %v4169 = vpop.permute.xlu0 %4168
        %s4171 = sor.u32 256, 80
        %4172 = vbcast.lane.b32.xlu0 %v4130, %s4171
        %v4173 = vpop.permute.xlu0 %4172
        %s4175 = sor.u32 256, 88
        %4176 = vbcast.lane.b32.xlu0 %v4130, %s4175
        %v4177 = vpop.permute.xlu0 %4176
        %s4179 = sor.u32 256, 96
        %4180 = vbcast.lane.b32.xlu0 %v4130, %s4179
        %v4181 = vpop.permute.xlu0 %4180
        %s4183 = sor.u32 256, 104
        %4184 = vbcast.lane.b32.xlu0 %v4130, %s4183
        %v4185 = vpop.permute.xlu0 %4184
        %s4187 = sor.u32 256, 112
        %4188 = vbcast.lane.b32.xlu0 %v4130, %s4187
        %v4189 = vpop.permute.xlu0 %4188
        %s4191 = sor.u32 256, 120
        %4192 = vbcast.lane.b32.xlu0 %v4130, %s4191
        %v4193 = vpop.permute.xlu0 %4192
        %v4194 = vlaneseq
        %v4195 = vshrl.u32 %v4194, 7
        %v4196 = vsub.s32 1, %v4195
        %v4197 = vrot.slane %v501, %v4196
        %4199 = vbcast.lane.b32.xlu0 %v4197, 256
        %v4200 = vpop.permute.xlu0 %4199
        %s4202 = sor.u32 256, 8
        %4203 = vbcast.lane.b32.xlu0 %v4197, %s4202
        %v4204 = vpop.permute.xlu0 %4203
        %s4206 = sor.u32 256, 16
        %4207 = vbcast.lane.b32.xlu0 %v4197, %s4206
        %v4208 = vpop.permute.xlu0 %4207
        %s4210 = sor.u32 256, 24
        %4211 = vbcast.lane.b32.xlu0 %v4197, %s4210
        %v4212 = vpop.permute.xlu0 %4211
        %s4214 = sor.u32 256, 32
        %4215 = vbcast.lane.b32.xlu0 %v4197, %s4214
        %v4216 = vpop.permute.xlu0 %4215
        %s4218 = sor.u32 256, 40
        %4219 = vbcast.lane.b32.xlu0 %v4197, %s4218
        %v4220 = vpop.permute.xlu0 %4219
        %s4222 = sor.u32 256, 48
        %4223 = vbcast.lane.b32.xlu0 %v4197, %s4222
        %v4224 = vpop.permute.xlu0 %4223
        %s4226 = sor.u32 256, 56
        %4227 = vbcast.lane.b32.xlu0 %v4197, %s4226
        %v4228 = vpop.permute.xlu0 %4227
        %s4230 = sor.u32 256, 64
        %4231 = vbcast.lane.b32.xlu0 %v4197, %s4230
        %v4232 = vpop.permute.xlu0 %4231
        %s4234 = sor.u32 256, 72
        %4235 = vbcast.lane.b32.xlu0 %v4197, %s4234
        %v4236 = vpop.permute.xlu0 %4235
        %s4238 = sor.u32 256, 80
        %4239 = vbcast.lane.b32.xlu0 %v4197, %s4238
        %v4240 = vpop.permute.xlu0 %4239
        %s4242 = sor.u32 256, 88
        %4243 = vbcast.lane.b32.xlu0 %v4197, %s4242
        %v4244 = vpop.permute.xlu0 %4243
        %s4246 = sor.u32 256, 96
        %4247 = vbcast.lane.b32.xlu0 %v4197, %s4246
        %v4248 = vpop.permute.xlu0 %4247
        %s4250 = sor.u32 256, 104
        %4251 = vbcast.lane.b32.xlu0 %v4197, %s4250
        %v4252 = vpop.permute.xlu0 %4251
        %s4254 = sor.u32 256, 112
        %4255 = vbcast.lane.b32.xlu0 %v4197, %s4254
        %v4256 = vpop.permute.xlu0 %4255
        %s4258 = sor.u32 256, 120
        %4259 = vbcast.lane.b32.xlu0 %v4197, %s4258
        %v4260 = vpop.permute.xlu0 %4259
        %v4261 = vlaneseq
        %v4262 = vshrl.u32 %v4261, 7
        %v4263 = vsub.s32 2, %v4262
        %v4264 = vrot.slane %v501, %v4263
        %4266 = vbcast.lane.b32.xlu0 %v4264, 256
        %v4267 = vpop.permute.xlu0 %4266
        %s4269 = sor.u32 256, 8
        %4270 = vbcast.lane.b32.xlu0 %v4264, %s4269
        %v4271 = vpop.permute.xlu0 %4270
        %s4273 = sor.u32 256, 16
        %4274 = vbcast.lane.b32.xlu0 %v4264, %s4273
        %v4275 = vpop.permute.xlu0 %4274
        %s4277 = sor.u32 256, 24
        %4278 = vbcast.lane.b32.xlu0 %v4264, %s4277
        %v4279 = vpop.permute.xlu0 %4278
        %s4281 = sor.u32 256, 32
        %4282 = vbcast.lane.b32.xlu0 %v4264, %s4281
        %v4283 = vpop.permute.xlu0 %4282
        %s4285 = sor.u32 256, 40
        %4286 = vbcast.lane.b32.xlu0 %v4264, %s4285
        %v4287 = vpop.permute.xlu0 %4286
        %s4289 = sor.u32 256, 48
        %4290 = vbcast.lane.b32.xlu0 %v4264, %s4289
        %v4291 = vpop.permute.xlu0 %4290
        %s4293 = sor.u32 256, 56
        %4294 = vbcast.lane.b32.xlu0 %v4264, %s4293
        %v4295 = vpop.permute.xlu0 %4294
        %s4297 = sor.u32 256, 64
        %4298 = vbcast.lane.b32.xlu0 %v4264, %s4297
        %v4299 = vpop.permute.xlu0 %4298
        %s4301 = sor.u32 256, 72
        %4302 = vbcast.lane.b32.xlu0 %v4264, %s4301
        %v4303 = vpop.permute.xlu0 %4302
        %s4305 = sor.u32 256, 80
        %4306 = vbcast.lane.b32.xlu0 %v4264, %s4305
        %v4307 = vpop.permute.xlu0 %4306
        %s4309 = sor.u32 256, 88
        %4310 = vbcast.lane.b32.xlu0 %v4264, %s4309
        %v4311 = vpop.permute.xlu0 %4310
        %s4313 = sor.u32 256, 96
        %4314 = vbcast.lane.b32.xlu0 %v4264, %s4313
        %v4315 = vpop.permute.xlu0 %4314
        %s4317 = sor.u32 256, 104
        %4318 = vbcast.lane.b32.xlu0 %v4264, %s4317
        %v4319 = vpop.permute.xlu0 %4318
        %s4321 = sor.u32 256, 112
        %4322 = vbcast.lane.b32.xlu0 %v4264, %s4321
        %v4323 = vpop.permute.xlu0 %4322
        %s4325 = sor.u32 256, 120
        %4326 = vbcast.lane.b32.xlu0 %v4264, %s4325
        %v4327 = vpop.permute.xlu0 %4326
        %v4328 = vlaneseq
        %v4329 = vshrl.u32 %v4328, 7
        %v4330 = vsub.s32 3, %v4329
        %v4331 = vrot.slane %v501, %v4330
        %4333 = vbcast.lane.b32.xlu0 %v4331, 256
        %v4334 = vpop.permute.xlu0 %4333
        %s4336 = sor.u32 256, 8
        %4337 = vbcast.lane.b32.xlu0 %v4331, %s4336
        %v4338 = vpop.permute.xlu0 %4337
        %s4340 = sor.u32 256, 16
        %4341 = vbcast.lane.b32.xlu0 %v4331, %s4340
        %v4342 = vpop.permute.xlu0 %4341
        %s4344 = sor.u32 256, 24
        %4345 = vbcast.lane.b32.xlu0 %v4331, %s4344
        %v4346 = vpop.permute.xlu0 %4345
        %s4348 = sor.u32 256, 32
        %4349 = vbcast.lane.b32.xlu0 %v4331, %s4348
        %v4350 = vpop.permute.xlu0 %4349
        %s4352 = sor.u32 256, 40
        %4353 = vbcast.lane.b32.xlu0 %v4331, %s4352
        %v4354 = vpop.permute.xlu0 %4353
        %s4356 = sor.u32 256, 48
        %4357 = vbcast.lane.b32.xlu0 %v4331, %s4356
        %v4358 = vpop.permute.xlu0 %4357
        %s4360 = sor.u32 256, 56
        %4361 = vbcast.lane.b32.xlu0 %v4331, %s4360
        %v4362 = vpop.permute.xlu0 %4361
        %s4364 = sor.u32 256, 64
        %4365 = vbcast.lane.b32.xlu0 %v4331, %s4364
        %v4366 = vpop.permute.xlu0 %4365
        %s4368 = sor.u32 256, 72
        %4369 = vbcast.lane.b32.xlu0 %v4331, %s4368
        %v4370 = vpop.permute.xlu0 %4369
        %s4372 = sor.u32 256, 80
        %4373 = vbcast.lane.b32.xlu0 %v4331, %s4372
        %v4374 = vpop.permute.xlu0 %4373
        %s4376 = sor.u32 256, 88
        %4377 = vbcast.lane.b32.xlu0 %v4331, %s4376
        %v4378 = vpop.permute.xlu0 %4377
        %s4380 = sor.u32 256, 96
        %4381 = vbcast.lane.b32.xlu0 %v4331, %s4380
        %v4382 = vpop.permute.xlu0 %4381
        %s4384 = sor.u32 256, 104
        %4385 = vbcast.lane.b32.xlu0 %v4331, %s4384
        %v4386 = vpop.permute.xlu0 %4385
        %s4388 = sor.u32 256, 112
        %4389 = vbcast.lane.b32.xlu0 %v4331, %s4388
        %v4390 = vpop.permute.xlu0 %4389
        %s4392 = sor.u32 256, 120
        %4393 = vbcast.lane.b32.xlu0 %v4331, %s4392
        %v4394 = vpop.permute.xlu0 %4393
        %v4395 = vlaneseq
        %v4396 = vshrl.u32 %v4395, 7
        %v4397 = vsub.s32 4, %v4396
        %v4398 = vrot.slane %v501, %v4397
        %4400 = vbcast.lane.b32.xlu0 %v4398, 256
        %v4401 = vpop.permute.xlu0 %4400
        %s4403 = sor.u32 256, 8
        %4404 = vbcast.lane.b32.xlu0 %v4398, %s4403
        %v4405 = vpop.permute.xlu0 %4404
        %s4407 = sor.u32 256, 16
        %4408 = vbcast.lane.b32.xlu0 %v4398, %s4407
        %v4409 = vpop.permute.xlu0 %4408
        %s4411 = sor.u32 256, 24
        %4412 = vbcast.lane.b32.xlu0 %v4398, %s4411
        %v4413 = vpop.permute.xlu0 %4412
        %s4415 = sor.u32 256, 32
        %4416 = vbcast.lane.b32.xlu0 %v4398, %s4415
        %v4417 = vpop.permute.xlu0 %4416
        %s4419 = sor.u32 256, 40
        %4420 = vbcast.lane.b32.xlu0 %v4398, %s4419
        %v4421 = vpop.permute.xlu0 %4420
        %s4423 = sor.u32 256, 48
        %4424 = vbcast.lane.b32.xlu0 %v4398, %s4423
        %v4425 = vpop.permute.xlu0 %4424
        %s4427 = sor.u32 256, 56
        %4428 = vbcast.lane.b32.xlu0 %v4398, %s4427
        %v4429 = vpop.permute.xlu0 %4428
        %s4431 = sor.u32 256, 64
        %4432 = vbcast.lane.b32.xlu0 %v4398, %s4431
        %v4433 = vpop.permute.xlu0 %4432
        %s4435 = sor.u32 256, 72
        %4436 = vbcast.lane.b32.xlu0 %v4398, %s4435
        %v4437 = vpop.permute.xlu0 %4436
        %s4439 = sor.u32 256, 80
        %4440 = vbcast.lane.b32.xlu0 %v4398, %s4439
        %v4441 = vpop.permute.xlu0 %4440
        %s4443 = sor.u32 256, 88
        %4444 = vbcast.lane.b32.xlu0 %v4398, %s4443
        %v4445 = vpop.permute.xlu0 %4444
        %s4447 = sor.u32 256, 96
        %4448 = vbcast.lane.b32.xlu0 %v4398, %s4447
        %v4449 = vpop.permute.xlu0 %4448
        %s4451 = sor.u32 256, 104
        %4452 = vbcast.lane.b32.xlu0 %v4398, %s4451
        %v4453 = vpop.permute.xlu0 %4452
        %s4455 = sor.u32 256, 112
        %4456 = vbcast.lane.b32.xlu0 %v4398, %s4455
        %v4457 = vpop.permute.xlu0 %4456
        %s4459 = sor.u32 256, 120
        %4460 = vbcast.lane.b32.xlu0 %v4398, %s4459
        %v4461 = vpop.permute.xlu0 %4460
        %v4462 = vlaneseq
        %v4463 = vshrl.u32 %v4462, 7
        %v4464 = vsub.s32 5, %v4463
        %v4465 = vrot.slane %v501, %v4464
        %4467 = vbcast.lane.b32.xlu0 %v4465, 256
        %v4468 = vpop.permute.xlu0 %4467
        %s4470 = sor.u32 256, 8
        %4471 = vbcast.lane.b32.xlu0 %v4465, %s4470
        %v4472 = vpop.permute.xlu0 %4471
        %s4474 = sor.u32 256, 16
        %4475 = vbcast.lane.b32.xlu0 %v4465, %s4474
        %v4476 = vpop.permute.xlu0 %4475
        %s4478 = sor.u32 256, 24
        %4479 = vbcast.lane.b32.xlu0 %v4465, %s4478
        %v4480 = vpop.permute.xlu0 %4479
        %s4482 = sor.u32 256, 32
        %4483 = vbcast.lane.b32.xlu0 %v4465, %s4482
        %v4484 = vpop.permute.xlu0 %4483
        %s4486 = sor.u32 256, 40
        %4487 = vbcast.lane.b32.xlu0 %v4465, %s4486
        %v4488 = vpop.permute.xlu0 %4487
        %s4490 = sor.u32 256, 48
        %4491 = vbcast.lane.b32.xlu0 %v4465, %s4490
        %v4492 = vpop.permute.xlu0 %4491
        %s4494 = sor.u32 256, 56
        %4495 = vbcast.lane.b32.xlu0 %v4465, %s4494
        %v4496 = vpop.permute.xlu0 %4495
        %s4498 = sor.u32 256, 64
        %4499 = vbcast.lane.b32.xlu0 %v4465, %s4498
        %v4500 = vpop.permute.xlu0 %4499
        %s4502 = sor.u32 256, 72
        %4503 = vbcast.lane.b32.xlu0 %v4465, %s4502
        %v4504 = vpop.permute.xlu0 %4503
        %s4506 = sor.u32 256, 80
        %4507 = vbcast.lane.b32.xlu0 %v4465, %s4506
        %v4508 = vpop.permute.xlu0 %4507
        %s4510 = sor.u32 256, 88
        %4511 = vbcast.lane.b32.xlu0 %v4465, %s4510
        %v4512 = vpop.permute.xlu0 %4511
        %s4514 = sor.u32 256, 96
        %4515 = vbcast.lane.b32.xlu0 %v4465, %s4514
        %v4516 = vpop.permute.xlu0 %4515
        %s4518 = sor.u32 256, 104
        %4519 = vbcast.lane.b32.xlu0 %v4465, %s4518
        %v4520 = vpop.permute.xlu0 %4519
        %s4522 = sor.u32 256, 112
        %4523 = vbcast.lane.b32.xlu0 %v4465, %s4522
        %v4524 = vpop.permute.xlu0 %4523
        %s4526 = sor.u32 256, 120
        %4527 = vbcast.lane.b32.xlu0 %v4465, %s4526
        %v4528 = vpop.permute.xlu0 %4527
        %v4529 = vlaneseq
        %v4530 = vshrl.u32 %v4529, 7
        %v4531 = vsub.s32 6, %v4530
        %v4532 = vrot.slane %v501, %v4531
        %4534 = vbcast.lane.b32.xlu0 %v4532, 256
        %v4535 = vpop.permute.xlu0 %4534
        %s4537 = sor.u32 256, 8
        %4538 = vbcast.lane.b32.xlu0 %v4532, %s4537
        %v4539 = vpop.permute.xlu0 %4538
        %s4541 = sor.u32 256, 16
        %4542 = vbcast.lane.b32.xlu0 %v4532, %s4541
        %v4543 = vpop.permute.xlu0 %4542
        %s4545 = sor.u32 256, 24
        %4546 = vbcast.lane.b32.xlu0 %v4532, %s4545
        %v4547 = vpop.permute.xlu0 %4546
        %s4549 = sor.u32 256, 32
        %4550 = vbcast.lane.b32.xlu0 %v4532, %s4549
        %v4551 = vpop.permute.xlu0 %4550
        %s4553 = sor.u32 256, 40
        %4554 = vbcast.lane.b32.xlu0 %v4532, %s4553
        %v4555 = vpop.permute.xlu0 %4554
        %s4557 = sor.u32 256, 48
        %4558 = vbcast.lane.b32.xlu0 %v4532, %s4557
        %v4559 = vpop.permute.xlu0 %4558
        %s4561 = sor.u32 256, 56
        %4562 = vbcast.lane.b32.xlu0 %v4532, %s4561
        %v4563 = vpop.permute.xlu0 %4562
        %s4565 = sor.u32 256, 64
        %4566 = vbcast.lane.b32.xlu0 %v4532, %s4565
        %v4567 = vpop.permute.xlu0 %4566
        %s4569 = sor.u32 256, 72
        %4570 = vbcast.lane.b32.xlu0 %v4532, %s4569
        %v4571 = vpop.permute.xlu0 %4570
        %s4573 = sor.u32 256, 80
        %4574 = vbcast.lane.b32.xlu0 %v4532, %s4573
        %v4575 = vpop.permute.xlu0 %4574
        %s4577 = sor.u32 256, 88
        %4578 = vbcast.lane.b32.xlu0 %v4532, %s4577
        %v4579 = vpop.permute.xlu0 %4578
        %s4581 = sor.u32 256, 96
        %4582 = vbcast.lane.b32.xlu0 %v4532, %s4581
        %v4583 = vpop.permute.xlu0 %4582
        %s4585 = sor.u32 256, 104
        %4586 = vbcast.lane.b32.xlu0 %v4532, %s4585
        %v4587 = vpop.permute.xlu0 %4586
        %s4589 = sor.u32 256, 112
        %4590 = vbcast.lane.b32.xlu0 %v4532, %s4589
        %v4591 = vpop.permute.xlu0 %4590
        %s4593 = sor.u32 256, 120
        %4594 = vbcast.lane.b32.xlu0 %v4532, %s4593
        %v4595 = vpop.permute.xlu0 %4594
        %v4596 = vlaneseq
        %v4597 = vshrl.u32 %v4596, 7
        %v4598 = vsub.s32 7, %v4597
        %v4599 = vrot.slane %v501, %v4598
        %4601 = vbcast.lane.b32.xlu0 %v4599, 256
        %v4602 = vpop.permute.xlu0 %4601
        %s4604 = sor.u32 256, 8
        %4605 = vbcast.lane.b32.xlu0 %v4599, %s4604
        %v4606 = vpop.permute.xlu0 %4605
        %s4608 = sor.u32 256, 16
        %4609 = vbcast.lane.b32.xlu0 %v4599, %s4608
        %v4610 = vpop.permute.xlu0 %4609
        %s4612 = sor.u32 256, 24
        %4613 = vbcast.lane.b32.xlu0 %v4599, %s4612
        %v4614 = vpop.permute.xlu0 %4613
        %s4616 = sor.u32 256, 32
        %4617 = vbcast.lane.b32.xlu0 %v4599, %s4616
        %v4618 = vpop.permute.xlu0 %4617
        %s4620 = sor.u32 256, 40
        %4621 = vbcast.lane.b32.xlu0 %v4599, %s4620
        %v4622 = vpop.permute.xlu0 %4621
        %s4624 = sor.u32 256, 48
        %4625 = vbcast.lane.b32.xlu0 %v4599, %s4624
        %v4626 = vpop.permute.xlu0 %4625
        %s4628 = sor.u32 256, 56
        %4629 = vbcast.lane.b32.xlu0 %v4599, %s4628
        %v4630 = vpop.permute.xlu0 %4629
        %s4632 = sor.u32 256, 64
        %4633 = vbcast.lane.b32.xlu0 %v4599, %s4632
        %v4634 = vpop.permute.xlu0 %4633
        %s4636 = sor.u32 256, 72
        %4637 = vbcast.lane.b32.xlu0 %v4599, %s4636
        %v4638 = vpop.permute.xlu0 %4637
        %s4640 = sor.u32 256, 80
        %4641 = vbcast.lane.b32.xlu0 %v4599, %s4640
        %v4642 = vpop.permute.xlu0 %4641
        %s4644 = sor.u32 256, 88
        %4645 = vbcast.lane.b32.xlu0 %v4599, %s4644
        %v4646 = vpop.permute.xlu0 %4645
        %s4648 = sor.u32 256, 96
        %4649 = vbcast.lane.b32.xlu0 %v4599, %s4648
        %v4650 = vpop.permute.xlu0 %4649
        %s4652 = sor.u32 256, 104
        %4653 = vbcast.lane.b32.xlu0 %v4599, %s4652
        %v4654 = vpop.permute.xlu0 %4653
        %s4656 = sor.u32 256, 112
        %4657 = vbcast.lane.b32.xlu0 %v4599, %s4656
        %v4658 = vpop.permute.xlu0 %4657
        %s4660 = sor.u32 256, 120
        %4661 = vbcast.lane.b32.xlu0 %v4599, %s4660
        %v4662 = vpop.permute.xlu0 %4661
        %v4663 = vmul.f32 %v3095, %v4133
        %v4664 = vmul.f32 %v3096, %v4133
        %v4665 = vmul.f32 %v3097, %v4133
        %v4666 = vmul.f32 %v3098, %v4133
        %v4667 = vmul.f32 %v3099, %v4133
        %v4668 = vmul.f32 %v3100, %v4133
        %v4669 = vmul.f32 %v3101, %v4133
        %v4670 = vmul.f32 %v3102, %v4133
        %v4671 = vmul.f32 %v3103, %v4137
        %v4672 = vmul.f32 %v3104, %v4137
        %v4673 = vmul.f32 %v3105, %v4137
        %v4674 = vmul.f32 %v3106, %v4137
        %v4675 = vmul.f32 %v3107, %v4137
        %v4676 = vmul.f32 %v3108, %v4137
        %v4677 = vmul.f32 %v3109, %v4137
        %v4678 = vmul.f32 %v3110, %v4137
        %v4679 = vmul.f32 %v3111, %v4141
        %v4680 = vmul.f32 %v3112, %v4141
        %v4681 = vmul.f32 %v3113, %v4141
        %v4682 = vmul.f32 %v3114, %v4141
        %v4683 = vmul.f32 %v3115, %v4141
        %v4684 = vmul.f32 %v3116, %v4141
        %v4685 = vmul.f32 %v3117, %v4141
        %v4686 = vmul.f32 %v3118, %v4141
        %v4687 = vmul.f32 %v3119, %v4145
        %v4688 = vmul.f32 %v3120, %v4145
        %v4689 = vmul.f32 %v3121, %v4145
        %v4690 = vmul.f32 %v3122, %v4145
        %v4691 = vmul.f32 %v3123, %v4145
        %v4692 = vmul.f32 %v3124, %v4145
        %v4693 = vmul.f32 %v3125, %v4145
        %v4694 = vmul.f32 %v3126, %v4145
        %v4695 = vmul.f32 %v3127, %v4149
        %v4696 = vmul.f32 %v3128, %v4149
        %v4697 = vmul.f32 %v3129, %v4149
        %v4698 = vmul.f32 %v3130, %v4149
        %v4699 = vmul.f32 %v3131, %v4149
        %v4700 = vmul.f32 %v3132, %v4149
        %v4701 = vmul.f32 %v3133, %v4149
        %v4702 = vmul.f32 %v3134, %v4149
        %v4703 = vmul.f32 %v3135, %v4153
        %v4704 = vmul.f32 %v3136, %v4153
        %v4705 = vmul.f32 %v3137, %v4153
        %v4706 = vmul.f32 %v3138, %v4153
        %v4707 = vmul.f32 %v3139, %v4153
        %v4708 = vmul.f32 %v3140, %v4153
        %v4709 = vmul.f32 %v3141, %v4153
        %v4710 = vmul.f32 %v3142, %v4153
        %v4711 = vmul.f32 %v3143, %v4157
        %v4712 = vmul.f32 %v3144, %v4157
        %v4713 = vmul.f32 %v3145, %v4157
        %v4714 = vmul.f32 %v3146, %v4157
        %v4715 = vmul.f32 %v3147, %v4157
        %v4716 = vmul.f32 %v3148, %v4157
        %v4717 = vmul.f32 %v3149, %v4157
        %v4718 = vmul.f32 %v3150, %v4157
        %v4719 = vmul.f32 %v3151, %v4161
        %v4720 = vmul.f32 %v3152, %v4161
        %v4721 = vmul.f32 %v3153, %v4161
        %v4722 = vmul.f32 %v3154, %v4161
        %v4723 = vmul.f32 %v3155, %v4161
        %v4724 = vmul.f32 %v3156, %v4161
        %v4725 = vmul.f32 %v3157, %v4161
        %v4726 = vmul.f32 %v3158, %v4161
        %v4727 = vmul.f32 %v3159, %v4165
        %v4728 = vmul.f32 %v3160, %v4165
        %v4729 = vmul.f32 %v3161, %v4165
        %v4730 = vmul.f32 %v3162, %v4165
        %v4731 = vmul.f32 %v3163, %v4165
        %v4732 = vmul.f32 %v3164, %v4165
        %v4733 = vmul.f32 %v3165, %v4165
        %v4734 = vmul.f32 %v3166, %v4165
        %v4735 = vmul.f32 %v3167, %v4169
        %v4736 = vmul.f32 %v3168, %v4169
        %v4737 = vmul.f32 %v3169, %v4169
        %v4738 = vmul.f32 %v3170, %v4169
        %v4739 = vmul.f32 %v3171, %v4169
        %v4740 = vmul.f32 %v3172, %v4169
        %v4741 = vmul.f32 %v3173, %v4169
        %v4742 = vmul.f32 %v3174, %v4169
        %v4743 = vmul.f32 %v3175, %v4173
        %v4744 = vmul.f32 %v3176, %v4173
        %v4745 = vmul.f32 %v3177, %v4173
        %v4746 = vmul.f32 %v3178, %v4173
        %v4747 = vmul.f32 %v3179, %v4173
        %v4748 = vmul.f32 %v3180, %v4173
        %v4749 = vmul.f32 %v3181, %v4173
        %v4750 = vmul.f32 %v3182, %v4173
        %v4751 = vmul.f32 %v3183, %v4177
        %v4752 = vmul.f32 %v3184, %v4177
        %v4753 = vmul.f32 %v3185, %v4177
        %v4754 = vmul.f32 %v3186, %v4177
        %v4755 = vmul.f32 %v3187, %v4177
        %v4756 = vmul.f32 %v3188, %v4177
        %v4757 = vmul.f32 %v3189, %v4177
        %v4758 = vmul.f32 %v3190, %v4177
        %v4759 = vmul.f32 %v3191, %v4181
        %v4760 = vmul.f32 %v3192, %v4181
        %v4761 = vmul.f32 %v3193, %v4181
        %v4762 = vmul.f32 %v3194, %v4181
        %v4763 = vmul.f32 %v3195, %v4181
        %v4764 = vmul.f32 %v3196, %v4181
        %v4765 = vmul.f32 %v3197, %v4181
        %v4766 = vmul.f32 %v3198, %v4181
        %v4767 = vmul.f32 %v3199, %v4185
        %v4768 = vmul.f32 %v3200, %v4185
        %v4769 = vmul.f32 %v3201, %v4185
        %v4770 = vmul.f32 %v3202, %v4185
        %v4771 = vmul.f32 %v3203, %v4185
        %v4772 = vmul.f32 %v3204, %v4185
        %v4773 = vmul.f32 %v3205, %v4185
        %v4774 = vmul.f32 %v3206, %v4185
        %v4775 = vmul.f32 %v3207, %v4189
        %v4776 = vmul.f32 %v3208, %v4189
        %v4777 = vmul.f32 %v3209, %v4189
        %v4778 = vmul.f32 %v3210, %v4189
        %v4779 = vmul.f32 %v3211, %v4189
        %v4780 = vmul.f32 %v3212, %v4189
        %v4781 = vmul.f32 %v3213, %v4189
        %v4782 = vmul.f32 %v3214, %v4189
        %v4783 = vmul.f32 %v3215, %v4193
        %v4784 = vmul.f32 %v3216, %v4193
        %v4785 = vmul.f32 %v3217, %v4193
        %v4786 = vmul.f32 %v3218, %v4193
        %v4787 = vmul.f32 %v3219, %v4193
        %v4788 = vmul.f32 %v3220, %v4193
        %v4789 = vmul.f32 %v3221, %v4193
        %v4790 = vmul.f32 %v3222, %v4193
        %v4791 = vmul.f32 %v3223, %v4200
        %v4792 = vmul.f32 %v3224, %v4200
        %v4793 = vmul.f32 %v3225, %v4200
        %v4794 = vmul.f32 %v3226, %v4200
        %v4795 = vmul.f32 %v3227, %v4200
        %v4796 = vmul.f32 %v3228, %v4200
        %v4797 = vmul.f32 %v3229, %v4200
        %v4798 = vmul.f32 %v3230, %v4200
        %v4799 = vmul.f32 %v3231, %v4204
        %v4800 = vmul.f32 %v3232, %v4204
        %v4801 = vmul.f32 %v3233, %v4204
        %v4802 = vmul.f32 %v3234, %v4204
        %v4803 = vmul.f32 %v3235, %v4204
        %v4804 = vmul.f32 %v3236, %v4204
        %v4805 = vmul.f32 %v3237, %v4204
        %v4806 = vmul.f32 %v3238, %v4204
        %v4807 = vmul.f32 %v3239, %v4208
        %v4808 = vmul.f32 %v3240, %v4208
        %v4809 = vmul.f32 %v3241, %v4208
        %v4810 = vmul.f32 %v3242, %v4208
        %v4811 = vmul.f32 %v3243, %v4208
        %v4812 = vmul.f32 %v3244, %v4208
        %v4813 = vmul.f32 %v3245, %v4208
        %v4814 = vmul.f32 %v3246, %v4208
        %v4815 = vmul.f32 %v3247, %v4212
        %v4816 = vmul.f32 %v3248, %v4212
        %v4817 = vmul.f32 %v3249, %v4212
        %v4818 = vmul.f32 %v3250, %v4212
        %v4819 = vmul.f32 %v3251, %v4212
        %v4820 = vmul.f32 %v3252, %v4212
        %v4821 = vmul.f32 %v3253, %v4212
        %v4822 = vmul.f32 %v3254, %v4212
        %v4823 = vmul.f32 %v3255, %v4216
        %v4824 = vmul.f32 %v3256, %v4216
        %v4825 = vmul.f32 %v3257, %v4216
        %v4826 = vmul.f32 %v3258, %v4216
        %v4827 = vmul.f32 %v3259, %v4216
        %v4828 = vmul.f32 %v3260, %v4216
        %v4829 = vmul.f32 %v3261, %v4216
        %v4830 = vmul.f32 %v3262, %v4216
        %v4831 = vmul.f32 %v3263, %v4220
        %v4832 = vmul.f32 %v3264, %v4220
        %v4833 = vmul.f32 %v3265, %v4220
        %v4834 = vmul.f32 %v3266, %v4220
        %v4835 = vmul.f32 %v3267, %v4220
        %v4836 = vmul.f32 %v3268, %v4220
        %v4837 = vmul.f32 %v3269, %v4220
        %v4838 = vmul.f32 %v3270, %v4220
        %v4839 = vmul.f32 %v3271, %v4224
        %v4840 = vmul.f32 %v3272, %v4224
        %v4841 = vmul.f32 %v3273, %v4224
        %v4842 = vmul.f32 %v3274, %v4224
        %v4843 = vmul.f32 %v3275, %v4224
        %v4844 = vmul.f32 %v3276, %v4224
        %v4845 = vmul.f32 %v3277, %v4224
        %v4846 = vmul.f32 %v3278, %v4224
        %v4847 = vmul.f32 %v3279, %v4228
        %v4848 = vmul.f32 %v3280, %v4228
        %v4849 = vmul.f32 %v3281, %v4228
        %v4850 = vmul.f32 %v3282, %v4228
        %v4851 = vmul.f32 %v3283, %v4228
        %v4852 = vmul.f32 %v3284, %v4228
        %v4853 = vmul.f32 %v3285, %v4228
        %v4854 = vmul.f32 %v3286, %v4228
        %v4855 = vmul.f32 %v3287, %v4232
        %v4856 = vmul.f32 %v3288, %v4232
        %v4857 = vmul.f32 %v3289, %v4232
        %v4858 = vmul.f32 %v3290, %v4232
        %v4859 = vmul.f32 %v3291, %v4232
        %v4860 = vmul.f32 %v3292, %v4232
        %v4861 = vmul.f32 %v3293, %v4232
        %v4862 = vmul.f32 %v3294, %v4232
        %v4863 = vmul.f32 %v3295, %v4236
        %v4864 = vmul.f32 %v3296, %v4236
        %v4865 = vmul.f32 %v3297, %v4236
        %v4866 = vmul.f32 %v3298, %v4236
        %v4867 = vmul.f32 %v3299, %v4236
        %v4868 = vmul.f32 %v3300, %v4236
        %v4869 = vmul.f32 %v3301, %v4236
        %v4870 = vmul.f32 %v3302, %v4236
        %v4871 = vmul.f32 %v3303, %v4240
        %v4872 = vmul.f32 %v3304, %v4240
        %v4873 = vmul.f32 %v3305, %v4240
        %v4874 = vmul.f32 %v3306, %v4240
        %v4875 = vmul.f32 %v3307, %v4240
        %v4876 = vmul.f32 %v3308, %v4240
        %v4877 = vmul.f32 %v3309, %v4240
        %v4878 = vmul.f32 %v3310, %v4240
        %v4879 = vmul.f32 %v3311, %v4244
        %v4880 = vmul.f32 %v3312, %v4244
        %v4881 = vmul.f32 %v3313, %v4244
        %v4882 = vmul.f32 %v3314, %v4244
        %v4883 = vmul.f32 %v3315, %v4244
        %v4884 = vmul.f32 %v3316, %v4244
        %v4885 = vmul.f32 %v3317, %v4244
        %v4886 = vmul.f32 %v3318, %v4244
        %v4887 = vmul.f32 %v3319, %v4248
        %v4888 = vmul.f32 %v3320, %v4248
        %v4889 = vmul.f32 %v3321, %v4248
        %v4890 = vmul.f32 %v3322, %v4248
        %v4891 = vmul.f32 %v3323, %v4248
        %v4892 = vmul.f32 %v3324, %v4248
        %v4893 = vmul.f32 %v3325, %v4248
        %v4894 = vmul.f32 %v3326, %v4248
        %v4895 = vmul.f32 %v3327, %v4252
        %v4896 = vmul.f32 %v3328, %v4252
        %v4897 = vmul.f32 %v3329, %v4252
        %v4898 = vmul.f32 %v3330, %v4252
        %v4899 = vmul.f32 %v3331, %v4252
        %v4900 = vmul.f32 %v3332, %v4252
        %v4901 = vmul.f32 %v3333, %v4252
        %v4902 = vmul.f32 %v3334, %v4252
        %v4903 = vmul.f32 %v3335, %v4256
        %v4904 = vmul.f32 %v3336, %v4256
        %v4905 = vmul.f32 %v3337, %v4256
        %v4906 = vmul.f32 %v3338, %v4256
        %v4907 = vmul.f32 %v3339, %v4256
        %v4908 = vmul.f32 %v3340, %v4256
        %v4909 = vmul.f32 %v3341, %v4256
        %v4910 = vmul.f32 %v3342, %v4256
        %v4911 = vmul.f32 %v3343, %v4260
        %v4912 = vmul.f32 %v3344, %v4260
        %v4913 = vmul.f32 %v3345, %v4260
        %v4914 = vmul.f32 %v3346, %v4260
        %v4915 = vmul.f32 %v3347, %v4260
        %v4916 = vmul.f32 %v3348, %v4260
        %v4917 = vmul.f32 %v3349, %v4260
        %v4918 = vmul.f32 %v3350, %v4260
        %v4919 = vmul.f32 %v3351, %v4267
        %v4920 = vmul.f32 %v3352, %v4267
        %v4921 = vmul.f32 %v3353, %v4267
        %v4922 = vmul.f32 %v3354, %v4267
        %v4923 = vmul.f32 %v3355, %v4267
        %v4924 = vmul.f32 %v3356, %v4267
        %v4925 = vmul.f32 %v3357, %v4267
        %v4926 = vmul.f32 %v3358, %v4267
        %v4927 = vmul.f32 %v3359, %v4271
        %v4928 = vmul.f32 %v3360, %v4271
        %v4929 = vmul.f32 %v3361, %v4271
        %v4930 = vmul.f32 %v3362, %v4271
        %v4931 = vmul.f32 %v3363, %v4271
        %v4932 = vmul.f32 %v3364, %v4271
        %v4933 = vmul.f32 %v3365, %v4271
        %v4934 = vmul.f32 %v3366, %v4271
        %v4935 = vmul.f32 %v3367, %v4275
        %v4936 = vmul.f32 %v3368, %v4275
        %v4937 = vmul.f32 %v3369, %v4275
        %v4938 = vmul.f32 %v3370, %v4275
        %v4939 = vmul.f32 %v3371, %v4275
        %v4940 = vmul.f32 %v3372, %v4275
        %v4941 = vmul.f32 %v3373, %v4275
        %v4942 = vmul.f32 %v3374, %v4275
        %v4943 = vmul.f32 %v3375, %v4279
        %v4944 = vmul.f32 %v3376, %v4279
        %v4945 = vmul.f32 %v3377, %v4279
        %v4946 = vmul.f32 %v3378, %v4279
        %v4947 = vmul.f32 %v3379, %v4279
        %v4948 = vmul.f32 %v3380, %v4279
        %v4949 = vmul.f32 %v3381, %v4279
        %v4950 = vmul.f32 %v3382, %v4279
        %v4951 = vmul.f32 %v3383, %v4283
        %v4952 = vmul.f32 %v3384, %v4283
        %v4953 = vmul.f32 %v3385, %v4283
        %v4954 = vmul.f32 %v3386, %v4283
        %v4955 = vmul.f32 %v3387, %v4283
        %v4956 = vmul.f32 %v3388, %v4283
        %v4957 = vmul.f32 %v3389, %v4283
        %v4958 = vmul.f32 %v3390, %v4283
        %v4959 = vmul.f32 %v3391, %v4287
        %v4960 = vmul.f32 %v3392, %v4287
        %v4961 = vmul.f32 %v3393, %v4287
        %v4962 = vmul.f32 %v3394, %v4287
        %v4963 = vmul.f32 %v3395, %v4287
        %v4964 = vmul.f32 %v3396, %v4287
        %v4965 = vmul.f32 %v3397, %v4287
        %v4966 = vmul.f32 %v3398, %v4287
        %v4967 = vmul.f32 %v3399, %v4291
        %v4968 = vmul.f32 %v3400, %v4291
        %v4969 = vmul.f32 %v3401, %v4291
        %v4970 = vmul.f32 %v3402, %v4291
        %v4971 = vmul.f32 %v3403, %v4291
        %v4972 = vmul.f32 %v3404, %v4291
        %v4973 = vmul.f32 %v3405, %v4291
        %v4974 = vmul.f32 %v3406, %v4291
        %v4975 = vmul.f32 %v3407, %v4295
        %v4976 = vmul.f32 %v3408, %v4295
        %v4977 = vmul.f32 %v3409, %v4295
        %v4978 = vmul.f32 %v3410, %v4295
        %v4979 = vmul.f32 %v3411, %v4295
        %v4980 = vmul.f32 %v3412, %v4295
        %v4981 = vmul.f32 %v3413, %v4295
        %v4982 = vmul.f32 %v3414, %v4295
        %v4983 = vmul.f32 %v3415, %v4299
        %v4984 = vmul.f32 %v3416, %v4299
        %v4985 = vmul.f32 %v3417, %v4299
        %v4986 = vmul.f32 %v3418, %v4299
        %v4987 = vmul.f32 %v3419, %v4299
        %v4988 = vmul.f32 %v3420, %v4299
        %v4989 = vmul.f32 %v3421, %v4299
        %v4990 = vmul.f32 %v3422, %v4299
        %v4991 = vmul.f32 %v3423, %v4303
        %v4992 = vmul.f32 %v3424, %v4303
        %v4993 = vmul.f32 %v3425, %v4303
        %v4994 = vmul.f32 %v3426, %v4303
        %v4995 = vmul.f32 %v3427, %v4303
        %v4996 = vmul.f32 %v3428, %v4303
        %v4997 = vmul.f32 %v3429, %v4303
        %v4998 = vmul.f32 %v3430, %v4303
        %v4999 = vmul.f32 %v3431, %v4307
        %v5000 = vmul.f32 %v3432, %v4307
        %v5001 = vmul.f32 %v3433, %v4307
        %v5002 = vmul.f32 %v3434, %v4307
        %v5003 = vmul.f32 %v3435, %v4307
        %v5004 = vmul.f32 %v3436, %v4307
        %v5005 = vmul.f32 %v3437, %v4307
        %v5006 = vmul.f32 %v3438, %v4307
        %v5007 = vmul.f32 %v3439, %v4311
        %v5008 = vmul.f32 %v3440, %v4311
        %v5009 = vmul.f32 %v3441, %v4311
        %v5010 = vmul.f32 %v3442, %v4311
        %v5011 = vmul.f32 %v3443, %v4311
        %v5012 = vmul.f32 %v3444, %v4311
        %v5013 = vmul.f32 %v3445, %v4311
        %v5014 = vmul.f32 %v3446, %v4311
        %v5015 = vmul.f32 %v3447, %v4315
        %v5016 = vmul.f32 %v3448, %v4315
        %v5017 = vmul.f32 %v3449, %v4315
        %v5018 = vmul.f32 %v3450, %v4315
        %v5019 = vmul.f32 %v3451, %v4315
        %v5020 = vmul.f32 %v3452, %v4315
        %v5021 = vmul.f32 %v3453, %v4315
        %v5022 = vmul.f32 %v3454, %v4315
        %v5023 = vmul.f32 %v3455, %v4319
        %v5024 = vmul.f32 %v3456, %v4319
        %v5025 = vmul.f32 %v3457, %v4319
        %v5026 = vmul.f32 %v3458, %v4319
        %v5027 = vmul.f32 %v3459, %v4319
        %v5028 = vmul.f32 %v3460, %v4319
        %v5029 = vmul.f32 %v3461, %v4319
        %v5030 = vmul.f32 %v3462, %v4319
        %v5031 = vmul.f32 %v3463, %v4323
        %v5032 = vmul.f32 %v3464, %v4323
        %v5033 = vmul.f32 %v3465, %v4323
        %v5034 = vmul.f32 %v3466, %v4323
        %v5035 = vmul.f32 %v3467, %v4323
        %v5036 = vmul.f32 %v3468, %v4323
        %v5037 = vmul.f32 %v3469, %v4323
        %v5038 = vmul.f32 %v3470, %v4323
        %v5039 = vmul.f32 %v3471, %v4327
        %v5040 = vmul.f32 %v3472, %v4327
        %v5041 = vmul.f32 %v3473, %v4327
        %v5042 = vmul.f32 %v3474, %v4327
        %v5043 = vmul.f32 %v3475, %v4327
        %v5044 = vmul.f32 %v3476, %v4327
        %v5045 = vmul.f32 %v3477, %v4327
        %v5046 = vmul.f32 %v3478, %v4327
        %v5047 = vmul.f32 %v3479, %v4334
        %v5048 = vmul.f32 %v3480, %v4334
        %v5049 = vmul.f32 %v3481, %v4334
        %v5050 = vmul.f32 %v3482, %v4334
        %v5051 = vmul.f32 %v3483, %v4334
        %v5052 = vmul.f32 %v3484, %v4334
        %v5053 = vmul.f32 %v3485, %v4334
        %v5054 = vmul.f32 %v3486, %v4334
        %v5055 = vmul.f32 %v3487, %v4338
        %v5056 = vmul.f32 %v3488, %v4338
        %v5057 = vmul.f32 %v3489, %v4338
        %v5058 = vmul.f32 %v3490, %v4338
        %v5059 = vmul.f32 %v3491, %v4338
        %v5060 = vmul.f32 %v3492, %v4338
        %v5061 = vmul.f32 %v3493, %v4338
        %v5062 = vmul.f32 %v3494, %v4338
        %v5063 = vmul.f32 %v3495, %v4342
        %v5064 = vmul.f32 %v3496, %v4342
        %v5065 = vmul.f32 %v3497, %v4342
        %v5066 = vmul.f32 %v3498, %v4342
        %v5067 = vmul.f32 %v3499, %v4342
        %v5068 = vmul.f32 %v3500, %v4342
        %v5069 = vmul.f32 %v3501, %v4342
        %v5070 = vmul.f32 %v3502, %v4342
        %v5071 = vmul.f32 %v3503, %v4346
        %v5072 = vmul.f32 %v3504, %v4346
        %v5073 = vmul.f32 %v3505, %v4346
        %v5074 = vmul.f32 %v3506, %v4346
        %v5075 = vmul.f32 %v3507, %v4346
        %v5076 = vmul.f32 %v3508, %v4346
        %v5077 = vmul.f32 %v3509, %v4346
        %v5078 = vmul.f32 %v3510, %v4346
        %v5079 = vmul.f32 %v3511, %v4350
        %v5080 = vmul.f32 %v3512, %v4350
        %v5081 = vmul.f32 %v3513, %v4350
        %v5082 = vmul.f32 %v3514, %v4350
        %v5083 = vmul.f32 %v3515, %v4350
        %v5084 = vmul.f32 %v3516, %v4350
        %v5085 = vmul.f32 %v3517, %v4350
        %v5086 = vmul.f32 %v3518, %v4350
        %v5087 = vmul.f32 %v3519, %v4354
        %v5088 = vmul.f32 %v3520, %v4354
        %v5089 = vmul.f32 %v3521, %v4354
        %v5090 = vmul.f32 %v3522, %v4354
        %v5091 = vmul.f32 %v3523, %v4354
        %v5092 = vmul.f32 %v3524, %v4354
        %v5093 = vmul.f32 %v3525, %v4354
        %v5094 = vmul.f32 %v3526, %v4354
        %v5095 = vmul.f32 %v3527, %v4358
        %v5096 = vmul.f32 %v3528, %v4358
        %v5097 = vmul.f32 %v3529, %v4358
        %v5098 = vmul.f32 %v3530, %v4358
        %v5099 = vmul.f32 %v3531, %v4358
        %v5100 = vmul.f32 %v3532, %v4358
        %v5101 = vmul.f32 %v3533, %v4358
        %v5102 = vmul.f32 %v3534, %v4358
        %v5103 = vmul.f32 %v3535, %v4362
        %v5104 = vmul.f32 %v3536, %v4362
        %v5105 = vmul.f32 %v3537, %v4362
        %v5106 = vmul.f32 %v3538, %v4362
        %v5107 = vmul.f32 %v3539, %v4362
        %v5108 = vmul.f32 %v3540, %v4362
        %v5109 = vmul.f32 %v3541, %v4362
        %v5110 = vmul.f32 %v3542, %v4362
        %v5111 = vmul.f32 %v3543, %v4366
        %v5112 = vmul.f32 %v3544, %v4366
        %v5113 = vmul.f32 %v3545, %v4366
        %v5114 = vmul.f32 %v3546, %v4366
        %v5115 = vmul.f32 %v3547, %v4366
        %v5116 = vmul.f32 %v3548, %v4366
        %v5117 = vmul.f32 %v3549, %v4366
        %v5118 = vmul.f32 %v3550, %v4366
        %v5119 = vmul.f32 %v3551, %v4370
        %v5120 = vmul.f32 %v3552, %v4370
        %v5121 = vmul.f32 %v3553, %v4370
        %v5122 = vmul.f32 %v3554, %v4370
        %v5123 = vmul.f32 %v3555, %v4370
        %v5124 = vmul.f32 %v3556, %v4370
        %v5125 = vmul.f32 %v3557, %v4370
        %v5126 = vmul.f32 %v3558, %v4370
        %v5127 = vmul.f32 %v3559, %v4374
        %v5128 = vmul.f32 %v3560, %v4374
        %v5129 = vmul.f32 %v3561, %v4374
        %v5130 = vmul.f32 %v3562, %v4374
        %v5131 = vmul.f32 %v3563, %v4374
        %v5132 = vmul.f32 %v3564, %v4374
        %v5133 = vmul.f32 %v3565, %v4374
        %v5134 = vmul.f32 %v3566, %v4374
        %v5135 = vmul.f32 %v3567, %v4378
        %v5136 = vmul.f32 %v3568, %v4378
        %v5137 = vmul.f32 %v3569, %v4378
        %v5138 = vmul.f32 %v3570, %v4378
        %v5139 = vmul.f32 %v3571, %v4378
        %v5140 = vmul.f32 %v3572, %v4378
        %v5141 = vmul.f32 %v3573, %v4378
        %v5142 = vmul.f32 %v3574, %v4378
        %v5143 = vmul.f32 %v3575, %v4382
        %v5144 = vmul.f32 %v3576, %v4382
        %v5145 = vmul.f32 %v3577, %v4382
        %v5146 = vmul.f32 %v3578, %v4382
        %v5147 = vmul.f32 %v3579, %v4382
        %v5148 = vmul.f32 %v3580, %v4382
        %v5149 = vmul.f32 %v3581, %v4382
        %v5150 = vmul.f32 %v3582, %v4382
        %v5151 = vmul.f32 %v3583, %v4386
        %v5152 = vmul.f32 %v3584, %v4386
        %v5153 = vmul.f32 %v3585, %v4386
        %v5154 = vmul.f32 %v3586, %v4386
        %v5155 = vmul.f32 %v3587, %v4386
        %v5156 = vmul.f32 %v3588, %v4386
        %v5157 = vmul.f32 %v3589, %v4386
        %v5158 = vmul.f32 %v3590, %v4386
        %v5159 = vmul.f32 %v3591, %v4390
        %v5160 = vmul.f32 %v3592, %v4390
        %v5161 = vmul.f32 %v3593, %v4390
        %v5162 = vmul.f32 %v3594, %v4390
        %v5163 = vmul.f32 %v3595, %v4390
        %v5164 = vmul.f32 %v3596, %v4390
        %v5165 = vmul.f32 %v3597, %v4390
        %v5166 = vmul.f32 %v3598, %v4390
        %v5167 = vmul.f32 %v3599, %v4394
        %v5168 = vmul.f32 %v3600, %v4394
        %v5169 = vmul.f32 %v3601, %v4394
        %v5170 = vmul.f32 %v3602, %v4394
        %v5171 = vmul.f32 %v3603, %v4394
        %v5172 = vmul.f32 %v3604, %v4394
        %v5173 = vmul.f32 %v3605, %v4394
        %v5174 = vmul.f32 %v3606, %v4394
        %v5175 = vmul.f32 %v3607, %v4401
        %v5176 = vmul.f32 %v3608, %v4401
        %v5177 = vmul.f32 %v3609, %v4401
        %v5178 = vmul.f32 %v3610, %v4401
        %v5179 = vmul.f32 %v3611, %v4401
        %v5180 = vmul.f32 %v3612, %v4401
        %v5181 = vmul.f32 %v3613, %v4401
        %v5182 = vmul.f32 %v3614, %v4401
        %v5183 = vmul.f32 %v3615, %v4405
        %v5184 = vmul.f32 %v3616, %v4405
        %v5185 = vmul.f32 %v3617, %v4405
        %v5186 = vmul.f32 %v3618, %v4405
        %v5187 = vmul.f32 %v3619, %v4405
        %v5188 = vmul.f32 %v3620, %v4405
        %v5189 = vmul.f32 %v3621, %v4405
        %v5190 = vmul.f32 %v3622, %v4405
        %v5191 = vmul.f32 %v3623, %v4409
        %v5192 = vmul.f32 %v3624, %v4409
        %v5193 = vmul.f32 %v3625, %v4409
        %v5194 = vmul.f32 %v3626, %v4409
        %v5195 = vmul.f32 %v3627, %v4409
        %v5196 = vmul.f32 %v3628, %v4409
        %v5197 = vmul.f32 %v3629, %v4409
        %v5198 = vmul.f32 %v3630, %v4409
        %v5199 = vmul.f32 %v3631, %v4413
        %v5200 = vmul.f32 %v3632, %v4413
        %v5201 = vmul.f32 %v3633, %v4413
        %v5202 = vmul.f32 %v3634, %v4413
        %v5203 = vmul.f32 %v3635, %v4413
        %v5204 = vmul.f32 %v3636, %v4413
        %v5205 = vmul.f32 %v3637, %v4413
        %v5206 = vmul.f32 %v3638, %v4413
        %v5207 = vmul.f32 %v3639, %v4417
        %v5208 = vmul.f32 %v3640, %v4417
        %v5209 = vmul.f32 %v3641, %v4417
        %v5210 = vmul.f32 %v3642, %v4417
        %v5211 = vmul.f32 %v3643, %v4417
        %v5212 = vmul.f32 %v3644, %v4417
        %v5213 = vmul.f32 %v3645, %v4417
        %v5214 = vmul.f32 %v3646, %v4417
        %v5215 = vmul.f32 %v3647, %v4421
        %v5216 = vmul.f32 %v3648, %v4421
        %v5217 = vmul.f32 %v3649, %v4421
        %v5218 = vmul.f32 %v3650, %v4421
        %v5219 = vmul.f32 %v3651, %v4421
        %v5220 = vmul.f32 %v3652, %v4421
        %v5221 = vmul.f32 %v3653, %v4421
        %v5222 = vmul.f32 %v3654, %v4421
        %v5223 = vmul.f32 %v3655, %v4425
        %v5224 = vmul.f32 %v3656, %v4425
        %v5225 = vmul.f32 %v3657, %v4425
        %v5226 = vmul.f32 %v3658, %v4425
        %v5227 = vmul.f32 %v3659, %v4425
        %v5228 = vmul.f32 %v3660, %v4425
        %v5229 = vmul.f32 %v3661, %v4425
        %v5230 = vmul.f32 %v3662, %v4425
        %v5231 = vmul.f32 %v3663, %v4429
        %v5232 = vmul.f32 %v3664, %v4429
        %v5233 = vmul.f32 %v3665, %v4429
        %v5234 = vmul.f32 %v3666, %v4429
        %v5235 = vmul.f32 %v3667, %v4429
        %v5236 = vmul.f32 %v3668, %v4429
        %v5237 = vmul.f32 %v3669, %v4429
        %v5238 = vmul.f32 %v3670, %v4429
        %v5239 = vmul.f32 %v3671, %v4433
        %v5240 = vmul.f32 %v3672, %v4433
        %v5241 = vmul.f32 %v3673, %v4433
        %v5242 = vmul.f32 %v3674, %v4433
        %v5243 = vmul.f32 %v3675, %v4433
        %v5244 = vmul.f32 %v3676, %v4433
        %v5245 = vmul.f32 %v3677, %v4433
        %v5246 = vmul.f32 %v3678, %v4433
        %v5247 = vmul.f32 %v3679, %v4437
        %v5248 = vmul.f32 %v3680, %v4437
        %v5249 = vmul.f32 %v3681, %v4437
        %v5250 = vmul.f32 %v3682, %v4437
        %v5251 = vmul.f32 %v3683, %v4437
        %v5252 = vmul.f32 %v3684, %v4437
        %v5253 = vmul.f32 %v3685, %v4437
        %v5254 = vmul.f32 %v3686, %v4437
        %v5255 = vmul.f32 %v3687, %v4441
        %v5256 = vmul.f32 %v3688, %v4441
        %v5257 = vmul.f32 %v3689, %v4441
        %v5258 = vmul.f32 %v3690, %v4441
        %v5259 = vmul.f32 %v3691, %v4441
        %v5260 = vmul.f32 %v3692, %v4441
        %v5261 = vmul.f32 %v3693, %v4441
        %v5262 = vmul.f32 %v3694, %v4441
        %v5263 = vmul.f32 %v3695, %v4445
        %v5264 = vmul.f32 %v3696, %v4445
        %v5265 = vmul.f32 %v3697, %v4445
        %v5266 = vmul.f32 %v3698, %v4445
        %v5267 = vmul.f32 %v3699, %v4445
        %v5268 = vmul.f32 %v3700, %v4445
        %v5269 = vmul.f32 %v3701, %v4445
        %v5270 = vmul.f32 %v3702, %v4445
        %v5271 = vmul.f32 %v3703, %v4449
        %v5272 = vmul.f32 %v3704, %v4449
        %v5273 = vmul.f32 %v3705, %v4449
        %v5274 = vmul.f32 %v3706, %v4449
        %v5275 = vmul.f32 %v3707, %v4449
        %v5276 = vmul.f32 %v3708, %v4449
        %v5277 = vmul.f32 %v3709, %v4449
        %v5278 = vmul.f32 %v3710, %v4449
        %v5279 = vmul.f32 %v3711, %v4453
        %v5280 = vmul.f32 %v3712, %v4453
        %v5281 = vmul.f32 %v3713, %v4453
        %v5282 = vmul.f32 %v3714, %v4453
        %v5283 = vmul.f32 %v3715, %v4453
        %v5284 = vmul.f32 %v3716, %v4453
        %v5285 = vmul.f32 %v3717, %v4453
        %v5286 = vmul.f32 %v3718, %v4453
        %v5287 = vmul.f32 %v3719, %v4457
        %v5288 = vmul.f32 %v3720, %v4457
        %v5289 = vmul.f32 %v3721, %v4457
        %v5290 = vmul.f32 %v3722, %v4457
        %v5291 = vmul.f32 %v3723, %v4457
        %v5292 = vmul.f32 %v3724, %v4457
        %v5293 = vmul.f32 %v3725, %v4457
        %v5294 = vmul.f32 %v3726, %v4457
        %v5295 = vmul.f32 %v3727, %v4461
        %v5296 = vmul.f32 %v3728, %v4461
        %v5297 = vmul.f32 %v3729, %v4461
        %v5298 = vmul.f32 %v3730, %v4461
        %v5299 = vmul.f32 %v3731, %v4461
        %v5300 = vmul.f32 %v3732, %v4461
        %v5301 = vmul.f32 %v3733, %v4461
        %v5302 = vmul.f32 %v3734, %v4461
        %v5303 = vmul.f32 %v3735, %v4468
        %v5304 = vmul.f32 %v3736, %v4468
        %v5305 = vmul.f32 %v3737, %v4468
        %v5306 = vmul.f32 %v3738, %v4468
        %v5307 = vmul.f32 %v3739, %v4468
        %v5308 = vmul.f32 %v3740, %v4468
        %v5309 = vmul.f32 %v3741, %v4468
        %v5310 = vmul.f32 %v3742, %v4468
        %v5311 = vmul.f32 %v3743, %v4472
        %v5312 = vmul.f32 %v3744, %v4472
        %v5313 = vmul.f32 %v3745, %v4472
        %v5314 = vmul.f32 %v3746, %v4472
        %v5315 = vmul.f32 %v3747, %v4472
        %v5316 = vmul.f32 %v3748, %v4472
        %v5317 = vmul.f32 %v3749, %v4472
        %v5318 = vmul.f32 %v3750, %v4472
        %v5319 = vmul.f32 %v3751, %v4476
        %v5320 = vmul.f32 %v3752, %v4476
        %v5321 = vmul.f32 %v3753, %v4476
        %v5322 = vmul.f32 %v3754, %v4476
        %v5323 = vmul.f32 %v3755, %v4476
        %v5324 = vmul.f32 %v3756, %v4476
        %v5325 = vmul.f32 %v3757, %v4476
        %v5326 = vmul.f32 %v3758, %v4476
        %v5327 = vmul.f32 %v3759, %v4480
        %v5328 = vmul.f32 %v3760, %v4480
        %v5329 = vmul.f32 %v3761, %v4480
        %v5330 = vmul.f32 %v3762, %v4480
        %v5331 = vmul.f32 %v3763, %v4480
        %v5332 = vmul.f32 %v3764, %v4480
        %v5333 = vmul.f32 %v3765, %v4480
        %v5334 = vmul.f32 %v3766, %v4480
        %v5335 = vmul.f32 %v3767, %v4484
        %v5336 = vmul.f32 %v3768, %v4484
        %v5337 = vmul.f32 %v3769, %v4484
        %v5338 = vmul.f32 %v3770, %v4484
        %v5339 = vmul.f32 %v3771, %v4484
        %v5340 = vmul.f32 %v3772, %v4484
        %v5341 = vmul.f32 %v3773, %v4484
        %v5342 = vmul.f32 %v3774, %v4484
        %v5343 = vmul.f32 %v3775, %v4488
        %v5344 = vmul.f32 %v3776, %v4488
        %v5345 = vmul.f32 %v3777, %v4488
        %v5346 = vmul.f32 %v3778, %v4488
        %v5347 = vmul.f32 %v3779, %v4488
        %v5348 = vmul.f32 %v3780, %v4488
        %v5349 = vmul.f32 %v3781, %v4488
        %v5350 = vmul.f32 %v3782, %v4488
        %v5351 = vmul.f32 %v3783, %v4492
        %v5352 = vmul.f32 %v3784, %v4492
        %v5353 = vmul.f32 %v3785, %v4492
        %v5354 = vmul.f32 %v3786, %v4492
        %v5355 = vmul.f32 %v3787, %v4492
        %v5356 = vmul.f32 %v3788, %v4492
        %v5357 = vmul.f32 %v3789, %v4492
        %v5358 = vmul.f32 %v3790, %v4492
        %v5359 = vmul.f32 %v3791, %v4496
        %v5360 = vmul.f32 %v3792, %v4496
        %v5361 = vmul.f32 %v3793, %v4496
        %v5362 = vmul.f32 %v3794, %v4496
        %v5363 = vmul.f32 %v3795, %v4496
        %v5364 = vmul.f32 %v3796, %v4496
        %v5365 = vmul.f32 %v3797, %v4496
        %v5366 = vmul.f32 %v3798, %v4496
        %v5367 = vmul.f32 %v3799, %v4500
        %v5368 = vmul.f32 %v3800, %v4500
        %v5369 = vmul.f32 %v3801, %v4500
        %v5370 = vmul.f32 %v3802, %v4500
        %v5371 = vmul.f32 %v3803, %v4500
        %v5372 = vmul.f32 %v3804, %v4500
        %v5373 = vmul.f32 %v3805, %v4500
        %v5374 = vmul.f32 %v3806, %v4500
        %v5375 = vmul.f32 %v3807, %v4504
        %v5376 = vmul.f32 %v3808, %v4504
        %v5377 = vmul.f32 %v3809, %v4504
        %v5378 = vmul.f32 %v3810, %v4504
        %v5379 = vmul.f32 %v3811, %v4504
        %v5380 = vmul.f32 %v3812, %v4504
        %v5381 = vmul.f32 %v3813, %v4504
        %v5382 = vmul.f32 %v3814, %v4504
        %v5383 = vmul.f32 %v3815, %v4508
        %v5384 = vmul.f32 %v3816, %v4508
        %v5385 = vmul.f32 %v3817, %v4508
        %v5386 = vmul.f32 %v3818, %v4508
        %v5387 = vmul.f32 %v3819, %v4508
        %v5388 = vmul.f32 %v3820, %v4508
        %v5389 = vmul.f32 %v3821, %v4508
        %v5390 = vmul.f32 %v3822, %v4508
        %v5391 = vmul.f32 %v3823, %v4512
        %v5392 = vmul.f32 %v3824, %v4512
        %v5393 = vmul.f32 %v3825, %v4512
        %v5394 = vmul.f32 %v3826, %v4512
        %v5395 = vmul.f32 %v3827, %v4512
        %v5396 = vmul.f32 %v3828, %v4512
        %v5397 = vmul.f32 %v3829, %v4512
        %v5398 = vmul.f32 %v3830, %v4512
        %v5399 = vmul.f32 %v3831, %v4516
        %v5400 = vmul.f32 %v3832, %v4516
        %v5401 = vmul.f32 %v3833, %v4516
        %v5402 = vmul.f32 %v3834, %v4516
        %v5403 = vmul.f32 %v3835, %v4516
        %v5404 = vmul.f32 %v3836, %v4516
        %v5405 = vmul.f32 %v3837, %v4516
        %v5406 = vmul.f32 %v3838, %v4516
        %v5407 = vmul.f32 %v3839, %v4520
        %v5408 = vmul.f32 %v3840, %v4520
        %v5409 = vmul.f32 %v3841, %v4520
        %v5410 = vmul.f32 %v3842, %v4520
        %v5411 = vmul.f32 %v3843, %v4520
        %v5412 = vmul.f32 %v3844, %v4520
        %v5413 = vmul.f32 %v3845, %v4520
        %v5414 = vmul.f32 %v3846, %v4520
        %v5415 = vmul.f32 %v3847, %v4524
        %v5416 = vmul.f32 %v3848, %v4524
        %v5417 = vmul.f32 %v3849, %v4524
        %v5418 = vmul.f32 %v3850, %v4524
        %v5419 = vmul.f32 %v3851, %v4524
        %v5420 = vmul.f32 %v3852, %v4524
        %v5421 = vmul.f32 %v3853, %v4524
        %v5422 = vmul.f32 %v3854, %v4524
        %v5423 = vmul.f32 %v3855, %v4528
        %v5424 = vmul.f32 %v3856, %v4528
        %v5425 = vmul.f32 %v3857, %v4528
        %v5426 = vmul.f32 %v3858, %v4528
        %v5427 = vmul.f32 %v3859, %v4528
        %v5428 = vmul.f32 %v3860, %v4528
        %v5429 = vmul.f32 %v3861, %v4528
        %v5430 = vmul.f32 %v3862, %v4528
        %v5431 = vmul.f32 %v3863, %v4535
        %v5432 = vmul.f32 %v3864, %v4535
        %v5433 = vmul.f32 %v3865, %v4535
        %v5434 = vmul.f32 %v3866, %v4535
        %v5435 = vmul.f32 %v3867, %v4535
        %v5436 = vmul.f32 %v3868, %v4535
        %v5437 = vmul.f32 %v3869, %v4535
        %v5438 = vmul.f32 %v3870, %v4535
        %v5439 = vmul.f32 %v3871, %v4539
        %v5440 = vmul.f32 %v3872, %v4539
        %v5441 = vmul.f32 %v3873, %v4539
        %v5442 = vmul.f32 %v3874, %v4539
        %v5443 = vmul.f32 %v3875, %v4539
        %v5444 = vmul.f32 %v3876, %v4539
        %v5445 = vmul.f32 %v3877, %v4539
        %v5446 = vmul.f32 %v3878, %v4539
        %v5447 = vmul.f32 %v3879, %v4543
        %v5448 = vmul.f32 %v3880, %v4543
        %v5449 = vmul.f32 %v3881, %v4543
        %v5450 = vmul.f32 %v3882, %v4543
        %v5451 = vmul.f32 %v3883, %v4543
        %v5452 = vmul.f32 %v3884, %v4543
        %v5453 = vmul.f32 %v3885, %v4543
        %v5454 = vmul.f32 %v3886, %v4543
        %v5455 = vmul.f32 %v3887, %v4547
        %v5456 = vmul.f32 %v3888, %v4547
        %v5457 = vmul.f32 %v3889, %v4547
        %v5458 = vmul.f32 %v3890, %v4547
        %v5459 = vmul.f32 %v3891, %v4547
        %v5460 = vmul.f32 %v3892, %v4547
        %v5461 = vmul.f32 %v3893, %v4547
        %v5462 = vmul.f32 %v3894, %v4547
        %v5463 = vmul.f32 %v3895, %v4551
        %v5464 = vmul.f32 %v3896, %v4551
        %v5465 = vmul.f32 %v3897, %v4551
        %v5466 = vmul.f32 %v3898, %v4551
        %v5467 = vmul.f32 %v3899, %v4551
        %v5468 = vmul.f32 %v3900, %v4551
        %v5469 = vmul.f32 %v3901, %v4551
        %v5470 = vmul.f32 %v3902, %v4551
        %v5471 = vmul.f32 %v3903, %v4555
        %v5472 = vmul.f32 %v3904, %v4555
        %v5473 = vmul.f32 %v3905, %v4555
        %v5474 = vmul.f32 %v3906, %v4555
        %v5475 = vmul.f32 %v3907, %v4555
        %v5476 = vmul.f32 %v3908, %v4555
        %v5477 = vmul.f32 %v3909, %v4555
        %v5478 = vmul.f32 %v3910, %v4555
        %v5479 = vmul.f32 %v3911, %v4559
        %v5480 = vmul.f32 %v3912, %v4559
        %v5481 = vmul.f32 %v3913, %v4559
        %v5482 = vmul.f32 %v3914, %v4559
        %v5483 = vmul.f32 %v3915, %v4559
        %v5484 = vmul.f32 %v3916, %v4559
        %v5485 = vmul.f32 %v3917, %v4559
        %v5486 = vmul.f32 %v3918, %v4559
        %v5487 = vmul.f32 %v3919, %v4563
        %v5488 = vmul.f32 %v3920, %v4563
        %v5489 = vmul.f32 %v3921, %v4563
        %v5490 = vmul.f32 %v3922, %v4563
        %v5491 = vmul.f32 %v3923, %v4563
        %v5492 = vmul.f32 %v3924, %v4563
        %v5493 = vmul.f32 %v3925, %v4563
        %v5494 = vmul.f32 %v3926, %v4563
        %v5495 = vmul.f32 %v3927, %v4567
        %v5496 = vmul.f32 %v3928, %v4567
        %v5497 = vmul.f32 %v3929, %v4567
        %v5498 = vmul.f32 %v3930, %v4567
        %v5499 = vmul.f32 %v3931, %v4567
        %v5500 = vmul.f32 %v3932, %v4567
        %v5501 = vmul.f32 %v3933, %v4567
        %v5502 = vmul.f32 %v3934, %v4567
        %v5503 = vmul.f32 %v3935, %v4571
        %v5504 = vmul.f32 %v3936, %v4571
        %v5505 = vmul.f32 %v3937, %v4571
        %v5506 = vmul.f32 %v3938, %v4571
        %v5507 = vmul.f32 %v3939, %v4571
        %v5508 = vmul.f32 %v3940, %v4571
        %v5509 = vmul.f32 %v3941, %v4571
        %v5510 = vmul.f32 %v3942, %v4571
        %v5511 = vmul.f32 %v3943, %v4575
        %v5512 = vmul.f32 %v3944, %v4575
        %v5513 = vmul.f32 %v3945, %v4575
        %v5514 = vmul.f32 %v3946, %v4575
        %v5515 = vmul.f32 %v3947, %v4575
        %v5516 = vmul.f32 %v3948, %v4575
        %v5517 = vmul.f32 %v3949, %v4575
        %v5518 = vmul.f32 %v3950, %v4575
        %v5519 = vmul.f32 %v3951, %v4579
        %v5520 = vmul.f32 %v3952, %v4579
        %v5521 = vmul.f32 %v3953, %v4579
        %v5522 = vmul.f32 %v3954, %v4579
        %v5523 = vmul.f32 %v3955, %v4579
        %v5524 = vmul.f32 %v3956, %v4579
        %v5525 = vmul.f32 %v3957, %v4579
        %v5526 = vmul.f32 %v3958, %v4579
        %v5527 = vmul.f32 %v3959, %v4583
        %v5528 = vmul.f32 %v3960, %v4583
        %v5529 = vmul.f32 %v3961, %v4583
        %v5530 = vmul.f32 %v3962, %v4583
        %v5531 = vmul.f32 %v3963, %v4583
        %v5532 = vmul.f32 %v3964, %v4583
        %v5533 = vmul.f32 %v3965, %v4583
        %v5534 = vmul.f32 %v3966, %v4583
        %v5535 = vmul.f32 %v3967, %v4587
        %v5536 = vmul.f32 %v3968, %v4587
        %v5537 = vmul.f32 %v3969, %v4587
        %v5538 = vmul.f32 %v3970, %v4587
        %v5539 = vmul.f32 %v3971, %v4587
        %v5540 = vmul.f32 %v3972, %v4587
        %v5541 = vmul.f32 %v3973, %v4587
        %v5542 = vmul.f32 %v3974, %v4587
        %v5543 = vmul.f32 %v3975, %v4591
        %v5544 = vmul.f32 %v3976, %v4591
        %v5545 = vmul.f32 %v3977, %v4591
        %v5546 = vmul.f32 %v3978, %v4591
        %v5547 = vmul.f32 %v3979, %v4591
        %v5548 = vmul.f32 %v3980, %v4591
        %v5549 = vmul.f32 %v3981, %v4591
        %v5550 = vmul.f32 %v3982, %v4591
        %v5551 = vmul.f32 %v3983, %v4595
        %v5552 = vmul.f32 %v3984, %v4595
        %v5553 = vmul.f32 %v3985, %v4595
        %v5554 = vmul.f32 %v3986, %v4595
        %v5555 = vmul.f32 %v3987, %v4595
        %v5556 = vmul.f32 %v3988, %v4595
        %v5557 = vmul.f32 %v3989, %v4595
        %v5558 = vmul.f32 %v3990, %v4595
        %v5559 = vmul.f32 %v3991, %v4602
        %v5560 = vmul.f32 %v3992, %v4602
        %v5561 = vmul.f32 %v3993, %v4602
        %v5562 = vmul.f32 %v3994, %v4602
        %v5563 = vmul.f32 %v3995, %v4602
        %v5564 = vmul.f32 %v3996, %v4602
        %v5565 = vmul.f32 %v3997, %v4602
        %v5566 = vmul.f32 %v3998, %v4602
        %v5567 = vmul.f32 %v3999, %v4606
        %v5568 = vmul.f32 %v4000, %v4606
        %v5569 = vmul.f32 %v4001, %v4606
        %v5570 = vmul.f32 %v4002, %v4606
        %v5571 = vmul.f32 %v4003, %v4606
        %v5572 = vmul.f32 %v4004, %v4606
        %v5573 = vmul.f32 %v4005, %v4606
        %v5574 = vmul.f32 %v4006, %v4606
        %v5575 = vmul.f32 %v4007, %v4610
        %v5576 = vmul.f32 %v4008, %v4610
        %v5577 = vmul.f32 %v4009, %v4610
        %v5578 = vmul.f32 %v4010, %v4610
        %v5579 = vmul.f32 %v4011, %v4610
        %v5580 = vmul.f32 %v4012, %v4610
        %v5581 = vmul.f32 %v4013, %v4610
        %v5582 = vmul.f32 %v4014, %v4610
        %v5583 = vmul.f32 %v4015, %v4614
        %v5584 = vmul.f32 %v4016, %v4614
        %v5585 = vmul.f32 %v4017, %v4614
        %v5586 = vmul.f32 %v4018, %v4614
        %v5587 = vmul.f32 %v4019, %v4614
        %v5588 = vmul.f32 %v4020, %v4614
        %v5589 = vmul.f32 %v4021, %v4614
        %v5590 = vmul.f32 %v4022, %v4614
        %v5591 = vmul.f32 %v4023, %v4618
        %v5592 = vmul.f32 %v4024, %v4618
        %v5593 = vmul.f32 %v4025, %v4618
        %v5594 = vmul.f32 %v4026, %v4618
        %v5595 = vmul.f32 %v4027, %v4618
        %v5596 = vmul.f32 %v4028, %v4618
        %v5597 = vmul.f32 %v4029, %v4618
        %v5598 = vmul.f32 %v4030, %v4618
        %v5599 = vmul.f32 %v4031, %v4622
        %v5600 = vmul.f32 %v4032, %v4622
        %v5601 = vmul.f32 %v4033, %v4622
        %v5602 = vmul.f32 %v4034, %v4622
        %v5603 = vmul.f32 %v4035, %v4622
        %v5604 = vmul.f32 %v4036, %v4622
        %v5605 = vmul.f32 %v4037, %v4622
        %v5606 = vmul.f32 %v4038, %v4622
        %v5607 = vmul.f32 %v4039, %v4626
        %v5608 = vmul.f32 %v4040, %v4626
        %v5609 = vmul.f32 %v4041, %v4626
        %v5610 = vmul.f32 %v4042, %v4626
        %v5611 = vmul.f32 %v4043, %v4626
        %v5612 = vmul.f32 %v4044, %v4626
        %v5613 = vmul.f32 %v4045, %v4626
        %v5614 = vmul.f32 %v4046, %v4626
        %v5615 = vmul.f32 %v4047, %v4630
        %v5616 = vmul.f32 %v4048, %v4630
        %v5617 = vmul.f32 %v4049, %v4630
        %v5618 = vmul.f32 %v4050, %v4630
        %v5619 = vmul.f32 %v4051, %v4630
        %v5620 = vmul.f32 %v4052, %v4630
        %v5621 = vmul.f32 %v4053, %v4630
        %v5622 = vmul.f32 %v4054, %v4630
        %v5623 = vmul.f32 %v4055, %v4634
        %v5624 = vmul.f32 %v4056, %v4634
        %v5625 = vmul.f32 %v4057, %v4634
        %v5626 = vmul.f32 %v4058, %v4634
        %v5627 = vmul.f32 %v4059, %v4634
        %v5628 = vmul.f32 %v4060, %v4634
        %v5629 = vmul.f32 %v4061, %v4634
        %v5630 = vmul.f32 %v4062, %v4634
        %v5631 = vmul.f32 %v4063, %v4638
        %v5632 = vmul.f32 %v4064, %v4638
        %v5633 = vmul.f32 %v4065, %v4638
        %v5634 = vmul.f32 %v4066, %v4638
        %v5635 = vmul.f32 %v4067, %v4638
        %v5636 = vmul.f32 %v4068, %v4638
        %v5637 = vmul.f32 %v4069, %v4638
        %v5638 = vmul.f32 %v4070, %v4638
        %v5639 = vmul.f32 %v4071, %v4642
        %v5640 = vmul.f32 %v4072, %v4642
        %v5641 = vmul.f32 %v4073, %v4642
        %v5642 = vmul.f32 %v4074, %v4642
        %v5643 = vmul.f32 %v4075, %v4642
        %v5644 = vmul.f32 %v4076, %v4642
        %v5645 = vmul.f32 %v4077, %v4642
        %v5646 = vmul.f32 %v4078, %v4642
        %v5647 = vmul.f32 %v4079, %v4646
        %v5648 = vmul.f32 %v4080, %v4646
        %v5649 = vmul.f32 %v4081, %v4646
        %v5650 = vmul.f32 %v4082, %v4646
        %v5651 = vmul.f32 %v4083, %v4646
        %v5652 = vmul.f32 %v4084, %v4646
        %v5653 = vmul.f32 %v4085, %v4646
        %v5654 = vmul.f32 %v4086, %v4646
        %v5655 = vmul.f32 %v4087, %v4650
        %v5656 = vmul.f32 %v4088, %v4650
        %v5657 = vmul.f32 %v4089, %v4650
        %v5658 = vmul.f32 %v4090, %v4650
        %v5659 = vmul.f32 %v4091, %v4650
        %v5660 = vmul.f32 %v4092, %v4650
        %v5661 = vmul.f32 %v4093, %v4650
        %v5662 = vmul.f32 %v4094, %v4650
        %v5663 = vmul.f32 %v4095, %v4654
        %v5664 = vmul.f32 %v4096, %v4654
        %v5665 = vmul.f32 %v4097, %v4654
        %v5666 = vmul.f32 %v4098, %v4654
        %v5667 = vmul.f32 %v4099, %v4654
        %v5668 = vmul.f32 %v4100, %v4654
        %v5669 = vmul.f32 %v4101, %v4654
        %v5670 = vmul.f32 %v4102, %v4654
        %v5671 = vmul.f32 %v4103, %v4658
        %v5672 = vmul.f32 %v4104, %v4658
        %v5673 = vmul.f32 %v4105, %v4658
        %v5674 = vmul.f32 %v4106, %v4658
        %v5675 = vmul.f32 %v4107, %v4658
        %v5676 = vmul.f32 %v4108, %v4658
        %v5677 = vmul.f32 %v4109, %v4658
        %v5678 = vmul.f32 %v4110, %v4658
        %v5679 = vmul.f32 %v4111, %v4662
        %v5680 = vmul.f32 %v4112, %v4662
        %v5681 = vmul.f32 %v4113, %v4662
        %v5682 = vmul.f32 %v4114, %v4662
        %v5683 = vmul.f32 %v4115, %v4662
        %v5684 = vmul.f32 %v4116, %v4662
        %v5685 = vmul.f32 %v4117, %v4662
        %v5686 = vmul.f32 %v4118, %v4662
        %v5687 = vadd.f32 %v4663, %v4671
        %v5688 = vadd.f32 %v5687, %v4679
        %v5689 = vadd.f32 %v5688, %v4687
        %v5690 = vadd.f32 %v5689, %v4695
        %v5691 = vadd.f32 %v5690, %v4703
        %v5692 = vadd.f32 %v5691, %v4711
        %v5693 = vadd.f32 %v5692, %v4719
        %v5694 = vadd.f32 %v5693, %v4727
        %v5695 = vadd.f32 %v5694, %v4735
        %v5696 = vadd.f32 %v5695, %v4743
        %v5697 = vadd.f32 %v5696, %v4751
        %v5698 = vadd.f32 %v5697, %v4759
        %v5699 = vadd.f32 %v5698, %v4767
        %v5700 = vadd.f32 %v5699, %v4775
        %v5701 = vadd.f32 %v5700, %v4783
        %v5702 = vrot.slane %v5701, 4
        %v5703 = vadd.f32 %v5701, %v5702
        %v5704 = vrot.slane %v5703, 2
        %v5705 = vadd.f32 %v5703, %v5704
        %v5706 = vrot.slane %v5705, 1
        %v5707 = vadd.f32 %v5705, %v5706
        %v5708 = vadd.f32 %v4664, %v4672
        %v5709 = vadd.f32 %v5708, %v4680
        %v5710 = vadd.f32 %v5709, %v4688
        %v5711 = vadd.f32 %v5710, %v4696
        %v5712 = vadd.f32 %v5711, %v4704
        %v5713 = vadd.f32 %v5712, %v4712
        %v5714 = vadd.f32 %v5713, %v4720
        %v5715 = vadd.f32 %v5714, %v4728
        %v5716 = vadd.f32 %v5715, %v4736
        %v5717 = vadd.f32 %v5716, %v4744
        %v5718 = vadd.f32 %v5717, %v4752
        %v5719 = vadd.f32 %v5718, %v4760
        %v5720 = vadd.f32 %v5719, %v4768
        %v5721 = vadd.f32 %v5720, %v4776
        %v5722 = vadd.f32 %v5721, %v4784
        %v5723 = vrot.slane %v5722, 4
        %v5724 = vadd.f32 %v5722, %v5723
        %v5725 = vrot.slane %v5724, 2
        %v5726 = vadd.f32 %v5724, %v5725
        %v5727 = vrot.slane %v5726, 1
        %v5728 = vadd.f32 %v5726, %v5727
        %v5729 = vadd.f32 %v4665, %v4673
        %v5730 = vadd.f32 %v5729, %v4681
        %v5731 = vadd.f32 %v5730, %v4689
        %v5732 = vadd.f32 %v5731, %v4697
        %v5733 = vadd.f32 %v5732, %v4705
        %v5734 = vadd.f32 %v5733, %v4713
        %v5735 = vadd.f32 %v5734, %v4721
        %v5736 = vadd.f32 %v5735, %v4729
        %v5737 = vadd.f32 %v5736, %v4737
        %v5738 = vadd.f32 %v5737, %v4745
        %v5739 = vadd.f32 %v5738, %v4753
        %v5740 = vadd.f32 %v5739, %v4761
        %v5741 = vadd.f32 %v5740, %v4769
        %v5742 = vadd.f32 %v5741, %v4777
        %v5743 = vadd.f32 %v5742, %v4785
        %v5744 = vrot.slane %v5743, 4
        %v5745 = vadd.f32 %v5743, %v5744
        %v5746 = vrot.slane %v5745, 2
        %v5747 = vadd.f32 %v5745, %v5746
        %v5748 = vrot.slane %v5747, 1
        %v5749 = vadd.f32 %v5747, %v5748
        %v5750 = vadd.f32 %v4666, %v4674
        %v5751 = vadd.f32 %v5750, %v4682
        %v5752 = vadd.f32 %v5751, %v4690
        %v5753 = vadd.f32 %v5752, %v4698
        %v5754 = vadd.f32 %v5753, %v4706
        %v5755 = vadd.f32 %v5754, %v4714
        %v5756 = vadd.f32 %v5755, %v4722
        %v5757 = vadd.f32 %v5756, %v4730
        %v5758 = vadd.f32 %v5757, %v4738
        %v5759 = vadd.f32 %v5758, %v4746
        %v5760 = vadd.f32 %v5759, %v4754
        %v5761 = vadd.f32 %v5760, %v4762
        %v5762 = vadd.f32 %v5761, %v4770
        %v5763 = vadd.f32 %v5762, %v4778
        %v5764 = vadd.f32 %v5763, %v4786
        %v5765 = vrot.slane %v5764, 4
        %v5766 = vadd.f32 %v5764, %v5765
        %v5767 = vrot.slane %v5766, 2
        %v5768 = vadd.f32 %v5766, %v5767
        %v5769 = vrot.slane %v5768, 1
        %v5770 = vadd.f32 %v5768, %v5769
        %v5771 = vadd.f32 %v4667, %v4675
        %v5772 = vadd.f32 %v5771, %v4683
        %v5773 = vadd.f32 %v5772, %v4691
        %v5774 = vadd.f32 %v5773, %v4699
        %v5775 = vadd.f32 %v5774, %v4707
        %v5776 = vadd.f32 %v5775, %v4715
        %v5777 = vadd.f32 %v5776, %v4723
        %v5778 = vadd.f32 %v5777, %v4731
        %v5779 = vadd.f32 %v5778, %v4739
        %v5780 = vadd.f32 %v5779, %v4747
        %v5781 = vadd.f32 %v5780, %v4755
        %v5782 = vadd.f32 %v5781, %v4763
        %v5783 = vadd.f32 %v5782, %v4771
        %v5784 = vadd.f32 %v5783, %v4779
        %v5785 = vadd.f32 %v5784, %v4787
        %v5786 = vrot.slane %v5785, 4
        %v5787 = vadd.f32 %v5785, %v5786
        %v5788 = vrot.slane %v5787, 2
        %v5789 = vadd.f32 %v5787, %v5788
        %v5790 = vrot.slane %v5789, 1
        %v5791 = vadd.f32 %v5789, %v5790
        %v5792 = vadd.f32 %v4668, %v4676
        %v5793 = vadd.f32 %v5792, %v4684
        %v5794 = vadd.f32 %v5793, %v4692
        %v5795 = vadd.f32 %v5794, %v4700
        %v5796 = vadd.f32 %v5795, %v4708
        %v5797 = vadd.f32 %v5796, %v4716
        %v5798 = vadd.f32 %v5797, %v4724
        %v5799 = vadd.f32 %v5798, %v4732
        %v5800 = vadd.f32 %v5799, %v4740
        %v5801 = vadd.f32 %v5800, %v4748
        %v5802 = vadd.f32 %v5801, %v4756
        %v5803 = vadd.f32 %v5802, %v4764
        %v5804 = vadd.f32 %v5803, %v4772
        %v5805 = vadd.f32 %v5804, %v4780
        %v5806 = vadd.f32 %v5805, %v4788
        %v5807 = vrot.slane %v5806, 4
        %v5808 = vadd.f32 %v5806, %v5807
        %v5809 = vrot.slane %v5808, 2
        %v5810 = vadd.f32 %v5808, %v5809
        %v5811 = vrot.slane %v5810, 1
        %v5812 = vadd.f32 %v5810, %v5811
        %v5813 = vadd.f32 %v4669, %v4677
        %v5814 = vadd.f32 %v5813, %v4685
        %v5815 = vadd.f32 %v5814, %v4693
        %v5816 = vadd.f32 %v5815, %v4701
        %v5817 = vadd.f32 %v5816, %v4709
        %v5818 = vadd.f32 %v5817, %v4717
        %v5819 = vadd.f32 %v5818, %v4725
        %v5820 = vadd.f32 %v5819, %v4733
        %v5821 = vadd.f32 %v5820, %v4741
        %v5822 = vadd.f32 %v5821, %v4749
        %v5823 = vadd.f32 %v5822, %v4757
        %v5824 = vadd.f32 %v5823, %v4765
        %v5825 = vadd.f32 %v5824, %v4773
        %v5826 = vadd.f32 %v5825, %v4781
        %v5827 = vadd.f32 %v5826, %v4789
        %v5828 = vrot.slane %v5827, 4
        %v5829 = vadd.f32 %v5827, %v5828
        %v5830 = vrot.slane %v5829, 2
        %v5831 = vadd.f32 %v5829, %v5830
        %v5832 = vrot.slane %v5831, 1
        %v5833 = vadd.f32 %v5831, %v5832
        %v5834 = vadd.f32 %v4670, %v4678
        %v5835 = vadd.f32 %v5834, %v4686
        %v5836 = vadd.f32 %v5835, %v4694
        %v5837 = vadd.f32 %v5836, %v4702
        %v5838 = vadd.f32 %v5837, %v4710
        %v5839 = vadd.f32 %v5838, %v4718
        %v5840 = vadd.f32 %v5839, %v4726
        %v5841 = vadd.f32 %v5840, %v4734
        %v5842 = vadd.f32 %v5841, %v4742
        %v5843 = vadd.f32 %v5842, %v4750
        %v5844 = vadd.f32 %v5843, %v4758
        %v5845 = vadd.f32 %v5844, %v4766
        %v5846 = vadd.f32 %v5845, %v4774
        %v5847 = vadd.f32 %v5846, %v4782
        %v5848 = vadd.f32 %v5847, %v4790
        %v5849 = vrot.slane %v5848, 4
        %v5850 = vadd.f32 %v5848, %v5849
        %v5851 = vrot.slane %v5850, 2
        %v5852 = vadd.f32 %v5850, %v5851
        %v5853 = vrot.slane %v5852, 1
        %v5854 = vadd.f32 %v5852, %v5853
        %v5855 = vadd.f32 %v4791, %v4799
        %v5856 = vadd.f32 %v5855, %v4807
        %v5857 = vadd.f32 %v5856, %v4815
        %v5858 = vadd.f32 %v5857, %v4823
        %v5859 = vadd.f32 %v5858, %v4831
        %v5860 = vadd.f32 %v5859, %v4839
        %v5861 = vadd.f32 %v5860, %v4847
        %v5862 = vadd.f32 %v5861, %v4855
        %v5863 = vadd.f32 %v5862, %v4863
        %v5864 = vadd.f32 %v5863, %v4871
        %v5865 = vadd.f32 %v5864, %v4879
        %v5866 = vadd.f32 %v5865, %v4887
        %v5867 = vadd.f32 %v5866, %v4895
        %v5868 = vadd.f32 %v5867, %v4903
        %v5869 = vadd.f32 %v5868, %v4911
        %v5870 = vrot.slane %v5869, 4
        %v5871 = vadd.f32 %v5869, %v5870
        %v5872 = vrot.slane %v5871, 2
        %v5873 = vadd.f32 %v5871, %v5872
        %v5874 = vrot.slane %v5873, 1
        %v5875 = vadd.f32 %v5873, %v5874
        %v5876 = vadd.f32 %v4792, %v4800
        %v5877 = vadd.f32 %v5876, %v4808
        %v5878 = vadd.f32 %v5877, %v4816
        %v5879 = vadd.f32 %v5878, %v4824
        %v5880 = vadd.f32 %v5879, %v4832
        %v5881 = vadd.f32 %v5880, %v4840
        %v5882 = vadd.f32 %v5881, %v4848
        %v5883 = vadd.f32 %v5882, %v4856
        %v5884 = vadd.f32 %v5883, %v4864
        %v5885 = vadd.f32 %v5884, %v4872
        %v5886 = vadd.f32 %v5885, %v4880
        %v5887 = vadd.f32 %v5886, %v4888
        %v5888 = vadd.f32 %v5887, %v4896
        %v5889 = vadd.f32 %v5888, %v4904
        %v5890 = vadd.f32 %v5889, %v4912
        %v5891 = vrot.slane %v5890, 4
        %v5892 = vadd.f32 %v5890, %v5891
        %v5893 = vrot.slane %v5892, 2
        %v5894 = vadd.f32 %v5892, %v5893
        %v5895 = vrot.slane %v5894, 1
        %v5896 = vadd.f32 %v5894, %v5895
        %v5897 = vadd.f32 %v4793, %v4801
        %v5898 = vadd.f32 %v5897, %v4809
        %v5899 = vadd.f32 %v5898, %v4817
        %v5900 = vadd.f32 %v5899, %v4825
        %v5901 = vadd.f32 %v5900, %v4833
        %v5902 = vadd.f32 %v5901, %v4841
        %v5903 = vadd.f32 %v5902, %v4849
        %v5904 = vadd.f32 %v5903, %v4857
        %v5905 = vadd.f32 %v5904, %v4865
        %v5906 = vadd.f32 %v5905, %v4873
        %v5907 = vadd.f32 %v5906, %v4881
        %v5908 = vadd.f32 %v5907, %v4889
        %v5909 = vadd.f32 %v5908, %v4897
        %v5910 = vadd.f32 %v5909, %v4905
        %v5911 = vadd.f32 %v5910, %v4913
        %v5912 = vrot.slane %v5911, 4
        %v5913 = vadd.f32 %v5911, %v5912
        %v5914 = vrot.slane %v5913, 2
        %v5915 = vadd.f32 %v5913, %v5914
        %v5916 = vrot.slane %v5915, 1
        %v5917 = vadd.f32 %v5915, %v5916
        %v5918 = vadd.f32 %v4794, %v4802
        %v5919 = vadd.f32 %v5918, %v4810
        %v5920 = vadd.f32 %v5919, %v4818
        %v5921 = vadd.f32 %v5920, %v4826
        %v5922 = vadd.f32 %v5921, %v4834
        %v5923 = vadd.f32 %v5922, %v4842
        %v5924 = vadd.f32 %v5923, %v4850
        %v5925 = vadd.f32 %v5924, %v4858
        %v5926 = vadd.f32 %v5925, %v4866
        %v5927 = vadd.f32 %v5926, %v4874
        %v5928 = vadd.f32 %v5927, %v4882
        %v5929 = vadd.f32 %v5928, %v4890
        %v5930 = vadd.f32 %v5929, %v4898
        %v5931 = vadd.f32 %v5930, %v4906
        %v5932 = vadd.f32 %v5931, %v4914
        %v5933 = vrot.slane %v5932, 4
        %v5934 = vadd.f32 %v5932, %v5933
        %v5935 = vrot.slane %v5934, 2
        %v5936 = vadd.f32 %v5934, %v5935
        %v5937 = vrot.slane %v5936, 1
        %v5938 = vadd.f32 %v5936, %v5937
        %v5939 = vadd.f32 %v4795, %v4803
        %v5940 = vadd.f32 %v5939, %v4811
        %v5941 = vadd.f32 %v5940, %v4819
        %v5942 = vadd.f32 %v5941, %v4827
        %v5943 = vadd.f32 %v5942, %v4835
        %v5944 = vadd.f32 %v5943, %v4843
        %v5945 = vadd.f32 %v5944, %v4851
        %v5946 = vadd.f32 %v5945, %v4859
        %v5947 = vadd.f32 %v5946, %v4867
        %v5948 = vadd.f32 %v5947, %v4875
        %v5949 = vadd.f32 %v5948, %v4883
        %v5950 = vadd.f32 %v5949, %v4891
        %v5951 = vadd.f32 %v5950, %v4899
        %v5952 = vadd.f32 %v5951, %v4907
        %v5953 = vadd.f32 %v5952, %v4915
        %v5954 = vrot.slane %v5953, 4
        %v5955 = vadd.f32 %v5953, %v5954
        %v5956 = vrot.slane %v5955, 2
        %v5957 = vadd.f32 %v5955, %v5956
        %v5958 = vrot.slane %v5957, 1
        %v5959 = vadd.f32 %v5957, %v5958
        %v5960 = vadd.f32 %v4796, %v4804
        %v5961 = vadd.f32 %v5960, %v4812
        %v5962 = vadd.f32 %v5961, %v4820
        %v5963 = vadd.f32 %v5962, %v4828
        %v5964 = vadd.f32 %v5963, %v4836
        %v5965 = vadd.f32 %v5964, %v4844
        %v5966 = vadd.f32 %v5965, %v4852
        %v5967 = vadd.f32 %v5966, %v4860
        %v5968 = vadd.f32 %v5967, %v4868
        %v5969 = vadd.f32 %v5968, %v4876
        %v5970 = vadd.f32 %v5969, %v4884
        %v5971 = vadd.f32 %v5970, %v4892
        %v5972 = vadd.f32 %v5971, %v4900
        %v5973 = vadd.f32 %v5972, %v4908
        %v5974 = vadd.f32 %v5973, %v4916
        %v5975 = vrot.slane %v5974, 4
        %v5976 = vadd.f32 %v5974, %v5975
        %v5977 = vrot.slane %v5976, 2
        %v5978 = vadd.f32 %v5976, %v5977
        %v5979 = vrot.slane %v5978, 1
        %v5980 = vadd.f32 %v5978, %v5979
        %v5981 = vadd.f32 %v4797, %v4805
        %v5982 = vadd.f32 %v5981, %v4813
        %v5983 = vadd.f32 %v5982, %v4821
        %v5984 = vadd.f32 %v5983, %v4829
        %v5985 = vadd.f32 %v5984, %v4837
        %v5986 = vadd.f32 %v5985, %v4845
        %v5987 = vadd.f32 %v5986, %v4853
        %v5988 = vadd.f32 %v5987, %v4861
        %v5989 = vadd.f32 %v5988, %v4869
        %v5990 = vadd.f32 %v5989, %v4877
        %v5991 = vadd.f32 %v5990, %v4885
        %v5992 = vadd.f32 %v5991, %v4893
        %v5993 = vadd.f32 %v5992, %v4901
        %v5994 = vadd.f32 %v5993, %v4909
        %v5995 = vadd.f32 %v5994, %v4917
        %v5996 = vrot.slane %v5995, 4
        %v5997 = vadd.f32 %v5995, %v5996
        %v5998 = vrot.slane %v5997, 2
        %v5999 = vadd.f32 %v5997, %v5998
        %v6000 = vrot.slane %v5999, 1
        %v6001 = vadd.f32 %v5999, %v6000
        %v6002 = vadd.f32 %v4798, %v4806
        %v6003 = vadd.f32 %v6002, %v4814
        %v6004 = vadd.f32 %v6003, %v4822
        %v6005 = vadd.f32 %v6004, %v4830
        %v6006 = vadd.f32 %v6005, %v4838
        %v6007 = vadd.f32 %v6006, %v4846
        %v6008 = vadd.f32 %v6007, %v4854
        %v6009 = vadd.f32 %v6008, %v4862
        %v6010 = vadd.f32 %v6009, %v4870
        %v6011 = vadd.f32 %v6010, %v4878
        %v6012 = vadd.f32 %v6011, %v4886
        %v6013 = vadd.f32 %v6012, %v4894
        %v6014 = vadd.f32 %v6013, %v4902
        %v6015 = vadd.f32 %v6014, %v4910
        %v6016 = vadd.f32 %v6015, %v4918
        %v6017 = vrot.slane %v6016, 4
        %v6018 = vadd.f32 %v6016, %v6017
        %v6019 = vrot.slane %v6018, 2
        %v6020 = vadd.f32 %v6018, %v6019
        %v6021 = vrot.slane %v6020, 1
        %v6022 = vadd.f32 %v6020, %v6021
        %v6023 = vadd.f32 %v4919, %v4927
        %v6024 = vadd.f32 %v6023, %v4935
        %v6025 = vadd.f32 %v6024, %v4943
        %v6026 = vadd.f32 %v6025, %v4951
        %v6027 = vadd.f32 %v6026, %v4959
        %v6028 = vadd.f32 %v6027, %v4967
        %v6029 = vadd.f32 %v6028, %v4975
        %v6030 = vadd.f32 %v6029, %v4983
        %v6031 = vadd.f32 %v6030, %v4991
        %v6032 = vadd.f32 %v6031, %v4999
        %v6033 = vadd.f32 %v6032, %v5007
        %v6034 = vadd.f32 %v6033, %v5015
        %v6035 = vadd.f32 %v6034, %v5023
        %v6036 = vadd.f32 %v6035, %v5031
        %v6037 = vadd.f32 %v6036, %v5039
        %v6038 = vrot.slane %v6037, 4
        %v6039 = vadd.f32 %v6037, %v6038
        %v6040 = vrot.slane %v6039, 2
        %v6041 = vadd.f32 %v6039, %v6040
        %v6042 = vrot.slane %v6041, 1
        %v6043 = vadd.f32 %v6041, %v6042
        %v6044 = vadd.f32 %v4920, %v4928
        %v6045 = vadd.f32 %v6044, %v4936
        %v6046 = vadd.f32 %v6045, %v4944
        %v6047 = vadd.f32 %v6046, %v4952
        %v6048 = vadd.f32 %v6047, %v4960
        %v6049 = vadd.f32 %v6048, %v4968
        %v6050 = vadd.f32 %v6049, %v4976
        %v6051 = vadd.f32 %v6050, %v4984
        %v6052 = vadd.f32 %v6051, %v4992
        %v6053 = vadd.f32 %v6052, %v5000
        %v6054 = vadd.f32 %v6053, %v5008
        %v6055 = vadd.f32 %v6054, %v5016
        %v6056 = vadd.f32 %v6055, %v5024
        %v6057 = vadd.f32 %v6056, %v5032
        %v6058 = vadd.f32 %v6057, %v5040
        %v6059 = vrot.slane %v6058, 4
        %v6060 = vadd.f32 %v6058, %v6059
        %v6061 = vrot.slane %v6060, 2
        %v6062 = vadd.f32 %v6060, %v6061
        %v6063 = vrot.slane %v6062, 1
        %v6064 = vadd.f32 %v6062, %v6063
        %v6065 = vadd.f32 %v4921, %v4929
        %v6066 = vadd.f32 %v6065, %v4937
        %v6067 = vadd.f32 %v6066, %v4945
        %v6068 = vadd.f32 %v6067, %v4953
        %v6069 = vadd.f32 %v6068, %v4961
        %v6070 = vadd.f32 %v6069, %v4969
        %v6071 = vadd.f32 %v6070, %v4977
        %v6072 = vadd.f32 %v6071, %v4985
        %v6073 = vadd.f32 %v6072, %v4993
        %v6074 = vadd.f32 %v6073, %v5001
        %v6075 = vadd.f32 %v6074, %v5009
        %v6076 = vadd.f32 %v6075, %v5017
        %v6077 = vadd.f32 %v6076, %v5025
        %v6078 = vadd.f32 %v6077, %v5033
        %v6079 = vadd.f32 %v6078, %v5041
        %v6080 = vrot.slane %v6079, 4
        %v6081 = vadd.f32 %v6079, %v6080
        %v6082 = vrot.slane %v6081, 2
        %v6083 = vadd.f32 %v6081, %v6082
        %v6084 = vrot.slane %v6083, 1
        %v6085 = vadd.f32 %v6083, %v6084
        %v6086 = vadd.f32 %v4922, %v4930
        %v6087 = vadd.f32 %v6086, %v4938
        %v6088 = vadd.f32 %v6087, %v4946
        %v6089 = vadd.f32 %v6088, %v4954
        %v6090 = vadd.f32 %v6089, %v4962
        %v6091 = vadd.f32 %v6090, %v4970
        %v6092 = vadd.f32 %v6091, %v4978
        %v6093 = vadd.f32 %v6092, %v4986
        %v6094 = vadd.f32 %v6093, %v4994
        %v6095 = vadd.f32 %v6094, %v5002
        %v6096 = vadd.f32 %v6095, %v5010
        %v6097 = vadd.f32 %v6096, %v5018
        %v6098 = vadd.f32 %v6097, %v5026
        %v6099 = vadd.f32 %v6098, %v5034
        %v6100 = vadd.f32 %v6099, %v5042
        %v6101 = vrot.slane %v6100, 4
        %v6102 = vadd.f32 %v6100, %v6101
        %v6103 = vrot.slane %v6102, 2
        %v6104 = vadd.f32 %v6102, %v6103
        %v6105 = vrot.slane %v6104, 1
        %v6106 = vadd.f32 %v6104, %v6105
        %v6107 = vadd.f32 %v4923, %v4931
        %v6108 = vadd.f32 %v6107, %v4939
        %v6109 = vadd.f32 %v6108, %v4947
        %v6110 = vadd.f32 %v6109, %v4955
        %v6111 = vadd.f32 %v6110, %v4963
        %v6112 = vadd.f32 %v6111, %v4971
        %v6113 = vadd.f32 %v6112, %v4979
        %v6114 = vadd.f32 %v6113, %v4987
        %v6115 = vadd.f32 %v6114, %v4995
        %v6116 = vadd.f32 %v6115, %v5003
        %v6117 = vadd.f32 %v6116, %v5011
        %v6118 = vadd.f32 %v6117, %v5019
        %v6119 = vadd.f32 %v6118, %v5027
        %v6120 = vadd.f32 %v6119, %v5035
        %v6121 = vadd.f32 %v6120, %v5043
        %v6122 = vrot.slane %v6121, 4
        %v6123 = vadd.f32 %v6121, %v6122
        %v6124 = vrot.slane %v6123, 2
        %v6125 = vadd.f32 %v6123, %v6124
        %v6126 = vrot.slane %v6125, 1
        %v6127 = vadd.f32 %v6125, %v6126
        %v6128 = vadd.f32 %v4924, %v4932
        %v6129 = vadd.f32 %v6128, %v4940
        %v6130 = vadd.f32 %v6129, %v4948
        %v6131 = vadd.f32 %v6130, %v4956
        %v6132 = vadd.f32 %v6131, %v4964
        %v6133 = vadd.f32 %v6132, %v4972
        %v6134 = vadd.f32 %v6133, %v4980
        %v6135 = vadd.f32 %v6134, %v4988
        %v6136 = vadd.f32 %v6135, %v4996
        %v6137 = vadd.f32 %v6136, %v5004
        %v6138 = vadd.f32 %v6137, %v5012
        %v6139 = vadd.f32 %v6138, %v5020
        %v6140 = vadd.f32 %v6139, %v5028
        %v6141 = vadd.f32 %v6140, %v5036
        %v6142 = vadd.f32 %v6141, %v5044
        %v6143 = vrot.slane %v6142, 4
        %v6144 = vadd.f32 %v6142, %v6143
        %v6145 = vrot.slane %v6144, 2
        %v6146 = vadd.f32 %v6144, %v6145
        %v6147 = vrot.slane %v6146, 1
        %v6148 = vadd.f32 %v6146, %v6147
        %v6149 = vadd.f32 %v4925, %v4933
        %v6150 = vadd.f32 %v6149, %v4941
        %v6151 = vadd.f32 %v6150, %v4949
        %v6152 = vadd.f32 %v6151, %v4957
        %v6153 = vadd.f32 %v6152, %v4965
        %v6154 = vadd.f32 %v6153, %v4973
        %v6155 = vadd.f32 %v6154, %v4981
        %v6156 = vadd.f32 %v6155, %v4989
        %v6157 = vadd.f32 %v6156, %v4997
        %v6158 = vadd.f32 %v6157, %v5005
        %v6159 = vadd.f32 %v6158, %v5013
        %v6160 = vadd.f32 %v6159, %v5021
        %v6161 = vadd.f32 %v6160, %v5029
        %v6162 = vadd.f32 %v6161, %v5037
        %v6163 = vadd.f32 %v6162, %v5045
        %v6164 = vrot.slane %v6163, 4
        %v6165 = vadd.f32 %v6163, %v6164
        %v6166 = vrot.slane %v6165, 2
        %v6167 = vadd.f32 %v6165, %v6166
        %v6168 = vrot.slane %v6167, 1
        %v6169 = vadd.f32 %v6167, %v6168
        %v6170 = vadd.f32 %v4926, %v4934
        %v6171 = vadd.f32 %v6170, %v4942
        %v6172 = vadd.f32 %v6171, %v4950
        %v6173 = vadd.f32 %v6172, %v4958
        %v6174 = vadd.f32 %v6173, %v4966
        %v6175 = vadd.f32 %v6174, %v4974
        %v6176 = vadd.f32 %v6175, %v4982
        %v6177 = vadd.f32 %v6176, %v4990
        %v6178 = vadd.f32 %v6177, %v4998
        %v6179 = vadd.f32 %v6178, %v5006
        %v6180 = vadd.f32 %v6179, %v5014
        %v6181 = vadd.f32 %v6180, %v5022
        %v6182 = vadd.f32 %v6181, %v5030
        %v6183 = vadd.f32 %v6182, %v5038
        %v6184 = vadd.f32 %v6183, %v5046
        %v6185 = vrot.slane %v6184, 4
        %v6186 = vadd.f32 %v6184, %v6185
        %v6187 = vrot.slane %v6186, 2
        %v6188 = vadd.f32 %v6186, %v6187
        %v6189 = vrot.slane %v6188, 1
        %v6190 = vadd.f32 %v6188, %v6189
        %v6191 = vadd.f32 %v5047, %v5055
        %v6192 = vadd.f32 %v6191, %v5063
        %v6193 = vadd.f32 %v6192, %v5071
        %v6194 = vadd.f32 %v6193, %v5079
        %v6195 = vadd.f32 %v6194, %v5087
        %v6196 = vadd.f32 %v6195, %v5095
        %v6197 = vadd.f32 %v6196, %v5103
        %v6198 = vadd.f32 %v6197, %v5111
        %v6199 = vadd.f32 %v6198, %v5119
        %v6200 = vadd.f32 %v6199, %v5127
        %v6201 = vadd.f32 %v6200, %v5135
        %v6202 = vadd.f32 %v6201, %v5143
        %v6203 = vadd.f32 %v6202, %v5151
        %v6204 = vadd.f32 %v6203, %v5159
        %v6205 = vadd.f32 %v6204, %v5167
        %v6206 = vrot.slane %v6205, 4
        %v6207 = vadd.f32 %v6205, %v6206
        %v6208 = vrot.slane %v6207, 2
        %v6209 = vadd.f32 %v6207, %v6208
        %v6210 = vrot.slane %v6209, 1
        %v6211 = vadd.f32 %v6209, %v6210
        %v6212 = vadd.f32 %v5048, %v5056
        %v6213 = vadd.f32 %v6212, %v5064
        %v6214 = vadd.f32 %v6213, %v5072
        %v6215 = vadd.f32 %v6214, %v5080
        %v6216 = vadd.f32 %v6215, %v5088
        %v6217 = vadd.f32 %v6216, %v5096
        %v6218 = vadd.f32 %v6217, %v5104
        %v6219 = vadd.f32 %v6218, %v5112
        %v6220 = vadd.f32 %v6219, %v5120
        %v6221 = vadd.f32 %v6220, %v5128
        %v6222 = vadd.f32 %v6221, %v5136
        %v6223 = vadd.f32 %v6222, %v5144
        %v6224 = vadd.f32 %v6223, %v5152
        %v6225 = vadd.f32 %v6224, %v5160
        %v6226 = vadd.f32 %v6225, %v5168
        %v6227 = vrot.slane %v6226, 4
        %v6228 = vadd.f32 %v6226, %v6227
        %v6229 = vrot.slane %v6228, 2
        %v6230 = vadd.f32 %v6228, %v6229
        %v6231 = vrot.slane %v6230, 1
        %v6232 = vadd.f32 %v6230, %v6231
        %v6233 = vadd.f32 %v5049, %v5057
        %v6234 = vadd.f32 %v6233, %v5065
        %v6235 = vadd.f32 %v6234, %v5073
        %v6236 = vadd.f32 %v6235, %v5081
        %v6237 = vadd.f32 %v6236, %v5089
        %v6238 = vadd.f32 %v6237, %v5097
        %v6239 = vadd.f32 %v6238, %v5105
        %v6240 = vadd.f32 %v6239, %v5113
        %v6241 = vadd.f32 %v6240, %v5121
        %v6242 = vadd.f32 %v6241, %v5129
        %v6243 = vadd.f32 %v6242, %v5137
        %v6244 = vadd.f32 %v6243, %v5145
        %v6245 = vadd.f32 %v6244, %v5153
        %v6246 = vadd.f32 %v6245, %v5161
        %v6247 = vadd.f32 %v6246, %v5169
        %v6248 = vrot.slane %v6247, 4
        %v6249 = vadd.f32 %v6247, %v6248
        %v6250 = vrot.slane %v6249, 2
        %v6251 = vadd.f32 %v6249, %v6250
        %v6252 = vrot.slane %v6251, 1
        %v6253 = vadd.f32 %v6251, %v6252
        %v6254 = vadd.f32 %v5050, %v5058
        %v6255 = vadd.f32 %v6254, %v5066
        %v6256 = vadd.f32 %v6255, %v5074
        %v6257 = vadd.f32 %v6256, %v5082
        %v6258 = vadd.f32 %v6257, %v5090
        %v6259 = vadd.f32 %v6258, %v5098
        %v6260 = vadd.f32 %v6259, %v5106
        %v6261 = vadd.f32 %v6260, %v5114
        %v6262 = vadd.f32 %v6261, %v5122
        %v6263 = vadd.f32 %v6262, %v5130
        %v6264 = vadd.f32 %v6263, %v5138
        %v6265 = vadd.f32 %v6264, %v5146
        %v6266 = vadd.f32 %v6265, %v5154
        %v6267 = vadd.f32 %v6266, %v5162
        %v6268 = vadd.f32 %v6267, %v5170
        %v6269 = vrot.slane %v6268, 4
        %v6270 = vadd.f32 %v6268, %v6269
        %v6271 = vrot.slane %v6270, 2
        %v6272 = vadd.f32 %v6270, %v6271
        %v6273 = vrot.slane %v6272, 1
        %v6274 = vadd.f32 %v6272, %v6273
        %v6275 = vadd.f32 %v5051, %v5059
        %v6276 = vadd.f32 %v6275, %v5067
        %v6277 = vadd.f32 %v6276, %v5075
        %v6278 = vadd.f32 %v6277, %v5083
        %v6279 = vadd.f32 %v6278, %v5091
        %v6280 = vadd.f32 %v6279, %v5099
        %v6281 = vadd.f32 %v6280, %v5107
        %v6282 = vadd.f32 %v6281, %v5115
        %v6283 = vadd.f32 %v6282, %v5123
        %v6284 = vadd.f32 %v6283, %v5131
        %v6285 = vadd.f32 %v6284, %v5139
        %v6286 = vadd.f32 %v6285, %v5147
        %v6287 = vadd.f32 %v6286, %v5155
        %v6288 = vadd.f32 %v6287, %v5163
        %v6289 = vadd.f32 %v6288, %v5171
        %v6290 = vrot.slane %v6289, 4
        %v6291 = vadd.f32 %v6289, %v6290
        %v6292 = vrot.slane %v6291, 2
        %v6293 = vadd.f32 %v6291, %v6292
        %v6294 = vrot.slane %v6293, 1
        %v6295 = vadd.f32 %v6293, %v6294
        %v6296 = vadd.f32 %v5052, %v5060
        %v6297 = vadd.f32 %v6296, %v5068
        %v6298 = vadd.f32 %v6297, %v5076
        %v6299 = vadd.f32 %v6298, %v5084
        %v6300 = vadd.f32 %v6299, %v5092
        %v6301 = vadd.f32 %v6300, %v5100
        %v6302 = vadd.f32 %v6301, %v5108
        %v6303 = vadd.f32 %v6302, %v5116
        %v6304 = vadd.f32 %v6303, %v5124
        %v6305 = vadd.f32 %v6304, %v5132
        %v6306 = vadd.f32 %v6305, %v5140
        %v6307 = vadd.f32 %v6306, %v5148
        %v6308 = vadd.f32 %v6307, %v5156
        %v6309 = vadd.f32 %v6308, %v5164
        %v6310 = vadd.f32 %v6309, %v5172
        %v6311 = vrot.slane %v6310, 4
        %v6312 = vadd.f32 %v6310, %v6311
        %v6313 = vrot.slane %v6312, 2
        %v6314 = vadd.f32 %v6312, %v6313
        %v6315 = vrot.slane %v6314, 1
        %v6316 = vadd.f32 %v6314, %v6315
        %v6317 = vadd.f32 %v5053, %v5061
        %v6318 = vadd.f32 %v6317, %v5069
        %v6319 = vadd.f32 %v6318, %v5077
        %v6320 = vadd.f32 %v6319, %v5085
        %v6321 = vadd.f32 %v6320, %v5093
        %v6322 = vadd.f32 %v6321, %v5101
        %v6323 = vadd.f32 %v6322, %v5109
        %v6324 = vadd.f32 %v6323, %v5117
        %v6325 = vadd.f32 %v6324, %v5125
        %v6326 = vadd.f32 %v6325, %v5133
        %v6327 = vadd.f32 %v6326, %v5141
        %v6328 = vadd.f32 %v6327, %v5149
        %v6329 = vadd.f32 %v6328, %v5157
        %v6330 = vadd.f32 %v6329, %v5165
        %v6331 = vadd.f32 %v6330, %v5173
        %v6332 = vrot.slane %v6331, 4
        %v6333 = vadd.f32 %v6331, %v6332
        %v6334 = vrot.slane %v6333, 2
        %v6335 = vadd.f32 %v6333, %v6334
        %v6336 = vrot.slane %v6335, 1
        %v6337 = vadd.f32 %v6335, %v6336
        %v6338 = vadd.f32 %v5054, %v5062
        %v6339 = vadd.f32 %v6338, %v5070
        %v6340 = vadd.f32 %v6339, %v5078
        %v6341 = vadd.f32 %v6340, %v5086
        %v6342 = vadd.f32 %v6341, %v5094
        %v6343 = vadd.f32 %v6342, %v5102
        %v6344 = vadd.f32 %v6343, %v5110
        %v6345 = vadd.f32 %v6344, %v5118
        %v6346 = vadd.f32 %v6345, %v5126
        %v6347 = vadd.f32 %v6346, %v5134
        %v6348 = vadd.f32 %v6347, %v5142
        %v6349 = vadd.f32 %v6348, %v5150
        %v6350 = vadd.f32 %v6349, %v5158
        %v6351 = vadd.f32 %v6350, %v5166
        %v6352 = vadd.f32 %v6351, %v5174
        %v6353 = vrot.slane %v6352, 4
        %v6354 = vadd.f32 %v6352, %v6353
        %v6355 = vrot.slane %v6354, 2
        %v6356 = vadd.f32 %v6354, %v6355
        %v6357 = vrot.slane %v6356, 1
        %v6358 = vadd.f32 %v6356, %v6357
        %v6359 = vadd.f32 %v5175, %v5183
        %v6360 = vadd.f32 %v6359, %v5191
        %v6361 = vadd.f32 %v6360, %v5199
        %v6362 = vadd.f32 %v6361, %v5207
        %v6363 = vadd.f32 %v6362, %v5215
        %v6364 = vadd.f32 %v6363, %v5223
        %v6365 = vadd.f32 %v6364, %v5231
        %v6366 = vadd.f32 %v6365, %v5239
        %v6367 = vadd.f32 %v6366, %v5247
        %v6368 = vadd.f32 %v6367, %v5255
        %v6369 = vadd.f32 %v6368, %v5263
        %v6370 = vadd.f32 %v6369, %v5271
        %v6371 = vadd.f32 %v6370, %v5279
        %v6372 = vadd.f32 %v6371, %v5287
        %v6373 = vadd.f32 %v6372, %v5295
        %v6374 = vrot.slane %v6373, 4
        %v6375 = vadd.f32 %v6373, %v6374
        %v6376 = vrot.slane %v6375, 2
        %v6377 = vadd.f32 %v6375, %v6376
        %v6378 = vrot.slane %v6377, 1
        %v6379 = vadd.f32 %v6377, %v6378
        %v6380 = vadd.f32 %v5176, %v5184
        %v6381 = vadd.f32 %v6380, %v5192
        %v6382 = vadd.f32 %v6381, %v5200
        %v6383 = vadd.f32 %v6382, %v5208
        %v6384 = vadd.f32 %v6383, %v5216
        %v6385 = vadd.f32 %v6384, %v5224
        %v6386 = vadd.f32 %v6385, %v5232
        %v6387 = vadd.f32 %v6386, %v5240
        %v6388 = vadd.f32 %v6387, %v5248
        %v6389 = vadd.f32 %v6388, %v5256
        %v6390 = vadd.f32 %v6389, %v5264
        %v6391 = vadd.f32 %v6390, %v5272
        %v6392 = vadd.f32 %v6391, %v5280
        %v6393 = vadd.f32 %v6392, %v5288
        %v6394 = vadd.f32 %v6393, %v5296
        %v6395 = vrot.slane %v6394, 4
        %v6396 = vadd.f32 %v6394, %v6395
        %v6397 = vrot.slane %v6396, 2
        %v6398 = vadd.f32 %v6396, %v6397
        %v6399 = vrot.slane %v6398, 1
        %v6400 = vadd.f32 %v6398, %v6399
        %v6401 = vadd.f32 %v5177, %v5185
        %v6402 = vadd.f32 %v6401, %v5193
        %v6403 = vadd.f32 %v6402, %v5201
        %v6404 = vadd.f32 %v6403, %v5209
        %v6405 = vadd.f32 %v6404, %v5217
        %v6406 = vadd.f32 %v6405, %v5225
        %v6407 = vadd.f32 %v6406, %v5233
        %v6408 = vadd.f32 %v6407, %v5241
        %v6409 = vadd.f32 %v6408, %v5249
        %v6410 = vadd.f32 %v6409, %v5257
        %v6411 = vadd.f32 %v6410, %v5265
        %v6412 = vadd.f32 %v6411, %v5273
        %v6413 = vadd.f32 %v6412, %v5281
        %v6414 = vadd.f32 %v6413, %v5289
        %v6415 = vadd.f32 %v6414, %v5297
        %v6416 = vrot.slane %v6415, 4
        %v6417 = vadd.f32 %v6415, %v6416
        %v6418 = vrot.slane %v6417, 2
        %v6419 = vadd.f32 %v6417, %v6418
        %v6420 = vrot.slane %v6419, 1
        %v6421 = vadd.f32 %v6419, %v6420
        %v6422 = vadd.f32 %v5178, %v5186
        %v6423 = vadd.f32 %v6422, %v5194
        %v6424 = vadd.f32 %v6423, %v5202
        %v6425 = vadd.f32 %v6424, %v5210
        %v6426 = vadd.f32 %v6425, %v5218
        %v6427 = vadd.f32 %v6426, %v5226
        %v6428 = vadd.f32 %v6427, %v5234
        %v6429 = vadd.f32 %v6428, %v5242
        %v6430 = vadd.f32 %v6429, %v5250
        %v6431 = vadd.f32 %v6430, %v5258
        %v6432 = vadd.f32 %v6431, %v5266
        %v6433 = vadd.f32 %v6432, %v5274
        %v6434 = vadd.f32 %v6433, %v5282
        %v6435 = vadd.f32 %v6434, %v5290
        %v6436 = vadd.f32 %v6435, %v5298
        %v6437 = vrot.slane %v6436, 4
        %v6438 = vadd.f32 %v6436, %v6437
        %v6439 = vrot.slane %v6438, 2
        %v6440 = vadd.f32 %v6438, %v6439
        %v6441 = vrot.slane %v6440, 1
        %v6442 = vadd.f32 %v6440, %v6441
        %v6443 = vadd.f32 %v5179, %v5187
        %v6444 = vadd.f32 %v6443, %v5195
        %v6445 = vadd.f32 %v6444, %v5203
        %v6446 = vadd.f32 %v6445, %v5211
        %v6447 = vadd.f32 %v6446, %v5219
        %v6448 = vadd.f32 %v6447, %v5227
        %v6449 = vadd.f32 %v6448, %v5235
        %v6450 = vadd.f32 %v6449, %v5243
        %v6451 = vadd.f32 %v6450, %v5251
        %v6452 = vadd.f32 %v6451, %v5259
        %v6453 = vadd.f32 %v6452, %v5267
        %v6454 = vadd.f32 %v6453, %v5275
        %v6455 = vadd.f32 %v6454, %v5283
        %v6456 = vadd.f32 %v6455, %v5291
        %v6457 = vadd.f32 %v6456, %v5299
        %v6458 = vrot.slane %v6457, 4
        %v6459 = vadd.f32 %v6457, %v6458
        %v6460 = vrot.slane %v6459, 2
        %v6461 = vadd.f32 %v6459, %v6460
        %v6462 = vrot.slane %v6461, 1
        %v6463 = vadd.f32 %v6461, %v6462
        %v6464 = vadd.f32 %v5180, %v5188
        %v6465 = vadd.f32 %v6464, %v5196
        %v6466 = vadd.f32 %v6465, %v5204
        %v6467 = vadd.f32 %v6466, %v5212
        %v6468 = vadd.f32 %v6467, %v5220
        %v6469 = vadd.f32 %v6468, %v5228
        %v6470 = vadd.f32 %v6469, %v5236
        %v6471 = vadd.f32 %v6470, %v5244
        %v6472 = vadd.f32 %v6471, %v5252
        %v6473 = vadd.f32 %v6472, %v5260
        %v6474 = vadd.f32 %v6473, %v5268
        %v6475 = vadd.f32 %v6474, %v5276
        %v6476 = vadd.f32 %v6475, %v5284
        %v6477 = vadd.f32 %v6476, %v5292
        %v6478 = vadd.f32 %v6477, %v5300
        %v6479 = vrot.slane %v6478, 4
        %v6480 = vadd.f32 %v6478, %v6479
        %v6481 = vrot.slane %v6480, 2
        %v6482 = vadd.f32 %v6480, %v6481
        %v6483 = vrot.slane %v6482, 1
        %v6484 = vadd.f32 %v6482, %v6483
        %v6485 = vadd.f32 %v5181, %v5189
        %v6486 = vadd.f32 %v6485, %v5197
        %v6487 = vadd.f32 %v6486, %v5205
        %v6488 = vadd.f32 %v6487, %v5213
        %v6489 = vadd.f32 %v6488, %v5221
        %v6490 = vadd.f32 %v6489, %v5229
        %v6491 = vadd.f32 %v6490, %v5237
        %v6492 = vadd.f32 %v6491, %v5245
        %v6493 = vadd.f32 %v6492, %v5253
        %v6494 = vadd.f32 %v6493, %v5261
        %v6495 = vadd.f32 %v6494, %v5269
        %v6496 = vadd.f32 %v6495, %v5277
        %v6497 = vadd.f32 %v6496, %v5285
        %v6498 = vadd.f32 %v6497, %v5293
        %v6499 = vadd.f32 %v6498, %v5301
        %v6500 = vrot.slane %v6499, 4
        %v6501 = vadd.f32 %v6499, %v6500
        %v6502 = vrot.slane %v6501, 2
        %v6503 = vadd.f32 %v6501, %v6502
        %v6504 = vrot.slane %v6503, 1
        %v6505 = vadd.f32 %v6503, %v6504
        %v6506 = vadd.f32 %v5182, %v5190
        %v6507 = vadd.f32 %v6506, %v5198
        %v6508 = vadd.f32 %v6507, %v5206
        %v6509 = vadd.f32 %v6508, %v5214
        %v6510 = vadd.f32 %v6509, %v5222
        %v6511 = vadd.f32 %v6510, %v5230
        %v6512 = vadd.f32 %v6511, %v5238
        %v6513 = vadd.f32 %v6512, %v5246
        %v6514 = vadd.f32 %v6513, %v5254
        %v6515 = vadd.f32 %v6514, %v5262
        %v6516 = vadd.f32 %v6515, %v5270
        %v6517 = vadd.f32 %v6516, %v5278
        %v6518 = vadd.f32 %v6517, %v5286
        %v6519 = vadd.f32 %v6518, %v5294
        %v6520 = vadd.f32 %v6519, %v5302
        %v6521 = vrot.slane %v6520, 4
        %v6522 = vadd.f32 %v6520, %v6521
        %v6523 = vrot.slane %v6522, 2
        %v6524 = vadd.f32 %v6522, %v6523
        %v6525 = vrot.slane %v6524, 1
        %v6526 = vadd.f32 %v6524, %v6525
        %v6527 = vadd.f32 %v5303, %v5311
        %v6528 = vadd.f32 %v6527, %v5319
        %v6529 = vadd.f32 %v6528, %v5327
        %v6530 = vadd.f32 %v6529, %v5335
        %v6531 = vadd.f32 %v6530, %v5343
        %v6532 = vadd.f32 %v6531, %v5351
        %v6533 = vadd.f32 %v6532, %v5359
        %v6534 = vadd.f32 %v6533, %v5367
        %v6535 = vadd.f32 %v6534, %v5375
        %v6536 = vadd.f32 %v6535, %v5383
        %v6537 = vadd.f32 %v6536, %v5391
        %v6538 = vadd.f32 %v6537, %v5399
        %v6539 = vadd.f32 %v6538, %v5407
        %v6540 = vadd.f32 %v6539, %v5415
        %v6541 = vadd.f32 %v6540, %v5423
        %v6542 = vrot.slane %v6541, 4
        %v6543 = vadd.f32 %v6541, %v6542
        %v6544 = vrot.slane %v6543, 2
        %v6545 = vadd.f32 %v6543, %v6544
        %v6546 = vrot.slane %v6545, 1
        %v6547 = vadd.f32 %v6545, %v6546
        %v6548 = vadd.f32 %v5304, %v5312
        %v6549 = vadd.f32 %v6548, %v5320
        %v6550 = vadd.f32 %v6549, %v5328
        %v6551 = vadd.f32 %v6550, %v5336
        %v6552 = vadd.f32 %v6551, %v5344
        %v6553 = vadd.f32 %v6552, %v5352
        %v6554 = vadd.f32 %v6553, %v5360
        %v6555 = vadd.f32 %v6554, %v5368
        %v6556 = vadd.f32 %v6555, %v5376
        %v6557 = vadd.f32 %v6556, %v5384
        %v6558 = vadd.f32 %v6557, %v5392
        %v6559 = vadd.f32 %v6558, %v5400
        %v6560 = vadd.f32 %v6559, %v5408
        %v6561 = vadd.f32 %v6560, %v5416
        %v6562 = vadd.f32 %v6561, %v5424
        %v6563 = vrot.slane %v6562, 4
        %v6564 = vadd.f32 %v6562, %v6563
        %v6565 = vrot.slane %v6564, 2
        %v6566 = vadd.f32 %v6564, %v6565
        %v6567 = vrot.slane %v6566, 1
        %v6568 = vadd.f32 %v6566, %v6567
        %v6569 = vadd.f32 %v5305, %v5313
        %v6570 = vadd.f32 %v6569, %v5321
        %v6571 = vadd.f32 %v6570, %v5329
        %v6572 = vadd.f32 %v6571, %v5337
        %v6573 = vadd.f32 %v6572, %v5345
        %v6574 = vadd.f32 %v6573, %v5353
        %v6575 = vadd.f32 %v6574, %v5361
        %v6576 = vadd.f32 %v6575, %v5369
        %v6577 = vadd.f32 %v6576, %v5377
        %v6578 = vadd.f32 %v6577, %v5385
        %v6579 = vadd.f32 %v6578, %v5393
        %v6580 = vadd.f32 %v6579, %v5401
        %v6581 = vadd.f32 %v6580, %v5409
        %v6582 = vadd.f32 %v6581, %v5417
        %v6583 = vadd.f32 %v6582, %v5425
        %v6584 = vrot.slane %v6583, 4
        %v6585 = vadd.f32 %v6583, %v6584
        %v6586 = vrot.slane %v6585, 2
        %v6587 = vadd.f32 %v6585, %v6586
        %v6588 = vrot.slane %v6587, 1
        %v6589 = vadd.f32 %v6587, %v6588
        %v6590 = vadd.f32 %v5306, %v5314
        %v6591 = vadd.f32 %v6590, %v5322
        %v6592 = vadd.f32 %v6591, %v5330
        %v6593 = vadd.f32 %v6592, %v5338
        %v6594 = vadd.f32 %v6593, %v5346
        %v6595 = vadd.f32 %v6594, %v5354
        %v6596 = vadd.f32 %v6595, %v5362
        %v6597 = vadd.f32 %v6596, %v5370
        %v6598 = vadd.f32 %v6597, %v5378
        %v6599 = vadd.f32 %v6598, %v5386
        %v6600 = vadd.f32 %v6599, %v5394
        %v6601 = vadd.f32 %v6600, %v5402
        %v6602 = vadd.f32 %v6601, %v5410
        %v6603 = vadd.f32 %v6602, %v5418
        %v6604 = vadd.f32 %v6603, %v5426
        %v6605 = vrot.slane %v6604, 4
        %v6606 = vadd.f32 %v6604, %v6605
        %v6607 = vrot.slane %v6606, 2
        %v6608 = vadd.f32 %v6606, %v6607
        %v6609 = vrot.slane %v6608, 1
        %v6610 = vadd.f32 %v6608, %v6609
        %v6611 = vadd.f32 %v5307, %v5315
        %v6612 = vadd.f32 %v6611, %v5323
        %v6613 = vadd.f32 %v6612, %v5331
        %v6614 = vadd.f32 %v6613, %v5339
        %v6615 = vadd.f32 %v6614, %v5347
        %v6616 = vadd.f32 %v6615, %v5355
        %v6617 = vadd.f32 %v6616, %v5363
        %v6618 = vadd.f32 %v6617, %v5371
        %v6619 = vadd.f32 %v6618, %v5379
        %v6620 = vadd.f32 %v6619, %v5387
        %v6621 = vadd.f32 %v6620, %v5395
        %v6622 = vadd.f32 %v6621, %v5403
        %v6623 = vadd.f32 %v6622, %v5411
        %v6624 = vadd.f32 %v6623, %v5419
        %v6625 = vadd.f32 %v6624, %v5427
        %v6626 = vrot.slane %v6625, 4
        %v6627 = vadd.f32 %v6625, %v6626
        %v6628 = vrot.slane %v6627, 2
        %v6629 = vadd.f32 %v6627, %v6628
        %v6630 = vrot.slane %v6629, 1
        %v6631 = vadd.f32 %v6629, %v6630
        %v6632 = vadd.f32 %v5308, %v5316
        %v6633 = vadd.f32 %v6632, %v5324
        %v6634 = vadd.f32 %v6633, %v5332
        %v6635 = vadd.f32 %v6634, %v5340
        %v6636 = vadd.f32 %v6635, %v5348
        %v6637 = vadd.f32 %v6636, %v5356
        %v6638 = vadd.f32 %v6637, %v5364
        %v6639 = vadd.f32 %v6638, %v5372
        %v6640 = vadd.f32 %v6639, %v5380
        %v6641 = vadd.f32 %v6640, %v5388
        %v6642 = vadd.f32 %v6641, %v5396
        %v6643 = vadd.f32 %v6642, %v5404
        %v6644 = vadd.f32 %v6643, %v5412
        %v6645 = vadd.f32 %v6644, %v5420
        %v6646 = vadd.f32 %v6645, %v5428
        %v6647 = vrot.slane %v6646, 4
        %v6648 = vadd.f32 %v6646, %v6647
        %v6649 = vrot.slane %v6648, 2
        %v6650 = vadd.f32 %v6648, %v6649
        %v6651 = vrot.slane %v6650, 1
        %v6652 = vadd.f32 %v6650, %v6651
        %v6653 = vadd.f32 %v5309, %v5317
        %v6654 = vadd.f32 %v6653, %v5325
        %v6655 = vadd.f32 %v6654, %v5333
        %v6656 = vadd.f32 %v6655, %v5341
        %v6657 = vadd.f32 %v6656, %v5349
        %v6658 = vadd.f32 %v6657, %v5357
        %v6659 = vadd.f32 %v6658, %v5365
        %v6660 = vadd.f32 %v6659, %v5373
        %v6661 = vadd.f32 %v6660, %v5381
        %v6662 = vadd.f32 %v6661, %v5389
        %v6663 = vadd.f32 %v6662, %v5397
        %v6664 = vadd.f32 %v6663, %v5405
        %v6665 = vadd.f32 %v6664, %v5413
        %v6666 = vadd.f32 %v6665, %v5421
        %v6667 = vadd.f32 %v6666, %v5429
        %v6668 = vrot.slane %v6667, 4
        %v6669 = vadd.f32 %v6667, %v6668
        %v6670 = vrot.slane %v6669, 2
        %v6671 = vadd.f32 %v6669, %v6670
        %v6672 = vrot.slane %v6671, 1
        %v6673 = vadd.f32 %v6671, %v6672
        %v6674 = vadd.f32 %v5310, %v5318
        %v6675 = vadd.f32 %v6674, %v5326
        %v6676 = vadd.f32 %v6675, %v5334
        %v6677 = vadd.f32 %v6676, %v5342
        %v6678 = vadd.f32 %v6677, %v5350
        %v6679 = vadd.f32 %v6678, %v5358
        %v6680 = vadd.f32 %v6679, %v5366
        %v6681 = vadd.f32 %v6680, %v5374
        %v6682 = vadd.f32 %v6681, %v5382
        %v6683 = vadd.f32 %v6682, %v5390
        %v6684 = vadd.f32 %v6683, %v5398
        %v6685 = vadd.f32 %v6684, %v5406
        %v6686 = vadd.f32 %v6685, %v5414
        %v6687 = vadd.f32 %v6686, %v5422
        %v6688 = vadd.f32 %v6687, %v5430
        %v6689 = vrot.slane %v6688, 4
        %v6690 = vadd.f32 %v6688, %v6689
        %v6691 = vrot.slane %v6690, 2
        %v6692 = vadd.f32 %v6690, %v6691
        %v6693 = vrot.slane %v6692, 1
        %v6694 = vadd.f32 %v6692, %v6693
        %v6695 = vadd.f32 %v5431, %v5439
        %v6696 = vadd.f32 %v6695, %v5447
        %v6697 = vadd.f32 %v6696, %v5455
        %v6698 = vadd.f32 %v6697, %v5463
        %v6699 = vadd.f32 %v6698, %v5471
        %v6700 = vadd.f32 %v6699, %v5479
        %v6701 = vadd.f32 %v6700, %v5487
        %v6702 = vadd.f32 %v6701, %v5495
        %v6703 = vadd.f32 %v6702, %v5503
        %v6704 = vadd.f32 %v6703, %v5511
        %v6705 = vadd.f32 %v6704, %v5519
        %v6706 = vadd.f32 %v6705, %v5527
        %v6707 = vadd.f32 %v6706, %v5535
        %v6708 = vadd.f32 %v6707, %v5543
        %v6709 = vadd.f32 %v6708, %v5551
        %v6710 = vrot.slane %v6709, 4
        %v6711 = vadd.f32 %v6709, %v6710
        %v6712 = vrot.slane %v6711, 2
        %v6713 = vadd.f32 %v6711, %v6712
        %v6714 = vrot.slane %v6713, 1
        %v6715 = vadd.f32 %v6713, %v6714
        %v6716 = vadd.f32 %v5432, %v5440
        %v6717 = vadd.f32 %v6716, %v5448
        %v6718 = vadd.f32 %v6717, %v5456
        %v6719 = vadd.f32 %v6718, %v5464
        %v6720 = vadd.f32 %v6719, %v5472
        %v6721 = vadd.f32 %v6720, %v5480
        %v6722 = vadd.f32 %v6721, %v5488
        %v6723 = vadd.f32 %v6722, %v5496
        %v6724 = vadd.f32 %v6723, %v5504
        %v6725 = vadd.f32 %v6724, %v5512
        %v6726 = vadd.f32 %v6725, %v5520
        %v6727 = vadd.f32 %v6726, %v5528
        %v6728 = vadd.f32 %v6727, %v5536
        %v6729 = vadd.f32 %v6728, %v5544
        %v6730 = vadd.f32 %v6729, %v5552
        %v6731 = vrot.slane %v6730, 4
        %v6732 = vadd.f32 %v6730, %v6731
        %v6733 = vrot.slane %v6732, 2
        %v6734 = vadd.f32 %v6732, %v6733
        %v6735 = vrot.slane %v6734, 1
        %v6736 = vadd.f32 %v6734, %v6735
        %v6737 = vadd.f32 %v5433, %v5441
        %v6738 = vadd.f32 %v6737, %v5449
        %v6739 = vadd.f32 %v6738, %v5457
        %v6740 = vadd.f32 %v6739, %v5465
        %v6741 = vadd.f32 %v6740, %v5473
        %v6742 = vadd.f32 %v6741, %v5481
        %v6743 = vadd.f32 %v6742, %v5489
        %v6744 = vadd.f32 %v6743, %v5497
        %v6745 = vadd.f32 %v6744, %v5505
        %v6746 = vadd.f32 %v6745, %v5513
        %v6747 = vadd.f32 %v6746, %v5521
        %v6748 = vadd.f32 %v6747, %v5529
        %v6749 = vadd.f32 %v6748, %v5537
        %v6750 = vadd.f32 %v6749, %v5545
        %v6751 = vadd.f32 %v6750, %v5553
        %v6752 = vrot.slane %v6751, 4
        %v6753 = vadd.f32 %v6751, %v6752
        %v6754 = vrot.slane %v6753, 2
        %v6755 = vadd.f32 %v6753, %v6754
        %v6756 = vrot.slane %v6755, 1
        %v6757 = vadd.f32 %v6755, %v6756
        %v6758 = vadd.f32 %v5434, %v5442
        %v6759 = vadd.f32 %v6758, %v5450
        %v6760 = vadd.f32 %v6759, %v5458
        %v6761 = vadd.f32 %v6760, %v5466
        %v6762 = vadd.f32 %v6761, %v5474
        %v6763 = vadd.f32 %v6762, %v5482
        %v6764 = vadd.f32 %v6763, %v5490
        %v6765 = vadd.f32 %v6764, %v5498
        %v6766 = vadd.f32 %v6765, %v5506
        %v6767 = vadd.f32 %v6766, %v5514
        %v6768 = vadd.f32 %v6767, %v5522
        %v6769 = vadd.f32 %v6768, %v5530
        %v6770 = vadd.f32 %v6769, %v5538
        %v6771 = vadd.f32 %v6770, %v5546
        %v6772 = vadd.f32 %v6771, %v5554
        %v6773 = vrot.slane %v6772, 4
        %v6774 = vadd.f32 %v6772, %v6773
        %v6775 = vrot.slane %v6774, 2
        %v6776 = vadd.f32 %v6774, %v6775
        %v6777 = vrot.slane %v6776, 1
        %v6778 = vadd.f32 %v6776, %v6777
        %v6779 = vadd.f32 %v5435, %v5443
        %v6780 = vadd.f32 %v6779, %v5451
        %v6781 = vadd.f32 %v6780, %v5459
        %v6782 = vadd.f32 %v6781, %v5467
        %v6783 = vadd.f32 %v6782, %v5475
        %v6784 = vadd.f32 %v6783, %v5483
        %v6785 = vadd.f32 %v6784, %v5491
        %v6786 = vadd.f32 %v6785, %v5499
        %v6787 = vadd.f32 %v6786, %v5507
        %v6788 = vadd.f32 %v6787, %v5515
        %v6789 = vadd.f32 %v6788, %v5523
        %v6790 = vadd.f32 %v6789, %v5531
        %v6791 = vadd.f32 %v6790, %v5539
        %v6792 = vadd.f32 %v6791, %v5547
        %v6793 = vadd.f32 %v6792, %v5555
        %v6794 = vrot.slane %v6793, 4
        %v6795 = vadd.f32 %v6793, %v6794
        %v6796 = vrot.slane %v6795, 2
        %v6797 = vadd.f32 %v6795, %v6796
        %v6798 = vrot.slane %v6797, 1
        %v6799 = vadd.f32 %v6797, %v6798
        %v6800 = vadd.f32 %v5436, %v5444
        %v6801 = vadd.f32 %v6800, %v5452
        %v6802 = vadd.f32 %v6801, %v5460
        %v6803 = vadd.f32 %v6802, %v5468
        %v6804 = vadd.f32 %v6803, %v5476
        %v6805 = vadd.f32 %v6804, %v5484
        %v6806 = vadd.f32 %v6805, %v5492
        %v6807 = vadd.f32 %v6806, %v5500
        %v6808 = vadd.f32 %v6807, %v5508
        %v6809 = vadd.f32 %v6808, %v5516
        %v6810 = vadd.f32 %v6809, %v5524
        %v6811 = vadd.f32 %v6810, %v5532
        %v6812 = vadd.f32 %v6811, %v5540
        %v6813 = vadd.f32 %v6812, %v5548
        %v6814 = vadd.f32 %v6813, %v5556
        %v6815 = vrot.slane %v6814, 4
        %v6816 = vadd.f32 %v6814, %v6815
        %v6817 = vrot.slane %v6816, 2
        %v6818 = vadd.f32 %v6816, %v6817
        %v6819 = vrot.slane %v6818, 1
        %v6820 = vadd.f32 %v6818, %v6819
        %v6821 = vadd.f32 %v5437, %v5445
        %v6822 = vadd.f32 %v6821, %v5453
        %v6823 = vadd.f32 %v6822, %v5461
        %v6824 = vadd.f32 %v6823, %v5469
        %v6825 = vadd.f32 %v6824, %v5477
        %v6826 = vadd.f32 %v6825, %v5485
        %v6827 = vadd.f32 %v6826, %v5493
        %v6828 = vadd.f32 %v6827, %v5501
        %v6829 = vadd.f32 %v6828, %v5509
        %v6830 = vadd.f32 %v6829, %v5517
        %v6831 = vadd.f32 %v6830, %v5525
        %v6832 = vadd.f32 %v6831, %v5533
        %v6833 = vadd.f32 %v6832, %v5541
        %v6834 = vadd.f32 %v6833, %v5549
        %v6835 = vadd.f32 %v6834, %v5557
        %v6836 = vrot.slane %v6835, 4
        %v6837 = vadd.f32 %v6835, %v6836
        %v6838 = vrot.slane %v6837, 2
        %v6839 = vadd.f32 %v6837, %v6838
        %v6840 = vrot.slane %v6839, 1
        %v6841 = vadd.f32 %v6839, %v6840
        %v6842 = vadd.f32 %v5438, %v5446
        %v6843 = vadd.f32 %v6842, %v5454
        %v6844 = vadd.f32 %v6843, %v5462
        %v6845 = vadd.f32 %v6844, %v5470
        %v6846 = vadd.f32 %v6845, %v5478
        %v6847 = vadd.f32 %v6846, %v5486
        %v6848 = vadd.f32 %v6847, %v5494
        %v6849 = vadd.f32 %v6848, %v5502
        %v6850 = vadd.f32 %v6849, %v5510
        %v6851 = vadd.f32 %v6850, %v5518
        %v6852 = vadd.f32 %v6851, %v5526
        %v6853 = vadd.f32 %v6852, %v5534
        %v6854 = vadd.f32 %v6853, %v5542
        %v6855 = vadd.f32 %v6854, %v5550
        %v6856 = vadd.f32 %v6855, %v5558
        %v6857 = vrot.slane %v6856, 4
        %v6858 = vadd.f32 %v6856, %v6857
        %v6859 = vrot.slane %v6858, 2
        %v6860 = vadd.f32 %v6858, %v6859
        %v6861 = vrot.slane %v6860, 1
        %v6862 = vadd.f32 %v6860, %v6861
        %v6863 = vadd.f32 %v5559, %v5567
        %v6864 = vadd.f32 %v6863, %v5575
        %v6865 = vadd.f32 %v6864, %v5583
        %v6866 = vadd.f32 %v6865, %v5591
        %v6867 = vadd.f32 %v6866, %v5599
        %v6868 = vadd.f32 %v6867, %v5607
        %v6869 = vadd.f32 %v6868, %v5615
        %v6870 = vadd.f32 %v6869, %v5623
        %v6871 = vadd.f32 %v6870, %v5631
        %v6872 = vadd.f32 %v6871, %v5639
        %v6873 = vadd.f32 %v6872, %v5647
        %v6874 = vadd.f32 %v6873, %v5655
        %v6875 = vadd.f32 %v6874, %v5663
        %v6876 = vadd.f32 %v6875, %v5671
        %v6877 = vadd.f32 %v6876, %v5679
        %v6878 = vrot.slane %v6877, 4
        %v6879 = vadd.f32 %v6877, %v6878
        %v6880 = vrot.slane %v6879, 2
        %v6881 = vadd.f32 %v6879, %v6880
        %v6882 = vrot.slane %v6881, 1
        %v6883 = vadd.f32 %v6881, %v6882
        %v6884 = vadd.f32 %v5560, %v5568
        %v6885 = vadd.f32 %v6884, %v5576
        %v6886 = vadd.f32 %v6885, %v5584
        %v6887 = vadd.f32 %v6886, %v5592
        %v6888 = vadd.f32 %v6887, %v5600
        %v6889 = vadd.f32 %v6888, %v5608
        %v6890 = vadd.f32 %v6889, %v5616
        %v6891 = vadd.f32 %v6890, %v5624
        %v6892 = vadd.f32 %v6891, %v5632
        %v6893 = vadd.f32 %v6892, %v5640
        %v6894 = vadd.f32 %v6893, %v5648
        %v6895 = vadd.f32 %v6894, %v5656
        %v6896 = vadd.f32 %v6895, %v5664
        %v6897 = vadd.f32 %v6896, %v5672
        %v6898 = vadd.f32 %v6897, %v5680
        %v6899 = vrot.slane %v6898, 4
        %v6900 = vadd.f32 %v6898, %v6899
        %v6901 = vrot.slane %v6900, 2
        %v6902 = vadd.f32 %v6900, %v6901
        %v6903 = vrot.slane %v6902, 1
        %v6904 = vadd.f32 %v6902, %v6903
        %v6905 = vadd.f32 %v5561, %v5569
        %v6906 = vadd.f32 %v6905, %v5577
        %v6907 = vadd.f32 %v6906, %v5585
        %v6908 = vadd.f32 %v6907, %v5593
        %v6909 = vadd.f32 %v6908, %v5601
        %v6910 = vadd.f32 %v6909, %v5609
        %v6911 = vadd.f32 %v6910, %v5617
        %v6912 = vadd.f32 %v6911, %v5625
        %v6913 = vadd.f32 %v6912, %v5633
        %v6914 = vadd.f32 %v6913, %v5641
        %v6915 = vadd.f32 %v6914, %v5649
        %v6916 = vadd.f32 %v6915, %v5657
        %v6917 = vadd.f32 %v6916, %v5665
        %v6918 = vadd.f32 %v6917, %v5673
        %v6919 = vadd.f32 %v6918, %v5681
        %v6920 = vrot.slane %v6919, 4
        %v6921 = vadd.f32 %v6919, %v6920
        %v6922 = vrot.slane %v6921, 2
        %v6923 = vadd.f32 %v6921, %v6922
        %v6924 = vrot.slane %v6923, 1
        %v6925 = vadd.f32 %v6923, %v6924
        %v6926 = vadd.f32 %v5562, %v5570
        %v6927 = vadd.f32 %v6926, %v5578
        %v6928 = vadd.f32 %v6927, %v5586
        %v6929 = vadd.f32 %v6928, %v5594
        %v6930 = vadd.f32 %v6929, %v5602
        %v6931 = vadd.f32 %v6930, %v5610
        %v6932 = vadd.f32 %v6931, %v5618
        %v6933 = vadd.f32 %v6932, %v5626
        %v6934 = vadd.f32 %v6933, %v5634
        %v6935 = vadd.f32 %v6934, %v5642
        %v6936 = vadd.f32 %v6935, %v5650
        %v6937 = vadd.f32 %v6936, %v5658
        %v6938 = vadd.f32 %v6937, %v5666
        %v6939 = vadd.f32 %v6938, %v5674
        %v6940 = vadd.f32 %v6939, %v5682
        %v6941 = vrot.slane %v6940, 4
        %v6942 = vadd.f32 %v6940, %v6941
        %v6943 = vrot.slane %v6942, 2
        %v6944 = vadd.f32 %v6942, %v6943
        %v6945 = vrot.slane %v6944, 1
        %v6946 = vadd.f32 %v6944, %v6945
        %v6947 = vadd.f32 %v5563, %v5571
        %v6948 = vadd.f32 %v6947, %v5579
        %v6949 = vadd.f32 %v6948, %v5587
        %v6950 = vadd.f32 %v6949, %v5595
        %v6951 = vadd.f32 %v6950, %v5603
        %v6952 = vadd.f32 %v6951, %v5611
        %v6953 = vadd.f32 %v6952, %v5619
        %v6954 = vadd.f32 %v6953, %v5627
        %v6955 = vadd.f32 %v6954, %v5635
        %v6956 = vadd.f32 %v6955, %v5643
        %v6957 = vadd.f32 %v6956, %v5651
        %v6958 = vadd.f32 %v6957, %v5659
        %v6959 = vadd.f32 %v6958, %v5667
        %v6960 = vadd.f32 %v6959, %v5675
        %v6961 = vadd.f32 %v6960, %v5683
        %v6962 = vrot.slane %v6961, 4
        %v6963 = vadd.f32 %v6961, %v6962
        %v6964 = vrot.slane %v6963, 2
        %v6965 = vadd.f32 %v6963, %v6964
        %v6966 = vrot.slane %v6965, 1
        %v6967 = vadd.f32 %v6965, %v6966
        %v6968 = vadd.f32 %v5564, %v5572
        %v6969 = vadd.f32 %v6968, %v5580
        %v6970 = vadd.f32 %v6969, %v5588
        %v6971 = vadd.f32 %v6970, %v5596
        %v6972 = vadd.f32 %v6971, %v5604
        %v6973 = vadd.f32 %v6972, %v5612
        %v6974 = vadd.f32 %v6973, %v5620
        %v6975 = vadd.f32 %v6974, %v5628
        %v6976 = vadd.f32 %v6975, %v5636
        %v6977 = vadd.f32 %v6976, %v5644
        %v6978 = vadd.f32 %v6977, %v5652
        %v6979 = vadd.f32 %v6978, %v5660
        %v6980 = vadd.f32 %v6979, %v5668
        %v6981 = vadd.f32 %v6980, %v5676
        %v6982 = vadd.f32 %v6981, %v5684
        %v6983 = vrot.slane %v6982, 4
        %v6984 = vadd.f32 %v6982, %v6983
        %v6985 = vrot.slane %v6984, 2
        %v6986 = vadd.f32 %v6984, %v6985
        %v6987 = vrot.slane %v6986, 1
        %v6988 = vadd.f32 %v6986, %v6987
        %v6989 = vadd.f32 %v5565, %v5573
        %v6990 = vadd.f32 %v6989, %v5581
        %v6991 = vadd.f32 %v6990, %v5589
        %v6992 = vadd.f32 %v6991, %v5597
        %v6993 = vadd.f32 %v6992, %v5605
        %v6994 = vadd.f32 %v6993, %v5613
        %v6995 = vadd.f32 %v6994, %v5621
        %v6996 = vadd.f32 %v6995, %v5629
        %v6997 = vadd.f32 %v6996, %v5637
        %v6998 = vadd.f32 %v6997, %v5645
        %v6999 = vadd.f32 %v6998, %v5653
        %v7000 = vadd.f32 %v6999, %v5661
        %v7001 = vadd.f32 %v7000, %v5669
        %v7002 = vadd.f32 %v7001, %v5677
        %v7003 = vadd.f32 %v7002, %v5685
        %v7004 = vrot.slane %v7003, 4
        %v7005 = vadd.f32 %v7003, %v7004
        %v7006 = vrot.slane %v7005, 2
        %v7007 = vadd.f32 %v7005, %v7006
        %v7008 = vrot.slane %v7007, 1
        %v7009 = vadd.f32 %v7007, %v7008
        %v7010 = vadd.f32 %v5566, %v5574
        %v7011 = vadd.f32 %v7010, %v5582
        %v7012 = vadd.f32 %v7011, %v5590
        %v7013 = vadd.f32 %v7012, %v5598
        %v7014 = vadd.f32 %v7013, %v5606
        %v7015 = vadd.f32 %v7014, %v5614
        %v7016 = vadd.f32 %v7015, %v5622
        %v7017 = vadd.f32 %v7016, %v5630
        %v7018 = vadd.f32 %v7017, %v5638
        %v7019 = vadd.f32 %v7018, %v5646
        %v7020 = vadd.f32 %v7019, %v5654
        %v7021 = vadd.f32 %v7020, %v5662
        %v7022 = vadd.f32 %v7021, %v5670
        %v7023 = vadd.f32 %v7022, %v5678
        %v7024 = vadd.f32 %v7023, %v5686
        %v7025 = vrot.slane %v7024, 4
        %v7026 = vadd.f32 %v7024, %v7025
        %v7027 = vrot.slane %v7026, 2
        %v7028 = vadd.f32 %v7026, %v7027
        %v7029 = vrot.slane %v7028, 1
        %v7030 = vadd.f32 %v7028, %v7029
        %vm7095 = vcmask 1041409
        %v7096 = vsel %vm7095, %v5875, %v5707
        %vm7097 = vcmask 1042434
        %v7098 = vsel %vm7097, %v6043, %v7096
        %vm7099 = vcmask 1043459
        %v7100 = vsel %vm7099, %v6211, %v7098
        %vm7101 = vcmask 1044484
        %v7102 = vsel %vm7101, %v6379, %v7100
        %vm7103 = vcmask 1045509
        %v7104 = vsel %vm7103, %v6547, %v7102
        %vm7105 = vcmask 1046534
        %v7106 = vsel %vm7105, %v6715, %v7104
        %vm7107 = vcmask 1047559
        %v7108 = vsel %vm7107, %v6883, %v7106
        %v7109 = vsel %vm7095, %v5896, %v5728
        %v7110 = vsel %vm7097, %v6064, %v7109
        %v7111 = vsel %vm7099, %v6232, %v7110
        %v7112 = vsel %vm7101, %v6400, %v7111
        %v7113 = vsel %vm7103, %v6568, %v7112
        %v7114 = vsel %vm7105, %v6736, %v7113
        %v7115 = vsel %vm7107, %v6904, %v7114
        %v7116 = vsel %vm7095, %v5917, %v5749
        %v7117 = vsel %vm7097, %v6085, %v7116
        %v7118 = vsel %vm7099, %v6253, %v7117
        %v7119 = vsel %vm7101, %v6421, %v7118
        %v7120 = vsel %vm7103, %v6589, %v7119
        %v7121 = vsel %vm7105, %v6757, %v7120
        %v7122 = vsel %vm7107, %v6925, %v7121
        %v7123 = vsel %vm7095, %v5938, %v5770
        %v7124 = vsel %vm7097, %v6106, %v7123
        %v7125 = vsel %vm7099, %v6274, %v7124
        %v7126 = vsel %vm7101, %v6442, %v7125
        %v7127 = vsel %vm7103, %v6610, %v7126
        %v7128 = vsel %vm7105, %v6778, %v7127
        %v7129 = vsel %vm7107, %v6946, %v7128
        %v7130 = vsel %vm7095, %v5959, %v5791
        %v7131 = vsel %vm7097, %v6127, %v7130
        %v7132 = vsel %vm7099, %v6295, %v7131
        %v7133 = vsel %vm7101, %v6463, %v7132
        %v7134 = vsel %vm7103, %v6631, %v7133
        %v7135 = vsel %vm7105, %v6799, %v7134
        %v7136 = vsel %vm7107, %v6967, %v7135
        %v7137 = vsel %vm7095, %v5980, %v5812
        %v7138 = vsel %vm7097, %v6148, %v7137
        %v7139 = vsel %vm7099, %v6316, %v7138
        %v7140 = vsel %vm7101, %v6484, %v7139
        %v7141 = vsel %vm7103, %v6652, %v7140
        %v7142 = vsel %vm7105, %v6820, %v7141
        %v7143 = vsel %vm7107, %v6988, %v7142
        %v7144 = vsel %vm7095, %v6001, %v5833
        %v7145 = vsel %vm7097, %v6169, %v7144
        %v7146 = vsel %vm7099, %v6337, %v7145
        %v7147 = vsel %vm7101, %v6505, %v7146
        %v7148 = vsel %vm7103, %v6673, %v7147
        %v7149 = vsel %vm7105, %v6841, %v7148
        %v7150 = vsel %vm7107, %v7009, %v7149
        %v7151 = vsel %vm7095, %v6022, %v5854
        %v7152 = vsel %vm7097, %v6190, %v7151
        %v7153 = vsel %vm7099, %v6358, %v7152
        %v7154 = vsel %vm7101, %v6526, %v7153
        %v7155 = vsel %vm7103, %v6694, %v7154
        %v7156 = vsel %vm7105, %v6862, %v7155
        %v7157 = vsel %vm7107, %v7030, %v7156
        %v7166 = vadd.f32 %v4119, %v7108
        %v7167 = vadd.f32 %v4120, %v7115
        %v7168 = vadd.f32 %v4121, %v7122
        %v7169 = vadd.f32 %v4122, %v7129
        %v7170 = vadd.f32 %v4123, %v7136
        %v7171 = vadd.f32 %v4124, %v7143
        %v7172 = vadd.f32 %v4125, %v7150
        %v7173 = vadd.f32 %v4126, %v7157
        %7174 = vst [vmem:[#allocation2] sm:$0xff] %v7166
        %7175 = vst [vmem:[#allocation2 + $0x8] sm:$0xff] %v7167
        %7176 = vst [vmem:[#allocation2 + $0x10] sm:$0xff] %v7168
        %7177 = vst [vmem:[#allocation2 + $0x18] sm:$0xff] %v7169
        %7178 = vst [vmem:[#allocation2 + $0x20] sm:$0xff] %v7170
        %7179 = vst [vmem:[#allocation2 + $0x28] sm:$0xff] %v7171
        %7180 = vst [vmem:[#allocation2 + $0x30] sm:$0xff] %v7172
        %7181 = vst [vmem:[#allocation2 + $0x38] sm:$0xff] %v7173
        %p7182 = scmp.eq.s32.totalorder %s36, 1
        // Predicated region
        $region93: #{tpu_custom_call.1} parent=55 // pred_check
          %p7183 = pneg %p7182
        $region94: #{tpu_custom_call.1} parent=55 // pred_check_branch
          %7185 = sbr.rel (%p7183) target = $region96
        $region95: #{tpu_custom_call.1} parent=55 // pred_region
          %v7186 = vld [vmem:[#allocation2] sm:$0xff]
          %v7187 = vld [vmem:[#allocation2 + $0x8] sm:$0xff]
          %v7188 = vld [vmem:[#allocation2 + $0x10] sm:$0xff]
          %v7189 = vld [vmem:[#allocation2 + $0x18] sm:$0xff]
          %v7190 = vld [vmem:[#allocation2 + $0x20] sm:$0xff]
          %v7191 = vld [vmem:[#allocation2 + $0x28] sm:$0xff]
          %v7192 = vld [vmem:[#allocation2 + $0x30] sm:$0xff]
          %v7193 = vld [vmem:[#allocation2 + $0x38] sm:$0xff]
          %v7194 = vadd.f32 %v7186, %v7187
          %v7195 = vadd.f32 %v7194, %v7188
          %v7196 = vadd.f32 %v7195, %v7189
          %v7197 = vadd.f32 %v7196, %v7190
          %v7198 = vadd.f32 %v7197, %v7191
          %v7199 = vadd.f32 %v7198, %v7192
          %v7200 = vadd.f32 %v7199, %v7193
          %7201 = vadd.xlane.f32.xlu0 %v7200
          %v7202 = vpop.xlane.xlu0 %7201
          %v7203 = vmax.f32 %v7202, 1e-09
          %v7204 = vld [vmem:[#allocation8] sm:$0xff]
          %v7205 = vld [vmem:[#allocation8 + $0x8] sm:$0xff]
          %v7206 = vld [vmem:[#allocation8 + $0x10] sm:$0xff]
          %v7207 = vld [vmem:[#allocation8 + $0x18] sm:$0xff]
          %v7208 = vld [vmem:[#allocation8 + $0x20] sm:$0xff]
          %v7209 = vld [vmem:[#allocation8 + $0x28] sm:$0xff]
          %v7210 = vld [vmem:[#allocation8 + $0x30] sm:$0xff]
          %v7211 = vld [vmem:[#allocation8 + $0x38] sm:$0xff]
          %v7212 = vld [vmem:[#allocation8 + $0x40] sm:$0xff]
          %v7213 = vld [vmem:[#allocation8 + $0x48] sm:$0xff]
          %v7214 = vld [vmem:[#allocation8 + $0x50] sm:$0xff]
          %v7215 = vld [vmem:[#allocation8 + $0x58] sm:$0xff]
          %v7216 = vld [vmem:[#allocation8 + $0x60] sm:$0xff]
          %v7217 = vld [vmem:[#allocation8 + $0x68] sm:$0xff]
          %v7218 = vld [vmem:[#allocation8 + $0x70] sm:$0xff]
          %v7219 = vld [vmem:[#allocation8 + $0x78] sm:$0xff]
          %v7220 = vld [vmem:[#allocation8 + $0x80] sm:$0xff]
          %v7221 = vld [vmem:[#allocation8 + $0x88] sm:$0xff]
          %v7222 = vld [vmem:[#allocation8 + $0x90] sm:$0xff]
          %v7223 = vld [vmem:[#allocation8 + $0x98] sm:$0xff]
          %v7224 = vld [vmem:[#allocation8 + $0xa0] sm:$0xff]
          %v7225 = vld [vmem:[#allocation8 + $0xa8] sm:$0xff]
          %v7226 = vld [vmem:[#allocation8 + $0xb0] sm:$0xff]
          %v7227 = vld [vmem:[#allocation8 + $0xb8] sm:$0xff]
          %v7228 = vld [vmem:[#allocation8 + $0xc0] sm:$0xff]
          %v7229 = vld [vmem:[#allocation8 + $0xc8] sm:$0xff]
          %v7230 = vld [vmem:[#allocation8 + $0xd0] sm:$0xff]
          %v7231 = vld [vmem:[#allocation8 + $0xd8] sm:$0xff]
          %v7232 = vld [vmem:[#allocation8 + $0xe0] sm:$0xff]
          %v7233 = vld [vmem:[#allocation8 + $0xe8] sm:$0xff]
          %v7234 = vld [vmem:[#allocation8 + $0xf0] sm:$0xff]
          %v7235 = vld [vmem:[#allocation8 + $0xf8] sm:$0xff]
          %v7236 = vld [vmem:[#allocation8 + $0x100] sm:$0xff]
          %v7237 = vld [vmem:[#allocation8 + $0x108] sm:$0xff]
          %v7238 = vld [vmem:[#allocation8 + $0x110] sm:$0xff]
          %v7239 = vld [vmem:[#allocation8 + $0x118] sm:$0xff]
          %v7240 = vld [vmem:[#allocation8 + $0x120] sm:$0xff]
          %v7241 = vld [vmem:[#allocation8 + $0x128] sm:$0xff]
          %v7242 = vld [vmem:[#allocation8 + $0x130] sm:$0xff]
          %v7243 = vld [vmem:[#allocation8 + $0x138] sm:$0xff]
          %v7244 = vld [vmem:[#allocation8 + $0x140] sm:$0xff]
          %v7245 = vld [vmem:[#allocation8 + $0x148] sm:$0xff]
          %v7246 = vld [vmem:[#allocation8 + $0x150] sm:$0xff]
          %v7247 = vld [vmem:[#allocation8 + $0x158] sm:$0xff]
          %v7248 = vld [vmem:[#allocation8 + $0x160] sm:$0xff]
          %v7249 = vld [vmem:[#allocation8 + $0x168] sm:$0xff]
          %v7250 = vld [vmem:[#allocation8 + $0x170] sm:$0xff]
          %v7251 = vld [vmem:[#allocation8 + $0x178] sm:$0xff]
          %v7252 = vld [vmem:[#allocation8 + $0x180] sm:$0xff]
          %v7253 = vld [vmem:[#allocation8 + $0x188] sm:$0xff]
          %v7254 = vld [vmem:[#allocation8 + $0x190] sm:$0xff]
          %v7255 = vld [vmem:[#allocation8 + $0x198] sm:$0xff]
          %v7256 = vld [vmem:[#allocation8 + $0x1a0] sm:$0xff]
          %v7257 = vld [vmem:[#allocation8 + $0x1a8] sm:$0xff]
          %v7258 = vld [vmem:[#allocation8 + $0x1b0] sm:$0xff]
          %v7259 = vld [vmem:[#allocation8 + $0x1b8] sm:$0xff]
          %v7260 = vld [vmem:[#allocation8 + $0x1c0] sm:$0xff]
          %v7261 = vld [vmem:[#allocation8 + $0x1c8] sm:$0xff]
          %v7262 = vld [vmem:[#allocation8 + $0x1d0] sm:$0xff]
          %v7263 = vld [vmem:[#allocation8 + $0x1d8] sm:$0xff]
          %v7264 = vld [vmem:[#allocation8 + $0x1e0] sm:$0xff]
          %v7265 = vld [vmem:[#allocation8 + $0x1e8] sm:$0xff]
          %v7266 = vld [vmem:[#allocation8 + $0x1f0] sm:$0xff]
          %v7267 = vld [vmem:[#allocation8 + $0x1f8] sm:$0xff]
          %v7268 = vld [vmem:[#allocation8 + $0x200] sm:$0xff]
          %v7269 = vld [vmem:[#allocation8 + $0x208] sm:$0xff]
          %v7270 = vld [vmem:[#allocation8 + $0x210] sm:$0xff]
          %v7271 = vld [vmem:[#allocation8 + $0x218] sm:$0xff]
          %v7272 = vld [vmem:[#allocation8 + $0x220] sm:$0xff]
          %v7273 = vld [vmem:[#allocation8 + $0x228] sm:$0xff]
          %v7274 = vld [vmem:[#allocation8 + $0x230] sm:$0xff]
          %v7275 = vld [vmem:[#allocation8 + $0x238] sm:$0xff]
          %v7276 = vld [vmem:[#allocation8 + $0x240] sm:$0xff]
          %v7277 = vld [vmem:[#allocation8 + $0x248] sm:$0xff]
          %v7278 = vld [vmem:[#allocation8 + $0x250] sm:$0xff]
          %v7279 = vld [vmem:[#allocation8 + $0x258] sm:$0xff]
          %v7280 = vld [vmem:[#allocation8 + $0x260] sm:$0xff]
          %v7281 = vld [vmem:[#allocation8 + $0x268] sm:$0xff]
          %v7282 = vld [vmem:[#allocation8 + $0x270] sm:$0xff]
          %v7283 = vld [vmem:[#allocation8 + $0x278] sm:$0xff]
          %v7284 = vld [vmem:[#allocation8 + $0x280] sm:$0xff]
          %v7285 = vld [vmem:[#allocation8 + $0x288] sm:$0xff]
          %v7286 = vld [vmem:[#allocation8 + $0x290] sm:$0xff]
          %v7287 = vld [vmem:[#allocation8 + $0x298] sm:$0xff]
          %v7288 = vld [vmem:[#allocation8 + $0x2a0] sm:$0xff]
          %v7289 = vld [vmem:[#allocation8 + $0x2a8] sm:$0xff]
          %v7290 = vld [vmem:[#allocation8 + $0x2b0] sm:$0xff]
          %v7291 = vld [vmem:[#allocation8 + $0x2b8] sm:$0xff]
          %v7292 = vld [vmem:[#allocation8 + $0x2c0] sm:$0xff]
          %v7293 = vld [vmem:[#allocation8 + $0x2c8] sm:$0xff]
          %v7294 = vld [vmem:[#allocation8 + $0x2d0] sm:$0xff]
          %v7295 = vld [vmem:[#allocation8 + $0x2d8] sm:$0xff]
          %v7296 = vld [vmem:[#allocation8 + $0x2e0] sm:$0xff]
          %v7297 = vld [vmem:[#allocation8 + $0x2e8] sm:$0xff]
          %v7298 = vld [vmem:[#allocation8 + $0x2f0] sm:$0xff]
          %v7299 = vld [vmem:[#allocation8 + $0x2f8] sm:$0xff]
          %v7300 = vld [vmem:[#allocation8 + $0x300] sm:$0xff]
          %v7301 = vld [vmem:[#allocation8 + $0x308] sm:$0xff]
          %v7302 = vld [vmem:[#allocation8 + $0x310] sm:$0xff]
          %v7303 = vld [vmem:[#allocation8 + $0x318] sm:$0xff]
          %v7304 = vld [vmem:[#allocation8 + $0x320] sm:$0xff]
          %v7305 = vld [vmem:[#allocation8 + $0x328] sm:$0xff]
          %v7306 = vld [vmem:[#allocation8 + $0x330] sm:$0xff]
          %v7307 = vld [vmem:[#allocation8 + $0x338] sm:$0xff]
          %v7308 = vld [vmem:[#allocation8 + $0x340] sm:$0xff]
          %v7309 = vld [vmem:[#allocation8 + $0x348] sm:$0xff]
          %v7310 = vld [vmem:[#allocation8 + $0x350] sm:$0xff]
          %v7311 = vld [vmem:[#allocation8 + $0x358] sm:$0xff]
          %v7312 = vld [vmem:[#allocation8 + $0x360] sm:$0xff]
          %v7313 = vld [vmem:[#allocation8 + $0x368] sm:$0xff]
          %v7314 = vld [vmem:[#allocation8 + $0x370] sm:$0xff]
          %v7315 = vld [vmem:[#allocation8 + $0x378] sm:$0xff]
          %v7316 = vld [vmem:[#allocation8 + $0x380] sm:$0xff]
          %v7317 = vld [vmem:[#allocation8 + $0x388] sm:$0xff]
          %v7318 = vld [vmem:[#allocation8 + $0x390] sm:$0xff]
          %v7319 = vld [vmem:[#allocation8 + $0x398] sm:$0xff]
          %v7320 = vld [vmem:[#allocation8 + $0x3a0] sm:$0xff]
          %v7321 = vld [vmem:[#allocation8 + $0x3a8] sm:$0xff]
          %v7322 = vld [vmem:[#allocation8 + $0x3b0] sm:$0xff]
          %v7323 = vld [vmem:[#allocation8 + $0x3b8] sm:$0xff]
          %v7324 = vld [vmem:[#allocation8 + $0x3c0] sm:$0xff]
          %v7325 = vld [vmem:[#allocation8 + $0x3c8] sm:$0xff]
          %v7326 = vld [vmem:[#allocation8 + $0x3d0] sm:$0xff]
          %v7327 = vld [vmem:[#allocation8 + $0x3d8] sm:$0xff]
          %v7328 = vld [vmem:[#allocation8 + $0x3e0] sm:$0xff]
          %v7329 = vld [vmem:[#allocation8 + $0x3e8] sm:$0xff]
          %v7330 = vld [vmem:[#allocation8 + $0x3f0] sm:$0xff]
          %v7331 = vld [vmem:[#allocation8 + $0x3f8] sm:$0xff]
          %v7332 = vld [vmem:[#allocation8 + $0x400] sm:$0xff]
          %v7333 = vld [vmem:[#allocation8 + $0x408] sm:$0xff]
          %v7334 = vld [vmem:[#allocation8 + $0x410] sm:$0xff]
          %v7335 = vld [vmem:[#allocation8 + $0x418] sm:$0xff]
          %v7336 = vld [vmem:[#allocation8 + $0x420] sm:$0xff]
          %v7337 = vld [vmem:[#allocation8 + $0x428] sm:$0xff]
          %v7338 = vld [vmem:[#allocation8 + $0x430] sm:$0xff]
          %v7339 = vld [vmem:[#allocation8 + $0x438] sm:$0xff]
          %v7340 = vld [vmem:[#allocation8 + $0x440] sm:$0xff]
          %v7341 = vld [vmem:[#allocation8 + $0x448] sm:$0xff]
          %v7342 = vld [vmem:[#allocation8 + $0x450] sm:$0xff]
          %v7343 = vld [vmem:[#allocation8 + $0x458] sm:$0xff]
          %v7344 = vld [vmem:[#allocation8 + $0x460] sm:$0xff]
          %v7345 = vld [vmem:[#allocation8 + $0x468] sm:$0xff]
          %v7346 = vld [vmem:[#allocation8 + $0x470] sm:$0xff]
          %v7347 = vld [vmem:[#allocation8 + $0x478] sm:$0xff]
          %v7348 = vld [vmem:[#allocation8 + $0x480] sm:$0xff]
          %v7349 = vld [vmem:[#allocation8 + $0x488] sm:$0xff]
          %v7350 = vld [vmem:[#allocation8 + $0x490] sm:$0xff]
          %v7351 = vld [vmem:[#allocation8 + $0x498] sm:$0xff]
          %v7352 = vld [vmem:[#allocation8 + $0x4a0] sm:$0xff]
          %v7353 = vld [vmem:[#allocation8 + $0x4a8] sm:$0xff]
          %v7354 = vld [vmem:[#allocation8 + $0x4b0] sm:$0xff]
          %v7355 = vld [vmem:[#allocation8 + $0x4b8] sm:$0xff]
          %v7356 = vld [vmem:[#allocation8 + $0x4c0] sm:$0xff]
          %v7357 = vld [vmem:[#allocation8 + $0x4c8] sm:$0xff]
          %v7358 = vld [vmem:[#allocation8 + $0x4d0] sm:$0xff]
          %v7359 = vld [vmem:[#allocation8 + $0x4d8] sm:$0xff]
          %v7360 = vld [vmem:[#allocation8 + $0x4e0] sm:$0xff]
          %v7361 = vld [vmem:[#allocation8 + $0x4e8] sm:$0xff]
          %v7362 = vld [vmem:[#allocation8 + $0x4f0] sm:$0xff]
          %v7363 = vld [vmem:[#allocation8 + $0x4f8] sm:$0xff]
          %v7364 = vld [vmem:[#allocation8 + $0x500] sm:$0xff]
          %v7365 = vld [vmem:[#allocation8 + $0x508] sm:$0xff]
          %v7366 = vld [vmem:[#allocation8 + $0x510] sm:$0xff]
          %v7367 = vld [vmem:[#allocation8 + $0x518] sm:$0xff]
          %v7368 = vld [vmem:[#allocation8 + $0x520] sm:$0xff]
          %v7369 = vld [vmem:[#allocation8 + $0x528] sm:$0xff]
          %v7370 = vld [vmem:[#allocation8 + $0x530] sm:$0xff]
          %v7371 = vld [vmem:[#allocation8 + $0x538] sm:$0xff]
          %v7372 = vld [vmem:[#allocation8 + $0x540] sm:$0xff]
          %v7373 = vld [vmem:[#allocation8 + $0x548] sm:$0xff]
          %v7374 = vld [vmem:[#allocation8 + $0x550] sm:$0xff]
          %v7375 = vld [vmem:[#allocation8 + $0x558] sm:$0xff]
          %v7376 = vld [vmem:[#allocation8 + $0x560] sm:$0xff]
          %v7377 = vld [vmem:[#allocation8 + $0x568] sm:$0xff]
          %v7378 = vld [vmem:[#allocation8 + $0x570] sm:$0xff]
          %v7379 = vld [vmem:[#allocation8 + $0x578] sm:$0xff]
          %v7380 = vld [vmem:[#allocation8 + $0x580] sm:$0xff]
          %v7381 = vld [vmem:[#allocation8 + $0x588] sm:$0xff]
          %v7382 = vld [vmem:[#allocation8 + $0x590] sm:$0xff]
          %v7383 = vld [vmem:[#allocation8 + $0x598] sm:$0xff]
          %v7384 = vld [vmem:[#allocation8 + $0x5a0] sm:$0xff]
          %v7385 = vld [vmem:[#allocation8 + $0x5a8] sm:$0xff]
          %v7386 = vld [vmem:[#allocation8 + $0x5b0] sm:$0xff]
          %v7387 = vld [vmem:[#allocation8 + $0x5b8] sm:$0xff]
          %v7388 = vld [vmem:[#allocation8 + $0x5c0] sm:$0xff]
          %v7389 = vld [vmem:[#allocation8 + $0x5c8] sm:$0xff]
          %v7390 = vld [vmem:[#allocation8 + $0x5d0] sm:$0xff]
          %v7391 = vld [vmem:[#allocation8 + $0x5d8] sm:$0xff]
          %v7392 = vld [vmem:[#allocation8 + $0x5e0] sm:$0xff]
          %v7393 = vld [vmem:[#allocation8 + $0x5e8] sm:$0xff]
          %v7394 = vld [vmem:[#allocation8 + $0x5f0] sm:$0xff]
          %v7395 = vld [vmem:[#allocation8 + $0x5f8] sm:$0xff]
          %v7396 = vld [vmem:[#allocation8 + $0x600] sm:$0xff]
          %v7397 = vld [vmem:[#allocation8 + $0x608] sm:$0xff]
          %v7398 = vld [vmem:[#allocation8 + $0x610] sm:$0xff]
          %v7399 = vld [vmem:[#allocation8 + $0x618] sm:$0xff]
          %v7400 = vld [vmem:[#allocation8 + $0x620] sm:$0xff]
          %v7401 = vld [vmem:[#allocation8 + $0x628] sm:$0xff]
          %v7402 = vld [vmem:[#allocation8 + $0x630] sm:$0xff]
          %v7403 = vld [vmem:[#allocation8 + $0x638] sm:$0xff]
          %v7404 = vld [vmem:[#allocation8 + $0x640] sm:$0xff]
          %v7405 = vld [vmem:[#allocation8 + $0x648] sm:$0xff]
          %v7406 = vld [vmem:[#allocation8 + $0x650] sm:$0xff]
          %v7407 = vld [vmem:[#allocation8 + $0x658] sm:$0xff]
          %v7408 = vld [vmem:[#allocation8 + $0x660] sm:$0xff]
          %v7409 = vld [vmem:[#allocation8 + $0x668] sm:$0xff]
          %v7410 = vld [vmem:[#allocation8 + $0x670] sm:$0xff]
          %v7411 = vld [vmem:[#allocation8 + $0x678] sm:$0xff]
          %v7412 = vld [vmem:[#allocation8 + $0x680] sm:$0xff]
          %v7413 = vld [vmem:[#allocation8 + $0x688] sm:$0xff]
          %v7414 = vld [vmem:[#allocation8 + $0x690] sm:$0xff]
          %v7415 = vld [vmem:[#allocation8 + $0x698] sm:$0xff]
          %v7416 = vld [vmem:[#allocation8 + $0x6a0] sm:$0xff]
          %v7417 = vld [vmem:[#allocation8 + $0x6a8] sm:$0xff]
          %v7418 = vld [vmem:[#allocation8 + $0x6b0] sm:$0xff]
          %v7419 = vld [vmem:[#allocation8 + $0x6b8] sm:$0xff]
          %v7420 = vld [vmem:[#allocation8 + $0x6c0] sm:$0xff]
          %v7421 = vld [vmem:[#allocation8 + $0x6c8] sm:$0xff]
          %v7422 = vld [vmem:[#allocation8 + $0x6d0] sm:$0xff]
          %v7423 = vld [vmem:[#allocation8 + $0x6d8] sm:$0xff]
          %v7424 = vld [vmem:[#allocation8 + $0x6e0] sm:$0xff]
          %v7425 = vld [vmem:[#allocation8 + $0x6e8] sm:$0xff]
          %v7426 = vld [vmem:[#allocation8 + $0x6f0] sm:$0xff]
          %v7427 = vld [vmem:[#allocation8 + $0x6f8] sm:$0xff]
          %v7428 = vld [vmem:[#allocation8 + $0x700] sm:$0xff]
          %v7429 = vld [vmem:[#allocation8 + $0x708] sm:$0xff]
          %v7430 = vld [vmem:[#allocation8 + $0x710] sm:$0xff]
          %v7431 = vld [vmem:[#allocation8 + $0x718] sm:$0xff]
          %v7432 = vld [vmem:[#allocation8 + $0x720] sm:$0xff]
          %v7433 = vld [vmem:[#allocation8 + $0x728] sm:$0xff]
          %v7434 = vld [vmem:[#allocation8 + $0x730] sm:$0xff]
          %v7435 = vld [vmem:[#allocation8 + $0x738] sm:$0xff]
          %v7436 = vld [vmem:[#allocation8 + $0x740] sm:$0xff]
          %v7437 = vld [vmem:[#allocation8 + $0x748] sm:$0xff]
          %v7438 = vld [vmem:[#allocation8 + $0x750] sm:$0xff]
          %v7439 = vld [vmem:[#allocation8 + $0x758] sm:$0xff]
          %v7440 = vld [vmem:[#allocation8 + $0x760] sm:$0xff]
          %v7441 = vld [vmem:[#allocation8 + $0x768] sm:$0xff]
          %v7442 = vld [vmem:[#allocation8 + $0x770] sm:$0xff]
          %v7443 = vld [vmem:[#allocation8 + $0x778] sm:$0xff]
          %v7444 = vld [vmem:[#allocation8 + $0x780] sm:$0xff]
          %v7445 = vld [vmem:[#allocation8 + $0x788] sm:$0xff]
          %v7446 = vld [vmem:[#allocation8 + $0x790] sm:$0xff]
          %v7447 = vld [vmem:[#allocation8 + $0x798] sm:$0xff]
          %v7448 = vld [vmem:[#allocation8 + $0x7a0] sm:$0xff]
          %v7449 = vld [vmem:[#allocation8 + $0x7a8] sm:$0xff]
          %v7450 = vld [vmem:[#allocation8 + $0x7b0] sm:$0xff]
          %v7451 = vld [vmem:[#allocation8 + $0x7b8] sm:$0xff]
          %v7452 = vld [vmem:[#allocation8 + $0x7c0] sm:$0xff]
          %v7453 = vld [vmem:[#allocation8 + $0x7c8] sm:$0xff]
          %v7454 = vld [vmem:[#allocation8 + $0x7d0] sm:$0xff]
          %v7455 = vld [vmem:[#allocation8 + $0x7d8] sm:$0xff]
          %v7456 = vld [vmem:[#allocation8 + $0x7e0] sm:$0xff]
          %v7457 = vld [vmem:[#allocation8 + $0x7e8] sm:$0xff]
          %v7458 = vld [vmem:[#allocation8 + $0x7f0] sm:$0xff]
          %v7459 = vld [vmem:[#allocation8 + $0x7f8] sm:$0xff]
          %v7460 = vld [vmem:[#allocation8 + $0x800] sm:$0xff]
          %v7461 = vld [vmem:[#allocation8 + $0x808] sm:$0xff]
          %v7462 = vld [vmem:[#allocation8 + $0x810] sm:$0xff]
          %v7463 = vld [vmem:[#allocation8 + $0x818] sm:$0xff]
          %v7464 = vld [vmem:[#allocation8 + $0x820] sm:$0xff]
          %v7465 = vld [vmem:[#allocation8 + $0x828] sm:$0xff]
          %v7466 = vld [vmem:[#allocation8 + $0x830] sm:$0xff]
          %v7467 = vld [vmem:[#allocation8 + $0x838] sm:$0xff]
          %v7468 = vld [vmem:[#allocation8 + $0x840] sm:$0xff]
          %v7469 = vld [vmem:[#allocation8 + $0x848] sm:$0xff]
          %v7470 = vld [vmem:[#allocation8 + $0x850] sm:$0xff]
          %v7471 = vld [vmem:[#allocation8 + $0x858] sm:$0xff]
          %v7472 = vld [vmem:[#allocation8 + $0x860] sm:$0xff]
          %v7473 = vld [vmem:[#allocation8 + $0x868] sm:$0xff]
          %v7474 = vld [vmem:[#allocation8 + $0x870] sm:$0xff]
          %v7475 = vld [vmem:[#allocation8 + $0x878] sm:$0xff]
          %v7476 = vld [vmem:[#allocation8 + $0x880] sm:$0xff]
          %v7477 = vld [vmem:[#allocation8 + $0x888] sm:$0xff]
          %v7478 = vld [vmem:[#allocation8 + $0x890] sm:$0xff]
          %v7479 = vld [vmem:[#allocation8 + $0x898] sm:$0xff]
          %v7480 = vld [vmem:[#allocation8 + $0x8a0] sm:$0xff]
          %v7481 = vld [vmem:[#allocation8 + $0x8a8] sm:$0xff]
          %v7482 = vld [vmem:[#allocation8 + $0x8b0] sm:$0xff]
          %v7483 = vld [vmem:[#allocation8 + $0x8b8] sm:$0xff]
          %v7484 = vld [vmem:[#allocation8 + $0x8c0] sm:$0xff]
          %v7485 = vld [vmem:[#allocation8 + $0x8c8] sm:$0xff]
          %v7486 = vld [vmem:[#allocation8 + $0x8d0] sm:$0xff]
          %v7487 = vld [vmem:[#allocation8 + $0x8d8] sm:$0xff]
          %v7488 = vld [vmem:[#allocation8 + $0x8e0] sm:$0xff]
          %v7489 = vld [vmem:[#allocation8 + $0x8e8] sm:$0xff]
          %v7490 = vld [vmem:[#allocation8 + $0x8f0] sm:$0xff]
          %v7491 = vld [vmem:[#allocation8 + $0x8f8] sm:$0xff]
          %v7492 = vld [vmem:[#allocation8 + $0x900] sm:$0xff]
          %v7493 = vld [vmem:[#allocation8 + $0x908] sm:$0xff]
          %v7494 = vld [vmem:[#allocation8 + $0x910] sm:$0xff]
          %v7495 = vld [vmem:[#allocation8 + $0x918] sm:$0xff]
          %v7496 = vld [vmem:[#allocation8 + $0x920] sm:$0xff]
          %v7497 = vld [vmem:[#allocation8 + $0x928] sm:$0xff]
          %v7498 = vld [vmem:[#allocation8 + $0x930] sm:$0xff]
          %v7499 = vld [vmem:[#allocation8 + $0x938] sm:$0xff]
          %v7500 = vld [vmem:[#allocation8 + $0x940] sm:$0xff]
          %v7501 = vld [vmem:[#allocation8 + $0x948] sm:$0xff]
          %v7502 = vld [vmem:[#allocation8 + $0x950] sm:$0xff]
          %v7503 = vld [vmem:[#allocation8 + $0x958] sm:$0xff]
          %v7504 = vld [vmem:[#allocation8 + $0x960] sm:$0xff]
          %v7505 = vld [vmem:[#allocation8 + $0x968] sm:$0xff]
          %v7506 = vld [vmem:[#allocation8 + $0x970] sm:$0xff]
          %v7507 = vld [vmem:[#allocation8 + $0x978] sm:$0xff]
          %v7508 = vld [vmem:[#allocation8 + $0x980] sm:$0xff]
          %v7509 = vld [vmem:[#allocation8 + $0x988] sm:$0xff]
          %v7510 = vld [vmem:[#allocation8 + $0x990] sm:$0xff]
          %v7511 = vld [vmem:[#allocation8 + $0x998] sm:$0xff]
          %v7512 = vld [vmem:[#allocation8 + $0x9a0] sm:$0xff]
          %v7513 = vld [vmem:[#allocation8 + $0x9a8] sm:$0xff]
          %v7514 = vld [vmem:[#allocation8 + $0x9b0] sm:$0xff]
          %v7515 = vld [vmem:[#allocation8 + $0x9b8] sm:$0xff]
          %v7516 = vld [vmem:[#allocation8 + $0x9c0] sm:$0xff]
          %v7517 = vld [vmem:[#allocation8 + $0x9c8] sm:$0xff]
          %v7518 = vld [vmem:[#allocation8 + $0x9d0] sm:$0xff]
          %v7519 = vld [vmem:[#allocation8 + $0x9d8] sm:$0xff]
          %v7520 = vld [vmem:[#allocation8 + $0x9e0] sm:$0xff]
          %v7521 = vld [vmem:[#allocation8 + $0x9e8] sm:$0xff]
          %v7522 = vld [vmem:[#allocation8 + $0x9f0] sm:$0xff]
          %v7523 = vld [vmem:[#allocation8 + $0x9f8] sm:$0xff]
          %v7524 = vld [vmem:[#allocation8 + $0xa00] sm:$0xff]
          %v7525 = vld [vmem:[#allocation8 + $0xa08] sm:$0xff]
          %v7526 = vld [vmem:[#allocation8 + $0xa10] sm:$0xff]
          %v7527 = vld [vmem:[#allocation8 + $0xa18] sm:$0xff]
          %v7528 = vld [vmem:[#allocation8 + $0xa20] sm:$0xff]
          %v7529 = vld [vmem:[#allocation8 + $0xa28] sm:$0xff]
          %v7530 = vld [vmem:[#allocation8 + $0xa30] sm:$0xff]
          %v7531 = vld [vmem:[#allocation8 + $0xa38] sm:$0xff]
          %v7532 = vld [vmem:[#allocation8 + $0xa40] sm:$0xff]
          %v7533 = vld [vmem:[#allocation8 + $0xa48] sm:$0xff]
          %v7534 = vld [vmem:[#allocation8 + $0xa50] sm:$0xff]
          %v7535 = vld [vmem:[#allocation8 + $0xa58] sm:$0xff]
          %v7536 = vld [vmem:[#allocation8 + $0xa60] sm:$0xff]
          %v7537 = vld [vmem:[#allocation8 + $0xa68] sm:$0xff]
          %v7538 = vld [vmem:[#allocation8 + $0xa70] sm:$0xff]
          %v7539 = vld [vmem:[#allocation8 + $0xa78] sm:$0xff]
          %v7540 = vld [vmem:[#allocation8 + $0xa80] sm:$0xff]
          %v7541 = vld [vmem:[#allocation8 + $0xa88] sm:$0xff]
          %v7542 = vld [vmem:[#allocation8 + $0xa90] sm:$0xff]
          %v7543 = vld [vmem:[#allocation8 + $0xa98] sm:$0xff]
          %v7544 = vld [vmem:[#allocation8 + $0xaa0] sm:$0xff]
          %v7545 = vld [vmem:[#allocation8 + $0xaa8] sm:$0xff]
          %v7546 = vld [vmem:[#allocation8 + $0xab0] sm:$0xff]
          %v7547 = vld [vmem:[#allocation8 + $0xab8] sm:$0xff]
          %v7548 = vld [vmem:[#allocation8 + $0xac0] sm:$0xff]
          %v7549 = vld [vmem:[#allocation8 + $0xac8] sm:$0xff]
          %v7550 = vld [vmem:[#allocation8 + $0xad0] sm:$0xff]
          %v7551 = vld [vmem:[#allocation8 + $0xad8] sm:$0xff]
          %v7552 = vld [vmem:[#allocation8 + $0xae0] sm:$0xff]
          %v7553 = vld [vmem:[#allocation8 + $0xae8] sm:$0xff]
          %v7554 = vld [vmem:[#allocation8 + $0xaf0] sm:$0xff]
          %v7555 = vld [vmem:[#allocation8 + $0xaf8] sm:$0xff]
          %v7556 = vld [vmem:[#allocation8 + $0xb00] sm:$0xff]
          %v7557 = vld [vmem:[#allocation8 + $0xb08] sm:$0xff]
          %v7558 = vld [vmem:[#allocation8 + $0xb10] sm:$0xff]
          %v7559 = vld [vmem:[#allocation8 + $0xb18] sm:$0xff]
          %v7560 = vld [vmem:[#allocation8 + $0xb20] sm:$0xff]
          %v7561 = vld [vmem:[#allocation8 + $0xb28] sm:$0xff]
          %v7562 = vld [vmem:[#allocation8 + $0xb30] sm:$0xff]
          %v7563 = vld [vmem:[#allocation8 + $0xb38] sm:$0xff]
          %v7564 = vld [vmem:[#allocation8 + $0xb40] sm:$0xff]
          %v7565 = vld [vmem:[#allocation8 + $0xb48] sm:$0xff]
          %v7566 = vld [vmem:[#allocation8 + $0xb50] sm:$0xff]
          %v7567 = vld [vmem:[#allocation8 + $0xb58] sm:$0xff]
          %v7568 = vld [vmem:[#allocation8 + $0xb60] sm:$0xff]
          %v7569 = vld [vmem:[#allocation8 + $0xb68] sm:$0xff]
          %v7570 = vld [vmem:[#allocation8 + $0xb70] sm:$0xff]
          %v7571 = vld [vmem:[#allocation8 + $0xb78] sm:$0xff]
          %v7572 = vld [vmem:[#allocation8 + $0xb80] sm:$0xff]
          %v7573 = vld [vmem:[#allocation8 + $0xb88] sm:$0xff]
          %v7574 = vld [vmem:[#allocation8 + $0xb90] sm:$0xff]
          %v7575 = vld [vmem:[#allocation8 + $0xb98] sm:$0xff]
          %v7576 = vld [vmem:[#allocation8 + $0xba0] sm:$0xff]
          %v7577 = vld [vmem:[#allocation8 + $0xba8] sm:$0xff]
          %v7578 = vld [vmem:[#allocation8 + $0xbb0] sm:$0xff]
          %v7579 = vld [vmem:[#allocation8 + $0xbb8] sm:$0xff]
          %v7580 = vld [vmem:[#allocation8 + $0xbc0] sm:$0xff]
          %v7581 = vld [vmem:[#allocation8 + $0xbc8] sm:$0xff]
          %v7582 = vld [vmem:[#allocation8 + $0xbd0] sm:$0xff]
          %v7583 = vld [vmem:[#allocation8 + $0xbd8] sm:$0xff]
          %v7584 = vld [vmem:[#allocation8 + $0xbe0] sm:$0xff]
          %v7585 = vld [vmem:[#allocation8 + $0xbe8] sm:$0xff]
          %v7586 = vld [vmem:[#allocation8 + $0xbf0] sm:$0xff]
          %v7587 = vld [vmem:[#allocation8 + $0xbf8] sm:$0xff]
          %v7588 = vunpack.c.l.bf16 %v7204
          %v7589 = vunpack.c.h.bf16 %v7204
          %v7590 = vunpack.c.l.bf16 %v7205
          %v7591 = vunpack.c.h.bf16 %v7205
          %v7592 = vunpack.c.l.bf16 %v7206
          %v7593 = vunpack.c.h.bf16 %v7206
          %v7594 = vunpack.c.l.bf16 %v7207
          %v7595 = vunpack.c.h.bf16 %v7207
          %v7596 = vunpack.c.l.bf16 %v7208
          %v7597 = vunpack.c.h.bf16 %v7208
          %v7598 = vunpack.c.l.bf16 %v7209
          %v7599 = vunpack.c.h.bf16 %v7209
          %v7600 = vunpack.c.l.bf16 %v7210
          %v7601 = vunpack.c.h.bf16 %v7210
          %v7602 = vunpack.c.l.bf16 %v7211
          %v7603 = vunpack.c.h.bf16 %v7211
          %v7604 = vunpack.c.l.bf16 %v7212
          %v7605 = vunpack.c.h.bf16 %v7212
          %v7606 = vunpack.c.l.bf16 %v7213
          %v7607 = vunpack.c.h.bf16 %v7213
          %v7608 = vunpack.c.l.bf16 %v7214
          %v7609 = vunpack.c.h.bf16 %v7214
          %v7610 = vunpack.c.l.bf16 %v7215
          %v7611 = vunpack.c.h.bf16 %v7215
          %v7612 = vunpack.c.l.bf16 %v7216
          %v7613 = vunpack.c.h.bf16 %v7216
          %v7614 = vunpack.c.l.bf16 %v7217
          %v7615 = vunpack.c.h.bf16 %v7217
          %v7616 = vunpack.c.l.bf16 %v7218
          %v7617 = vunpack.c.h.bf16 %v7218
          %v7618 = vunpack.c.l.bf16 %v7219
          %v7619 = vunpack.c.h.bf16 %v7219
          %v7620 = vunpack.c.l.bf16 %v7220
          %v7621 = vunpack.c.h.bf16 %v7220
          %v7622 = vunpack.c.l.bf16 %v7221
          %v7623 = vunpack.c.h.bf16 %v7221
          %v7624 = vunpack.c.l.bf16 %v7222
          %v7625 = vunpack.c.h.bf16 %v7222
          %v7626 = vunpack.c.l.bf16 %v7223
          %v7627 = vunpack.c.h.bf16 %v7223
          %v7628 = vunpack.c.l.bf16 %v7224
          %v7629 = vunpack.c.h.bf16 %v7224
          %v7630 = vunpack.c.l.bf16 %v7225
          %v7631 = vunpack.c.h.bf16 %v7225
          %v7632 = vunpack.c.l.bf16 %v7226
          %v7633 = vunpack.c.h.bf16 %v7226
          %v7634 = vunpack.c.l.bf16 %v7227
          %v7635 = vunpack.c.h.bf16 %v7227
          %v7636 = vunpack.c.l.bf16 %v7228
          %v7637 = vunpack.c.h.bf16 %v7228
          %v7638 = vunpack.c.l.bf16 %v7229
          %v7639 = vunpack.c.h.bf16 %v7229
          %v7640 = vunpack.c.l.bf16 %v7230
          %v7641 = vunpack.c.h.bf16 %v7230
          %v7642 = vunpack.c.l.bf16 %v7231
          %v7643 = vunpack.c.h.bf16 %v7231
          %v7644 = vunpack.c.l.bf16 %v7232
          %v7645 = vunpack.c.h.bf16 %v7232
          %v7646 = vunpack.c.l.bf16 %v7233
          %v7647 = vunpack.c.h.bf16 %v7233
          %v7648 = vunpack.c.l.bf16 %v7234
          %v7649 = vunpack.c.h.bf16 %v7234
          %v7650 = vunpack.c.l.bf16 %v7235
          %v7651 = vunpack.c.h.bf16 %v7235
          %v7652 = vunpack.c.l.bf16 %v7236
          %v7653 = vunpack.c.h.bf16 %v7236
          %v7654 = vunpack.c.l.bf16 %v7237
          %v7655 = vunpack.c.h.bf16 %v7237
          %v7656 = vunpack.c.l.bf16 %v7238
          %v7657 = vunpack.c.h.bf16 %v7238
          %v7658 = vunpack.c.l.bf16 %v7239
          %v7659 = vunpack.c.h.bf16 %v7239
          %v7660 = vunpack.c.l.bf16 %v7240
          %v7661 = vunpack.c.h.bf16 %v7240
          %v7662 = vunpack.c.l.bf16 %v7241
          %v7663 = vunpack.c.h.bf16 %v7241
          %v7664 = vunpack.c.l.bf16 %v7242
          %v7665 = vunpack.c.h.bf16 %v7242
          %v7666 = vunpack.c.l.bf16 %v7243
          %v7667 = vunpack.c.h.bf16 %v7243
          %v7668 = vunpack.c.l.bf16 %v7244
          %v7669 = vunpack.c.h.bf16 %v7244
          %v7670 = vunpack.c.l.bf16 %v7245
          %v7671 = vunpack.c.h.bf16 %v7245
          %v7672 = vunpack.c.l.bf16 %v7246
          %v7673 = vunpack.c.h.bf16 %v7246
          %v7674 = vunpack.c.l.bf16 %v7247
          %v7675 = vunpack.c.h.bf16 %v7247
          %v7676 = vunpack.c.l.bf16 %v7248
          %v7677 = vunpack.c.h.bf16 %v7248
          %v7678 = vunpack.c.l.bf16 %v7249
          %v7679 = vunpack.c.h.bf16 %v7249
          %v7680 = vunpack.c.l.bf16 %v7250
          %v7681 = vunpack.c.h.bf16 %v7250
          %v7682 = vunpack.c.l.bf16 %v7251
          %v7683 = vunpack.c.h.bf16 %v7251
          %v7684 = vunpack.c.l.bf16 %v7252
          %v7685 = vunpack.c.h.bf16 %v7252
          %v7686 = vunpack.c.l.bf16 %v7253
          %v7687 = vunpack.c.h.bf16 %v7253
          %v7688 = vunpack.c.l.bf16 %v7254
          %v7689 = vunpack.c.h.bf16 %v7254
          %v7690 = vunpack.c.l.bf16 %v7255
          %v7691 = vunpack.c.h.bf16 %v7255
          %v7692 = vunpack.c.l.bf16 %v7256
          %v7693 = vunpack.c.h.bf16 %v7256
          %v7694 = vunpack.c.l.bf16 %v7257
          %v7695 = vunpack.c.h.bf16 %v7257
          %v7696 = vunpack.c.l.bf16 %v7258
          %v7697 = vunpack.c.h.bf16 %v7258
          %v7698 = vunpack.c.l.bf16 %v7259
          %v7699 = vunpack.c.h.bf16 %v7259
          %v7700 = vunpack.c.l.bf16 %v7260
          %v7701 = vunpack.c.h.bf16 %v7260
          %v7702 = vunpack.c.l.bf16 %v7261
          %v7703 = vunpack.c.h.bf16 %v7261
          %v7704 = vunpack.c.l.bf16 %v7262
          %v7705 = vunpack.c.h.bf16 %v7262
          %v7706 = vunpack.c.l.bf16 %v7263
          %v7707 = vunpack.c.h.bf16 %v7263
          %v7708 = vunpack.c.l.bf16 %v7264
          %v7709 = vunpack.c.h.bf16 %v7264
          %v7710 = vunpack.c.l.bf16 %v7265
          %v7711 = vunpack.c.h.bf16 %v7265
          %v7712 = vunpack.c.l.bf16 %v7266
          %v7713 = vunpack.c.h.bf16 %v7266
          %v7714 = vunpack.c.l.bf16 %v7267
          %v7715 = vunpack.c.h.bf16 %v7267
          %v7716 = vunpack.c.l.bf16 %v7268
          %v7717 = vunpack.c.h.bf16 %v7268
          %v7718 = vunpack.c.l.bf16 %v7269
          %v7719 = vunpack.c.h.bf16 %v7269
          %v7720 = vunpack.c.l.bf16 %v7270
          %v7721 = vunpack.c.h.bf16 %v7270
          %v7722 = vunpack.c.l.bf16 %v7271
          %v7723 = vunpack.c.h.bf16 %v7271
          %v7724 = vunpack.c.l.bf16 %v7272
          %v7725 = vunpack.c.h.bf16 %v7272
          %v7726 = vunpack.c.l.bf16 %v7273
          %v7727 = vunpack.c.h.bf16 %v7273
          %v7728 = vunpack.c.l.bf16 %v7274
          %v7729 = vunpack.c.h.bf16 %v7274
          %v7730 = vunpack.c.l.bf16 %v7275
          %v7731 = vunpack.c.h.bf16 %v7275
          %v7732 = vunpack.c.l.bf16 %v7276
          %v7733 = vunpack.c.h.bf16 %v7276
          %v7734 = vunpack.c.l.bf16 %v7277
          %v7735 = vunpack.c.h.bf16 %v7277
          %v7736 = vunpack.c.l.bf16 %v7278
          %v7737 = vunpack.c.h.bf16 %v7278
          %v7738 = vunpack.c.l.bf16 %v7279
          %v7739 = vunpack.c.h.bf16 %v7279
          %v7740 = vunpack.c.l.bf16 %v7280
          %v7741 = vunpack.c.h.bf16 %v7280
          %v7742 = vunpack.c.l.bf16 %v7281
          %v7743 = vunpack.c.h.bf16 %v7281
          %v7744 = vunpack.c.l.bf16 %v7282
          %v7745 = vunpack.c.h.bf16 %v7282
          %v7746 = vunpack.c.l.bf16 %v7283
          %v7747 = vunpack.c.h.bf16 %v7283
          %v7748 = vunpack.c.l.bf16 %v7284
          %v7749 = vunpack.c.h.bf16 %v7284
          %v7750 = vunpack.c.l.bf16 %v7285
          %v7751 = vunpack.c.h.bf16 %v7285
          %v7752 = vunpack.c.l.bf16 %v7286
          %v7753 = vunpack.c.h.bf16 %v7286
          %v7754 = vunpack.c.l.bf16 %v7287
          %v7755 = vunpack.c.h.bf16 %v7287
          %v7756 = vunpack.c.l.bf16 %v7288
          %v7757 = vunpack.c.h.bf16 %v7288
          %v7758 = vunpack.c.l.bf16 %v7289
          %v7759 = vunpack.c.h.bf16 %v7289
          %v7760 = vunpack.c.l.bf16 %v7290
          %v7761 = vunpack.c.h.bf16 %v7290
          %v7762 = vunpack.c.l.bf16 %v7291
          %v7763 = vunpack.c.h.bf16 %v7291
          %v7764 = vunpack.c.l.bf16 %v7292
          %v7765 = vunpack.c.h.bf16 %v7292
          %v7766 = vunpack.c.l.bf16 %v7293
          %v7767 = vunpack.c.h.bf16 %v7293
          %v7768 = vunpack.c.l.bf16 %v7294
          %v7769 = vunpack.c.h.bf16 %v7294
          %v7770 = vunpack.c.l.bf16 %v7295
          %v7771 = vunpack.c.h.bf16 %v7295
          %v7772 = vunpack.c.l.bf16 %v7296
          %v7773 = vunpack.c.h.bf16 %v7296
          %v7774 = vunpack.c.l.bf16 %v7297
          %v7775 = vunpack.c.h.bf16 %v7297
          %v7776 = vunpack.c.l.bf16 %v7298
          %v7777 = vunpack.c.h.bf16 %v7298
          %v7778 = vunpack.c.l.bf16 %v7299
          %v7779 = vunpack.c.h.bf16 %v7299
          %v7780 = vunpack.c.l.bf16 %v7300
          %v7781 = vunpack.c.h.bf16 %v7300
          %v7782 = vunpack.c.l.bf16 %v7301
          %v7783 = vunpack.c.h.bf16 %v7301
          %v7784 = vunpack.c.l.bf16 %v7302
          %v7785 = vunpack.c.h.bf16 %v7302
          %v7786 = vunpack.c.l.bf16 %v7303
          %v7787 = vunpack.c.h.bf16 %v7303
          %v7788 = vunpack.c.l.bf16 %v7304
          %v7789 = vunpack.c.h.bf16 %v7304
          %v7790 = vunpack.c.l.bf16 %v7305
          %v7791 = vunpack.c.h.bf16 %v7305
          %v7792 = vunpack.c.l.bf16 %v7306
          %v7793 = vunpack.c.h.bf16 %v7306
          %v7794 = vunpack.c.l.bf16 %v7307
          %v7795 = vunpack.c.h.bf16 %v7307
          %v7796 = vunpack.c.l.bf16 %v7308
          %v7797 = vunpack.c.h.bf16 %v7308
          %v7798 = vunpack.c.l.bf16 %v7309
          %v7799 = vunpack.c.h.bf16 %v7309
          %v7800 = vunpack.c.l.bf16 %v7310
          %v7801 = vunpack.c.h.bf16 %v7310
          %v7802 = vunpack.c.l.bf16 %v7311
          %v7803 = vunpack.c.h.bf16 %v7311
          %v7804 = vunpack.c.l.bf16 %v7312
          %v7805 = vunpack.c.h.bf16 %v7312
          %v7806 = vunpack.c.l.bf16 %v7313
          %v7807 = vunpack.c.h.bf16 %v7313
          %v7808 = vunpack.c.l.bf16 %v7314
          %v7809 = vunpack.c.h.bf16 %v7314
          %v7810 = vunpack.c.l.bf16 %v7315
          %v7811 = vunpack.c.h.bf16 %v7315
          %v7812 = vunpack.c.l.bf16 %v7316
          %v7813 = vunpack.c.h.bf16 %v7316
          %v7814 = vunpack.c.l.bf16 %v7317
          %v7815 = vunpack.c.h.bf16 %v7317
          %v7816 = vunpack.c.l.bf16 %v7318
          %v7817 = vunpack.c.h.bf16 %v7318
          %v7818 = vunpack.c.l.bf16 %v7319
          %v7819 = vunpack.c.h.bf16 %v7319
          %v7820 = vunpack.c.l.bf16 %v7320
          %v7821 = vunpack.c.h.bf16 %v7320
          %v7822 = vunpack.c.l.bf16 %v7321
          %v7823 = vunpack.c.h.bf16 %v7321
          %v7824 = vunpack.c.l.bf16 %v7322
          %v7825 = vunpack.c.h.bf16 %v7322
          %v7826 = vunpack.c.l.bf16 %v7323
          %v7827 = vunpack.c.h.bf16 %v7323
          %v7828 = vunpack.c.l.bf16 %v7324
          %v7829 = vunpack.c.h.bf16 %v7324
          %v7830 = vunpack.c.l.bf16 %v7325
          %v7831 = vunpack.c.h.bf16 %v7325
          %v7832 = vunpack.c.l.bf16 %v7326
          %v7833 = vunpack.c.h.bf16 %v7326
          %v7834 = vunpack.c.l.bf16 %v7327
          %v7835 = vunpack.c.h.bf16 %v7327
          %v7836 = vunpack.c.l.bf16 %v7328
          %v7837 = vunpack.c.h.bf16 %v7328
          %v7838 = vunpack.c.l.bf16 %v7329
          %v7839 = vunpack.c.h.bf16 %v7329
          %v7840 = vunpack.c.l.bf16 %v7330
          %v7841 = vunpack.c.h.bf16 %v7330
          %v7842 = vunpack.c.l.bf16 %v7331
          %v7843 = vunpack.c.h.bf16 %v7331
          %v7844 = vunpack.c.l.bf16 %v7332
          %v7845 = vunpack.c.h.bf16 %v7332
          %v7846 = vunpack.c.l.bf16 %v7333
          %v7847 = vunpack.c.h.bf16 %v7333
          %v7848 = vunpack.c.l.bf16 %v7334
          %v7849 = vunpack.c.h.bf16 %v7334
          %v7850 = vunpack.c.l.bf16 %v7335
          %v7851 = vunpack.c.h.bf16 %v7335
          %v7852 = vunpack.c.l.bf16 %v7336
          %v7853 = vunpack.c.h.bf16 %v7336
          %v7854 = vunpack.c.l.bf16 %v7337
          %v7855 = vunpack.c.h.bf16 %v7337
          %v7856 = vunpack.c.l.bf16 %v7338
          %v7857 = vunpack.c.h.bf16 %v7338
          %v7858 = vunpack.c.l.bf16 %v7339
          %v7859 = vunpack.c.h.bf16 %v7339
          %v7860 = vunpack.c.l.bf16 %v7340
          %v7861 = vunpack.c.h.bf16 %v7340
          %v7862 = vunpack.c.l.bf16 %v7341
          %v7863 = vunpack.c.h.bf16 %v7341
          %v7864 = vunpack.c.l.bf16 %v7342
          %v7865 = vunpack.c.h.bf16 %v7342
          %v7866 = vunpack.c.l.bf16 %v7343
          %v7867 = vunpack.c.h.bf16 %v7343
          %v7868 = vunpack.c.l.bf16 %v7344
          %v7869 = vunpack.c.h.bf16 %v7344
          %v7870 = vunpack.c.l.bf16 %v7345
          %v7871 = vunpack.c.h.bf16 %v7345
          %v7872 = vunpack.c.l.bf16 %v7346
          %v7873 = vunpack.c.h.bf16 %v7346
          %v7874 = vunpack.c.l.bf16 %v7347
          %v7875 = vunpack.c.h.bf16 %v7347
          %v7876 = vunpack.c.l.bf16 %v7348
          %v7877 = vunpack.c.h.bf16 %v7348
          %v7878 = vunpack.c.l.bf16 %v7349
          %v7879 = vunpack.c.h.bf16 %v7349
          %v7880 = vunpack.c.l.bf16 %v7350
          %v7881 = vunpack.c.h.bf16 %v7350
          %v7882 = vunpack.c.l.bf16 %v7351
          %v7883 = vunpack.c.h.bf16 %v7351
          %v7884 = vunpack.c.l.bf16 %v7352
          %v7885 = vunpack.c.h.bf16 %v7352
          %v7886 = vunpack.c.l.bf16 %v7353
          %v7887 = vunpack.c.h.bf16 %v7353
          %v7888 = vunpack.c.l.bf16 %v7354
          %v7889 = vunpack.c.h.bf16 %v7354
          %v7890 = vunpack.c.l.bf16 %v7355
          %v7891 = vunpack.c.h.bf16 %v7355
          %v7892 = vunpack.c.l.bf16 %v7356
          %v7893 = vunpack.c.h.bf16 %v7356
          %v7894 = vunpack.c.l.bf16 %v7357
          %v7895 = vunpack.c.h.bf16 %v7357
          %v7896 = vunpack.c.l.bf16 %v7358
          %v7897 = vunpack.c.h.bf16 %v7358
          %v7898 = vunpack.c.l.bf16 %v7359
          %v7899 = vunpack.c.h.bf16 %v7359
          %v7900 = vunpack.c.l.bf16 %v7360
          %v7901 = vunpack.c.h.bf16 %v7360
          %v7902 = vunpack.c.l.bf16 %v7361
          %v7903 = vunpack.c.h.bf16 %v7361
          %v7904 = vunpack.c.l.bf16 %v7362
          %v7905 = vunpack.c.h.bf16 %v7362
          %v7906 = vunpack.c.l.bf16 %v7363
          %v7907 = vunpack.c.h.bf16 %v7363
          %v7908 = vunpack.c.l.bf16 %v7364
          %v7909 = vunpack.c.h.bf16 %v7364
          %v7910 = vunpack.c.l.bf16 %v7365
          %v7911 = vunpack.c.h.bf16 %v7365
          %v7912 = vunpack.c.l.bf16 %v7366
          %v7913 = vunpack.c.h.bf16 %v7366
          %v7914 = vunpack.c.l.bf16 %v7367
          %v7915 = vunpack.c.h.bf16 %v7367
          %v7916 = vunpack.c.l.bf16 %v7368
          %v7917 = vunpack.c.h.bf16 %v7368
          %v7918 = vunpack.c.l.bf16 %v7369
          %v7919 = vunpack.c.h.bf16 %v7369
          %v7920 = vunpack.c.l.bf16 %v7370
          %v7921 = vunpack.c.h.bf16 %v7370
          %v7922 = vunpack.c.l.bf16 %v7371
          %v7923 = vunpack.c.h.bf16 %v7371
          %v7924 = vunpack.c.l.bf16 %v7372
          %v7925 = vunpack.c.h.bf16 %v7372
          %v7926 = vunpack.c.l.bf16 %v7373
          %v7927 = vunpack.c.h.bf16 %v7373
          %v7928 = vunpack.c.l.bf16 %v7374
          %v7929 = vunpack.c.h.bf16 %v7374
          %v7930 = vunpack.c.l.bf16 %v7375
          %v7931 = vunpack.c.h.bf16 %v7375
          %v7932 = vunpack.c.l.bf16 %v7376
          %v7933 = vunpack.c.h.bf16 %v7376
          %v7934 = vunpack.c.l.bf16 %v7377
          %v7935 = vunpack.c.h.bf16 %v7377
          %v7936 = vunpack.c.l.bf16 %v7378
          %v7937 = vunpack.c.h.bf16 %v7378
          %v7938 = vunpack.c.l.bf16 %v7379
          %v7939 = vunpack.c.h.bf16 %v7379
          %v7940 = vunpack.c.l.bf16 %v7380
          %v7941 = vunpack.c.h.bf16 %v7380
          %v7942 = vunpack.c.l.bf16 %v7381
          %v7943 = vunpack.c.h.bf16 %v7381
          %v7944 = vunpack.c.l.bf16 %v7382
          %v7945 = vunpack.c.h.bf16 %v7382
          %v7946 = vunpack.c.l.bf16 %v7383
          %v7947 = vunpack.c.h.bf16 %v7383
          %v7948 = vunpack.c.l.bf16 %v7384
          %v7949 = vunpack.c.h.bf16 %v7384
          %v7950 = vunpack.c.l.bf16 %v7385
          %v7951 = vunpack.c.h.bf16 %v7385
          %v7952 = vunpack.c.l.bf16 %v7386
          %v7953 = vunpack.c.h.bf16 %v7386
          %v7954 = vunpack.c.l.bf16 %v7387
          %v7955 = vunpack.c.h.bf16 %v7387
          %v7956 = vunpack.c.l.bf16 %v7388
          %v7957 = vunpack.c.h.bf16 %v7388
          %v7958 = vunpack.c.l.bf16 %v7389
          %v7959 = vunpack.c.h.bf16 %v7389
          %v7960 = vunpack.c.l.bf16 %v7390
          %v7961 = vunpack.c.h.bf16 %v7390
          %v7962 = vunpack.c.l.bf16 %v7391
          %v7963 = vunpack.c.h.bf16 %v7391
          %v7964 = vunpack.c.l.bf16 %v7392
          %v7965 = vunpack.c.h.bf16 %v7392
          %v7966 = vunpack.c.l.bf16 %v7393
          %v7967 = vunpack.c.h.bf16 %v7393
          %v7968 = vunpack.c.l.bf16 %v7394
          %v7969 = vunpack.c.h.bf16 %v7394
          %v7970 = vunpack.c.l.bf16 %v7395
          %v7971 = vunpack.c.h.bf16 %v7395
          %v7972 = vunpack.c.l.bf16 %v7396
          %v7973 = vunpack.c.h.bf16 %v7396
          %v7974 = vunpack.c.l.bf16 %v7397
          %v7975 = vunpack.c.h.bf16 %v7397
          %v7976 = vunpack.c.l.bf16 %v7398
          %v7977 = vunpack.c.h.bf16 %v7398
          %v7978 = vunpack.c.l.bf16 %v7399
          %v7979 = vunpack.c.h.bf16 %v7399
          %v7980 = vunpack.c.l.bf16 %v7400
          %v7981 = vunpack.c.h.bf16 %v7400
          %v7982 = vunpack.c.l.bf16 %v7401
          %v7983 = vunpack.c.h.bf16 %v7401
          %v7984 = vunpack.c.l.bf16 %v7402
          %v7985 = vunpack.c.h.bf16 %v7402
          %v7986 = vunpack.c.l.bf16 %v7403
          %v7987 = vunpack.c.h.bf16 %v7403
          %v7988 = vunpack.c.l.bf16 %v7404
          %v7989 = vunpack.c.h.bf16 %v7404
          %v7990 = vunpack.c.l.bf16 %v7405
          %v7991 = vunpack.c.h.bf16 %v7405
          %v7992 = vunpack.c.l.bf16 %v7406
          %v7993 = vunpack.c.h.bf16 %v7406
          %v7994 = vunpack.c.l.bf16 %v7407
          %v7995 = vunpack.c.h.bf16 %v7407
          %v7996 = vunpack.c.l.bf16 %v7408
          %v7997 = vunpack.c.h.bf16 %v7408
          %v7998 = vunpack.c.l.bf16 %v7409
          %v7999 = vunpack.c.h.bf16 %v7409
          %v8000 = vunpack.c.l.bf16 %v7410
          %v8001 = vunpack.c.h.bf16 %v7410
          %v8002 = vunpack.c.l.bf16 %v7411
          %v8003 = vunpack.c.h.bf16 %v7411
          %v8004 = vunpack.c.l.bf16 %v7412
          %v8005 = vunpack.c.h.bf16 %v7412
          %v8006 = vunpack.c.l.bf16 %v7413
          %v8007 = vunpack.c.h.bf16 %v7413
          %v8008 = vunpack.c.l.bf16 %v7414
          %v8009 = vunpack.c.h.bf16 %v7414
          %v8010 = vunpack.c.l.bf16 %v7415
          %v8011 = vunpack.c.h.bf16 %v7415
          %v8012 = vunpack.c.l.bf16 %v7416
          %v8013 = vunpack.c.h.bf16 %v7416
          %v8014 = vunpack.c.l.bf16 %v7417
          %v8015 = vunpack.c.h.bf16 %v7417
          %v8016 = vunpack.c.l.bf16 %v7418
          %v8017 = vunpack.c.h.bf16 %v7418
          %v8018 = vunpack.c.l.bf16 %v7419
          %v8019 = vunpack.c.h.bf16 %v7419
          %v8020 = vunpack.c.l.bf16 %v7420
          %v8021 = vunpack.c.h.bf16 %v7420
          %v8022 = vunpack.c.l.bf16 %v7421
          %v8023 = vunpack.c.h.bf16 %v7421
          %v8024 = vunpack.c.l.bf16 %v7422
          %v8025 = vunpack.c.h.bf16 %v7422
          %v8026 = vunpack.c.l.bf16 %v7423
          %v8027 = vunpack.c.h.bf16 %v7423
          %v8028 = vunpack.c.l.bf16 %v7424
          %v8029 = vunpack.c.h.bf16 %v7424
          %v8030 = vunpack.c.l.bf16 %v7425
          %v8031 = vunpack.c.h.bf16 %v7425
          %v8032 = vunpack.c.l.bf16 %v7426
          %v8033 = vunpack.c.h.bf16 %v7426
          %v8034 = vunpack.c.l.bf16 %v7427
          %v8035 = vunpack.c.h.bf16 %v7427
          %v8036 = vunpack.c.l.bf16 %v7428
          %v8037 = vunpack.c.h.bf16 %v7428
          %v8038 = vunpack.c.l.bf16 %v7429
          %v8039 = vunpack.c.h.bf16 %v7429
          %v8040 = vunpack.c.l.bf16 %v7430
          %v8041 = vunpack.c.h.bf16 %v7430
          %v8042 = vunpack.c.l.bf16 %v7431
          %v8043 = vunpack.c.h.bf16 %v7431
          %v8044 = vunpack.c.l.bf16 %v7432
          %v8045 = vunpack.c.h.bf16 %v7432
          %v8046 = vunpack.c.l.bf16 %v7433
          %v8047 = vunpack.c.h.bf16 %v7433
          %v8048 = vunpack.c.l.bf16 %v7434
          %v8049 = vunpack.c.h.bf16 %v7434
          %v8050 = vunpack.c.l.bf16 %v7435
          %v8051 = vunpack.c.h.bf16 %v7435
          %v8052 = vunpack.c.l.bf16 %v7436
          %v8053 = vunpack.c.h.bf16 %v7436
          %v8054 = vunpack.c.l.bf16 %v7437
          %v8055 = vunpack.c.h.bf16 %v7437
          %v8056 = vunpack.c.l.bf16 %v7438
          %v8057 = vunpack.c.h.bf16 %v7438
          %v8058 = vunpack.c.l.bf16 %v7439
          %v8059 = vunpack.c.h.bf16 %v7439
          %v8060 = vunpack.c.l.bf16 %v7440
          %v8061 = vunpack.c.h.bf16 %v7440
          %v8062 = vunpack.c.l.bf16 %v7441
          %v8063 = vunpack.c.h.bf16 %v7441
          %v8064 = vunpack.c.l.bf16 %v7442
          %v8065 = vunpack.c.h.bf16 %v7442
          %v8066 = vunpack.c.l.bf16 %v7443
          %v8067 = vunpack.c.h.bf16 %v7443
          %v8068 = vunpack.c.l.bf16 %v7444
          %v8069 = vunpack.c.h.bf16 %v7444
          %v8070 = vunpack.c.l.bf16 %v7445
          %v8071 = vunpack.c.h.bf16 %v7445
          %v8072 = vunpack.c.l.bf16 %v7446
          %v8073 = vunpack.c.h.bf16 %v7446
          %v8074 = vunpack.c.l.bf16 %v7447
          %v8075 = vunpack.c.h.bf16 %v7447
          %v8076 = vunpack.c.l.bf16 %v7448
          %v8077 = vunpack.c.h.bf16 %v7448
          %v8078 = vunpack.c.l.bf16 %v7449
          %v8079 = vunpack.c.h.bf16 %v7449
          %v8080 = vunpack.c.l.bf16 %v7450
          %v8081 = vunpack.c.h.bf16 %v7450
          %v8082 = vunpack.c.l.bf16 %v7451
          %v8083 = vunpack.c.h.bf16 %v7451
          %v8084 = vunpack.c.l.bf16 %v7452
          %v8085 = vunpack.c.h.bf16 %v7452
          %v8086 = vunpack.c.l.bf16 %v7453
          %v8087 = vunpack.c.h.bf16 %v7453
          %v8088 = vunpack.c.l.bf16 %v7454
          %v8089 = vunpack.c.h.bf16 %v7454
          %v8090 = vunpack.c.l.bf16 %v7455
          %v8091 = vunpack.c.h.bf16 %v7455
          %v8092 = vunpack.c.l.bf16 %v7456
          %v8093 = vunpack.c.h.bf16 %v7456
          %v8094 = vunpack.c.l.bf16 %v7457
          %v8095 = vunpack.c.h.bf16 %v7457
          %v8096 = vunpack.c.l.bf16 %v7458
          %v8097 = vunpack.c.h.bf16 %v7458
          %v8098 = vunpack.c.l.bf16 %v7459
          %v8099 = vunpack.c.h.bf16 %v7459
          %v8100 = vunpack.c.l.bf16 %v7460
          %v8101 = vunpack.c.h.bf16 %v7460
          %v8102 = vunpack.c.l.bf16 %v7461
          %v8103 = vunpack.c.h.bf16 %v7461
          %v8104 = vunpack.c.l.bf16 %v7462
          %v8105 = vunpack.c.h.bf16 %v7462
          %v8106 = vunpack.c.l.bf16 %v7463
          %v8107 = vunpack.c.h.bf16 %v7463
          %v8108 = vunpack.c.l.bf16 %v7464
          %v8109 = vunpack.c.h.bf16 %v7464
          %v8110 = vunpack.c.l.bf16 %v7465
          %v8111 = vunpack.c.h.bf16 %v7465
          %v8112 = vunpack.c.l.bf16 %v7466
          %v8113 = vunpack.c.h.bf16 %v7466
          %v8114 = vunpack.c.l.bf16 %v7467
          %v8115 = vunpack.c.h.bf16 %v7467
          %v8116 = vunpack.c.l.bf16 %v7468
          %v8117 = vunpack.c.h.bf16 %v7468
          %v8118 = vunpack.c.l.bf16 %v7469
          %v8119 = vunpack.c.h.bf16 %v7469
          %v8120 = vunpack.c.l.bf16 %v7470
          %v8121 = vunpack.c.h.bf16 %v7470
          %v8122 = vunpack.c.l.bf16 %v7471
          %v8123 = vunpack.c.h.bf16 %v7471
          %v8124 = vunpack.c.l.bf16 %v7472
          %v8125 = vunpack.c.h.bf16 %v7472
          %v8126 = vunpack.c.l.bf16 %v7473
          %v8127 = vunpack.c.h.bf16 %v7473
          %v8128 = vunpack.c.l.bf16 %v7474
          %v8129 = vunpack.c.h.bf16 %v7474
          %v8130 = vunpack.c.l.bf16 %v7475
          %v8131 = vunpack.c.h.bf16 %v7475
          %v8132 = vunpack.c.l.bf16 %v7476
          %v8133 = vunpack.c.h.bf16 %v7476
          %v8134 = vunpack.c.l.bf16 %v7477
          %v8135 = vunpack.c.h.bf16 %v7477
          %v8136 = vunpack.c.l.bf16 %v7478
          %v8137 = vunpack.c.h.bf16 %v7478
          %v8138 = vunpack.c.l.bf16 %v7479
          %v8139 = vunpack.c.h.bf16 %v7479
          %v8140 = vunpack.c.l.bf16 %v7480
          %v8141 = vunpack.c.h.bf16 %v7480
          %v8142 = vunpack.c.l.bf16 %v7481
          %v8143 = vunpack.c.h.bf16 %v7481
          %v8144 = vunpack.c.l.bf16 %v7482
          %v8145 = vunpack.c.h.bf16 %v7482
          %v8146 = vunpack.c.l.bf16 %v7483
          %v8147 = vunpack.c.h.bf16 %v7483
          %v8148 = vunpack.c.l.bf16 %v7484
          %v8149 = vunpack.c.h.bf16 %v7484
          %v8150 = vunpack.c.l.bf16 %v7485
          %v8151 = vunpack.c.h.bf16 %v7485
          %v8152 = vunpack.c.l.bf16 %v7486
          %v8153 = vunpack.c.h.bf16 %v7486
          %v8154 = vunpack.c.l.bf16 %v7487
          %v8155 = vunpack.c.h.bf16 %v7487
          %v8156 = vunpack.c.l.bf16 %v7488
          %v8157 = vunpack.c.h.bf16 %v7488
          %v8158 = vunpack.c.l.bf16 %v7489
          %v8159 = vunpack.c.h.bf16 %v7489
          %v8160 = vunpack.c.l.bf16 %v7490
          %v8161 = vunpack.c.h.bf16 %v7490
          %v8162 = vunpack.c.l.bf16 %v7491
          %v8163 = vunpack.c.h.bf16 %v7491
          %v8164 = vunpack.c.l.bf16 %v7492
          %v8165 = vunpack.c.h.bf16 %v7492
          %v8166 = vunpack.c.l.bf16 %v7493
          %v8167 = vunpack.c.h.bf16 %v7493
          %v8168 = vunpack.c.l.bf16 %v7494
          %v8169 = vunpack.c.h.bf16 %v7494
          %v8170 = vunpack.c.l.bf16 %v7495
          %v8171 = vunpack.c.h.bf16 %v7495
          %v8172 = vunpack.c.l.bf16 %v7496
          %v8173 = vunpack.c.h.bf16 %v7496
          %v8174 = vunpack.c.l.bf16 %v7497
          %v8175 = vunpack.c.h.bf16 %v7497
          %v8176 = vunpack.c.l.bf16 %v7498
          %v8177 = vunpack.c.h.bf16 %v7498
          %v8178 = vunpack.c.l.bf16 %v7499
          %v8179 = vunpack.c.h.bf16 %v7499
          %v8180 = vunpack.c.l.bf16 %v7500
          %v8181 = vunpack.c.h.bf16 %v7500
          %v8182 = vunpack.c.l.bf16 %v7501
          %v8183 = vunpack.c.h.bf16 %v7501
          %v8184 = vunpack.c.l.bf16 %v7502
          %v8185 = vunpack.c.h.bf16 %v7502
          %v8186 = vunpack.c.l.bf16 %v7503
          %v8187 = vunpack.c.h.bf16 %v7503
          %v8188 = vunpack.c.l.bf16 %v7504
          %v8189 = vunpack.c.h.bf16 %v7504
          %v8190 = vunpack.c.l.bf16 %v7505
          %v8191 = vunpack.c.h.bf16 %v7505
          %v8192 = vunpack.c.l.bf16 %v7506
          %v8193 = vunpack.c.h.bf16 %v7506
          %v8194 = vunpack.c.l.bf16 %v7507
          %v8195 = vunpack.c.h.bf16 %v7507
          %v8196 = vunpack.c.l.bf16 %v7508
          %v8197 = vunpack.c.h.bf16 %v7508
          %v8198 = vunpack.c.l.bf16 %v7509
          %v8199 = vunpack.c.h.bf16 %v7509
          %v8200 = vunpack.c.l.bf16 %v7510
          %v8201 = vunpack.c.h.bf16 %v7510
          %v8202 = vunpack.c.l.bf16 %v7511
          %v8203 = vunpack.c.h.bf16 %v7511
          %v8204 = vunpack.c.l.bf16 %v7512
          %v8205 = vunpack.c.h.bf16 %v7512
          %v8206 = vunpack.c.l.bf16 %v7513
          %v8207 = vunpack.c.h.bf16 %v7513
          %v8208 = vunpack.c.l.bf16 %v7514
          %v8209 = vunpack.c.h.bf16 %v7514
          %v8210 = vunpack.c.l.bf16 %v7515
          %v8211 = vunpack.c.h.bf16 %v7515
          %v8212 = vunpack.c.l.bf16 %v7516
          %v8213 = vunpack.c.h.bf16 %v7516
          %v8214 = vunpack.c.l.bf16 %v7517
          %v8215 = vunpack.c.h.bf16 %v7517
          %v8216 = vunpack.c.l.bf16 %v7518
          %v8217 = vunpack.c.h.bf16 %v7518
          %v8218 = vunpack.c.l.bf16 %v7519
          %v8219 = vunpack.c.h.bf16 %v7519
          %v8220 = vunpack.c.l.bf16 %v7520
          %v8221 = vunpack.c.h.bf16 %v7520
          %v8222 = vunpack.c.l.bf16 %v7521
          %v8223 = vunpack.c.h.bf16 %v7521
          %v8224 = vunpack.c.l.bf16 %v7522
          %v8225 = vunpack.c.h.bf16 %v7522
          %v8226 = vunpack.c.l.bf16 %v7523
          %v8227 = vunpack.c.h.bf16 %v7523
          %v8228 = vunpack.c.l.bf16 %v7524
          %v8229 = vunpack.c.h.bf16 %v7524
          %v8230 = vunpack.c.l.bf16 %v7525
          %v8231 = vunpack.c.h.bf16 %v7525
          %v8232 = vunpack.c.l.bf16 %v7526
          %v8233 = vunpack.c.h.bf16 %v7526
          %v8234 = vunpack.c.l.bf16 %v7527
          %v8235 = vunpack.c.h.bf16 %v7527
          %v8236 = vunpack.c.l.bf16 %v7528
          %v8237 = vunpack.c.h.bf16 %v7528
          %v8238 = vunpack.c.l.bf16 %v7529
          %v8239 = vunpack.c.h.bf16 %v7529
          %v8240 = vunpack.c.l.bf16 %v7530
          %v8241 = vunpack.c.h.bf16 %v7530
          %v8242 = vunpack.c.l.bf16 %v7531
          %v8243 = vunpack.c.h.bf16 %v7531
          %v8244 = vunpack.c.l.bf16 %v7532
          %v8245 = vunpack.c.h.bf16 %v7532
          %v8246 = vunpack.c.l.bf16 %v7533
          %v8247 = vunpack.c.h.bf16 %v7533
          %v8248 = vunpack.c.l.bf16 %v7534
          %v8249 = vunpack.c.h.bf16 %v7534
          %v8250 = vunpack.c.l.bf16 %v7535
          %v8251 = vunpack.c.h.bf16 %v7535
          %v8252 = vunpack.c.l.bf16 %v7536
          %v8253 = vunpack.c.h.bf16 %v7536
          %v8254 = vunpack.c.l.bf16 %v7537
          %v8255 = vunpack.c.h.bf16 %v7537
          %v8256 = vunpack.c.l.bf16 %v7538
          %v8257 = vunpack.c.h.bf16 %v7538
          %v8258 = vunpack.c.l.bf16 %v7539
          %v8259 = vunpack.c.h.bf16 %v7539
          %v8260 = vunpack.c.l.bf16 %v7540
          %v8261 = vunpack.c.h.bf16 %v7540
          %v8262 = vunpack.c.l.bf16 %v7541
          %v8263 = vunpack.c.h.bf16 %v7541
          %v8264 = vunpack.c.l.bf16 %v7542
          %v8265 = vunpack.c.h.bf16 %v7542
          %v8266 = vunpack.c.l.bf16 %v7543
          %v8267 = vunpack.c.h.bf16 %v7543
          %v8268 = vunpack.c.l.bf16 %v7544
          %v8269 = vunpack.c.h.bf16 %v7544
          %v8270 = vunpack.c.l.bf16 %v7545
          %v8271 = vunpack.c.h.bf16 %v7545
          %v8272 = vunpack.c.l.bf16 %v7546
          %v8273 = vunpack.c.h.bf16 %v7546
          %v8274 = vunpack.c.l.bf16 %v7547
          %v8275 = vunpack.c.h.bf16 %v7547
          %v8276 = vunpack.c.l.bf16 %v7548
          %v8277 = vunpack.c.h.bf16 %v7548
          %v8278 = vunpack.c.l.bf16 %v7549
          %v8279 = vunpack.c.h.bf16 %v7549
          %v8280 = vunpack.c.l.bf16 %v7550
          %v8281 = vunpack.c.h.bf16 %v7550
          %v8282 = vunpack.c.l.bf16 %v7551
          %v8283 = vunpack.c.h.bf16 %v7551
          %v8284 = vunpack.c.l.bf16 %v7552
          %v8285 = vunpack.c.h.bf16 %v7552
          %v8286 = vunpack.c.l.bf16 %v7553
          %v8287 = vunpack.c.h.bf16 %v7553
          %v8288 = vunpack.c.l.bf16 %v7554
          %v8289 = vunpack.c.h.bf16 %v7554
          %v8290 = vunpack.c.l.bf16 %v7555
          %v8291 = vunpack.c.h.bf16 %v7555
          %v8292 = vunpack.c.l.bf16 %v7556
          %v8293 = vunpack.c.h.bf16 %v7556
          %v8294 = vunpack.c.l.bf16 %v7557
          %v8295 = vunpack.c.h.bf16 %v7557
          %v8296 = vunpack.c.l.bf16 %v7558
          %v8297 = vunpack.c.h.bf16 %v7558
          %v8298 = vunpack.c.l.bf16 %v7559
          %v8299 = vunpack.c.h.bf16 %v7559
          %v8300 = vunpack.c.l.bf16 %v7560
          %v8301 = vunpack.c.h.bf16 %v7560
          %v8302 = vunpack.c.l.bf16 %v7561
          %v8303 = vunpack.c.h.bf16 %v7561
          %v8304 = vunpack.c.l.bf16 %v7562
          %v8305 = vunpack.c.h.bf16 %v7562
          %v8306 = vunpack.c.l.bf16 %v7563
          %v8307 = vunpack.c.h.bf16 %v7563
          %v8308 = vunpack.c.l.bf16 %v7564
          %v8309 = vunpack.c.h.bf16 %v7564
          %v8310 = vunpack.c.l.bf16 %v7565
          %v8311 = vunpack.c.h.bf16 %v7565
          %v8312 = vunpack.c.l.bf16 %v7566
          %v8313 = vunpack.c.h.bf16 %v7566
          %v8314 = vunpack.c.l.bf16 %v7567
          %v8315 = vunpack.c.h.bf16 %v7567
          %v8316 = vunpack.c.l.bf16 %v7568
          %v8317 = vunpack.c.h.bf16 %v7568
          %v8318 = vunpack.c.l.bf16 %v7569
          %v8319 = vunpack.c.h.bf16 %v7569
          %v8320 = vunpack.c.l.bf16 %v7570
          %v8321 = vunpack.c.h.bf16 %v7570
          %v8322 = vunpack.c.l.bf16 %v7571
          %v8323 = vunpack.c.h.bf16 %v7571
          %v8324 = vunpack.c.l.bf16 %v7572
          %v8325 = vunpack.c.h.bf16 %v7572
          %v8326 = vunpack.c.l.bf16 %v7573
          %v8327 = vunpack.c.h.bf16 %v7573
          %v8328 = vunpack.c.l.bf16 %v7574
          %v8329 = vunpack.c.h.bf16 %v7574
          %v8330 = vunpack.c.l.bf16 %v7575
          %v8331 = vunpack.c.h.bf16 %v7575
          %v8332 = vunpack.c.l.bf16 %v7576
          %v8333 = vunpack.c.h.bf16 %v7576
          %v8334 = vunpack.c.l.bf16 %v7577
          %v8335 = vunpack.c.h.bf16 %v7577
          %v8336 = vunpack.c.l.bf16 %v7578
          %v8337 = vunpack.c.h.bf16 %v7578
          %v8338 = vunpack.c.l.bf16 %v7579
          %v8339 = vunpack.c.h.bf16 %v7579
          %v8340 = vunpack.c.l.bf16 %v7580
          %v8341 = vunpack.c.h.bf16 %v7580
          %v8342 = vunpack.c.l.bf16 %v7581
          %v8343 = vunpack.c.h.bf16 %v7581
          %v8344 = vunpack.c.l.bf16 %v7582
          %v8345 = vunpack.c.h.bf16 %v7582
          %v8346 = vunpack.c.l.bf16 %v7583
          %v8347 = vunpack.c.h.bf16 %v7583
          %v8348 = vunpack.c.l.bf16 %v7584
          %v8349 = vunpack.c.h.bf16 %v7584
          %v8350 = vunpack.c.l.bf16 %v7585
          %v8351 = vunpack.c.h.bf16 %v7585
          %v8352 = vunpack.c.l.bf16 %v7586
          %v8353 = vunpack.c.h.bf16 %v7586
          %v8354 = vunpack.c.l.bf16 %v7587
          %v8355 = vunpack.c.h.bf16 %v7587
          %8356 = vmatprep.subr.mxu0 %v7589
          %8357 = vmatpush1.msra.mxu0 %v7588
          %8358 = vmatprep.subr.mxu0 %v7595
          %8359 = vmatpush1.msra.mxu0 %v7594
          %8360 = vmatprep.subr.mxu0 %v7601
          %8361 = vmatpush1.msra.mxu0 %v7600
          %8362 = vmatprep.subr.mxu0 %v7607
          %8363 = vmatpush1.msra.mxu0 %v7606
          %8364 = vmatprep.subr.mxu0 %v7613
          %8365 = vmatpush1.msra.mxu0 %v7612
          %8366 = vmatprep.subr.mxu0 %v7619
          %8367 = vmatpush1.msra.mxu0 %v7618
          %8368 = vmatprep.subr.mxu0 %v7625
          %8369 = vmatpush1.msra.mxu0 %v7624
          %8370 = vmatprep.subr.mxu0 %v7631
          %8371 = vmatpush1.msra.mxu0 %v7630
          %8372 = vmatprep.subr.mxu0 %v7637
          %8373 = vmatpush1.msra.mxu0 %v7636
          %8374 = vmatprep.subr.mxu0 %v7643
          %8375 = vmatpush1.msra.mxu0 %v7642
          %8376 = vmatprep.subr.mxu0 %v7649
          %8377 = vmatpush1.msra.mxu0 %v7648
          %8378 = vmatprep.subr.mxu0 %v7655
          %8379 = vmatpush1.msra.mxu0 %v7654
          %8380 = vmatprep.subr.mxu0 %v7661
          %8381 = vmatpush1.msra.mxu0 %v7660
          %8382 = vmatprep.subr.mxu0 %v7667
          %8383 = vmatpush1.msra.mxu0 %v7666
          %8384 = vmatprep.subr.mxu0 %v7673
          %8385 = vmatpush1.msra.mxu0 %v7672
          %8386 = vmatprep.subr.mxu0 %v7679
          %8387 = vmatpush1.msra.mxu0 %v7678
          %8388 = vmatprep.subr.mxu0 %v7685
          %8389 = vmatpush1.msra.mxu0 %v7684
          %8390 = vmatprep.subr.mxu0 %v7691
          %8391 = vmatpush1.msra.mxu0 %v7690
          %8392 = vmatprep.subr.mxu0 %v7697
          %8393 = vmatpush1.msra.mxu0 %v7696
          %8394 = vmatprep.subr.mxu0 %v7703
          %8395 = vmatpush1.msra.mxu0 %v7702
          %8396 = vmatprep.subr.mxu0 %v7709
          %8397 = vmatpush1.msra.mxu0 %v7708
          %8398 = vmatprep.subr.mxu0 %v7715
          %8399 = vmatpush1.msra.mxu0 %v7714
          %8400 = vmatprep.subr.mxu0 %v7721
          %8401 = vmatpush1.msra.mxu0 %v7720
          %8402 = vmatprep.subr.mxu0 %v7727
          %8403 = vmatpush1.msra.mxu0 %v7726
          %8404 = vmatprep.subr.mxu0 %v7733
          %8405 = vmatpush1.msra.mxu0 %v7732
          %8406 = vmatprep.subr.mxu0 %v7739
          %8407 = vmatpush1.msra.mxu0 %v7738
          %8408 = vmatprep.subr.mxu0 %v7745
          %8409 = vmatpush1.msra.mxu0 %v7744
          %8410 = vmatprep.subr.mxu0 %v7751
          %8411 = vmatpush1.msra.mxu0 %v7750
          %8412 = vmatprep.subr.mxu0 %v7757
          %8413 = vmatpush1.msra.mxu0 %v7756
          %8414 = vmatprep.subr.mxu0 %v7763
          %8415 = vmatpush1.msra.mxu0 %v7762
          %8416 = vmatprep.subr.mxu0 %v7769
          %8417 = vmatpush1.msra.mxu0 %v7768
          %8418 = vmatprep.subr.mxu0 %v7775
          %8419 = vmatpush1.msra.mxu0 %v7774
          %8420 = vmatprep.mubr.f32.mxu0 %v7187
          %8421 = vmatmul.mubr.f32.gmra.mrb[0].mxu0 %v7186
          %v8422 = vpop.f32.mrb[0].mxu0
          %v8423 = vadd.f32 0.0, %v8422
          %v8424 = vpop.f32.mrb[0].mxu0
          %v8425 = vadd.f32 0.0, %v8424
          %8426 = vdwg.mxu0
          %8427 = vmatprep.subr.mxu0 %v7781
          %8428 = vmatpush1.msra.mxu0 %v7780
          %8429 = vmatprep.subr.mxu0 %v7787
          %8430 = vmatpush1.msra.mxu0 %v7786
          %8431 = vmatprep.subr.mxu0 %v7793
          %8432 = vmatpush1.msra.mxu0 %v7792
          %8433 = vmatprep.subr.mxu0 %v7799
          %8434 = vmatpush1.msra.mxu0 %v7798
          %8435 = vmatprep.subr.mxu0 %v7805
          %8436 = vmatpush1.msra.mxu0 %v7804
          %8437 = vmatprep.subr.mxu0 %v7811
          %8438 = vmatpush1.msra.mxu0 %v7810
          %8439 = vmatprep.subr.mxu0 %v7817
          %8440 = vmatpush1.msra.mxu0 %v7816
          %8441 = vmatprep.subr.mxu0 %v7823
          %8442 = vmatpush1.msra.mxu0 %v7822
          %8443 = vmatprep.subr.mxu0 %v7829
          %8444 = vmatpush1.msra.mxu0 %v7828
          %8445 = vmatprep.subr.mxu0 %v7835
          %8446 = vmatpush1.msra.mxu0 %v7834
          %8447 = vmatprep.subr.mxu0 %v7841
          %8448 = vmatpush1.msra.mxu0 %v7840
          %8449 = vmatprep.subr.mxu0 %v7847
          %8450 = vmatpush1.msra.mxu0 %v7846
          %8451 = vmatprep.subr.mxu0 %v7853
          %8452 = vmatpush1.msra.mxu0 %v7852
          %8453 = vmatprep.subr.mxu0 %v7859
          %8454 = vmatpush1.msra.mxu0 %v7858
          %8455 = vmatprep.subr.mxu0 %v7865
          %8456 = vmatpush1.msra.mxu0 %v7864
          %8457 = vmatprep.subr.mxu0 %v7871
          %8458 = vmatpush1.msra.mxu0 %v7870
          %8459 = vmatprep.subr.mxu0 %v7877
          %8460 = vmatpush1.msra.mxu0 %v7876
          %8461 = vmatprep.subr.mxu0 %v7883
          %8462 = vmatpush1.msra.mxu0 %v7882
          %8463 = vmatprep.subr.mxu0 %v7889
          %8464 = vmatpush1.msra.mxu0 %v7888
          %8465 = vmatprep.subr.mxu0 %v7895
          %8466 = vmatpush1.msra.mxu0 %v7894
          %8467 = vmatprep.subr.mxu0 %v7901
          %8468 = vmatpush1.msra.mxu0 %v7900
          %8469 = vmatprep.subr.mxu0 %v7907
          %8470 = vmatpush1.msra.mxu0 %v7906
          %8471 = vmatprep.subr.mxu0 %v7913
          %8472 = vmatpush1.msra.mxu0 %v7912
          %8473 = vmatprep.subr.mxu0 %v7919
          %8474 = vmatpush1.msra.mxu0 %v7918
          %8475 = vmatprep.subr.mxu0 %v7925
          %8476 = vmatpush1.msra.mxu0 %v7924
          %8477 = vmatprep.subr.mxu0 %v7931
          %8478 = vmatpush1.msra.mxu0 %v7930
          %8479 = vmatprep.subr.mxu0 %v7937
          %8480 = vmatpush1.msra.mxu0 %v7936
          %8481 = vmatprep.subr.mxu0 %v7943
          %8482 = vmatpush1.msra.mxu0 %v7942
          %8483 = vmatprep.subr.mxu0 %v7949
          %8484 = vmatpush1.msra.mxu0 %v7948
          %8485 = vmatprep.subr.mxu0 %v7955
          %8486 = vmatpush1.msra.mxu0 %v7954
          %8487 = vmatprep.subr.mxu0 %v7961
          %8488 = vmatpush1.msra.mxu0 %v7960
          %8489 = vmatprep.subr.mxu0 %v7967
          %8490 = vmatpush1.msra.mxu0 %v7966
          %8491 = vmatprep.mubr.f32.mxu0 %v7189
          %8492 = vmatmul.mubr.f32.gmra.mrb[0].mxu0 %v7188
          %v8493 = vpop.f32.mrb[0].mxu0
          %v8494 = vadd.f32 %v8423, %v8493
          %v8495 = vpop.f32.mrb[0].mxu0
          %v8496 = vadd.f32 %v8425, %v8495
          %8497 = vdwg.mxu0
          %8498 = vmatprep.subr.mxu0 %v7973
          %8499 = vmatpush1.msra.mxu0 %v7972
          %8500 = vmatprep.subr.mxu0 %v7979
          %8501 = vmatpush1.msra.mxu0 %v7978
          %8502 = vmatprep.subr.mxu0 %v7985
          %8503 = vmatpush1.msra.mxu0 %v7984
          %8504 = vmatprep.subr.mxu0 %v7991
          %8505 = vmatpush1.msra.mxu0 %v7990
          %8506 = vmatprep.subr.mxu0 %v7997
          %8507 = vmatpush1.msra.mxu0 %v7996
          %8508 = vmatprep.subr.mxu0 %v8003
          %8509 = vmatpush1.msra.mxu0 %v8002
          %8510 = vmatprep.subr.mxu0 %v8009
          %8511 = vmatpush1.msra.mxu0 %v8008
          %8512 = vmatprep.subr.mxu0 %v8015
          %8513 = vmatpush1.msra.mxu0 %v8014
          %8514 = vmatprep.subr.mxu0 %v8021
          %8515 = vmatpush1.msra.mxu0 %v8020
          %8516 = vmatprep.subr.mxu0 %v8027
          %8517 = vmatpush1.msra.mxu0 %v8026
          %8518 = vmatprep.subr.mxu0 %v8033
          %8519 = vmatpush1.msra.mxu0 %v8032
          %8520 = vmatprep.subr.mxu0 %v8039
          %8521 = vmatpush1.msra.mxu0 %v8038
          %8522 = vmatprep.subr.mxu0 %v8045
          %8523 = vmatpush1.msra.mxu0 %v8044
          %8524 = vmatprep.subr.mxu0 %v8051
          %8525 = vmatpush1.msra.mxu0 %v8050
          %8526 = vmatprep.subr.mxu0 %v8057
          %8527 = vmatpush1.msra.mxu0 %v8056
          %8528 = vmatprep.subr.mxu0 %v8063
          %8529 = vmatpush1.msra.mxu0 %v8062
          %8530 = vmatprep.subr.mxu0 %v8069
          %8531 = vmatpush1.msra.mxu0 %v8068
          %8532 = vmatprep.subr.mxu0 %v8075
          %8533 = vmatpush1.msra.mxu0 %v8074
          %8534 = vmatprep.subr.mxu0 %v8081
          %8535 = vmatpush1.msra.mxu0 %v8080
          %8536 = vmatprep.subr.mxu0 %v8087
          %8537 = vmatpush1.msra.mxu0 %v8086
          %8538 = vmatprep.subr.mxu0 %v8093
          %8539 = vmatpush1.msra.mxu0 %v8092
          %8540 = vmatprep.subr.mxu0 %v8099
          %8541 = vmatpush1.msra.mxu0 %v8098
          %8542 = vmatprep.subr.mxu0 %v8105
          %8543 = vmatpush1.msra.mxu0 %v8104
          %8544 = vmatprep.subr.mxu0 %v8111
          %8545 = vmatpush1.msra.mxu0 %v8110
          %8546 = vmatprep.subr.mxu0 %v8117
          %8547 = vmatpush1.msra.mxu0 %v8116
          %8548 = vmatprep.subr.mxu0 %v8123
          %8549 = vmatpush1.msra.mxu0 %v8122
          %8550 = vmatprep.subr.mxu0 %v8129
          %8551 = vmatpush1.msra.mxu0 %v8128
          %8552 = vmatprep.subr.mxu0 %v8135
          %8553 = vmatpush1.msra.mxu0 %v8134
          %8554 = vmatprep.subr.mxu0 %v8141
          %8555 = vmatpush1.msra.mxu0 %v8140
          %8556 = vmatprep.subr.mxu0 %v8147
          %8557 = vmatpush1.msra.mxu0 %v8146
          %8558 = vmatprep.subr.mxu0 %v8153
          %8559 = vmatpush1.msra.mxu0 %v8152
          %8560 = vmatprep.subr.mxu0 %v8159
          %8561 = vmatpush1.msra.mxu0 %v8158
          %8562 = vmatprep.mubr.f32.mxu0 %v7191
          %8563 = vmatmul.mubr.f32.gmra.mrb[0].mxu0 %v7190
          %v8564 = vpop.f32.mrb[0].mxu0
          %v8565 = vadd.f32 %v8494, %v8564
          %v8566 = vpop.f32.mrb[0].mxu0
          %v8567 = vadd.f32 %v8496, %v8566
          %8568 = vdwg.mxu0
          %8569 = vmatprep.subr.mxu0 %v8165
          %8570 = vmatpush1.msra.mxu0 %v8164
          %8571 = vmatprep.subr.mxu0 %v8171
          %8572 = vmatpush1.msra.mxu0 %v8170
          %8573 = vmatprep.subr.mxu0 %v8177
          %8574 = vmatpush1.msra.mxu0 %v8176
          %8575 = vmatprep.subr.mxu0 %v8183
          %8576 = vmatpush1.msra.mxu0 %v8182
          %8577 = vmatprep.subr.mxu0 %v8189
          %8578 = vmatpush1.msra.mxu0 %v8188
          %8579 = vmatprep.subr.mxu0 %v8195
          %8580 = vmatpush1.msra.mxu0 %v8194
          %8581 = vmatprep.subr.mxu0 %v8201
          %8582 = vmatpush1.msra.mxu0 %v8200
          %8583 = vmatprep.subr.mxu0 %v8207
          %8584 = vmatpush1.msra.mxu0 %v8206
          %8585 = vmatprep.subr.mxu0 %v8213
          %8586 = vmatpush1.msra.mxu0 %v8212
          %8587 = vmatprep.subr.mxu0 %v8219
          %8588 = vmatpush1.msra.mxu0 %v8218
          %8589 = vmatprep.subr.mxu0 %v8225
          %8590 = vmatpush1.msra.mxu0 %v8224
          %8591 = vmatprep.subr.mxu0 %v8231
          %8592 = vmatpush1.msra.mxu0 %v8230
          %8593 = vmatprep.subr.mxu0 %v8237
          %8594 = vmatpush1.msra.mxu0 %v8236
          %8595 = vmatprep.subr.mxu0 %v8243
          %8596 = vmatpush1.msra.mxu0 %v8242
          %8597 = vmatprep.subr.mxu0 %v8249
          %8598 = vmatpush1.msra.mxu0 %v8248
          %8599 = vmatprep.subr.mxu0 %v8255
          %8600 = vmatpush1.msra.mxu0 %v8254
          %8601 = vmatprep.subr.mxu0 %v8261
          %8602 = vmatpush1.msra.mxu0 %v8260
          %8603 = vmatprep.subr.mxu0 %v8267
          %8604 = vmatpush1.msra.mxu0 %v8266
          %8605 = vmatprep.subr.mxu0 %v8273
          %8606 = vmatpush1.msra.mxu0 %v8272
          %8607 = vmatprep.subr.mxu0 %v8279
          %8608 = vmatpush1.msra.mxu0 %v8278
          %8609 = vmatprep.subr.mxu0 %v8285
          %8610 = vmatpush1.msra.mxu0 %v8284
          %8611 = vmatprep.subr.mxu0 %v8291
          %8612 = vmatpush1.msra.mxu0 %v8290
          %8613 = vmatprep.subr.mxu0 %v8297
          %8614 = vmatpush1.msra.mxu0 %v8296
          %8615 = vmatprep.subr.mxu0 %v8303
          %8616 = vmatpush1.msra.mxu0 %v8302
          %8617 = vmatprep.subr.mxu0 %v8309
          %8618 = vmatpush1.msra.mxu0 %v8308
          %8619 = vmatprep.subr.mxu0 %v8315
          %8620 = vmatpush1.msra.mxu0 %v8314
          %8621 = vmatprep.subr.mxu0 %v8321
          %8622 = vmatpush1.msra.mxu0 %v8320
          %8623 = vmatprep.subr.mxu0 %v8327
          %8624 = vmatpush1.msra.mxu0 %v8326
          %8625 = vmatprep.subr.mxu0 %v8333
          %8626 = vmatpush1.msra.mxu0 %v8332
          %8627 = vmatprep.subr.mxu0 %v8339
          %8628 = vmatpush1.msra.mxu0 %v8338
          %8629 = vmatprep.subr.mxu0 %v8345
          %8630 = vmatpush1.msra.mxu0 %v8344
          %8631 = vmatprep.subr.mxu0 %v8351
          %8632 = vmatpush1.msra.mxu0 %v8350
          %8633 = vmatprep.mubr.f32.mxu0 %v7193
          %8634 = vmatmul.mubr.f32.gmra.mrb[0].mxu0 %v7192
          %v8635 = vpop.f32.mrb[0].mxu0
          %v8636 = vadd.f32 %v8565, %v8635
          %v8637 = vpop.f32.mrb[0].mxu0
          %v8638 = vadd.f32 %v8567, %v8637
          %8639 = vdwg.mxu0
          %8640 = vmatprep.subr.mxu0 %v7591
          %8641 = vmatpush1.msra.mxu0 %v7590
          %8642 = vmatprep.subr.mxu0 %v7597
          %8643 = vmatpush1.msra.mxu0 %v7596
          %8644 = vmatprep.subr.mxu0 %v7603
          %8645 = vmatpush1.msra.mxu0 %v7602
          %8646 = vmatprep.subr.mxu0 %v7609
          %8647 = vmatpush1.msra.mxu0 %v7608
          %8648 = vmatprep.subr.mxu0 %v7615
          %8649 = vmatpush1.msra.mxu0 %v7614
          %8650 = vmatprep.subr.mxu0 %v7621
          %8651 = vmatpush1.msra.mxu0 %v7620
          %8652 = vmatprep.subr.mxu0 %v7627
          %8653 = vmatpush1.msra.mxu0 %v7626
          %8654 = vmatprep.subr.mxu0 %v7633
          %8655 = vmatpush1.msra.mxu0 %v7632
          %8656 = vmatprep.subr.mxu0 %v7639
          %8657 = vmatpush1.msra.mxu0 %v7638
          %8658 = vmatprep.subr.mxu0 %v7645
          %8659 = vmatpush1.msra.mxu0 %v7644
          %8660 = vmatprep.subr.mxu0 %v7651
          %8661 = vmatpush1.msra.mxu0 %v7650
          %8662 = vmatprep.subr.mxu0 %v7657
          %8663 = vmatpush1.msra.mxu0 %v7656
          %8664 = vmatprep.subr.mxu0 %v7663
          %8665 = vmatpush1.msra.mxu0 %v7662
          %8666 = vmatprep.subr.mxu0 %v7669
          %8667 = vmatpush1.msra.mxu0 %v7668
          %8668 = vmatprep.subr.mxu0 %v7675
          %8669 = vmatpush1.msra.mxu0 %v7674
          %8670 = vmatprep.subr.mxu0 %v7681
          %8671 = vmatpush1.msra.mxu0 %v7680
          %8672 = vmatprep.subr.mxu0 %v7687
          %8673 = vmatpush1.msra.mxu0 %v7686
          %8674 = vmatprep.subr.mxu0 %v7693
          %8675 = vmatpush1.msra.mxu0 %v7692
          %8676 = vmatprep.subr.mxu0 %v7699
          %8677 = vmatpush1.msra.mxu0 %v7698
          %8678 = vmatprep.subr.mxu0 %v7705
          %8679 = vmatpush1.msra.mxu0 %v7704
          %8680 = vmatprep.subr.mxu0 %v7711
          %8681 = vmatpush1.msra.mxu0 %v7710
          %8682 = vmatprep.subr.mxu0 %v7717
          %8683 = vmatpush1.msra.mxu0 %v7716
          %8684 = vmatprep.subr.mxu0 %v7723
          %8685 = vmatpush1.msra.mxu0 %v7722
          %8686 = vmatprep.subr.mxu0 %v7729
          %8687 = vmatpush1.msra.mxu0 %v7728
          %8688 = vmatprep.subr.mxu0 %v7735
          %8689 = vmatpush1.msra.mxu0 %v7734
          %8690 = vmatprep.subr.mxu0 %v7741
          %8691 = vmatpush1.msra.mxu0 %v7740
          %8692 = vmatprep.subr.mxu0 %v7747
          %8693 = vmatpush1.msra.mxu0 %v7746
          %8694 = vmatprep.subr.mxu0 %v7753
          %8695 = vmatpush1.msra.mxu0 %v7752
          %8696 = vmatprep.subr.mxu0 %v7759
          %8697 = vmatpush1.msra.mxu0 %v7758
          %8698 = vmatprep.subr.mxu0 %v7765
          %8699 = vmatpush1.msra.mxu0 %v7764
          %8700 = vmatprep.subr.mxu0 %v7771
          %8701 = vmatpush1.msra.mxu0 %v7770
          %8702 = vmatprep.subr.mxu0 %v7777
          %8703 = vmatpush1.msra.mxu0 %v7776
          %8704 = vmatprep.mubr.f32.mxu0 %v7187
          %8705 = vmatmul.mubr.f32.gmra.mrb[0].mxu0 %v7186
          %v8706 = vpop.f32.mrb[0].mxu0
          %v8707 = vadd.f32 0.0, %v8706
          %v8708 = vpop.f32.mrb[0].mxu0
          %v8709 = vadd.f32 0.0, %v8708
          %8710 = vdwg.mxu0
          %8711 = vmatprep.subr.mxu0 %v7783
          %8712 = vmatpush1.msra.mxu0 %v7782
          %8713 = vmatprep.subr.mxu0 %v7789
          %8714 = vmatpush1.msra.mxu0 %v7788
          %8715 = vmatprep.subr.mxu0 %v7795
          %8716 = vmatpush1.msra.mxu0 %v7794
          %8717 = vmatprep.subr.mxu0 %v7801
          %8718 = vmatpush1.msra.mxu0 %v7800
          %8719 = vmatprep.subr.mxu0 %v7807
          %8720 = vmatpush1.msra.mxu0 %v7806
          %8721 = vmatprep.subr.mxu0 %v7813
          %8722 = vmatpush1.msra.mxu0 %v7812
          %8723 = vmatprep.subr.mxu0 %v7819
          %8724 = vmatpush1.msra.mxu0 %v7818
          %8725 = vmatprep.subr.mxu0 %v7825
          %8726 = vmatpush1.msra.mxu0 %v7824
          %8727 = vmatprep.subr.mxu0 %v7831
          %8728 = vmatpush1.msra.mxu0 %v7830
          %8729 = vmatprep.subr.mxu0 %v7837
          %8730 = vmatpush1.msra.mxu0 %v7836
          %8731 = vmatprep.subr.mxu0 %v7843
          %8732 = vmatpush1.msra.mxu0 %v7842
          %8733 = vmatprep.subr.mxu0 %v7849
          %8734 = vmatpush1.msra.mxu0 %v7848
          %8735 = vmatprep.subr.mxu0 %v7855
          %8736 = vmatpush1.msra.mxu0 %v7854
          %8737 = vmatprep.subr.mxu0 %v7861
          %8738 = vmatpush1.msra.mxu0 %v7860
          %8739 = vmatprep.subr.mxu0 %v7867
          %8740 = vmatpush1.msra.mxu0 %v7866
          %8741 = vmatprep.subr.mxu0 %v7873
          %8742 = vmatpush1.msra.mxu0 %v7872
          %8743 = vmatprep.subr.mxu0 %v7879
          %8744 = vmatpush1.msra.mxu0 %v7878
          %8745 = vmatprep.subr.mxu0 %v7885
          %8746 = vmatpush1.msra.mxu0 %v7884
          %8747 = vmatprep.subr.mxu0 %v7891
          %8748 = vmatpush1.msra.mxu0 %v7890
          %8749 = vmatprep.subr.mxu0 %v7897
          %8750 = vmatpush1.msra.mxu0 %v7896
          %8751 = vmatprep.subr.mxu0 %v7903
          %8752 = vmatpush1.msra.mxu0 %v7902
          %8753 = vmatprep.subr.mxu0 %v7909
          %8754 = vmatpush1.msra.mxu0 %v7908
          %8755 = vmatprep.subr.mxu0 %v7915
          %8756 = vmatpush1.msra.mxu0 %v7914
          %8757 = vmatprep.subr.mxu0 %v7921
          %8758 = vmatpush1.msra.mxu0 %v7920
          %8759 = vmatprep.subr.mxu0 %v7927
          %8760 = vmatpush1.msra.mxu0 %v7926
          %8761 = vmatprep.subr.mxu0 %v7933
          %8762 = vmatpush1.msra.mxu0 %v7932
          %8763 = vmatprep.subr.mxu0 %v7939
          %8764 = vmatpush1.msra.mxu0 %v7938
          %8765 = vmatprep.subr.mxu0 %v7945
          %8766 = vmatpush1.msra.mxu0 %v7944
          %8767 = vmatprep.subr.mxu0 %v7951
          %8768 = vmatpush1.msra.mxu0 %v7950
          %8769 = vmatprep.subr.mxu0 %v7957
          %8770 = vmatpush1.msra.mxu0 %v7956
          %8771 = vmatprep.subr.mxu0 %v7963
          %8772 = vmatpush1.msra.mxu0 %v7962
          %8773 = vmatprep.subr.mxu0 %v7969
          %8774 = vmatpush1.msra.mxu0 %v7968
          %8775 = vmatprep.mubr.f32.mxu0 %v7189
          %8776 = vmatmul.mubr.f32.gmra.mrb[0].mxu0 %v7188
          %v8777 = vpop.f32.mrb[0].mxu0
          %v8778 = vadd.f32 %v8707, %v8777
          %v8779 = vpop.f32.mrb[0].mxu0
          %v8780 = vadd.f32 %v8709, %v8779
          %8781 = vdwg.mxu0
          %8782 = vmatprep.subr.mxu0 %v7975
          %8783 = vmatpush1.msra.mxu0 %v7974
          %8784 = vmatprep.subr.mxu0 %v7981
          %8785 = vmatpush1.msra.mxu0 %v7980
          %8786 = vmatprep.subr.mxu0 %v7987
          %8787 = vmatpush1.msra.mxu0 %v7986
          %8788 = vmatprep.subr.mxu0 %v7993
          %8789 = vmatpush1.msra.mxu0 %v7992
          %8790 = vmatprep.subr.mxu0 %v7999
          %8791 = vmatpush1.msra.mxu0 %v7998
          %8792 = vmatprep.subr.mxu0 %v8005
          %8793 = vmatpush1.msra.mxu0 %v8004
          %8794 = vmatprep.subr.mxu0 %v8011
          %8795 = vmatpush1.msra.mxu0 %v8010
          %8796 = vmatprep.subr.mxu0 %v8017
          %8797 = vmatpush1.msra.mxu0 %v8016
          %8798 = vmatprep.subr.mxu0 %v8023
          %8799 = vmatpush1.msra.mxu0 %v8022
          %8800 = vmatprep.subr.mxu0 %v8029
          %8801 = vmatpush1.msra.mxu0 %v8028
          %8802 = vmatprep.subr.mxu0 %v8035
          %8803 = vmatpush1.msra.mxu0 %v8034
          %8804 = vmatprep.subr.mxu0 %v8041
          %8805 = vmatpush1.msra.mxu0 %v8040
          %8806 = vmatprep.subr.mxu0 %v8047
          %8807 = vmatpush1.msra.mxu0 %v8046
          %8808 = vmatprep.subr.mxu0 %v8053
          %8809 = vmatpush1.msra.mxu0 %v8052
          %8810 = vmatprep.subr.mxu0 %v8059
          %8811 = vmatpush1.msra.mxu0 %v8058
          %8812 = vmatprep.subr.mxu0 %v8065
          %8813 = vmatpush1.msra.mxu0 %v8064
          %8814 = vmatprep.subr.mxu0 %v8071
          %8815 = vmatpush1.msra.mxu0 %v8070
          %8816 = vmatprep.subr.mxu0 %v8077
          %8817 = vmatpush1.msra.mxu0 %v8076
          %8818 = vmatprep.subr.mxu0 %v8083
          %8819 = vmatpush1.msra.mxu0 %v8082
          %8820 = vmatprep.subr.mxu0 %v8089
          %8821 = vmatpush1.msra.mxu0 %v8088
          %8822 = vmatprep.subr.mxu0 %v8095
          %8823 = vmatpush1.msra.mxu0 %v8094
          %8824 = vmatprep.subr.mxu0 %v8101
          %8825 = vmatpush1.msra.mxu0 %v8100
          %8826 = vmatprep.subr.mxu0 %v8107
          %8827 = vmatpush1.msra.mxu0 %v8106
          %8828 = vmatprep.subr.mxu0 %v8113
          %8829 = vmatpush1.msra.mxu0 %v8112
          %8830 = vmatprep.subr.mxu0 %v8119
          %8831 = vmatpush1.msra.mxu0 %v8118
          %8832 = vmatprep.subr.mxu0 %v8125
          %8833 = vmatpush1.msra.mxu0 %v8124
          %8834 = vmatprep.subr.mxu0 %v8131
          %8835 = vmatpush1.msra.mxu0 %v8130
          %8836 = vmatprep.subr.mxu0 %v8137
          %8837 = vmatpush1.msra.mxu0 %v8136
          %8838 = vmatprep.subr.mxu0 %v8143
          %8839 = vmatpush1.msra.mxu0 %v8142
          %8840 = vmatprep.subr.mxu0 %v8149
          %8841 = vmatpush1.msra.mxu0 %v8148
          %8842 = vmatprep.subr.mxu0 %v8155
          %8843 = vmatpush1.msra.mxu0 %v8154
          %8844 = vmatprep.subr.mxu0 %v8161
          %8845 = vmatpush1.msra.mxu0 %v8160
          %8846 = vmatprep.mubr.f32.mxu0 %v7191
          %8847 = vmatmul.mubr.f32.gmra.mrb[0].mxu0 %v7190
          %v8848 = vpop.f32.mrb[0].mxu0
          %v8849 = vadd.f32 %v8778, %v8848
          %v8850 = vpop.f32.mrb[0].mxu0
          %v8851 = vadd.f32 %v8780, %v8850
          %8852 = vdwg.mxu0
          %8853 = vmatprep.subr.mxu0 %v8167
          %8854 = vmatpush1.msra.mxu0 %v8166
          %8855 = vmatprep.subr.mxu0 %v8173
          %8856 = vmatpush1.msra.mxu0 %v8172
          %8857 = vmatprep.subr.mxu0 %v8179
          %8858 = vmatpush1.msra.mxu0 %v8178
          %8859 = vmatprep.subr.mxu0 %v8185
          %8860 = vmatpush1.msra.mxu0 %v8184
          %8861 = vmatprep.subr.mxu0 %v8191
          %8862 = vmatpush1.msra.mxu0 %v8190
          %8863 = vmatprep.subr.mxu0 %v8197
          %8864 = vmatpush1.msra.mxu0 %v8196
          %8865 = vmatprep.subr.mxu0 %v8203
          %8866 = vmatpush1.msra.mxu0 %v8202
          %8867 = vmatprep.subr.mxu0 %v8209
          %8868 = vmatpush1.msra.mxu0 %v8208
          %8869 = vmatprep.subr.mxu0 %v8215
          %8870 = vmatpush1.msra.mxu0 %v8214
          %8871 = vmatprep.subr.mxu0 %v8221
          %8872 = vmatpush1.msra.mxu0 %v8220
          %8873 = vmatprep.subr.mxu0 %v8227
          %8874 = vmatpush1.msra.mxu0 %v8226
          %8875 = vmatprep.subr.mxu0 %v8233
          %8876 = vmatpush1.msra.mxu0 %v8232
          %8877 = vmatprep.subr.mxu0 %v8239
          %8878 = vmatpush1.msra.mxu0 %v8238
          %8879 = vmatprep.subr.mxu0 %v8245
          %8880 = vmatpush1.msra.mxu0 %v8244
          %8881 = vmatprep.subr.mxu0 %v8251
          %8882 = vmatpush1.msra.mxu0 %v8250
          %8883 = vmatprep.subr.mxu0 %v8257
          %8884 = vmatpush1.msra.mxu0 %v8256
          %8885 = vmatprep.subr.mxu0 %v8263
          %8886 = vmatpush1.msra.mxu0 %v8262
          %8887 = vmatprep.subr.mxu0 %v8269
          %8888 = vmatpush1.msra.mxu0 %v8268
          %8889 = vmatprep.subr.mxu0 %v8275
          %8890 = vmatpush1.msra.mxu0 %v8274
          %8891 = vmatprep.subr.mxu0 %v8281
          %8892 = vmatpush1.msra.mxu0 %v8280
          %8893 = vmatprep.subr.mxu0 %v8287
          %8894 = vmatpush1.msra.mxu0 %v8286
          %8895 = vmatprep.subr.mxu0 %v8293
          %8896 = vmatpush1.msra.mxu0 %v8292
          %8897 = vmatprep.subr.mxu0 %v8299
          %8898 = vmatpush1.msra.mxu0 %v8298
          %8899 = vmatprep.subr.mxu0 %v8305
          %8900 = vmatpush1.msra.mxu0 %v8304
          %8901 = vmatprep.subr.mxu0 %v8311
          %8902 = vmatpush1.msra.mxu0 %v8310
          %8903 = vmatprep.subr.mxu0 %v8317
          %8904 = vmatpush1.msra.mxu0 %v8316
          %8905 = vmatprep.subr.mxu0 %v8323
          %8906 = vmatpush1.msra.mxu0 %v8322
          %8907 = vmatprep.subr.mxu0 %v8329
          %8908 = vmatpush1.msra.mxu0 %v8328
          %8909 = vmatprep.subr.mxu0 %v8335
          %8910 = vmatpush1.msra.mxu0 %v8334
          %8911 = vmatprep.subr.mxu0 %v8341
          %8912 = vmatpush1.msra.mxu0 %v8340
          %8913 = vmatprep.subr.mxu0 %v8347
          %8914 = vmatpush1.msra.mxu0 %v8346
          %8915 = vmatprep.subr.mxu0 %v8353
          %8916 = vmatpush1.msra.mxu0 %v8352
          %8917 = vmatprep.mubr.f32.mxu0 %v7193
          %8918 = vmatmul.mubr.f32.gmra.mrb[0].mxu0 %v7192
          %v8919 = vpop.f32.mrb[0].mxu0
          %v8920 = vadd.f32 %v8849, %v8919
          %v8921 = vpop.f32.mrb[0].mxu0
          %v8922 = vadd.f32 %v8851, %v8921
          %8923 = vdwg.mxu0
          %8924 = vmatprep.subr.mxu0 %v7593
          %8925 = vmatpush1.msra.mxu0 %v7592
          %8926 = vmatprep.subr.mxu0 %v7599
          %8927 = vmatpush1.msra.mxu0 %v7598
          %8928 = vmatprep.subr.mxu0 %v7605
          %8929 = vmatpush1.msra.mxu0 %v7604
          %8930 = vmatprep.subr.mxu0 %v7611
          %8931 = vmatpush1.msra.mxu0 %v7610
          %8932 = vmatprep.subr.mxu0 %v7617
          %8933 = vmatpush1.msra.mxu0 %v7616
          %8934 = vmatprep.subr.mxu0 %v7623
          %8935 = vmatpush1.msra.mxu0 %v7622
          %8936 = vmatprep.subr.mxu0 %v7629
          %8937 = vmatpush1.msra.mxu0 %v7628
          %8938 = vmatprep.subr.mxu0 %v7635
          %8939 = vmatpush1.msra.mxu0 %v7634
          %8940 = vmatprep.subr.mxu0 %v7641
          %8941 = vmatpush1.msra.mxu0 %v7640
          %8942 = vmatprep.subr.mxu0 %v7647
          %8943 = vmatpush1.msra.mxu0 %v7646
          %8944 = vmatprep.subr.mxu0 %v7653
          %8945 = vmatpush1.msra.mxu0 %v7652
          %8946 = vmatprep.subr.mxu0 %v7659
          %8947 = vmatpush1.msra.mxu0 %v7658
          %8948 = vmatprep.subr.mxu0 %v7665
          %8949 = vmatpush1.msra.mxu0 %v7664
          %8950 = vmatprep.subr.mxu0 %v7671
          %8951 = vmatpush1.msra.mxu0 %v7670
          %8952 = vmatprep.subr.mxu0 %v7677
          %8953 = vmatpush1.msra.mxu0 %v7676
          %8954 = vmatprep.subr.mxu0 %v7683
          %8955 = vmatpush1.msra.mxu0 %v7682
          %8956 = vmatprep.subr.mxu0 %v7689
          %8957 = vmatpush1.msra.mxu0 %v7688
          %8958 = vmatprep.subr.mxu0 %v7695
          %8959 = vmatpush1.msra.mxu0 %v7694
          %8960 = vmatprep.subr.mxu0 %v7701
          %8961 = vmatpush1.msra.mxu0 %v7700
          %8962 = vmatprep.subr.mxu0 %v7707
          %8963 = vmatpush1.msra.mxu0 %v7706
          %8964 = vmatprep.subr.mxu0 %v7713
          %8965 = vmatpush1.msra.mxu0 %v7712
          %8966 = vmatprep.subr.mxu0 %v7719
          %8967 = vmatpush1.msra.mxu0 %v7718
          %8968 = vmatprep.subr.mxu0 %v7725
          %8969 = vmatpush1.msra.mxu0 %v7724
          %8970 = vmatprep.subr.mxu0 %v7731
          %8971 = vmatpush1.msra.mxu0 %v7730
          %8972 = vmatprep.subr.mxu0 %v7737
          %8973 = vmatpush1.msra.mxu0 %v7736
          %8974 = vmatprep.subr.mxu0 %v7743
          %8975 = vmatpush1.msra.mxu0 %v7742
          %8976 = vmatprep.subr.mxu0 %v7749
          %8977 = vmatpush1.msra.mxu0 %v7748
          %8978 = vmatprep.subr.mxu0 %v7755
          %8979 = vmatpush1.msra.mxu0 %v7754
          %8980 = vmatprep.subr.mxu0 %v7761
          %8981 = vmatpush1.msra.mxu0 %v7760
          %8982 = vmatprep.subr.mxu0 %v7767
          %8983 = vmatpush1.msra.mxu0 %v7766
          %8984 = vmatprep.subr.mxu0 %v7773
          %8985 = vmatpush1.msra.mxu0 %v7772
          %8986 = vmatprep.subr.mxu0 %v7779
          %8987 = vmatpush1.msra.mxu0 %v7778
          %8988 = vmatprep.mubr.f32.mxu0 %v7187
          %8989 = vmatmul.mubr.f32.gmra.mrb[0].mxu0 %v7186
          %v8990 = vpop.f32.mrb[0].mxu0
          %v8991 = vadd.f32 0.0, %v8990
          %v8992 = vpop.f32.mrb[0].mxu0
          %v8993 = vadd.f32 0.0, %v8992
          %8994 = vdwg.mxu0
          %8995 = vmatprep.subr.mxu0 %v7785
          %8996 = vmatpush1.msra.mxu0 %v7784
          %8997 = vmatprep.subr.mxu0 %v7791
          %8998 = vmatpush1.msra.mxu0 %v7790
          %8999 = vmatprep.subr.mxu0 %v7797
          %9000 = vmatpush1.msra.mxu0 %v7796
          %9001 = vmatprep.subr.mxu0 %v7803
          %9002 = vmatpush1.msra.mxu0 %v7802
          %9003 = vmatprep.subr.mxu0 %v7809
          %9004 = vmatpush1.msra.mxu0 %v7808
          %9005 = vmatprep.subr.mxu0 %v7815
          %9006 = vmatpush1.msra.mxu0 %v7814
          %9007 = vmatprep.subr.mxu0 %v7821
          %9008 = vmatpush1.msra.mxu0 %v7820
          %9009 = vmatprep.subr.mxu0 %v7827
          %9010 = vmatpush1.msra.mxu0 %v7826
          %9011 = vmatprep.subr.mxu0 %v7833
          %9012 = vmatpush1.msra.mxu0 %v7832
          %9013 = vmatprep.subr.mxu0 %v7839
          %9014 = vmatpush1.msra.mxu0 %v7838
          %9015 = vmatprep.subr.mxu0 %v7845
          %9016 = vmatpush1.msra.mxu0 %v7844
          %9017 = vmatprep.subr.mxu0 %v7851
          %9018 = vmatpush1.msra.mxu0 %v7850
          %9019 = vmatprep.subr.mxu0 %v7857
          %9020 = vmatpush1.msra.mxu0 %v7856
          %9021 = vmatprep.subr.mxu0 %v7863
          %9022 = vmatpush1.msra.mxu0 %v7862
          %9023 = vmatprep.subr.mxu0 %v7869
          %9024 = vmatpush1.msra.mxu0 %v7868
          %9025 = vmatprep.subr.mxu0 %v7875
          %9026 = vmatpush1.msra.mxu0 %v7874
          %9027 = vmatprep.subr.mxu0 %v7881
          %9028 = vmatpush1.msra.mxu0 %v7880
          %9029 = vmatprep.subr.mxu0 %v7887
          %9030 = vmatpush1.msra.mxu0 %v7886
          %9031 = vmatprep.subr.mxu0 %v7893
          %9032 = vmatpush1.msra.mxu0 %v7892
          %9033 = vmatprep.subr.mxu0 %v7899
          %9034 = vmatpush1.msra.mxu0 %v7898
          %9035 = vmatprep.subr.mxu0 %v7905
          %9036 = vmatpush1.msra.mxu0 %v7904
          %9037 = vmatprep.subr.mxu0 %v7911
          %9038 = vmatpush1.msra.mxu0 %v7910
          %9039 = vmatprep.subr.mxu0 %v7917
          %9040 = vmatpush1.msra.mxu0 %v7916
          %9041 = vmatprep.subr.mxu0 %v7923
          %9042 = vmatpush1.msra.mxu0 %v7922
          %9043 = vmatprep.subr.mxu0 %v7929
          %9044 = vmatpush1.msra.mxu0 %v7928
          %9045 = vmatprep.subr.mxu0 %v7935
          %9046 = vmatpush1.msra.mxu0 %v7934
          %9047 = vmatprep.subr.mxu0 %v7941
          %9048 = vmatpush1.msra.mxu0 %v7940
          %9049 = vmatprep.subr.mxu0 %v7947
          %9050 = vmatpush1.msra.mxu0 %v7946
          %9051 = vmatprep.subr.mxu0 %v7953
          %9052 = vmatpush1.msra.mxu0 %v7952
          %9053 = vmatprep.subr.mxu0 %v7959
          %9054 = vmatpush1.msra.mxu0 %v7958
          %9055 = vmatprep.subr.mxu0 %v7965
          %9056 = vmatpush1.msra.mxu0 %v7964
          %9057 = vmatprep.subr.mxu0 %v7971
          %9058 = vmatpush1.msra.mxu0 %v7970
          %9059 = vmatprep.mubr.f32.mxu0 %v7189
          %9060 = vmatmul.mubr.f32.gmra.mrb[0].mxu0 %v7188
          %v9061 = vpop.f32.mrb[0].mxu0
          %v9062 = vadd.f32 %v8991, %v9061
          %v9063 = vpop.f32.mrb[0].mxu0
          %v9064 = vadd.f32 %v8993, %v9063
          %9065 = vdwg.mxu0
          %9066 = vmatprep.subr.mxu0 %v7977
          %9067 = vmatpush1.msra.mxu0 %v7976
          %9068 = vmatprep.subr.mxu0 %v7983
          %9069 = vmatpush1.msra.mxu0 %v7982
          %9070 = vmatprep.subr.mxu0 %v7989
          %9071 = vmatpush1.msra.mxu0 %v7988
          %9072 = vmatprep.subr.mxu0 %v7995
          %9073 = vmatpush1.msra.mxu0 %v7994
          %9074 = vmatprep.subr.mxu0 %v8001
          %9075 = vmatpush1.msra.mxu0 %v8000
          %9076 = vmatprep.subr.mxu0 %v8007
          %9077 = vmatpush1.msra.mxu0 %v8006
          %9078 = vmatprep.subr.mxu0 %v8013
          %9079 = vmatpush1.msra.mxu0 %v8012
          %9080 = vmatprep.subr.mxu0 %v8019
          %9081 = vmatpush1.msra.mxu0 %v8018
          %9082 = vmatprep.subr.mxu0 %v8025
          %9083 = vmatpush1.msra.mxu0 %v8024
          %9084 = vmatprep.subr.mxu0 %v8031
          %9085 = vmatpush1.msra.mxu0 %v8030
          %9086 = vmatprep.subr.mxu0 %v8037
          %9087 = vmatpush1.msra.mxu0 %v8036
          %9088 = vmatprep.subr.mxu0 %v8043
          %9089 = vmatpush1.msra.mxu0 %v8042
          %9090 = vmatprep.subr.mxu0 %v8049
          %9091 = vmatpush1.msra.mxu0 %v8048
          %9092 = vmatprep.subr.mxu0 %v8055
          %9093 = vmatpush1.msra.mxu0 %v8054
          %9094 = vmatprep.subr.mxu0 %v8061
          %9095 = vmatpush1.msra.mxu0 %v8060
          %9096 = vmatprep.subr.mxu0 %v8067
          %9097 = vmatpush1.msra.mxu0 %v8066
          %9098 = vmatprep.subr.mxu0 %v8073
          %9099 = vmatpush1.msra.mxu0 %v8072
          %9100 = vmatprep.subr.mxu0 %v8079
          %9101 = vmatpush1.msra.mxu0 %v8078
          %9102 = vmatprep.subr.mxu0 %v8085
          %9103 = vmatpush1.msra.mxu0 %v8084
          %9104 = vmatprep.subr.mxu0 %v8091
          %9105 = vmatpush1.msra.mxu0 %v8090
          %9106 = vmatprep.subr.mxu0 %v8097
          %9107 = vmatpush1.msra.mxu0 %v8096
          %9108 = vmatprep.subr.mxu0 %v8103
          %9109 = vmatpush1.msra.mxu0 %v8102
          %9110 = vmatprep.subr.mxu0 %v8109
          %9111 = vmatpush1.msra.mxu0 %v8108
          %9112 = vmatprep.subr.mxu0 %v8115
          %9113 = vmatpush1.msra.mxu0 %v8114
          %9114 = vmatprep.subr.mxu0 %v8121
          %9115 = vmatpush1.msra.mxu0 %v8120
          %9116 = vmatprep.subr.mxu0 %v8127
          %9117 = vmatpush1.msra.mxu0 %v8126
          %9118 = vmatprep.subr.mxu0 %v8133
          %9119 = vmatpush1.msra.mxu0 %v8132
          %9120 = vmatprep.subr.mxu0 %v8139
          %9121 = vmatpush1.msra.mxu0 %v8138
          %9122 = vmatprep.subr.mxu0 %v8145
          %9123 = vmatpush1.msra.mxu0 %v8144
          %9124 = vmatprep.subr.mxu0 %v8151
          %9125 = vmatpush1.msra.mxu0 %v8150
          %9126 = vmatprep.subr.mxu0 %v8157
          %9127 = vmatpush1.msra.mxu0 %v8156
          %9128 = vmatprep.subr.mxu0 %v8163
          %9129 = vmatpush1.msra.mxu0 %v8162
          %9130 = vmatprep.mubr.f32.mxu0 %v7191
          %9131 = vmatmul.mubr.f32.gmra.mrb[0].mxu0 %v7190
          %v9132 = vpop.f32.mrb[0].mxu0
          %v9133 = vadd.f32 %v9062, %v9132
          %v9134 = vpop.f32.mrb[0].mxu0
          %v9135 = vadd.f32 %v9064, %v9134
          %9136 = vdwg.mxu0
          %9137 = vmatprep.subr.mxu0 %v8169
          %9138 = vmatpush1.msra.mxu0 %v8168
          %9139 = vmatprep.subr.mxu0 %v8175
          %9140 = vmatpush1.msra.mxu0 %v8174
          %9141 = vmatprep.subr.mxu0 %v8181
          %9142 = vmatpush1.msra.mxu0 %v8180
          %9143 = vmatprep.subr.mxu0 %v8187
          %9144 = vmatpush1.msra.mxu0 %v8186
          %9145 = vmatprep.subr.mxu0 %v8193
          %9146 = vmatpush1.msra.mxu0 %v8192
          %9147 = vmatprep.subr.mxu0 %v8199
          %9148 = vmatpush1.msra.mxu0 %v8198
          %9149 = vmatprep.subr.mxu0 %v8205
          %9150 = vmatpush1.msra.mxu0 %v8204
          %9151 = vmatprep.subr.mxu0 %v8211
          %9152 = vmatpush1.msra.mxu0 %v8210
          %9153 = vmatprep.subr.mxu0 %v8217
          %9154 = vmatpush1.msra.mxu0 %v8216
          %9155 = vmatprep.subr.mxu0 %v8223
          %9156 = vmatpush1.msra.mxu0 %v8222
          %9157 = vmatprep.subr.mxu0 %v8229
          %9158 = vmatpush1.msra.mxu0 %v8228
          %9159 = vmatprep.subr.mxu0 %v8235
          %9160 = vmatpush1.msra.mxu0 %v8234
          %9161 = vmatprep.subr.mxu0 %v8241
          %9162 = vmatpush1.msra.mxu0 %v8240
          %9163 = vmatprep.subr.mxu0 %v8247
          %9164 = vmatpush1.msra.mxu0 %v8246
          %9165 = vmatprep.subr.mxu0 %v8253
          %9166 = vmatpush1.msra.mxu0 %v8252
          %9167 = vmatprep.subr.mxu0 %v8259
          %9168 = vmatpush1.msra.mxu0 %v8258
          %9169 = vmatprep.subr.mxu0 %v8265
          %9170 = vmatpush1.msra.mxu0 %v8264
          %9171 = vmatprep.subr.mxu0 %v8271
          %9172 = vmatpush1.msra.mxu0 %v8270
          %9173 = vmatprep.subr.mxu0 %v8277
          %9174 = vmatpush1.msra.mxu0 %v8276
          %9175 = vmatprep.subr.mxu0 %v8283
          %9176 = vmatpush1.msra.mxu0 %v8282
          %9177 = vmatprep.subr.mxu0 %v8289
          %9178 = vmatpush1.msra.mxu0 %v8288
          %9179 = vmatprep.subr.mxu0 %v8295
          %9180 = vmatpush1.msra.mxu0 %v8294
          %9181 = vmatprep.subr.mxu0 %v8301
          %9182 = vmatpush1.msra.mxu0 %v8300
          %9183 = vmatprep.subr.mxu0 %v8307
          %9184 = vmatpush1.msra.mxu0 %v8306
          %9185 = vmatprep.subr.mxu0 %v8313
          %9186 = vmatpush1.msra.mxu0 %v8312
          %9187 = vmatprep.subr.mxu0 %v8319
          %9188 = vmatpush1.msra.mxu0 %v8318
          %9189 = vmatprep.subr.mxu0 %v8325
          %9190 = vmatpush1.msra.mxu0 %v8324
          %9191 = vmatprep.subr.mxu0 %v8331
          %9192 = vmatpush1.msra.mxu0 %v8330
          %9193 = vmatprep.subr.mxu0 %v8337
          %9194 = vmatpush1.msra.mxu0 %v8336
          %9195 = vmatprep.subr.mxu0 %v8343
          %9196 = vmatpush1.msra.mxu0 %v8342
          %9197 = vmatprep.subr.mxu0 %v8349
          %9198 = vmatpush1.msra.mxu0 %v8348
          %9199 = vmatprep.subr.mxu0 %v8355
          %9200 = vmatpush1.msra.mxu0 %v8354
          %9201 = vmatprep.mubr.f32.mxu0 %v7193
          %9202 = vmatmul.mubr.f32.gmra.mrb[0].mxu0 %v7192
          %v9203 = vpop.f32.mrb[0].mxu0
          %v9204 = vadd.f32 %v9133, %v9203
          %v9205 = vpop.f32.mrb[0].mxu0
          %v9206 = vadd.f32 %v9135, %v9205
          %9207 = vdwg.mxu0
          %v9208 = vrcp.pop %v7203
          %v9209 = vmul.f32 %v8636, %v9208
          %v9210 = vmul.f32 %v8638, %v9208
          %v9211 = vmul.f32 %v8920, %v9208
          %v9212 = vmul.f32 %v8922, %v9208
          %v9213 = vmul.f32 %v9204, %v9208
          %v9214 = vmul.f32 %v9206, %v9208
          %v9215 = vpack.c.bf16 %v9209, %v9209
          %v9216 = vpack.c.bf16 %v9210, %v9210
          %v9217 = vpack.c.bf16 %v9211, %v9211
          %v9218 = vpack.c.bf16 %v9212, %v9212
          %v9219 = vpack.c.bf16 %v9213, %v9213
          %v9220 = vpack.c.bf16 %v9214, %v9214
          %v9221 = vld [vmem:[#allocation9] sm:$0xff]
          %v9222 = vld [vmem:[#allocation9 + $0x8] sm:$0xff]
          %v9223 = vld [vmem:[#allocation9 + $0x10] sm:$0xff]
          %v9224 = vld [vmem:[#allocation9 + $0x18] sm:$0xff]
          %v9225 = vld [vmem:[#allocation9 + $0x20] sm:$0xff]
          %v9226 = vld [vmem:[#allocation9 + $0x28] sm:$0xff]
          %v9227 = vld [vmem:[#allocation9 + $0x30] sm:$0xff]
          %v9228 = vld [vmem:[#allocation9 + $0x38] sm:$0xff]
          %v9229 = vld [vmem:[#allocation9 + $0x40] sm:$0xff]
          %v9230 = vld [vmem:[#allocation9 + $0x48] sm:$0xff]
          %v9231 = vld [vmem:[#allocation9 + $0x50] sm:$0xff]
          %v9232 = vld [vmem:[#allocation9 + $0x58] sm:$0xff]
          %v9233 = vld [vmem:[#allocation9 + $0x60] sm:$0xff]
          %v9234 = vld [vmem:[#allocation9 + $0x68] sm:$0xff]
          %v9235 = vld [vmem:[#allocation9 + $0x70] sm:$0xff]
          %v9236 = vld [vmem:[#allocation9 + $0x78] sm:$0xff]
          %v9237 = vld [vmem:[#allocation9 + $0x80] sm:$0xff]
          %v9238 = vld [vmem:[#allocation9 + $0x88] sm:$0xff]
          %v9239 = vld [vmem:[#allocation9 + $0x90] sm:$0xff]
          %v9240 = vld [vmem:[#allocation9 + $0x98] sm:$0xff]
          %v9241 = vld [vmem:[#allocation9 + $0xa0] sm:$0xff]
          %v9242 = vld [vmem:[#allocation9 + $0xa8] sm:$0xff]
          %v9243 = vld [vmem:[#allocation9 + $0xb0] sm:$0xff]
          %v9244 = vld [vmem:[#allocation9 + $0xb8] sm:$0xff]
          %v9245 = vld [vmem:[#allocation9 + $0xc0] sm:$0xff]
          %v9246 = vld [vmem:[#allocation9 + $0xc8] sm:$0xff]
          %v9247 = vld [vmem:[#allocation9 + $0xd0] sm:$0xff]
          %v9248 = vld [vmem:[#allocation9 + $0xd8] sm:$0xff]
          %v9249 = vld [vmem:[#allocation9 + $0xe0] sm:$0xff]
          %v9250 = vld [vmem:[#allocation9 + $0xe8] sm:$0xff]
          %v9251 = vld [vmem:[#allocation9 + $0xf0] sm:$0xff]
          %v9252 = vld [vmem:[#allocation9 + $0xf8] sm:$0xff]
          %v9253 = vld [vmem:[#allocation9 + $0x100] sm:$0xff]
          %v9254 = vld [vmem:[#allocation9 + $0x108] sm:$0xff]
          %v9255 = vld [vmem:[#allocation9 + $0x110] sm:$0xff]
          %v9256 = vld [vmem:[#allocation9 + $0x118] sm:$0xff]
          %v9257 = vld [vmem:[#allocation9 + $0x120] sm:$0xff]
          %v9258 = vld [vmem:[#allocation9 + $0x128] sm:$0xff]
          %v9259 = vld [vmem:[#allocation9 + $0x130] sm:$0xff]
          %v9260 = vld [vmem:[#allocation9 + $0x138] sm:$0xff]
          %v9261 = vld [vmem:[#allocation9 + $0x140] sm:$0xff]
          %v9262 = vld [vmem:[#allocation9 + $0x148] sm:$0xff]
          %v9263 = vld [vmem:[#allocation9 + $0x150] sm:$0xff]
          %v9264 = vld [vmem:[#allocation9 + $0x158] sm:$0xff]
          %v9265 = vld [vmem:[#allocation9 + $0x160] sm:$0xff]
          %v9266 = vld [vmem:[#allocation9 + $0x168] sm:$0xff]
          %v9267 = vld [vmem:[#allocation9 + $0x170] sm:$0xff]
          %v9268 = vld [vmem:[#allocation9 + $0x178] sm:$0xff]
          %v9269 = vld [vmem:[#allocation9 + $0x180] sm:$0xff]
          %v9270 = vld [vmem:[#allocation9 + $0x188] sm:$0xff]
          %v9271 = vld [vmem:[#allocation9 + $0x190] sm:$0xff]
          %v9272 = vld [vmem:[#allocation9 + $0x198] sm:$0xff]
          %v9273 = vld [vmem:[#allocation9 + $0x1a0] sm:$0xff]
          %v9274 = vld [vmem:[#allocation9 + $0x1a8] sm:$0xff]
          %v9275 = vld [vmem:[#allocation9 + $0x1b0] sm:$0xff]
          %v9276 = vld [vmem:[#allocation9 + $0x1b8] sm:$0xff]
          %v9277 = vld [vmem:[#allocation9 + $0x1c0] sm:$0xff]
          %v9278 = vld [vmem:[#allocation9 + $0x1c8] sm:$0xff]
          %v9279 = vld [vmem:[#allocation9 + $0x1d0] sm:$0xff]
          %v9280 = vld [vmem:[#allocation9 + $0x1d8] sm:$0xff]
          %v9281 = vld [vmem:[#allocation9 + $0x1e0] sm:$0xff]
          %v9282 = vld [vmem:[#allocation9 + $0x1e8] sm:$0xff]
          %v9283 = vld [vmem:[#allocation9 + $0x1f0] sm:$0xff]
          %v9284 = vld [vmem:[#allocation9 + $0x1f8] sm:$0xff]
          %v9285 = vld [vmem:[#allocation9 + $0x200] sm:$0xff]
          %v9286 = vld [vmem:[#allocation9 + $0x208] sm:$0xff]
          %v9287 = vld [vmem:[#allocation9 + $0x210] sm:$0xff]
          %v9288 = vld [vmem:[#allocation9 + $0x218] sm:$0xff]
          %v9289 = vld [vmem:[#allocation9 + $0x220] sm:$0xff]
          %v9290 = vld [vmem:[#allocation9 + $0x228] sm:$0xff]
          %v9291 = vld [vmem:[#allocation9 + $0x230] sm:$0xff]
          %v9292 = vld [vmem:[#allocation9 + $0x238] sm:$0xff]
          %v9293 = vld [vmem:[#allocation9 + $0x240] sm:$0xff]
          %v9294 = vld [vmem:[#allocation9 + $0x248] sm:$0xff]
          %v9295 = vld [vmem:[#allocation9 + $0x250] sm:$0xff]
          %v9296 = vld [vmem:[#allocation9 + $0x258] sm:$0xff]
          %v9297 = vld [vmem:[#allocation9 + $0x260] sm:$0xff]
          %v9298 = vld [vmem:[#allocation9 + $0x268] sm:$0xff]
          %v9299 = vld [vmem:[#allocation9 + $0x270] sm:$0xff]
          %v9300 = vld [vmem:[#allocation9 + $0x278] sm:$0xff]
          %v9301 = vld [vmem:[#allocation9 + $0x280] sm:$0xff]
          %v9302 = vld [vmem:[#allocation9 + $0x288] sm:$0xff]
          %v9303 = vld [vmem:[#allocation9 + $0x290] sm:$0xff]
          %v9304 = vld [vmem:[#allocation9 + $0x298] sm:$0xff]
          %v9305 = vld [vmem:[#allocation9 + $0x2a0] sm:$0xff]
          %v9306 = vld [vmem:[#allocation9 + $0x2a8] sm:$0xff]
          %v9307 = vld [vmem:[#allocation9 + $0x2b0] sm:$0xff]
          %v9308 = vld [vmem:[#allocation9 + $0x2b8] sm:$0xff]
          %v9309 = vld [vmem:[#allocation9 + $0x2c0] sm:$0xff]
          %v9310 = vld [vmem:[#allocation9 + $0x2c8] sm:$0xff]
          %v9311 = vld [vmem:[#allocation9 + $0x2d0] sm:$0xff]
          %v9312 = vld [vmem:[#allocation9 + $0x2d8] sm:$0xff]
          %v9313 = vld [vmem:[#allocation9 + $0x2e0] sm:$0xff]
          %v9314 = vld [vmem:[#allocation9 + $0x2e8] sm:$0xff]
          %v9315 = vld [vmem:[#allocation9 + $0x2f0] sm:$0xff]
          %v9316 = vld [vmem:[#allocation9 + $0x2f8] sm:$0xff]
          %v9317 = vld [vmem:[#allocation9 + $0x300] sm:$0xff]
          %v9318 = vld [vmem:[#allocation9 + $0x308] sm:$0xff]
          %v9319 = vld [vmem:[#allocation9 + $0x310] sm:$0xff]
          %v9320 = vld [vmem:[#allocation9 + $0x318] sm:$0xff]
          %v9321 = vld [vmem:[#allocation9 + $0x320] sm:$0xff]
          %v9322 = vld [vmem:[#allocation9 + $0x328] sm:$0xff]
          %v9323 = vld [vmem:[#allocation9 + $0x330] sm:$0xff]
          %v9324 = vld [vmem:[#allocation9 + $0x338] sm:$0xff]
          %v9325 = vld [vmem:[#allocation9 + $0x340] sm:$0xff]
          %v9326 = vld [vmem:[#allocation9 + $0x348] sm:$0xff]
          %v9327 = vld [vmem:[#allocation9 + $0x350] sm:$0xff]
          %v9328 = vld [vmem:[#allocation9 + $0x358] sm:$0xff]
          %v9329 = vld [vmem:[#allocation9 + $0x360] sm:$0xff]
          %v9330 = vld [vmem:[#allocation9 + $0x368] sm:$0xff]
          %v9331 = vld [vmem:[#allocation9 + $0x370] sm:$0xff]
          %v9332 = vld [vmem:[#allocation9 + $0x378] sm:$0xff]
          %v9333 = vld [vmem:[#allocation9 + $0x380] sm:$0xff]
          %v9334 = vld [vmem:[#allocation9 + $0x388] sm:$0xff]
          %v9335 = vld [vmem:[#allocation9 + $0x390] sm:$0xff]
          %v9336 = vld [vmem:[#allocation9 + $0x398] sm:$0xff]
          %v9337 = vld [vmem:[#allocation9 + $0x3a0] sm:$0xff]
          %v9338 = vld [vmem:[#allocation9 + $0x3a8] sm:$0xff]
          %v9339 = vld [vmem:[#allocation9 + $0x3b0] sm:$0xff]
          %v9340 = vld [vmem:[#allocation9 + $0x3b8] sm:$0xff]
          %v9341 = vld [vmem:[#allocation9 + $0x3c0] sm:$0xff]
          %v9342 = vld [vmem:[#allocation9 + $0x3c8] sm:$0xff]
          %v9343 = vld [vmem:[#allocation9 + $0x3d0] sm:$0xff]
          %v9344 = vld [vmem:[#allocation9 + $0x3d8] sm:$0xff]
          %v9345 = vld [vmem:[#allocation9 + $0x3e0] sm:$0xff]
          %v9346 = vld [vmem:[#allocation9 + $0x3e8] sm:$0xff]
          %v9347 = vld [vmem:[#allocation9 + $0x3f0] sm:$0xff]
          %v9348 = vld [vmem:[#allocation9 + $0x3f8] sm:$0xff]
          %v9349 = vld [vmem:[#allocation9 + $0x400] sm:$0xff]
          %v9350 = vld [vmem:[#allocation9 + $0x408] sm:$0xff]
          %v9351 = vld [vmem:[#allocation9 + $0x410] sm:$0xff]
          %v9352 = vld [vmem:[#allocation9 + $0x418] sm:$0xff]
          %v9353 = vld [vmem:[#allocation9 + $0x420] sm:$0xff]
          %v9354 = vld [vmem:[#allocation9 + $0x428] sm:$0xff]
          %v9355 = vld [vmem:[#allocation9 + $0x430] sm:$0xff]
          %v9356 = vld [vmem:[#allocation9 + $0x438] sm:$0xff]
          %v9357 = vld [vmem:[#allocation9 + $0x440] sm:$0xff]
          %v9358 = vld [vmem:[#allocation9 + $0x448] sm:$0xff]
          %v9359 = vld [vmem:[#allocation9 + $0x450] sm:$0xff]
          %v9360 = vld [vmem:[#allocation9 + $0x458] sm:$0xff]
          %v9361 = vld [vmem:[#allocation9 + $0x460] sm:$0xff]
          %v9362 = vld [vmem:[#allocation9 + $0x468] sm:$0xff]
          %v9363 = vld [vmem:[#allocation9 + $0x470] sm:$0xff]
          %v9364 = vld [vmem:[#allocation9 + $0x478] sm:$0xff]
          %v9365 = vld [vmem:[#allocation9 + $0x480] sm:$0xff]
          %v9366 = vld [vmem:[#allocation9 + $0x488] sm:$0xff]
          %v9367 = vld [vmem:[#allocation9 + $0x490] sm:$0xff]
          %v9368 = vld [vmem:[#allocation9 + $0x498] sm:$0xff]
          %v9369 = vld [vmem:[#allocation9 + $0x4a0] sm:$0xff]
          %v9370 = vld [vmem:[#allocation9 + $0x4a8] sm:$0xff]
          %v9371 = vld [vmem:[#allocation9 + $0x4b0] sm:$0xff]
          %v9372 = vld [vmem:[#allocation9 + $0x4b8] sm:$0xff]
          %v9373 = vld [vmem:[#allocation9 + $0x4c0] sm:$0xff]
          %v9374 = vld [vmem:[#allocation9 + $0x4c8] sm:$0xff]
          %v9375 = vld [vmem:[#allocation9 + $0x4d0] sm:$0xff]
          %v9376 = vld [vmem:[#allocation9 + $0x4d8] sm:$0xff]
          %v9377 = vld [vmem:[#allocation9 + $0x4e0] sm:$0xff]
          %v9378 = vld [vmem:[#allocation9 + $0x4e8] sm:$0xff]
          %v9379 = vld [vmem:[#allocation9 + $0x4f0] sm:$0xff]
          %v9380 = vld [vmem:[#allocation9 + $0x4f8] sm:$0xff]
          %v9381 = vld [vmem:[#allocation9 + $0x500] sm:$0xff]
          %v9382 = vld [vmem:[#allocation9 + $0x508] sm:$0xff]
          %v9383 = vld [vmem:[#allocation9 + $0x510] sm:$0xff]
          %v9384 = vld [vmem:[#allocation9 + $0x518] sm:$0xff]
          %v9385 = vld [vmem:[#allocation9 + $0x520] sm:$0xff]
          %v9386 = vld [vmem:[#allocation9 + $0x528] sm:$0xff]
          %v9387 = vld [vmem:[#allocation9 + $0x530] sm:$0xff]
          %v9388 = vld [vmem:[#allocation9 + $0x538] sm:$0xff]
          %v9389 = vld [vmem:[#allocation9 + $0x540] sm:$0xff]
          %v9390 = vld [vmem:[#allocation9 + $0x548] sm:$0xff]
          %v9391 = vld [vmem:[#allocation9 + $0x550] sm:$0xff]
          %v9392 = vld [vmem:[#allocation9 + $0x558] sm:$0xff]
          %v9393 = vld [vmem:[#allocation9 + $0x560] sm:$0xff]
          %v9394 = vld [vmem:[#allocation9 + $0x568] sm:$0xff]
          %v9395 = vld [vmem:[#allocation9 + $0x570] sm:$0xff]
          %v9396 = vld [vmem:[#allocation9 + $0x578] sm:$0xff]
          %v9397 = vld [vmem:[#allocation9 + $0x580] sm:$0xff]
          %v9398 = vld [vmem:[#allocation9 + $0x588] sm:$0xff]
          %v9399 = vld [vmem:[#allocation9 + $0x590] sm:$0xff]
          %v9400 = vld [vmem:[#allocation9 + $0x598] sm:$0xff]
          %v9401 = vld [vmem:[#allocation9 + $0x5a0] sm:$0xff]
          %v9402 = vld [vmem:[#allocation9 + $0x5a8] sm:$0xff]
          %v9403 = vld [vmem:[#allocation9 + $0x5b0] sm:$0xff]
          %v9404 = vld [vmem:[#allocation9 + $0x5b8] sm:$0xff]
          %v9405 = vld [vmem:[#allocation9 + $0x5c0] sm:$0xff]
          %v9406 = vld [vmem:[#allocation9 + $0x5c8] sm:$0xff]
          %v9407 = vld [vmem:[#allocation9 + $0x5d0] sm:$0xff]
          %v9408 = vld [vmem:[#allocation9 + $0x5d8] sm:$0xff]
          %v9409 = vld [vmem:[#allocation9 + $0x5e0] sm:$0xff]
          %v9410 = vld [vmem:[#allocation9 + $0x5e8] sm:$0xff]
          %v9411 = vld [vmem:[#allocation9 + $0x5f0] sm:$0xff]
          %v9412 = vld [vmem:[#allocation9 + $0x5f8] sm:$0xff]
          %v9413 = vld [vmem:[#allocation11] sm:$0xf]
          %v9415 = vlaneseq
          %v9416 = vshrl.u32 %v9415, 7
          %v9417 = vsub.s32 0, %v9416
          %v9418 = vrot.slane %v9413, %v9417
          %v9419 = vlaneseq
          %v9420 = vshrl.u32 %v9419, 7
          %v9421 = vsub.s32 1, %v9420
          %v9422 = vrot.slane %v9413, %v9421
          %v9423 = vlaneseq
          %v9424 = vshrl.u32 %v9423, 7
          %v9425 = vsub.s32 2, %v9424
          %v9426 = vrot.slane %v9413, %v9425
          %v9427 = vlaneseq
          %v9428 = vshrl.u32 %v9427, 7
          %v9429 = vsub.s32 3, %v9428
          %v9430 = vrot.slane %v9413, %v9429
          %v9627 = vunpack.c.l.b16 %v9221
          %v9628 = vunpack.c.h.b16 %v9221
          %v9629 = vunpack.c.l.b16 %v9222
          %v9630 = vunpack.c.h.b16 %v9222
          %v9631 = vunpack.c.l.b16 %v9223
          %v9632 = vunpack.c.h.b16 %v9223
          %v9633 = vunpack.c.l.b16 %v9224
          %v9634 = vunpack.c.h.b16 %v9224
          %v9635 = vunpack.c.l.b16 %v9225
          %v9636 = vunpack.c.h.b16 %v9225
          %v9637 = vunpack.c.l.b16 %v9226
          %v9638 = vunpack.c.h.b16 %v9226
          %v9639 = vunpack.c.l.b16 %v9227
          %v9640 = vunpack.c.h.b16 %v9227
          %v9641 = vunpack.c.l.b16 %v9228
          %v9642 = vunpack.c.h.b16 %v9228
          %v9643 = vunpack.c.l.b16 %v9229
          %v9644 = vunpack.c.h.b16 %v9229
          %v9645 = vunpack.c.l.b16 %v9230
          %v9646 = vunpack.c.h.b16 %v9230
          %v9647 = vunpack.c.l.b16 %v9231
          %v9648 = vunpack.c.h.b16 %v9231
          %v9649 = vunpack.c.l.b16 %v9232
          %v9650 = vunpack.c.h.b16 %v9232
          %v9651 = vunpack.c.l.b16 %v9233
          %v9652 = vunpack.c.h.b16 %v9233
          %v9653 = vunpack.c.l.b16 %v9234
          %v9654 = vunpack.c.h.b16 %v9234
          %v9655 = vunpack.c.l.b16 %v9235
          %v9656 = vunpack.c.h.b16 %v9235
          %v9657 = vunpack.c.l.b16 %v9236
          %v9658 = vunpack.c.h.b16 %v9236
          %v9659 = vunpack.c.l.b16 %v9237
          %v9660 = vunpack.c.h.b16 %v9237
          %v9661 = vunpack.c.l.b16 %v9238
          %v9662 = vunpack.c.h.b16 %v9238
          %v9663 = vunpack.c.l.b16 %v9239
          %v9664 = vunpack.c.h.b16 %v9239
          %v9665 = vunpack.c.l.b16 %v9240
          %v9666 = vunpack.c.h.b16 %v9240
          %v9667 = vunpack.c.l.b16 %v9241
          %v9668 = vunpack.c.h.b16 %v9241
          %v9669 = vunpack.c.l.b16 %v9242
          %v9670 = vunpack.c.h.b16 %v9242
          %v9671 = vunpack.c.l.b16 %v9243
          %v9672 = vunpack.c.h.b16 %v9243
          %v9673 = vunpack.c.l.b16 %v9244
          %v9674 = vunpack.c.h.b16 %v9244
          %v9675 = vunpack.c.l.b16 %v9245
          %v9676 = vunpack.c.h.b16 %v9245
          %v9677 = vunpack.c.l.b16 %v9246
          %v9678 = vunpack.c.h.b16 %v9246
          %v9679 = vunpack.c.l.b16 %v9247
          %v9680 = vunpack.c.h.b16 %v9247
          %v9681 = vunpack.c.l.b16 %v9248
          %v9682 = vunpack.c.h.b16 %v9248
          %v9683 = vunpack.c.l.b16 %v9249
          %v9684 = vunpack.c.h.b16 %v9249
          %v9685 = vunpack.c.l.b16 %v9250
          %v9686 = vunpack.c.h.b16 %v9250
          %v9687 = vunpack.c.l.b16 %v9251
          %v9688 = vunpack.c.h.b16 %v9251
          %v9689 = vunpack.c.l.b16 %v9252
          %v9690 = vunpack.c.h.b16 %v9252
          %v9691 = vunpack.c.l.b16 %v9253
          %v9692 = vunpack.c.h.b16 %v9253
          %v9693 = vunpack.c.l.b16 %v9254
          %v9694 = vunpack.c.h.b16 %v9254
          %v9695 = vunpack.c.l.b16 %v9255
          %v9696 = vunpack.c.h.b16 %v9255
          %v9697 = vunpack.c.l.b16 %v9256
          %v9698 = vunpack.c.h.b16 %v9256
          %v9699 = vunpack.c.l.b16 %v9257
          %v9700 = vunpack.c.h.b16 %v9257
          %v9701 = vunpack.c.l.b16 %v9258
          %v9702 = vunpack.c.h.b16 %v9258
          %v9703 = vunpack.c.l.b16 %v9259
          %v9704 = vunpack.c.h.b16 %v9259
          %v9705 = vunpack.c.l.b16 %v9260
          %v9706 = vunpack.c.h.b16 %v9260
          %v9707 = vunpack.c.l.b16 %v9261
          %v9708 = vunpack.c.h.b16 %v9261
          %v9709 = vunpack.c.l.b16 %v9262
          %v9710 = vunpack.c.h.b16 %v9262
          %v9711 = vunpack.c.l.b16 %v9263
          %v9712 = vunpack.c.h.b16 %v9263
          %v9713 = vunpack.c.l.b16 %v9264
          %v9714 = vunpack.c.h.b16 %v9264
          %v9715 = vunpack.c.l.b16 %v9265
          %v9716 = vunpack.c.h.b16 %v9265
          %v9717 = vunpack.c.l.b16 %v9266
          %v9718 = vunpack.c.h.b16 %v9266
          %v9719 = vunpack.c.l.b16 %v9267
          %v9720 = vunpack.c.h.b16 %v9267
          %v9721 = vunpack.c.l.b16 %v9268
          %v9722 = vunpack.c.h.b16 %v9268
          %v9723 = vunpack.c.l.b16 %v9269
          %v9724 = vunpack.c.h.b16 %v9269
          %v9725 = vunpack.c.l.b16 %v9270
          %v9726 = vunpack.c.h.b16 %v9270
          %v9727 = vunpack.c.l.b16 %v9271
          %v9728 = vunpack.c.h.b16 %v9271
          %v9729 = vunpack.c.l.b16 %v9272
          %v9730 = vunpack.c.h.b16 %v9272
          %v9731 = vunpack.c.l.b16 %v9273
          %v9732 = vunpack.c.h.b16 %v9273
          %v9733 = vunpack.c.l.b16 %v9274
          %v9734 = vunpack.c.h.b16 %v9274
          %v9735 = vunpack.c.l.b16 %v9275
          %v9736 = vunpack.c.h.b16 %v9275
          %v9737 = vunpack.c.l.b16 %v9276
          %v9738 = vunpack.c.h.b16 %v9276
          %v9739 = vunpack.c.l.b16 %v9277
          %v9740 = vunpack.c.h.b16 %v9277
          %v9741 = vunpack.c.l.b16 %v9278
          %v9742 = vunpack.c.h.b16 %v9278
          %v9743 = vunpack.c.l.b16 %v9279
          %v9744 = vunpack.c.h.b16 %v9279
          %v9745 = vunpack.c.l.b16 %v9280
          %v9746 = vunpack.c.h.b16 %v9280
          %v9747 = vunpack.c.l.b16 %v9281
          %v9748 = vunpack.c.h.b16 %v9281
          %v9749 = vunpack.c.l.b16 %v9282
          %v9750 = vunpack.c.h.b16 %v9282
          %v9751 = vunpack.c.l.b16 %v9283
          %v9752 = vunpack.c.h.b16 %v9283
          %v9753 = vunpack.c.l.b16 %v9284
          %v9754 = vunpack.c.h.b16 %v9284
          %v9755 = vunpack.c.l.b16 %v9285
          %v9756 = vunpack.c.h.b16 %v9285
          %v9757 = vunpack.c.l.b16 %v9286
          %v9758 = vunpack.c.h.b16 %v9286
          %v9759 = vunpack.c.l.b16 %v9287
          %v9760 = vunpack.c.h.b16 %v9287
          %v9761 = vunpack.c.l.b16 %v9288
          %v9762 = vunpack.c.h.b16 %v9288
          %v9763 = vunpack.c.l.b16 %v9289
          %v9764 = vunpack.c.h.b16 %v9289
          %v9765 = vunpack.c.l.b16 %v9290
          %v9766 = vunpack.c.h.b16 %v9290
          %v9767 = vunpack.c.l.b16 %v9291
          %v9768 = vunpack.c.h.b16 %v9291
          %v9769 = vunpack.c.l.b16 %v9292
          %v9770 = vunpack.c.h.b16 %v9292
          %v9771 = vunpack.c.l.b16 %v9293
          %v9772 = vunpack.c.h.b16 %v9293
          %v9773 = vunpack.c.l.b16 %v9294
          %v9774 = vunpack.c.h.b16 %v9294
          %v9775 = vunpack.c.l.b16 %v9295
          %v9776 = vunpack.c.h.b16 %v9295
          %v9777 = vunpack.c.l.b16 %v9296
          %v9778 = vunpack.c.h.b16 %v9296
          %v9779 = vunpack.c.l.b16 %v9297
          %v9780 = vunpack.c.h.b16 %v9297
          %v9781 = vunpack.c.l.b16 %v9298
          %v9782 = vunpack.c.h.b16 %v9298
          %v9783 = vunpack.c.l.b16 %v9299
          %v9784 = vunpack.c.h.b16 %v9299
          %v9785 = vunpack.c.l.b16 %v9300
          %v9786 = vunpack.c.h.b16 %v9300
          %v9787 = vunpack.c.l.b16 %v9301
          %v9788 = vunpack.c.h.b16 %v9301
          %v9789 = vunpack.c.l.b16 %v9302
          %v9790 = vunpack.c.h.b16 %v9302
          %v9791 = vunpack.c.l.b16 %v9303
          %v9792 = vunpack.c.h.b16 %v9303
          %v9793 = vunpack.c.l.b16 %v9304
          %v9794 = vunpack.c.h.b16 %v9304
          %v9795 = vunpack.c.l.b16 %v9305
          %v9796 = vunpack.c.h.b16 %v9305
          %v9797 = vunpack.c.l.b16 %v9306
          %v9798 = vunpack.c.h.b16 %v9306
          %v9799 = vunpack.c.l.b16 %v9307
          %v9800 = vunpack.c.h.b16 %v9307
          %v9801 = vunpack.c.l.b16 %v9308
          %v9802 = vunpack.c.h.b16 %v9308
          %v9803 = vunpack.c.l.b16 %v9309
          %v9804 = vunpack.c.h.b16 %v9309
          %v9805 = vunpack.c.l.b16 %v9310
          %v9806 = vunpack.c.h.b16 %v9310
          %v9807 = vunpack.c.l.b16 %v9311
          %v9808 = vunpack.c.h.b16 %v9311
          %v9809 = vunpack.c.l.b16 %v9312
          %v9810 = vunpack.c.h.b16 %v9312
          %v9811 = vunpack.c.l.b16 %v9313
          %v9812 = vunpack.c.h.b16 %v9313
          %v9813 = vunpack.c.l.b16 %v9314
          %v9814 = vunpack.c.h.b16 %v9314
          %v9815 = vunpack.c.l.b16 %v9315
          %v9816 = vunpack.c.h.b16 %v9315
          %v9817 = vunpack.c.l.b16 %v9316
          %v9818 = vunpack.c.h.b16 %v9316
          %v9819 = vunpack.c.l.b16 %v9317
          %v9820 = vunpack.c.h.b16 %v9317
          %v9821 = vunpack.c.l.b16 %v9318
          %v9822 = vunpack.c.h.b16 %v9318
          %v9823 = vunpack.c.l.b16 %v9319
          %v9824 = vunpack.c.h.b16 %v9319
          %v9825 = vunpack.c.l.b16 %v9320
          %v9826 = vunpack.c.h.b16 %v9320
          %v9827 = vunpack.c.l.b16 %v9321
          %v9828 = vunpack.c.h.b16 %v9321
          %v9829 = vunpack.c.l.b16 %v9322
          %v9830 = vunpack.c.h.b16 %v9322
          %v9831 = vunpack.c.l.b16 %v9323
          %v9832 = vunpack.c.h.b16 %v9323
          %v9833 = vunpack.c.l.b16 %v9324
          %v9834 = vunpack.c.h.b16 %v9324
          %v9835 = vunpack.c.l.b16 %v9325
          %v9836 = vunpack.c.h.b16 %v9325
          %v9837 = vunpack.c.l.b16 %v9326
          %v9838 = vunpack.c.h.b16 %v9326
          %v9839 = vunpack.c.l.b16 %v9327
          %v9840 = vunpack.c.h.b16 %v9327
          %v9841 = vunpack.c.l.b16 %v9328
          %v9842 = vunpack.c.h.b16 %v9328
          %v9843 = vunpack.c.l.b16 %v9329
          %v9844 = vunpack.c.h.b16 %v9329
          %v9845 = vunpack.c.l.b16 %v9330
          %v9846 = vunpack.c.h.b16 %v9330
          %v9847 = vunpack.c.l.b16 %v9331
          %v9848 = vunpack.c.h.b16 %v9331
          %v9849 = vunpack.c.l.b16 %v9332
          %v9850 = vunpack.c.h.b16 %v9332
          %v9851 = vunpack.c.l.b16 %v9333
          %v9852 = vunpack.c.h.b16 %v9333
          %v9853 = vunpack.c.l.b16 %v9334
          %v9854 = vunpack.c.h.b16 %v9334
          %v9855 = vunpack.c.l.b16 %v9335
          %v9856 = vunpack.c.h.b16 %v9335
          %v9857 = vunpack.c.l.b16 %v9336
          %v9858 = vunpack.c.h.b16 %v9336
          %v9859 = vunpack.c.l.b16 %v9337
          %v9860 = vunpack.c.h.b16 %v9337
          %v9861 = vunpack.c.l.b16 %v9338
          %v9862 = vunpack.c.h.b16 %v9338
          %v9863 = vunpack.c.l.b16 %v9339
          %v9864 = vunpack.c.h.b16 %v9339
          %v9865 = vunpack.c.l.b16 %v9340
          %v9866 = vunpack.c.h.b16 %v9340
          %v9867 = vunpack.c.l.b16 %v9341
          %v9868 = vunpack.c.h.b16 %v9341
          %v9869 = vunpack.c.l.b16 %v9342
          %v9870 = vunpack.c.h.b16 %v9342
          %v9871 = vunpack.c.l.b16 %v9343
          %v9872 = vunpack.c.h.b16 %v9343
          %v9873 = vunpack.c.l.b16 %v9344
          %v9874 = vunpack.c.h.b16 %v9344
          %v9875 = vunpack.c.l.b16 %v9345
          %v9876 = vunpack.c.h.b16 %v9345
          %v9877 = vunpack.c.l.b16 %v9346
          %v9878 = vunpack.c.h.b16 %v9346
          %v9879 = vunpack.c.l.b16 %v9347
          %v9880 = vunpack.c.h.b16 %v9347
          %v9881 = vunpack.c.l.b16 %v9348
          %v9882 = vunpack.c.h.b16 %v9348
          %v9883 = vunpack.c.l.b16 %v9349
          %v9884 = vunpack.c.h.b16 %v9349
          %v9885 = vunpack.c.l.b16 %v9350
          %v9886 = vunpack.c.h.b16 %v9350
          %v9887 = vunpack.c.l.b16 %v9351
          %v9888 = vunpack.c.h.b16 %v9351
          %v9889 = vunpack.c.l.b16 %v9352
          %v9890 = vunpack.c.h.b16 %v9352
          %v9891 = vunpack.c.l.b16 %v9353
          %v9892 = vunpack.c.h.b16 %v9353
          %v9893 = vunpack.c.l.b16 %v9354
          %v9894 = vunpack.c.h.b16 %v9354
          %v9895 = vunpack.c.l.b16 %v9355
          %v9896 = vunpack.c.h.b16 %v9355
          %v9897 = vunpack.c.l.b16 %v9356
          %v9898 = vunpack.c.h.b16 %v9356
          %v9899 = vunpack.c.l.b16 %v9357
          %v9900 = vunpack.c.h.b16 %v9357
          %v9901 = vunpack.c.l.b16 %v9358
          %v9902 = vunpack.c.h.b16 %v9358
          %v9903 = vunpack.c.l.b16 %v9359
          %v9904 = vunpack.c.h.b16 %v9359
          %v9905 = vunpack.c.l.b16 %v9360
          %v9906 = vunpack.c.h.b16 %v9360
          %v9907 = vunpack.c.l.b16 %v9361
          %v9908 = vunpack.c.h.b16 %v9361
          %v9909 = vunpack.c.l.b16 %v9362
          %v9910 = vunpack.c.h.b16 %v9362
          %v9911 = vunpack.c.l.b16 %v9363
          %v9912 = vunpack.c.h.b16 %v9363
          %v9913 = vunpack.c.l.b16 %v9364
          %v9914 = vunpack.c.h.b16 %v9364
          %v9915 = vunpack.c.l.b16 %v9365
          %v9916 = vunpack.c.h.b16 %v9365
          %v9917 = vunpack.c.l.b16 %v9366
          %v9918 = vunpack.c.h.b16 %v9366
          %v9919 = vunpack.c.l.b16 %v9367
          %v9920 = vunpack.c.h.b16 %v9367
          %v9921 = vunpack.c.l.b16 %v9368
          %v9922 = vunpack.c.h.b16 %v9368
          %v9923 = vunpack.c.l.b16 %v9369
          %v9924 = vunpack.c.h.b16 %v9369
          %v9925 = vunpack.c.l.b16 %v9370
          %v9926 = vunpack.c.h.b16 %v9370
          %v9927 = vunpack.c.l.b16 %v9371
          %v9928 = vunpack.c.h.b16 %v9371
          %v9929 = vunpack.c.l.b16 %v9372
          %v9930 = vunpack.c.h.b16 %v9372
          %v9931 = vunpack.c.l.b16 %v9373
          %v9932 = vunpack.c.h.b16 %v9373
          %v9933 = vunpack.c.l.b16 %v9374
          %v9934 = vunpack.c.h.b16 %v9374
          %v9935 = vunpack.c.l.b16 %v9375
          %v9936 = vunpack.c.h.b16 %v9375
          %v9937 = vunpack.c.l.b16 %v9376
          %v9938 = vunpack.c.h.b16 %v9376
          %v9939 = vunpack.c.l.b16 %v9377
          %v9940 = vunpack.c.h.b16 %v9377
          %v9941 = vunpack.c.l.b16 %v9378
          %v9942 = vunpack.c.h.b16 %v9378
          %v9943 = vunpack.c.l.b16 %v9379
          %v9944 = vunpack.c.h.b16 %v9379
          %v9945 = vunpack.c.l.b16 %v9380
          %v9946 = vunpack.c.h.b16 %v9380
          %v9947 = vunpack.c.l.b16 %v9381
          %v9948 = vunpack.c.h.b16 %v9381
          %v9949 = vunpack.c.l.b16 %v9382
          %v9950 = vunpack.c.h.b16 %v9382
          %v9951 = vunpack.c.l.b16 %v9383
          %v9952 = vunpack.c.h.b16 %v9383
          %v9953 = vunpack.c.l.b16 %v9384
          %v9954 = vunpack.c.h.b16 %v9384
          %v9955 = vunpack.c.l.b16 %v9385
          %v9956 = vunpack.c.h.b16 %v9385
          %v9957 = vunpack.c.l.b16 %v9386
          %v9958 = vunpack.c.h.b16 %v9386
          %v9959 = vunpack.c.l.b16 %v9387
          %v9960 = vunpack.c.h.b16 %v9387
          %v9961 = vunpack.c.l.b16 %v9388
          %v9962 = vunpack.c.h.b16 %v9388
          %v9963 = vunpack.c.l.b16 %v9389
          %v9964 = vunpack.c.h.b16 %v9389
          %v9965 = vunpack.c.l.b16 %v9390
          %v9966 = vunpack.c.h.b16 %v9390
          %v9967 = vunpack.c.l.b16 %v9391
          %v9968 = vunpack.c.h.b16 %v9391
          %v9969 = vunpack.c.l.b16 %v9392
          %v9970 = vunpack.c.h.b16 %v9392
          %v9971 = vunpack.c.l.b16 %v9393
          %v9972 = vunpack.c.h.b16 %v9393
          %v9973 = vunpack.c.l.b16 %v9394
          %v9974 = vunpack.c.h.b16 %v9394
          %v9975 = vunpack.c.l.b16 %v9395
          %v9976 = vunpack.c.h.b16 %v9395
          %v9977 = vunpack.c.l.b16 %v9396
          %v9978 = vunpack.c.h.b16 %v9396
          %v9979 = vunpack.c.l.b16 %v9397
          %v9980 = vunpack.c.h.b16 %v9397
          %v9981 = vunpack.c.l.b16 %v9398
          %v9982 = vunpack.c.h.b16 %v9398
          %v9983 = vunpack.c.l.b16 %v9399
          %v9984 = vunpack.c.h.b16 %v9399
          %v9985 = vunpack.c.l.b16 %v9400
          %v9986 = vunpack.c.h.b16 %v9400
          %v9987 = vunpack.c.l.b16 %v9401
          %v9988 = vunpack.c.h.b16 %v9401
          %v9989 = vunpack.c.l.b16 %v9402
          %v9990 = vunpack.c.h.b16 %v9402
          %v9991 = vunpack.c.l.b16 %v9403
          %v9992 = vunpack.c.h.b16 %v9403
          %v9993 = vunpack.c.l.b16 %v9404
          %v9994 = vunpack.c.h.b16 %v9404
          %v9995 = vunpack.c.l.b16 %v9405
          %v9996 = vunpack.c.h.b16 %v9405
          %v9997 = vunpack.c.l.b16 %v9406
          %v9998 = vunpack.c.h.b16 %v9406
          %v9999 = vunpack.c.l.b16 %v9407
          %v10000 = vunpack.c.h.b16 %v9407
          %v10001 = vunpack.c.l.b16 %v9408
          %v10002 = vunpack.c.h.b16 %v9408
          %v10003 = vunpack.c.l.b16 %v9409
          %v10004 = vunpack.c.h.b16 %v9409
          %v10005 = vunpack.c.l.b16 %v9410
          %v10006 = vunpack.c.h.b16 %v9410
          %v10007 = vunpack.c.l.b16 %v9411
          %v10008 = vunpack.c.h.b16 %v9411
          %v10009 = vunpack.c.l.b16 %v9412
          %v10010 = vunpack.c.h.b16 %v9412
          %v10011 = vpack.c.b16 %v9631, %v9627
          %v10012 = vpack.c.b16 %v9632, %v9628
          %v10013 = vpack.c.b16 %v9633, %v9629
          %v10014 = vpack.c.b16 %v9634, %v9630
          %v10015 = vpack.c.b16 %v9639, %v9635
          %v10016 = vpack.c.b16 %v9640, %v9636
          %v10017 = vpack.c.b16 %v9641, %v9637
          %v10018 = vpack.c.b16 %v9642, %v9638
          %v10019 = vpack.c.b16 %v9647, %v9643
          %v10020 = vpack.c.b16 %v9648, %v9644
          %v10021 = vpack.c.b16 %v9649, %v9645
          %v10022 = vpack.c.b16 %v9650, %v9646
          %v10023 = vpack.c.b16 %v9655, %v9651
          %v10024 = vpack.c.b16 %v9656, %v9652
          %v10025 = vpack.c.b16 %v9657, %v9653
          %v10026 = vpack.c.b16 %v9658, %v9654
          %v10027 = vpack.c.b16 %v9663, %v9659
          %v10028 = vpack.c.b16 %v9664, %v9660
          %v10029 = vpack.c.b16 %v9665, %v9661
          %v10030 = vpack.c.b16 %v9666, %v9662
          %v10031 = vpack.c.b16 %v9671, %v9667
          %v10032 = vpack.c.b16 %v9672, %v9668
          %v10033 = vpack.c.b16 %v9673, %v9669
          %v10034 = vpack.c.b16 %v9674, %v9670
          %v10035 = vpack.c.b16 %v9679, %v9675
          %v10036 = vpack.c.b16 %v9680, %v9676
          %v10037 = vpack.c.b16 %v9681, %v9677
          %v10038 = vpack.c.b16 %v9682, %v9678
          %v10039 = vpack.c.b16 %v9687, %v9683
          %v10040 = vpack.c.b16 %v9688, %v9684
          %v10041 = vpack.c.b16 %v9689, %v9685
          %v10042 = vpack.c.b16 %v9690, %v9686
          %v10043 = vpack.c.b16 %v9695, %v9691
          %v10044 = vpack.c.b16 %v9696, %v9692
          %v10045 = vpack.c.b16 %v9697, %v9693
          %v10046 = vpack.c.b16 %v9698, %v9694
          %v10047 = vpack.c.b16 %v9703, %v9699
          %v10048 = vpack.c.b16 %v9704, %v9700
          %v10049 = vpack.c.b16 %v9705, %v9701
          %v10050 = vpack.c.b16 %v9706, %v9702
          %v10051 = vpack.c.b16 %v9711, %v9707
          %v10052 = vpack.c.b16 %v9712, %v9708
          %v10053 = vpack.c.b16 %v9713, %v9709
          %v10054 = vpack.c.b16 %v9714, %v9710
          %v10055 = vpack.c.b16 %v9719, %v9715
          %v10056 = vpack.c.b16 %v9720, %v9716
          %v10057 = vpack.c.b16 %v9721, %v9717
          %v10058 = vpack.c.b16 %v9722, %v9718
          %v10059 = vpack.c.b16 %v9727, %v9723
          %v10060 = vpack.c.b16 %v9728, %v9724
          %v10061 = vpack.c.b16 %v9729, %v9725
          %v10062 = vpack.c.b16 %v9730, %v9726
          %v10063 = vpack.c.b16 %v9735, %v9731
          %v10064 = vpack.c.b16 %v9736, %v9732
          %v10065 = vpack.c.b16 %v9737, %v9733
          %v10066 = vpack.c.b16 %v9738, %v9734
          %v10067 = vpack.c.b16 %v9743, %v9739
          %v10068 = vpack.c.b16 %v9744, %v9740
          %v10069 = vpack.c.b16 %v9745, %v9741
          %v10070 = vpack.c.b16 %v9746, %v9742
          %v10071 = vpack.c.b16 %v9751, %v9747
          %v10072 = vpack.c.b16 %v9752, %v9748
          %v10073 = vpack.c.b16 %v9753, %v9749
          %v10074 = vpack.c.b16 %v9754, %v9750
          %v10075 = vpack.c.b16 %v9759, %v9755
          %v10076 = vpack.c.b16 %v9760, %v9756
          %v10077 = vpack.c.b16 %v9761, %v9757
          %v10078 = vpack.c.b16 %v9762, %v9758
          %v10079 = vpack.c.b16 %v9767, %v9763
          %v10080 = vpack.c.b16 %v9768, %v9764
          %v10081 = vpack.c.b16 %v9769, %v9765
          %v10082 = vpack.c.b16 %v9770, %v9766
          %v10083 = vpack.c.b16 %v9775, %v9771
          %v10084 = vpack.c.b16 %v9776, %v9772
          %v10085 = vpack.c.b16 %v9777, %v9773
          %v10086 = vpack.c.b16 %v9778, %v9774
          %v10087 = vpack.c.b16 %v9783, %v9779
          %v10088 = vpack.c.b16 %v9784, %v9780
          %v10089 = vpack.c.b16 %v9785, %v9781
          %v10090 = vpack.c.b16 %v9786, %v9782
          %v10091 = vpack.c.b16 %v9791, %v9787
          %v10092 = vpack.c.b16 %v9792, %v9788
          %v10093 = vpack.c.b16 %v9793, %v9789
          %v10094 = vpack.c.b16 %v9794, %v9790
          %v10095 = vpack.c.b16 %v9799, %v9795
          %v10096 = vpack.c.b16 %v9800, %v9796
          %v10097 = vpack.c.b16 %v9801, %v9797
          %v10098 = vpack.c.b16 %v9802, %v9798
          %v10099 = vpack.c.b16 %v9807, %v9803
          %v10100 = vpack.c.b16 %v9808, %v9804
          %v10101 = vpack.c.b16 %v9809, %v9805
          %v10102 = vpack.c.b16 %v9810, %v9806
          %v10103 = vpack.c.b16 %v9815, %v9811
          %v10104 = vpack.c.b16 %v9816, %v9812
          %v10105 = vpack.c.b16 %v9817, %v9813
          %v10106 = vpack.c.b16 %v9818, %v9814
          %v10107 = vpack.c.b16 %v9823, %v9819
          %v10108 = vpack.c.b16 %v9824, %v9820
          %v10109 = vpack.c.b16 %v9825, %v9821
          %v10110 = vpack.c.b16 %v9826, %v9822
          %v10111 = vpack.c.b16 %v9831, %v9827
          %v10112 = vpack.c.b16 %v9832, %v9828
          %v10113 = vpack.c.b16 %v9833, %v9829
          %v10114 = vpack.c.b16 %v9834, %v9830
          %v10115 = vpack.c.b16 %v9839, %v9835
          %v10116 = vpack.c.b16 %v9840, %v9836
          %v10117 = vpack.c.b16 %v9841, %v9837
          %v10118 = vpack.c.b16 %v9842, %v9838
          %v10119 = vpack.c.b16 %v9847, %v9843
          %v10120 = vpack.c.b16 %v9848, %v9844
          %v10121 = vpack.c.b16 %v9849, %v9845
          %v10122 = vpack.c.b16 %v9850, %v9846
          %v10123 = vpack.c.b16 %v9855, %v9851
          %v10124 = vpack.c.b16 %v9856, %v9852
          %v10125 = vpack.c.b16 %v9857, %v9853
          %v10126 = vpack.c.b16 %v9858, %v9854
          %v10127 = vpack.c.b16 %v9863, %v9859
          %v10128 = vpack.c.b16 %v9864, %v9860
          %v10129 = vpack.c.b16 %v9865, %v9861
          %v10130 = vpack.c.b16 %v9866, %v9862
          %v10131 = vpack.c.b16 %v9871, %v9867
          %v10132 = vpack.c.b16 %v9872, %v9868
          %v10133 = vpack.c.b16 %v9873, %v9869
          %v10134 = vpack.c.b16 %v9874, %v9870
          %v10135 = vpack.c.b16 %v9879, %v9875
          %v10136 = vpack.c.b16 %v9880, %v9876
          %v10137 = vpack.c.b16 %v9881, %v9877
          %v10138 = vpack.c.b16 %v9882, %v9878
          %v10139 = vpack.c.b16 %v9887, %v9883
          %v10140 = vpack.c.b16 %v9888, %v9884
          %v10141 = vpack.c.b16 %v9889, %v9885
          %v10142 = vpack.c.b16 %v9890, %v9886
          %v10143 = vpack.c.b16 %v9895, %v9891
          %v10144 = vpack.c.b16 %v9896, %v9892
          %v10145 = vpack.c.b16 %v9897, %v9893
          %v10146 = vpack.c.b16 %v9898, %v9894
          %v10147 = vpack.c.b16 %v9903, %v9899
          %v10148 = vpack.c.b16 %v9904, %v9900
          %v10149 = vpack.c.b16 %v9905, %v9901
          %v10150 = vpack.c.b16 %v9906, %v9902
          %v10151 = vpack.c.b16 %v9911, %v9907
          %v10152 = vpack.c.b16 %v9912, %v9908
          %v10153 = vpack.c.b16 %v9913, %v9909
          %v10154 = vpack.c.b16 %v9914, %v9910
          %v10155 = vpack.c.b16 %v9919, %v9915
          %v10156 = vpack.c.b16 %v9920, %v9916
          %v10157 = vpack.c.b16 %v9921, %v9917
          %v10158 = vpack.c.b16 %v9922, %v9918
          %v10159 = vpack.c.b16 %v9927, %v9923
          %v10160 = vpack.c.b16 %v9928, %v9924
          %v10161 = vpack.c.b16 %v9929, %v9925
          %v10162 = vpack.c.b16 %v9930, %v9926
          %v10163 = vpack.c.b16 %v9935, %v9931
          %v10164 = vpack.c.b16 %v9936, %v9932
          %v10165 = vpack.c.b16 %v9937, %v9933
          %v10166 = vpack.c.b16 %v9938, %v9934
          %v10167 = vpack.c.b16 %v9943, %v9939
          %v10168 = vpack.c.b16 %v9944, %v9940
          %v10169 = vpack.c.b16 %v9945, %v9941
          %v10170 = vpack.c.b16 %v9946, %v9942
          %v10171 = vpack.c.b16 %v9951, %v9947
          %v10172 = vpack.c.b16 %v9952, %v9948
          %v10173 = vpack.c.b16 %v9953, %v9949
          %v10174 = vpack.c.b16 %v9954, %v9950
          %v10175 = vpack.c.b16 %v9959, %v9955
          %v10176 = vpack.c.b16 %v9960, %v9956
          %v10177 = vpack.c.b16 %v9961, %v9957
          %v10178 = vpack.c.b16 %v9962, %v9958
          %v10179 = vpack.c.b16 %v9967, %v9963
          %v10180 = vpack.c.b16 %v9968, %v9964
          %v10181 = vpack.c.b16 %v9969, %v9965
          %v10182 = vpack.c.b16 %v9970, %v9966
          %v10183 = vpack.c.b16 %v9975, %v9971
          %v10184 = vpack.c.b16 %v9976, %v9972
          %v10185 = vpack.c.b16 %v9977, %v9973
          %v10186 = vpack.c.b16 %v9978, %v9974
          %v10187 = vpack.c.b16 %v9983, %v9979
          %v10188 = vpack.c.b16 %v9984, %v9980
          %v10189 = vpack.c.b16 %v9985, %v9981
          %v10190 = vpack.c.b16 %v9986, %v9982
          %v10191 = vpack.c.b16 %v9991, %v9987
          %v10192 = vpack.c.b16 %v9992, %v9988
          %v10193 = vpack.c.b16 %v9993, %v9989
          %v10194 = vpack.c.b16 %v9994, %v9990
          %v10195 = vpack.c.b16 %v9999, %v9995
          %v10196 = vpack.c.b16 %v10000, %v9996
          %v10197 = vpack.c.b16 %v10001, %v9997
          %v10198 = vpack.c.b16 %v10002, %v9998
          %v10199 = vpack.c.b16 %v10007, %v10003
          %v10200 = vpack.c.b16 %v10008, %v10004
          %v10201 = vpack.c.b16 %v10009, %v10005
          %v10202 = vpack.c.b16 %v10010, %v10006
          %10395 = vmatprep.subr.bf16.mxu0 %v10012
          %10396 = vmatpush1.bf16.msra.mxu0 %v10011
          %10397 = vmatprep.subr.bf16.mxu0 %v10016
          %10398 = vmatpush1.bf16.msra.mxu0 %v10015
          %10399 = vmatprep.subr.bf16.mxu0 %v10020
          %10400 = vmatpush1.bf16.msra.mxu0 %v10019
          %10401 = vmatprep.subr.bf16.mxu0 %v10024
          %10402 = vmatpush1.bf16.msra.mxu0 %v10023
          %10403 = vmatprep.subr.bf16.mxu0 %v10028
          %10404 = vmatpush1.bf16.msra.mxu0 %v10027
          %10405 = vmatprep.subr.bf16.mxu0 %v10032
          %10406 = vmatpush1.bf16.msra.mxu0 %v10031
          %10407 = vmatprep.subr.bf16.mxu0 %v10036
          %10408 = vmatpush1.bf16.msra.mxu0 %v10035
          %10409 = vmatprep.subr.bf16.mxu0 %v10040
          %10410 = vmatpush1.bf16.msra.mxu0 %v10039
          %10411 = vmatprep.subr.bf16.mxu0 %v10044
          %10412 = vmatpush1.bf16.msra.mxu0 %v10043
          %10413 = vmatprep.subr.bf16.mxu0 %v10048
          %10414 = vmatpush1.bf16.msra.mxu0 %v10047
          %10415 = vmatprep.subr.bf16.mxu0 %v10052
          %10416 = vmatpush1.bf16.msra.mxu0 %v10051
          %10417 = vmatprep.subr.bf16.mxu0 %v10056
          %10418 = vmatpush1.bf16.msra.mxu0 %v10055
          %10419 = vmatprep.subr.bf16.mxu0 %v10060
          %10420 = vmatpush1.bf16.msra.mxu0 %v10059
          %10421 = vmatprep.subr.bf16.mxu0 %v10064
          %10422 = vmatpush1.bf16.msra.mxu0 %v10063
          %10423 = vmatprep.subr.bf16.mxu0 %v10068
          %10424 = vmatpush1.bf16.msra.mxu0 %v10067
          %10425 = vmatprep.subr.bf16.mxu0 %v10072
          %10426 = vmatpush1.bf16.msra.mxu0 %v10071
          %10427 = vmatprep.mubr.bf16.mxu0 %v9216
          %10428 = vmatmul.mubr.bf16.gmra.mrb[0].mxu0 %v9215
          %v10429 = vpop.f32.mrb[0].mxu0
          %v10430 = vadd.f32 %v9418, %v10429
          %v10431 = vpop.f32.mrb[0].mxu0
          %v10432 = vadd.f32 %v9422, %v10431
          %v10433 = vpop.f32.mrb[0].mxu0
          %v10434 = vpop.f32.mrb[0].mxu0
          %10435 = vdwg.mxu0
          %10436 = vmatprep.subr.bf16.mxu0 %v10076
          %10437 = vmatpush1.bf16.msra.mxu0 %v10075
          %10438 = vmatprep.subr.bf16.mxu0 %v10080
          %10439 = vmatpush1.bf16.msra.mxu0 %v10079
          %10440 = vmatprep.subr.bf16.mxu0 %v10084
          %10441 = vmatpush1.bf16.msra.mxu0 %v10083
          %10442 = vmatprep.subr.bf16.mxu0 %v10088
          %10443 = vmatpush1.bf16.msra.mxu0 %v10087
          %10444 = vmatprep.subr.bf16.mxu0 %v10092
          %10445 = vmatpush1.bf16.msra.mxu0 %v10091
          %10446 = vmatprep.subr.bf16.mxu0 %v10096
          %10447 = vmatpush1.bf16.msra.mxu0 %v10095
          %10448 = vmatprep.subr.bf16.mxu0 %v10100
          %10449 = vmatpush1.bf16.msra.mxu0 %v10099
          %10450 = vmatprep.subr.bf16.mxu0 %v10104
          %10451 = vmatpush1.bf16.msra.mxu0 %v10103
          %10452 = vmatprep.subr.bf16.mxu0 %v10108
          %10453 = vmatpush1.bf16.msra.mxu0 %v10107
          %10454 = vmatprep.subr.bf16.mxu0 %v10112
          %10455 = vmatpush1.bf16.msra.mxu0 %v10111
          %10456 = vmatprep.subr.bf16.mxu0 %v10116
          %10457 = vmatpush1.bf16.msra.mxu0 %v10115
          %10458 = vmatprep.subr.bf16.mxu0 %v10120
          %10459 = vmatpush1.bf16.msra.mxu0 %v10119
          %10460 = vmatprep.subr.bf16.mxu0 %v10124
          %10461 = vmatpush1.bf16.msra.mxu0 %v10123
          %10462 = vmatprep.subr.bf16.mxu0 %v10128
          %10463 = vmatpush1.bf16.msra.mxu0 %v10127
          %10464 = vmatprep.subr.bf16.mxu0 %v10132
          %10465 = vmatpush1.bf16.msra.mxu0 %v10131
          %10466 = vmatprep.subr.bf16.mxu0 %v10136
          %10467 = vmatpush1.bf16.msra.mxu0 %v10135
          %10468 = vmatprep.mubr.bf16.mxu0 %v9218
          %10469 = vmatmul.mubr.bf16.gmra.mrb[0].mxu0 %v9217
          %v10470 = vpop.f32.mrb[0].mxu0
          %v10471 = vadd.f32 %v10430, %v10470
          %v10472 = vpop.f32.mrb[0].mxu0
          %v10473 = vadd.f32 %v10432, %v10472
          %v10474 = vpop.f32.mrb[0].mxu0
          %v10475 = vpop.f32.mrb[0].mxu0
          %10476 = vdwg.mxu0
          %10477 = vmatprep.subr.bf16.mxu0 %v10140
          %10478 = vmatpush1.bf16.msra.mxu0 %v10139
          %10479 = vmatprep.subr.bf16.mxu0 %v10144
          %10480 = vmatpush1.bf16.msra.mxu0 %v10143
          %10481 = vmatprep.subr.bf16.mxu0 %v10148
          %10482 = vmatpush1.bf16.msra.mxu0 %v10147
          %10483 = vmatprep.subr.bf16.mxu0 %v10152
          %10484 = vmatpush1.bf16.msra.mxu0 %v10151
          %10485 = vmatprep.subr.bf16.mxu0 %v10156
          %10486 = vmatpush1.bf16.msra.mxu0 %v10155
          %10487 = vmatprep.subr.bf16.mxu0 %v10160
          %10488 = vmatpush1.bf16.msra.mxu0 %v10159
          %10489 = vmatprep.subr.bf16.mxu0 %v10164
          %10490 = vmatpush1.bf16.msra.mxu0 %v10163
          %10491 = vmatprep.subr.bf16.mxu0 %v10168
          %10492 = vmatpush1.bf16.msra.mxu0 %v10167
          %10493 = vmatprep.subr.bf16.mxu0 %v10172
          %10494 = vmatpush1.bf16.msra.mxu0 %v10171
          %10495 = vmatprep.subr.bf16.mxu0 %v10176
          %10496 = vmatpush1.bf16.msra.mxu0 %v10175
          %10497 = vmatprep.subr.bf16.mxu0 %v10180
          %10498 = vmatpush1.bf16.msra.mxu0 %v10179
          %10499 = vmatprep.subr.bf16.mxu0 %v10184
          %10500 = vmatpush1.bf16.msra.mxu0 %v10183
          %10501 = vmatprep.subr.bf16.mxu0 %v10188
          %10502 = vmatpush1.bf16.msra.mxu0 %v10187
          %10503 = vmatprep.subr.bf16.mxu0 %v10192
          %10504 = vmatpush1.bf16.msra.mxu0 %v10191
          %10505 = vmatprep.subr.bf16.mxu0 %v10196
          %10506 = vmatpush1.bf16.msra.mxu0 %v10195
          %10507 = vmatprep.subr.bf16.mxu0 %v10200
          %10508 = vmatpush1.bf16.msra.mxu0 %v10199
          %10509 = vmatprep.mubr.bf16.mxu0 %v9220
          %10510 = vmatmul.mubr.bf16.gmra.mrb[0].mxu0 %v9219
          %v10511 = vpop.f32.mrb[0].mxu0
          %v10512 = vadd.f32 %v10471, %v10511
          %v10513 = vpop.f32.mrb[0].mxu0
          %v10514 = vadd.f32 %v10473, %v10513
          %v10515 = vpop.f32.mrb[0].mxu0
          %v10516 = vpop.f32.mrb[0].mxu0
          %10517 = vdwg.mxu0
          %10518 = vmatprep.subr.bf16.mxu0 %v10014
          %10519 = vmatpush1.bf16.msra.mxu0 %v10013
          %10520 = vmatprep.subr.bf16.mxu0 %v10018
          %10521 = vmatpush1.bf16.msra.mxu0 %v10017
          %10522 = vmatprep.subr.bf16.mxu0 %v10022
          %10523 = vmatpush1.bf16.msra.mxu0 %v10021
          %10524 = vmatprep.subr.bf16.mxu0 %v10026
          %10525 = vmatpush1.bf16.msra.mxu0 %v10025
          %10526 = vmatprep.subr.bf16.mxu0 %v10030
          %10527 = vmatpush1.bf16.msra.mxu0 %v10029
          %10528 = vmatprep.subr.bf16.mxu0 %v10034
          %10529 = vmatpush1.bf16.msra.mxu0 %v10033
          %10530 = vmatprep.subr.bf16.mxu0 %v10038
          %10531 = vmatpush1.bf16.msra.mxu0 %v10037
          %10532 = vmatprep.subr.bf16.mxu0 %v10042
          %10533 = vmatpush1.bf16.msra.mxu0 %v10041
          %10534 = vmatprep.subr.bf16.mxu0 %v10046
          %10535 = vmatpush1.bf16.msra.mxu0 %v10045
          %10536 = vmatprep.subr.bf16.mxu0 %v10050
          %10537 = vmatpush1.bf16.msra.mxu0 %v10049
          %10538 = vmatprep.subr.bf16.mxu0 %v10054
          %10539 = vmatpush1.bf16.msra.mxu0 %v10053
          %10540 = vmatprep.subr.bf16.mxu0 %v10058
          %10541 = vmatpush1.bf16.msra.mxu0 %v10057
          %10542 = vmatprep.subr.bf16.mxu0 %v10062
          %10543 = vmatpush1.bf16.msra.mxu0 %v10061
          %10544 = vmatprep.subr.bf16.mxu0 %v10066
          %10545 = vmatpush1.bf16.msra.mxu0 %v10065
          %10546 = vmatprep.subr.bf16.mxu0 %v10070
          %10547 = vmatpush1.bf16.msra.mxu0 %v10069
          %10548 = vmatprep.subr.bf16.mxu0 %v10074
          %10549 = vmatpush1.bf16.msra.mxu0 %v10073
          %10550 = vmatprep.mubr.bf16.mxu0 %v9216
          %10551 = vmatmul.mubr.bf16.gmra.mrb[0].mxu0 %v9215
          %v10552 = vpop.f32.mrb[0].mxu0
          %v10553 = vadd.f32 %v9426, %v10552
          %v10554 = vpop.f32.mrb[0].mxu0
          %v10555 = vadd.f32 %v9430, %v10554
          %v10556 = vpop.f32.mrb[0].mxu0
          %v10557 = vpop.f32.mrb[0].mxu0
          %10558 = vdwg.mxu0
          %10559 = vmatprep.subr.bf16.mxu0 %v10078
          %10560 = vmatpush1.bf16.msra.mxu0 %v10077
          %10561 = vmatprep.subr.bf16.mxu0 %v10082
          %10562 = vmatpush1.bf16.msra.mxu0 %v10081
          %10563 = vmatprep.subr.bf16.mxu0 %v10086
          %10564 = vmatpush1.bf16.msra.mxu0 %v10085
          %10565 = vmatprep.subr.bf16.mxu0 %v10090
          %10566 = vmatpush1.bf16.msra.mxu0 %v10089
          %10567 = vmatprep.subr.bf16.mxu0 %v10094
          %10568 = vmatpush1.bf16.msra.mxu0 %v10093
          %10569 = vmatprep.subr.bf16.mxu0 %v10098
          %10570 = vmatpush1.bf16.msra.mxu0 %v10097
          %10571 = vmatprep.subr.bf16.mxu0 %v10102
          %10572 = vmatpush1.bf16.msra.mxu0 %v10101
          %10573 = vmatprep.subr.bf16.mxu0 %v10106
          %10574 = vmatpush1.bf16.msra.mxu0 %v10105
          %10575 = vmatprep.subr.bf16.mxu0 %v10110
          %10576 = vmatpush1.bf16.msra.mxu0 %v10109
          %10577 = vmatprep.subr.bf16.mxu0 %v10114
          %10578 = vmatpush1.bf16.msra.mxu0 %v10113
          %10579 = vmatprep.subr.bf16.mxu0 %v10118
          %10580 = vmatpush1.bf16.msra.mxu0 %v10117
          %10581 = vmatprep.subr.bf16.mxu0 %v10122
          %10582 = vmatpush1.bf16.msra.mxu0 %v10121
          %10583 = vmatprep.subr.bf16.mxu0 %v10126
          %10584 = vmatpush1.bf16.msra.mxu0 %v10125
          %10585 = vmatprep.subr.bf16.mxu0 %v10130
          %10586 = vmatpush1.bf16.msra.mxu0 %v10129
          %10587 = vmatprep.subr.bf16.mxu0 %v10134
          %10588 = vmatpush1.bf16.msra.mxu0 %v10133
          %10589 = vmatprep.subr.bf16.mxu0 %v10138
          %10590 = vmatpush1.bf16.msra.mxu0 %v10137
          %10591 = vmatprep.mubr.bf16.mxu0 %v9218
          %10592 = vmatmul.mubr.bf16.gmra.mrb[0].mxu0 %v9217
          %v10593 = vpop.f32.mrb[0].mxu0
          %v10594 = vadd.f32 %v10553, %v10593
          %v10595 = vpop.f32.mrb[0].mxu0
          %v10596 = vadd.f32 %v10555, %v10595
          %v10597 = vpop.f32.mrb[0].mxu0
          %v10598 = vpop.f32.mrb[0].mxu0
          %10599 = vdwg.mxu0
          %10600 = vmatprep.subr.bf16.mxu0 %v10142
          %10601 = vmatpush1.bf16.msra.mxu0 %v10141
          %10602 = vmatprep.subr.bf16.mxu0 %v10146
          %10603 = vmatpush1.bf16.msra.mxu0 %v10145
          %10604 = vmatprep.subr.bf16.mxu0 %v10150
          %10605 = vmatpush1.bf16.msra.mxu0 %v10149
          %10606 = vmatprep.subr.bf16.mxu0 %v10154
          %10607 = vmatpush1.bf16.msra.mxu0 %v10153
          %10608 = vmatprep.subr.bf16.mxu0 %v10158
          %10609 = vmatpush1.bf16.msra.mxu0 %v10157
          %10610 = vmatprep.subr.bf16.mxu0 %v10162
          %10611 = vmatpush1.bf16.msra.mxu0 %v10161
          %10612 = vmatprep.subr.bf16.mxu0 %v10166
          %10613 = vmatpush1.bf16.msra.mxu0 %v10165
          %10614 = vmatprep.subr.bf16.mxu0 %v10170
          %10615 = vmatpush1.bf16.msra.mxu0 %v10169
          %10616 = vmatprep.subr.bf16.mxu0 %v10174
          %10617 = vmatpush1.bf16.msra.mxu0 %v10173
          %10618 = vmatprep.subr.bf16.mxu0 %v10178
          %10619 = vmatpush1.bf16.msra.mxu0 %v10177
          %10620 = vmatprep.subr.bf16.mxu0 %v10182
          %10621 = vmatpush1.bf16.msra.mxu0 %v10181
          %10622 = vmatprep.subr.bf16.mxu0 %v10186
          %10623 = vmatpush1.bf16.msra.mxu0 %v10185
          %10624 = vmatprep.subr.bf16.mxu0 %v10190
          %10625 = vmatpush1.bf16.msra.mxu0 %v10189
          %10626 = vmatprep.subr.bf16.mxu0 %v10194
          %10627 = vmatpush1.bf16.msra.mxu0 %v10193
          %10628 = vmatprep.subr.bf16.mxu0 %v10198
          %10629 = vmatpush1.bf16.msra.mxu0 %v10197
          %10630 = vmatprep.subr.bf16.mxu0 %v10202
          %10631 = vmatpush1.bf16.msra.mxu0 %v10201
          %10632 = vmatprep.mubr.bf16.mxu0 %v9220
          %10633 = vmatmul.mubr.bf16.gmra.mrb[0].mxu0 %v9219
          %v10634 = vpop.f32.mrb[0].mxu0
          %v10635 = vadd.f32 %v10594, %v10634
          %v10636 = vpop.f32.mrb[0].mxu0
          %v10637 = vadd.f32 %v10596, %v10636
          %v10638 = vpop.f32.mrb[0].mxu0
          %v10639 = vpop.f32.mrb[0].mxu0
          %10640 = vdwg.mxu0
          %v10641 = vmax.f32 %v10512, 0.0
          %v10642 = vmax.f32 %v10514, 0.0
          %v10643 = vmax.f32 %v10635, 0.0
          %v10644 = vmax.f32 %v10637, 0.0
          %v10645 = vpack.c.bf16 %v10641, %v10641
          %v10646 = vpack.c.bf16 %v10642, %v10642
          %v10647 = vpack.c.bf16 %v10643, %v10643
          %v10648 = vpack.c.bf16 %v10644, %v10644
          %v10649 = vld [vmem:[#allocation12] sm:$0xff]
          %v10650 = vld [vmem:[#allocation12 + $0x8] sm:$0xff]
          %v10651 = vld [vmem:[#allocation12 + $0x10] sm:$0xff]
          %v10652 = vld [vmem:[#allocation12 + $0x18] sm:$0xff]
          %v10653 = vld [vmem:[#allocation12 + $0x20] sm:$0xff]
          %v10654 = vld [vmem:[#allocation12 + $0x28] sm:$0xff]
          %v10655 = vld [vmem:[#allocation12 + $0x30] sm:$0xff]
          %v10656 = vld [vmem:[#allocation12 + $0x38] sm:$0xff]
          %v10657 = vld [vmem:[#allocation12 + $0x40] sm:$0xff]
          %v10658 = vld [vmem:[#allocation12 + $0x48] sm:$0xff]
          %v10659 = vld [vmem:[#allocation12 + $0x50] sm:$0xff]
          %v10660 = vld [vmem:[#allocation12 + $0x58] sm:$0xff]
          %v10661 = vld [vmem:[#allocation12 + $0x60] sm:$0xff]
          %v10662 = vld [vmem:[#allocation12 + $0x68] sm:$0xff]
          %v10663 = vld [vmem:[#allocation12 + $0x70] sm:$0xff]
          %v10664 = vld [vmem:[#allocation12 + $0x78] sm:$0xff]
          %v10665 = vld [vmem:[#allocation12 + $0x80] sm:$0xff]
          %v10666 = vld [vmem:[#allocation12 + $0x88] sm:$0xff]
          %v10667 = vld [vmem:[#allocation12 + $0x90] sm:$0xff]
          %v10668 = vld [vmem:[#allocation12 + $0x98] sm:$0xff]
          %v10669 = vld [vmem:[#allocation12 + $0xa0] sm:$0xff]
          %v10670 = vld [vmem:[#allocation12 + $0xa8] sm:$0xff]
          %v10671 = vld [vmem:[#allocation12 + $0xb0] sm:$0xff]
          %v10672 = vld [vmem:[#allocation12 + $0xb8] sm:$0xff]
          %v10673 = vld [vmem:[#allocation12 + $0xc0] sm:$0xff]
          %v10674 = vld [vmem:[#allocation12 + $0xc8] sm:$0xff]
          %v10675 = vld [vmem:[#allocation12 + $0xd0] sm:$0xff]
          %v10676 = vld [vmem:[#allocation12 + $0xd8] sm:$0xff]
          %v10677 = vld [vmem:[#allocation12 + $0xe0] sm:$0xff]
          %v10678 = vld [vmem:[#allocation12 + $0xe8] sm:$0xff]
          %v10679 = vld [vmem:[#allocation12 + $0xf0] sm:$0xff]
          %v10680 = vld [vmem:[#allocation12 + $0xf8] sm:$0xff]
          %v10681 = vld [vmem:[#allocation12 + $0x100] sm:$0xff]
          %v10682 = vld [vmem:[#allocation12 + $0x108] sm:$0xff]
          %v10683 = vld [vmem:[#allocation12 + $0x110] sm:$0xff]
          %v10684 = vld [vmem:[#allocation12 + $0x118] sm:$0xff]
          %v10685 = vld [vmem:[#allocation12 + $0x120] sm:$0xff]
          %v10686 = vld [vmem:[#allocation12 + $0x128] sm:$0xff]
          %v10687 = vld [vmem:[#allocation12 + $0x130] sm:$0xff]
          %v10688 = vld [vmem:[#allocation12 + $0x138] sm:$0xff]
          %v10689 = vld [vmem:[#allocation12 + $0x140] sm:$0xff]
          %v10690 = vld [vmem:[#allocation12 + $0x148] sm:$0xff]
          %v10691 = vld [vmem:[#allocation12 + $0x150] sm:$0xff]
          %v10692 = vld [vmem:[#allocation12 + $0x158] sm:$0xff]
          %v10693 = vld [vmem:[#allocation12 + $0x160] sm:$0xff]
          %v10694 = vld [vmem:[#allocation12 + $0x168] sm:$0xff]
          %v10695 = vld [vmem:[#allocation12 + $0x170] sm:$0xff]
          %v10696 = vld [vmem:[#allocation12 + $0x178] sm:$0xff]
          %v10697 = vld [vmem:[#allocation12 + $0x180] sm:$0xff]
          %v10698 = vld [vmem:[#allocation12 + $0x188] sm:$0xff]
          %v10699 = vld [vmem:[#allocation12 + $0x190] sm:$0xff]
          %v10700 = vld [vmem:[#allocation12 + $0x198] sm:$0xff]
          %v10701 = vld [vmem:[#allocation12 + $0x1a0] sm:$0xff]
          %v10702 = vld [vmem:[#allocation12 + $0x1a8] sm:$0xff]
          %v10703 = vld [vmem:[#allocation12 + $0x1b0] sm:$0xff]
          %v10704 = vld [vmem:[#allocation12 + $0x1b8] sm:$0xff]
          %v10705 = vld [vmem:[#allocation12 + $0x1c0] sm:$0xff]
          %v10706 = vld [vmem:[#allocation12 + $0x1c8] sm:$0xff]
          %v10707 = vld [vmem:[#allocation12 + $0x1d0] sm:$0xff]
          %v10708 = vld [vmem:[#allocation12 + $0x1d8] sm:$0xff]
          %v10709 = vld [vmem:[#allocation12 + $0x1e0] sm:$0xff]
          %v10710 = vld [vmem:[#allocation12 + $0x1e8] sm:$0xff]
          %v10711 = vld [vmem:[#allocation12 + $0x1f0] sm:$0xff]
          %v10712 = vld [vmem:[#allocation12 + $0x1f8] sm:$0xff]
          %v10713 = vld [vmem:[#allocation14] sm:$0x3]
          %v10715 = vlaneseq
          %v10716 = vshrl.u32 %v10715, 7
          %v10717 = vsub.s32 0, %v10716
          %v10718 = vrot.slane %v10713, %v10717
          %v10719 = vlaneseq
          %v10720 = vshrl.u32 %v10719, 7
          %v10721 = vsub.s32 1, %v10720
          %v10722 = vrot.slane %v10713, %v10721
          %v10789 = vunpack.c.l.b16 %v10649
          %v10790 = vunpack.c.h.b16 %v10649
          %v10791 = vunpack.c.l.b16 %v10650
          %v10792 = vunpack.c.h.b16 %v10650
          %v10793 = vunpack.c.l.b16 %v10651
          %v10794 = vunpack.c.h.b16 %v10651
          %v10795 = vunpack.c.l.b16 %v10652
          %v10796 = vunpack.c.h.b16 %v10652
          %v10797 = vunpack.c.l.b16 %v10653
          %v10798 = vunpack.c.h.b16 %v10653
          %v10799 = vunpack.c.l.b16 %v10654
          %v10800 = vunpack.c.h.b16 %v10654
          %v10801 = vunpack.c.l.b16 %v10655
          %v10802 = vunpack.c.h.b16 %v10655
          %v10803 = vunpack.c.l.b16 %v10656
          %v10804 = vunpack.c.h.b16 %v10656
          %v10805 = vunpack.c.l.b16 %v10657
          %v10806 = vunpack.c.h.b16 %v10657
          %v10807 = vunpack.c.l.b16 %v10658
          %v10808 = vunpack.c.h.b16 %v10658
          %v10809 = vunpack.c.l.b16 %v10659
          %v10810 = vunpack.c.h.b16 %v10659
          %v10811 = vunpack.c.l.b16 %v10660
          %v10812 = vunpack.c.h.b16 %v10660
          %v10813 = vunpack.c.l.b16 %v10661
          %v10814 = vunpack.c.h.b16 %v10661
          %v10815 = vunpack.c.l.b16 %v10662
          %v10816 = vunpack.c.h.b16 %v10662
          %v10817 = vunpack.c.l.b16 %v10663
          %v10818 = vunpack.c.h.b16 %v10663
          %v10819 = vunpack.c.l.b16 %v10664
          %v10820 = vunpack.c.h.b16 %v10664
          %v10821 = vunpack.c.l.b16 %v10665
          %v10822 = vunpack.c.h.b16 %v10665
          %v10823 = vunpack.c.l.b16 %v10666
          %v10824 = vunpack.c.h.b16 %v10666
          %v10825 = vunpack.c.l.b16 %v10667
          %v10826 = vunpack.c.h.b16 %v10667
          %v10827 = vunpack.c.l.b16 %v10668
          %v10828 = vunpack.c.h.b16 %v10668
          %v10829 = vunpack.c.l.b16 %v10669
          %v10830 = vunpack.c.h.b16 %v10669
          %v10831 = vunpack.c.l.b16 %v10670
          %v10832 = vunpack.c.h.b16 %v10670
          %v10833 = vunpack.c.l.b16 %v10671
          %v10834 = vunpack.c.h.b16 %v10671
          %v10835 = vunpack.c.l.b16 %v10672
          %v10836 = vunpack.c.h.b16 %v10672
          %v10837 = vunpack.c.l.b16 %v10673
          %v10838 = vunpack.c.h.b16 %v10673
          %v10839 = vunpack.c.l.b16 %v10674
          %v10840 = vunpack.c.h.b16 %v10674
          %v10841 = vunpack.c.l.b16 %v10675
          %v10842 = vunpack.c.h.b16 %v10675
          %v10843 = vunpack.c.l.b16 %v10676
          %v10844 = vunpack.c.h.b16 %v10676
          %v10845 = vunpack.c.l.b16 %v10677
          %v10846 = vunpack.c.h.b16 %v10677
          %v10847 = vunpack.c.l.b16 %v10678
          %v10848 = vunpack.c.h.b16 %v10678
          %v10849 = vunpack.c.l.b16 %v10679
          %v10850 = vunpack.c.h.b16 %v10679
          %v10851 = vunpack.c.l.b16 %v10680
          %v10852 = vunpack.c.h.b16 %v10680
          %v10853 = vunpack.c.l.b16 %v10681
          %v10854 = vunpack.c.h.b16 %v10681
          %v10855 = vunpack.c.l.b16 %v10682
          %v10856 = vunpack.c.h.b16 %v10682
          %v10857 = vunpack.c.l.b16 %v10683
          %v10858 = vunpack.c.h.b16 %v10683
          %v10859 = vunpack.c.l.b16 %v10684
          %v10860 = vunpack.c.h.b16 %v10684
          %v10861 = vunpack.c.l.b16 %v10685
          %v10862 = vunpack.c.h.b16 %v10685
          %v10863 = vunpack.c.l.b16 %v10686
          %v10864 = vunpack.c.h.b16 %v10686
          %v10865 = vunpack.c.l.b16 %v10687
          %v10866 = vunpack.c.h.b16 %v10687
          %v10867 = vunpack.c.l.b16 %v10688
          %v10868 = vunpack.c.h.b16 %v10688
          %v10869 = vunpack.c.l.b16 %v10689
          %v10870 = vunpack.c.h.b16 %v10689
          %v10871 = vunpack.c.l.b16 %v10690
          %v10872 = vunpack.c.h.b16 %v10690
          %v10873 = vunpack.c.l.b16 %v10691
          %v10874 = vunpack.c.h.b16 %v10691
          %v10875 = vunpack.c.l.b16 %v10692
          %v10876 = vunpack.c.h.b16 %v10692
          %v10877 = vunpack.c.l.b16 %v10693
          %v10878 = vunpack.c.h.b16 %v10693
          %v10879 = vunpack.c.l.b16 %v10694
          %v10880 = vunpack.c.h.b16 %v10694
          %v10881 = vunpack.c.l.b16 %v10695
          %v10882 = vunpack.c.h.b16 %v10695
          %v10883 = vunpack.c.l.b16 %v10696
          %v10884 = vunpack.c.h.b16 %v10696
          %v10885 = vunpack.c.l.b16 %v10697
          %v10886 = vunpack.c.h.b16 %v10697
          %v10887 = vunpack.c.l.b16 %v10698
          %v10888 = vunpack.c.h.b16 %v10698
          %v10889 = vunpack.c.l.b16 %v10699
          %v10890 = vunpack.c.h.b16 %v10699
          %v10891 = vunpack.c.l.b16 %v10700
          %v10892 = vunpack.c.h.b16 %v10700
          %v10893 = vunpack.c.l.b16 %v10701
          %v10894 = vunpack.c.h.b16 %v10701
          %v10895 = vunpack.c.l.b16 %v10702
          %v10896 = vunpack.c.h.b16 %v10702
          %v10897 = vunpack.c.l.b16 %v10703
          %v10898 = vunpack.c.h.b16 %v10703
          %v10899 = vunpack.c.l.b16 %v10704
          %v10900 = vunpack.c.h.b16 %v10704
          %v10901 = vunpack.c.l.b16 %v10705
          %v10902 = vunpack.c.h.b16 %v10705
          %v10903 = vunpack.c.l.b16 %v10706
          %v10904 = vunpack.c.h.b16 %v10706
          %v10905 = vunpack.c.l.b16 %v10707
          %v10906 = vunpack.c.h.b16 %v10707
          %v10907 = vunpack.c.l.b16 %v10708
          %v10908 = vunpack.c.h.b16 %v10708
          %v10909 = vunpack.c.l.b16 %v10709
          %v10910 = vunpack.c.h.b16 %v10709
          %v10911 = vunpack.c.l.b16 %v10710
          %v10912 = vunpack.c.h.b16 %v10710
          %v10913 = vunpack.c.l.b16 %v10711
          %v10914 = vunpack.c.h.b16 %v10711
          %v10915 = vunpack.c.l.b16 %v10712
          %v10916 = vunpack.c.h.b16 %v10712
          %v10917 = vpack.c.b16 %v10791, %v10789
          %v10918 = vpack.c.b16 %v10792, %v10790
          %v10919 = vpack.c.b16 %v10795, %v10793
          %v10920 = vpack.c.b16 %v10796, %v10794
          %v10921 = vpack.c.b16 %v10799, %v10797
          %v10922 = vpack.c.b16 %v10800, %v10798
          %v10923 = vpack.c.b16 %v10803, %v10801
          %v10924 = vpack.c.b16 %v10804, %v10802
          %v10925 = vpack.c.b16 %v10807, %v10805
          %v10926 = vpack.c.b16 %v10808, %v10806
          %v10927 = vpack.c.b16 %v10811, %v10809
          %v10928 = vpack.c.b16 %v10812, %v10810
          %v10929 = vpack.c.b16 %v10815, %v10813
          %v10930 = vpack.c.b16 %v10816, %v10814
          %v10931 = vpack.c.b16 %v10819, %v10817
          %v10932 = vpack.c.b16 %v10820, %v10818
          %v10933 = vpack.c.b16 %v10823, %v10821
          %v10934 = vpack.c.b16 %v10824, %v10822
          %v10935 = vpack.c.b16 %v10827, %v10825
          %v10936 = vpack.c.b16 %v10828, %v10826
          %v10937 = vpack.c.b16 %v10831, %v10829
          %v10938 = vpack.c.b16 %v10832, %v10830
          %v10939 = vpack.c.b16 %v10835, %v10833
          %v10940 = vpack.c.b16 %v10836, %v10834
          %v10941 = vpack.c.b16 %v10839, %v10837
          %v10942 = vpack.c.b16 %v10840, %v10838
          %v10943 = vpack.c.b16 %v10843, %v10841
          %v10944 = vpack.c.b16 %v10844, %v10842
          %v10945 = vpack.c.b16 %v10847, %v10845
          %v10946 = vpack.c.b16 %v10848, %v10846
          %v10947 = vpack.c.b16 %v10851, %v10849
          %v10948 = vpack.c.b16 %v10852, %v10850
          %v10949 = vpack.c.b16 %v10855, %v10853
          %v10950 = vpack.c.b16 %v10856, %v10854
          %v10951 = vpack.c.b16 %v10859, %v10857
          %v10952 = vpack.c.b16 %v10860, %v10858
          %v10953 = vpack.c.b16 %v10863, %v10861
          %v10954 = vpack.c.b16 %v10864, %v10862
          %v10955 = vpack.c.b16 %v10867, %v10865
          %v10956 = vpack.c.b16 %v10868, %v10866
          %v10957 = vpack.c.b16 %v10871, %v10869
          %v10958 = vpack.c.b16 %v10872, %v10870
          %v10959 = vpack.c.b16 %v10875, %v10873
          %v10960 = vpack.c.b16 %v10876, %v10874
          %v10961 = vpack.c.b16 %v10879, %v10877
          %v10962 = vpack.c.b16 %v10880, %v10878
          %v10963 = vpack.c.b16 %v10883, %v10881
          %v10964 = vpack.c.b16 %v10884, %v10882
          %v10965 = vpack.c.b16 %v10887, %v10885
          %v10966 = vpack.c.b16 %v10888, %v10886
          %v10967 = vpack.c.b16 %v10891, %v10889
          %v10968 = vpack.c.b16 %v10892, %v10890
          %v10969 = vpack.c.b16 %v10895, %v10893
          %v10970 = vpack.c.b16 %v10896, %v10894
          %v10971 = vpack.c.b16 %v10899, %v10897
          %v10972 = vpack.c.b16 %v10900, %v10898
          %v10973 = vpack.c.b16 %v10903, %v10901
          %v10974 = vpack.c.b16 %v10904, %v10902
          %v10975 = vpack.c.b16 %v10907, %v10905
          %v10976 = vpack.c.b16 %v10908, %v10906
          %v10977 = vpack.c.b16 %v10911, %v10909
          %v10978 = vpack.c.b16 %v10912, %v10910
          %v10979 = vpack.c.b16 %v10915, %v10913
          %v10980 = vpack.c.b16 %v10916, %v10914
          %11045 = vmatprep.subr.bf16.mxu0 %v10918
          %11046 = vmatpush1.bf16.msra.mxu0 %v10917
          %11047 = vmatprep.subr.bf16.mxu0 %v10920
          %11048 = vmatpush1.bf16.msra.mxu0 %v10919
          %11049 = vmatprep.subr.bf16.mxu0 %v10922
          %11050 = vmatpush1.bf16.msra.mxu0 %v10921
          %11051 = vmatprep.subr.bf16.mxu0 %v10924
          %11052 = vmatpush1.bf16.msra.mxu0 %v10923
          %11053 = vmatprep.subr.bf16.mxu0 %v10926
          %11054 = vmatpush1.bf16.msra.mxu0 %v10925
          %11055 = vmatprep.subr.bf16.mxu0 %v10928
          %11056 = vmatpush1.bf16.msra.mxu0 %v10927
          %11057 = vmatprep.subr.bf16.mxu0 %v10930
          %11058 = vmatpush1.bf16.msra.mxu0 %v10929
          %11059 = vmatprep.subr.bf16.mxu0 %v10932
          %11060 = vmatpush1.bf16.msra.mxu0 %v10931
          %11061 = vmatprep.subr.bf16.mxu0 %v10934
          %11062 = vmatpush1.bf16.msra.mxu0 %v10933
          %11063 = vmatprep.subr.bf16.mxu0 %v10936
          %11064 = vmatpush1.bf16.msra.mxu0 %v10935
          %11065 = vmatprep.subr.bf16.mxu0 %v10938
          %11066 = vmatpush1.bf16.msra.mxu0 %v10937
          %11067 = vmatprep.subr.bf16.mxu0 %v10940
          %11068 = vmatpush1.bf16.msra.mxu0 %v10939
          %11069 = vmatprep.subr.bf16.mxu0 %v10942
          %11070 = vmatpush1.bf16.msra.mxu0 %v10941
          %11071 = vmatprep.subr.bf16.mxu0 %v10944
          %11072 = vmatpush1.bf16.msra.mxu0 %v10943
          %11073 = vmatprep.subr.bf16.mxu0 %v10946
          %11074 = vmatpush1.bf16.msra.mxu0 %v10945
          %11075 = vmatprep.subr.bf16.mxu0 %v10948
          %11076 = vmatpush1.bf16.msra.mxu0 %v10947
          %11077 = vmatprep.mubr.bf16.mxu0 %v10646
          %11078 = vmatmul.mubr.bf16.gmra.mrb[0].mxu0 %v10645
          %v11079 = vpop.f32.mrb[0].mxu0
          %v11080 = vadd.f32 %v10718, %v11079
          %v11081 = vpop.f32.mrb[0].mxu0
          %v11082 = vadd.f32 %v10722, %v11081
          %v11083 = vpop.f32.mrb[0].mxu0
          %v11084 = vpop.f32.mrb[0].mxu0
          %11085 = vdwg.mxu0
          %11086 = vmatprep.subr.bf16.mxu0 %v10950
          %11087 = vmatpush1.bf16.msra.mxu0 %v10949
          %11088 = vmatprep.subr.bf16.mxu0 %v10952
          %11089 = vmatpush1.bf16.msra.mxu0 %v10951
          %11090 = vmatprep.subr.bf16.mxu0 %v10954
          %11091 = vmatpush1.bf16.msra.mxu0 %v10953
          %11092 = vmatprep.subr.bf16.mxu0 %v10956
          %11093 = vmatpush1.bf16.msra.mxu0 %v10955
          %11094 = vmatprep.subr.bf16.mxu0 %v10958
          %11095 = vmatpush1.bf16.msra.mxu0 %v10957
          %11096 = vmatprep.subr.bf16.mxu0 %v10960
          %11097 = vmatpush1.bf16.msra.mxu0 %v10959
          %11098 = vmatprep.subr.bf16.mxu0 %v10962
          %11099 = vmatpush1.bf16.msra.mxu0 %v10961
          %11100 = vmatprep.subr.bf16.mxu0 %v10964
          %11101 = vmatpush1.bf16.msra.mxu0 %v10963
          %11102 = vmatprep.subr.bf16.mxu0 %v10966
          %11103 = vmatpush1.bf16.msra.mxu0 %v10965
          %11104 = vmatprep.subr.bf16.mxu0 %v10968
          %11105 = vmatpush1.bf16.msra.mxu0 %v10967
          %11106 = vmatprep.subr.bf16.mxu0 %v10970
          %11107 = vmatpush1.bf16.msra.mxu0 %v10969
          %11108 = vmatprep.subr.bf16.mxu0 %v10972
          %11109 = vmatpush1.bf16.msra.mxu0 %v10971
          %11110 = vmatprep.subr.bf16.mxu0 %v10974
          %11111 = vmatpush1.bf16.msra.mxu0 %v10973
          %11112 = vmatprep.subr.bf16.mxu0 %v10976
          %11113 = vmatpush1.bf16.msra.mxu0 %v10975
          %11114 = vmatprep.subr.bf16.mxu0 %v10978
          %11115 = vmatpush1.bf16.msra.mxu0 %v10977
          %11116 = vmatprep.subr.bf16.mxu0 %v10980
          %11117 = vmatpush1.bf16.msra.mxu0 %v10979
          %11118 = vmatprep.mubr.bf16.mxu0 %v10648
          %11119 = vmatmul.mubr.bf16.gmra.mrb[0].mxu0 %v10647
          %v11120 = vpop.f32.mrb[0].mxu0
          %v11121 = vadd.f32 %v11080, %v11120
          %v11122 = vpop.f32.mrb[0].mxu0
          %v11123 = vadd.f32 %v11082, %v11122
          %v11124 = vpop.f32.mrb[0].mxu0
          %v11125 = vpop.f32.mrb[0].mxu0
          %11126 = vdwg.mxu0
          %v11127 = vmax.f32 %v11121, 0.0
          %v11128 = vmax.f32 %v11123, 0.0
          %v11129 = vld [vmem:[#allocation15] sm:$0x3]
          %v11131 = vlaneseq
          %v11132 = vshrl.u32 %v11131, 7
          %v11133 = vsub.s32 0, %v11132
          %v11134 = vrot.slane %v11129, %v11133
          %v11135 = vlaneseq
          %v11136 = vshrl.u32 %v11135, 7
          %v11137 = vsub.s32 1, %v11136
          %v11138 = vrot.slane %v11129, %v11137
          %v11141 = vmul.f32 %v11127, %v11134
          %v11142 = vmul.f32 %v11128, %v11138
          %v11143 = vadd.f32 %v11141, %v11142
          %11144 = vadd.xlane.f32.xlu0 %v11143
          %v11145 = vpop.xlane.xlu0 %11144
          %v11146 = vld [vmem:[#allocation3] sm:$0x1]
          %v11148 = vlaneseq
          %v11149 = vshrl.u32 %v11148, 7
          %v11150 = vsub.s32 0, %v11149
          %v11151 = vrot.slane %v11146, %v11150
          %v11153 = vadd.f32 %v11145, %v11151
          %vm11154 = vcmask 7168
          %11155 = vst.msk [vmem:[%s487] sm:$0xff] %vm11154, %v11153
        $region96: #{tpu_custom_call.1} parent=55 // pred_fallthru
          _
        %p11156 = scmp.lt.s32.totalorder %s35, 1
        %s11157 = scalar_select %p11156, %s35, 1
        %s11158 = smul.addr %s11157, 8
        %s11159 = scalar_lea.vmem %s9, %s11158
        // Predicated region
        $region97: #{tpu_custom_call.1} parent=55 // pred_check
          %p11160 = pneg %p264
        $region98: #{tpu_custom_call.1} parent=55 // pred_check_branch
          %11162 = sbr.rel (%p11160) target = $region100
        $region99: #{tpu_custom_call.1} parent=55 // pred_region
          _
        $region100: #{tpu_custom_call.1} parent=55 // pred_fallthru
          _
      $region56: #{tpu_custom_call.1} parent=5 // pred_fallthru
        _
      %p11163 = scmp.le.s32.totalorder 2, %s26
      // Predicated region
      $region101: #{tpu_custom_call.1} parent=5 // pred_check
        %p11164 = pneg %p11163
      $region102: #{tpu_custom_call.1} parent=5 // pred_check_branch
        %11166 = sbr.rel (%p11164) target = $region104
      $region103: #{tpu_custom_call.1} parent=5 // pred_region
        %s11167 = ssub.s32 %s26, 2
        // Predicated region
        $region105: #{tpu_custom_call.1} parent=103 // pred_check
          %p11168 = pneg %p270
        $region106: #{tpu_custom_call.1} parent=103 // pred_check_branch
          %11170 = sbr.rel (%p11168) target = $region108
        $region107: #{tpu_custom_call.1} parent=103 // pred_region
          %p11171 = scmp.lt.s32.totalorder %s37, 1
          %s11172 = scalar_select %p11171, %s37, 1
          %s11173 = smul.addr %s11172, 8
          %s11174 = scalar_lea.vmem %s9, %s11173
        $region108: #{tpu_custom_call.1} parent=103 // pred_fallthru
          _
      $region104: #{tpu_custom_call.1} parent=5 // pred_fallthru
        _
    $region6: #{tpu_custom_call.1} parent=1 // loop_footer
      %s30 = sadd.s32 1, %s26
    $region7: #{tpu_custom_call.1} parent=1 // loop_footer_branch
      %25 = sbr.rel target = $region3
    $region8: #{tpu_custom_call.1} parent=1 // loop_exit
      _
    %11175 = vsyncpa [#allocation5], 1
    %s11176 = scalar_lea.sflag [#allocation5], 1
    %11177 = vsyncpa %s11176, 1
    %11178 = vsyncpa [#allocation7], 1
    %s11179 = scalar_lea.sflag [#allocation7], 1
    %11180 = vsyncpa %s11179, 1
    %11181 = vsyncpa [#allocation10], 1
    %11182 = vsyncpa [#allocation13], 1
    %11183 = vsyncpa [#allocation16], 1

</llo_original>
